<compile_context>
chip_gen: v7x
topology: tpu7x:2x2x1
jax: 0.10.0
libtpu: 0.0.40
codegen_flags: <defaults>
</compile_context>

<pallas_src>
import functools

import jax
import jax.numpy as jnp
from jax import lax
from jax.experimental import pallas as pl
from jax.experimental.pallas import tpu as pltpu

# ----- module hyper-parameters (defaults of PMapper, use_small=True) -----
C_M = 1
MID = 256
EMBED = 256
NP1 = 6
NP2 = 6
NH1 = 6
NH2 = 6
NK = 2
GN_GROUPS = 32
GN_EPS = 1e-5
GAMMA = 1.0  # Predicates gamma


def _full_spec(shape):
    """Whole-array block for a grid=(1,) pallas_call."""
    nd = len(shape)
    return pl.BlockSpec(tuple(shape), lambda i, _nd=nd: (0,) * _nd)


# ============================== fused stage kernel ==============================

def _stage_kernel(patches_t_ref, conv_w_ref, conv_b_ref, gn_g_ref, gn_b_ref,
                  gmat_ref, gmat_t_ref, sred_ref, sred_t_ref,
                  wa_ref, ba_ref, wb_ref, bb_ref,
                  pa_ref, pa_sq_ref, pb_ref, pb_sq_ref, sb_ref,
                  lmat_ref, rmat_ref, mrows_ref,
                  proj_ref, rel_ref,
                  *, n_a, p_spatial):
    """One PMapper stage, fully fused.

    patches_t : (K=C*9, R)  bf16, R = (n_a + n_b) * p_spatial  (transposed im2col)
    conv_w    : (K, MID) bf16;  conv_b/gn_g/gn_b : (1, MID) f32
    gmat      : (MID, G) f32 channel->group indicator; gmat_t : (G, MID) f32
    sred      : (S, R) bf16 row-sum-per-sample; sred_t : (R, S) bf16
    wa/ba     : head A (Q1 / QH1) for the first n_a samples
    wb/bb     : head B (Q2 / QH2) for the remaining samples
    pa/pa_sq  : predicate prototypes (M, E) f32 and their sq-norms (1, M)   [proj]
    pb/pb_sq  : predicate prototypes for the relational head               [rel]
    sb        : (M, NP) f32 group-sum matrix (sum over the NK axis)
    lmat      : (bN, bNN) f32, rmat : (bNN, bN) f32 block-diagonal builders
    mrows     : (bN, chw) f32 rows to be relationally mixed (m or gr)
    proj_ref  : (bN, EMBED) f32 output (pr / phr rows)
    rel_ref   : (bN, chw)  f32 output (gr / ghr rows)
    """
    f32 = jnp.float32
    bf16 = jnp.bfloat16

    # ---- Conv(3x3, stride 2) as a single transposed-LHS bf16 matmul ----
    y = lax.dot_general(patches_t_ref[...], conv_w_ref[...],
                        dimension_numbers=(((0,), (0,)), ((), ())),
                        preferred_element_type=f32) + conv_b_ref[...]     # (R, MID)

    # ---- GroupNorm(32) statistics via segment matmuls (no concatenates) ----
    sred_bf = sred_ref[...]                                               # (S, R) bf16
    ch_sum = jnp.dot(sred_bf, y.astype(bf16), preferred_element_type=f32)
    # E[x^2] accumulation kept in f32 (variance accuracy, per review).
    ch_sq = jnp.dot(sred_bf.astype(f32), y * y, preferred_element_type=f32)

    inv_n = 1.0 / float(p_spatial * (MID // GN_GROUPS))
    g_mean = jnp.dot(ch_sum, gmat_ref[...], preferred_element_type=f32) * inv_n
    g_msq = jnp.dot(ch_sq, gmat_ref[...], preferred_element_type=f32) * inv_n
    g_var = jnp.maximum(g_msq - g_mean * g_mean, 0.0)                     # clamp >= 0
    g_rstd = lax.rsqrt(g_var + GN_EPS)

    mean_c = jnp.dot(g_mean, gmat_t_ref[...], preferred_element_type=f32)
    rstd_c = jnp.dot(g_rstd, gmat_t_ref[...], preferred_element_type=f32)
    scale_c = rstd_c * gn_g_ref[...]
    shift_c = gn_b_ref[...] - mean_c * scale_c

    sred_t_bf = sred_t_ref[...]                                           # (R, S) bf16
    scale_r = jnp.dot(sred_t_bf, scale_c.astype(bf16), preferred_element_type=f32)
    shift_r = jnp.dot(sred_t_bf, shift_c.astype(bf16), preferred_element_type=f32)
    yn = y * scale_r + shift_r

    # SiLU (f32 elementwise path: also correct on v5e, no bf16 VPU/EUP there).
    ys = yn * pl.reciprocal(1.0 + jnp.exp(-yn), approx=True)

    # spatial mean (AdaptiveAvgPool2d(1)) -> (S, MID)
    feat = jnp.dot(sred_bf, ys.astype(bf16),
                   preferred_element_type=f32) * (1.0 / float(p_spatial))

    # ---- row-partitioned MID -> EMBED heads ----
    qa = jnp.dot(feat[:n_a].astype(bf16), wa_ref[...],
                 preferred_element_type=f32) + ba_ref[...]                # (bN, E)
    qb = jnp.dot(feat[n_a:].astype(bf16), wb_ref[...],
                 preferred_element_type=f32) + bb_ref[...]                # (bNN, E)

    # ---- predicate head A: p = exp(-gamma * ||q - P||); out = p @ P ----
    pa = pa_ref[...]                                                      # (M, E) f32
    qa_n = jnp.sum(qa * qa, axis=1, keepdims=True)
    cross_a = lax.dot_general(qa.astype(bf16), pa.astype(bf16),
                              dimension_numbers=(((1,), (1,)), ((), ())),
                              preferred_element_type=f32)                 # (bN, M)
    dist_a = jnp.sqrt(jnp.maximum(qa_n + pa_sq_ref[...] - 2.0 * cross_a, 0.0))
    p_a = jnp.exp(-GAMMA * dist_a)
    proj_ref[...] = jnp.dot(p_a, pa, preferred_element_type=f32)          # (bN, E)

    # ---- predicate head B: pred -> normalize -> max -> relational matmul ----
    pb = pb_ref[...]                                                      # (M, E) f32
    qb_n = jnp.sum(qb * qb, axis=1, keepdims=True)
    cross_b = lax.dot_general(qb.astype(bf16), pb.astype(bf16),
                              dimension_numbers=(((1,), (1,)), ((), ())),
                              preferred_element_type=f32)                 # (bNN, M)
    dist_b = jnp.sqrt(jnp.maximum(qb_n + pb_sq_ref[...] - 2.0 * cross_b, 0.0))
    p_b = jnp.exp(-GAMMA * dist_b)
    pred_raw = jnp.dot(p_b, sb_ref[...], preferred_element_type=f32)      # (bNN, NP)
    pred = pred_raw / jnp.sum(pred_raw, axis=1, keepdims=True)            # exact divide
    p2m = jnp.max(pred, axis=1, keepdims=True)                            # (bNN, 1)
    # block-diagonal A[i*N+w, i*N+j] = p2m[i,w,j] built as lmat @ diag(p2m) @ rmat
    blockdiag = jnp.dot(lmat_ref[...], p2m * rmat_ref[...],
                        preferred_element_type=f32)                       # (bN, bN)
    rel_ref[...] = jnp.dot(blockdiag, mrows_ref[...],
                           preferred_element_type=f32)                    # (bN, chw)


def run_stage(patches_t, mrows, wa, ba, wb, bb, pa, pa_sq, pb, pb_sq, sb,
              params, consts):
    sred = consts["sred"]
    n_tot = sred.shape[0]
    n_a = consts["lmat"].shape[0]                      # = b*N
    p_spatial = patches_t.shape[1] // n_tot
    chw = mrows.shape[1]

    args = (patches_t, params["conv_w"], params["conv_b"],
            params["gn_g"], params["gn_b"],
            params["gmat"], params["gmat_t"],
            consts["sred"], consts["sred_t"],
            wa, ba, wb, bb,
            pa, pa_sq, pb, pb_sq, sb,
            consts["lmat"], consts["rmat"], mrows)

    kern = functools.partial(_stage_kernel, n_a=n_a, p_spatial=p_spatial)
    return pl.pallas_call(
        kern,
        out_shape=(jax.ShapeDtypeStruct((n_a, EMBED), jnp.float32),
                   jax.ShapeDtypeStruct((n_a, chw), jnp.float32)),
        grid=(1,),
        in_specs=[_full_spec(a.shape) for a in args],
        out_specs=(_full_spec((n_a, EMBED)), _full_spec((n_a, chw))),
        compiler_params=pltpu.CompilerParams(
            dimension_semantics=("arbitrary",),
            vmem_limit_bytes=24 * 1024 * 1024),
    )(*args)


# ============================== jitted JAX glue ==============================

def im2col_t(x, kh=3, kw=3, stride=2):
    """NCHW -> (C*kh*kw, B*P) transposed patches (contraction dim on sublanes)."""
    n, c, h, w = x.shape
    ho = (h - kh) // stride + 1
    wo = (w - kw) // stride + 1
    slices = []
    for di in range(kh):
        for dj in range(kw):
            slices.append(x[:, :, di:di + stride * ho:stride,
                            dj:dj + stride * wo:stride])      # (n, c, ho, wo)
    pat = jnp.stack(slices, axis=2)                            # (n, c, 9, ho, wo)
    pat = pat.reshape(n, c * kh * kw, ho * wo)                 # (n, K, P)
    pat = jnp.transpose(pat, (1, 0, 2))                        # (K, n, P)
    return pat.reshape(c * kh * kw, n * ho * wo)               # (K, R)


def pair_sum_clamp(m):
    """mp[i,a,j] = min(m[i,j] + m[i,a], 1), flattened over (a, j)."""
    b, N, c, h, w = m.shape
    mp = m[:, None] + m[:, :, None]                            # (b, N, N, c, h, w)
    mp = jnp.minimum(mp, 1.0)                                  # mp - ReLU(mp - 1)
    return mp.reshape(b * N * N, c, h, w)


def _pmapper_forward_impl(m, params, consts):
    b, N, c, h, w = m.shape
    chw = c * h * w
    bN = b * N
    bf16 = jnp.bfloat16

    # ---------- stage 1: embed(m) + P1/P2 predicates ----------
    x1 = m.reshape(bN, c, h, w)
    mp = pair_sum_clamp(m)
    patches1 = im2col_t(jnp.concatenate([x1, mp], axis=0)).astype(bf16)
    m_rows = m.reshape(bN, chw)

    pr_rows, gr_rows = run_stage(
        patches1, m_rows,
        params["q1_w"], params["q1_b"], params["q2_w"], params["q2_b"],
        params["p1"], params["p1_sq"], params["p2"], params["p2_sq"],
        params["s2"], params, consts)
    pr = pr_rows.reshape(b, N, EMBED)
    gr = gr_rows.reshape(b, N, c, h, w)

    # ---------- stage 2: embedH(gr) + PH1/PH2 predicates ----------
    xh1 = gr.reshape(bN, c, h, w)
    gp = pair_sum_clamp(gr)
    patches2 = im2col_t(jnp.concatenate([xh1, gp], axis=0)).astype(bf16)

    phr_rows, ghr_rows = run_stage(
        patches2, gr_rows,
        params["qh1_w"], params["qh1_b"], params["qh2_w"], params["qh2_b"],
        params["ph1"], params["ph1_sq"], params["ph2"], params["ph2_sq"],
        params["sh2"], params, consts)
    phr = phr_rows.reshape(b, N, EMBED)
    ghr = ghr_rows.reshape(b, N, c, h, w)

    return pr, gr, phr, ghr


pmapper_forward = jax.jit(_pmapper_forward_impl)


# ============================== constants & parameters ==============================

def make_consts(b, N, c, h, w):
    """Shape-dependent constant matrices, built once (hoisted out of the jit body)."""
    f32 = jnp.float32
    bf16 = jnp.bfloat16
    bN = b * N
    bNN = b * N * N
    n_tot = bN + bNN
    P = ((h - 3) // 2 + 1) * ((w - 3) // 2 + 1)                # conv out spatial
    R = n_tot * P

    r_idx = jnp.arange(R)
    sred = (r_idx[None, :] // P == jnp.arange(n_tot)[:, None]).astype(bf16)
    sred_t = sred.T

    k_idx = jnp.arange(bNN)
    i_idx = k_idx // (N * N)
    w_idx = (k_idx // N) % N
    j_idx = k_idx % N
    lmat = ((i_idx * N + w_idx)[None, :] == jnp.arange(bN)[:, None]).astype(f32)
    rmat = ((i_idx * N + j_idx)[:, None] == jnp.arange(bN)[None, :]).astype(f32)

    return dict(sred=sred, sred_t=sred_t, lmat=lmat, rmat=rmat)


def make_params(key):
    ks = jax.random.split(key, 16)
    f32 = jnp.float32
    bf16 = jnp.bfloat16

    conv_w = 0.2 * jax.random.normal(ks[0], (MID, C_M, 3, 3), f32)
    conv_b = 0.02 * jax.random.normal(ks[1], (MID,), f32)
    gn_g = jnp.ones((MID,), f32) + 0.05 * jax.random.normal(ks[2], (MID,), f32)
    gn_b = 0.05 * jax.random.normal(ks[3], (MID,), f32)

    def linear(kw, kb, din, dout):
        ww = jax.random.normal(kw, (dout, din), f32) / jnp.sqrt(din)
        bb = 0.02 * jax.random.normal(kb, (dout,), f32)
        return ww.T.astype(bf16), bb.reshape(1, dout)          # (in, out) bf16, f32 bias

    q1_w, q1_b = linear(ks[4], ks[5], MID, EMBED)
    q2_w, q2_b = linear(ks[6], ks[7], MID, EMBED)
    qh1_w, qh1_b = linear(ks[8], ks[9], MID, EMBED)
    qh2_w, qh2_b = linear(ks[10], ks[11], MID, EMBED)

    def pred_mat(k, n_p):
        # kaiming-normal-like init; predicate prototypes stay f32
        return jax.random.normal(k, (n_p * NK, EMBED), f32) * jnp.sqrt(2.0 / EMBED)

    p1 = pred_mat(ks[12], NP1)
    p2 = pred_mat(ks[13], NP2)
    ph1 = pred_mat(ks[14], NH1)
    ph2 = pred_mat(ks[15], NH2)

    def sqnorm(p):
        return jnp.sum(p * p, axis=1).reshape(1, -1)           # (1, NP*NK) f32

    def group_sum_mat(n_p):
        idx = jnp.arange(n_p * NK)
        return (idx[:, None] // NK == jnp.arange(n_p)[None, :]).astype(f32)

    # channel -> group indicator for GroupNorm(32, MID)
    ch = jnp.arange(MID)
    gmat = (ch[:, None] // (MID // GN_GROUPS) ==
            jnp.arange(GN_GROUPS)[None, :]).astype(f32)

    return dict(
        conv_w=conv_w.reshape(MID, C_M * 9).T.astype(bf16),    # (K, MID) bf16
        conv_b=conv_b.reshape(1, MID),
        gn_g=gn_g.reshape(1, MID), gn_b=gn_b.reshape(1, MID),
        gmat=gmat, gmat_t=gmat.T,
        q1_w=q1_w, q1_b=q1_b, q2_w=q2_w, q2_b=q2_b,
        qh1_w=qh1_w, qh1_b=qh1_b, qh2_w=qh2_w, qh2_b=qh2_b,
        p1=p1, p1_sq=sqnorm(p1),
        p2=p2, p2_sq=sqnorm(p2), s2=group_sum_mat(NP2),
        ph1=ph1, ph1_sq=sqnorm(ph1),
        ph2=ph2, ph2_sq=sqnorm(ph2), sh2=group_sum_mat(NH2),
    )


# ============================== main ==============================

if __name__ == "__main__":
    key = jax.random.PRNGKey(0)
    kp, kx = jax.random.split(key)
    params = make_params(kp)

    b, N, c, h, w = 2, 3, C_M, 16, 16
    consts = make_consts(b, N, c, h, w)
    m = jax.random.uniform(kx, (b, N, c, h, w), jnp.float32)   # mask-like inputs

    pr, gr, phr, ghr = pmapper_forward(m, params, consts)
    jax.block_until_ready((pr, gr, phr, ghr))

    assert pr.shape == (b, N, EMBED)
    assert gr.shape == (b, N, c, h, w)
    assert phr.shape == (b, N, EMBED)
    assert ghr.shape == (b, N, c, h, w)
    assert all(bool(jnp.all(jnp.isfinite(t))) for t in (pr, gr, phr, ghr))

    print("KERNEL_OK")
</pallas_src>

<mosaic_0001>
module attributes {stable_mosaic.version = 11 : i64} {
  func.func @_stage_kernel(%arg0: i32, %arg1: memref<9x1176xbf16, #tpu.memory_space<vmem>>, %arg2: memref<9x256xbf16, #tpu.memory_space<vmem>>, %arg3: memref<1x256xf32, #tpu.memory_space<vmem>>, %arg4: memref<1x256xf32, #tpu.memory_space<vmem>>, %arg5: memref<1x256xf32, #tpu.memory_space<vmem>>, %arg6: memref<256x32xf32, #tpu.memory_space<vmem>>, %arg7: memref<32x256xf32, #tpu.memory_space<vmem>>, %arg8: memref<24x1176xbf16, #tpu.memory_space<vmem>>, %arg9: memref<1176x24xbf16, #tpu.memory_space<vmem>>, %arg10: memref<256x256xbf16, #tpu.memory_space<vmem>>, %arg11: memref<1x256xf32, #tpu.memory_space<vmem>>, %arg12: memref<256x256xbf16, #tpu.memory_space<vmem>>, %arg13: memref<1x256xf32, #tpu.memory_space<vmem>>, %arg14: memref<12x256xf32, #tpu.memory_space<vmem>>, %arg15: memref<1x12xf32, #tpu.memory_space<vmem>>, %arg16: memref<12x256xf32, #tpu.memory_space<vmem>>, %arg17: memref<1x12xf32, #tpu.memory_space<vmem>>, %arg18: memref<12x6xf32, #tpu.memory_space<vmem>>, %arg19: memref<6x18xf32, #tpu.memory_space<vmem>>, %arg20: memref<18x6xf32, #tpu.memory_space<vmem>>, %arg21: memref<6x256xf32, #tpu.memory_space<vmem>>, %arg22: memref<6x256xf32, #tpu.memory_space<vmem>>, %arg23: memref<6x256xf32, #tpu.memory_space<vmem>>) attributes {dimension_semantics = [#tpu.dimension_semantics<arbitrary>], iteration_bounds = array<i64: 1>, scalar_prefetch = 0 : i64, scratch_operands = 0 : i64, tpu.core_type = #tpu.core_type<tc>, window_params = [{pipeline_mode = #tpu.pipeline_mode<synchronous>, transform_indices = @transform_0, window_bounds = array<i64: 9, 1176>}, {pipeline_mode = #tpu.pipeline_mode<synchronous>, transform_indices = @transform_1, window_bounds = array<i64: 9, 256>}, {pipeline_mode = #tpu.pipeline_mode<synchronous>, transform_indices = @transform_2, window_bounds = array<i64: 1, 256>}, {pipeline_mode = #tpu.pipeline_mode<synchronous>, transform_indices = @transform_3, window_bounds = array<i64: 1, 256>}, {pipeline_mode = #tpu.pipeline_mode<synchronous>, transform_indices = @transform_4, window_bounds = array<i64: 1, 256>}, {pipeline_mode = #tpu.pipeline_mode<synchronous>, transform_indices = @transform_5, window_bounds = array<i64: 256, 32>}, {pipeline_mode = #tpu.pipeline_mode<synchronous>, transform_indices = @transform_6, window_bounds = array<i64: 32, 256>}, {pipeline_mode = #tpu.pipeline_mode<synchronous>, transform_indices = @transform_7, window_bounds = array<i64: 24, 1176>}, {pipeline_mode = #tpu.pipeline_mode<synchronous>, transform_indices = @transform_8, window_bounds = array<i64: 1176, 24>}, {pipeline_mode = #tpu.pipeline_mode<synchronous>, transform_indices = @transform_9, window_bounds = array<i64: 256, 256>}, {pipeline_mode = #tpu.pipeline_mode<synchronous>, transform_indices = @transform_10, window_bounds = array<i64: 1, 256>}, {pipeline_mode = #tpu.pipeline_mode<synchronous>, transform_indices = @transform_11, window_bounds = array<i64: 256, 256>}, {pipeline_mode = #tpu.pipeline_mode<synchronous>, transform_indices = @transform_12, window_bounds = array<i64: 1, 256>}, {pipeline_mode = #tpu.pipeline_mode<synchronous>, transform_indices = @transform_13, window_bounds = array<i64: 12, 256>}, {pipeline_mode = #tpu.pipeline_mode<synchronous>, transform_indices = @transform_14, window_bounds = array<i64: 1, 12>}, {pipeline_mode = #tpu.pipeline_mode<synchronous>, transform_indices = @transform_15, window_bounds = array<i64: 12, 256>}, {pipeline_mode = #tpu.pipeline_mode<synchronous>, transform_indices = @transform_16, window_bounds = array<i64: 1, 12>}, {pipeline_mode = #tpu.pipeline_mode<synchronous>, transform_indices = @transform_17, window_bounds = array<i64: 12, 6>}, {pipeline_mode = #tpu.pipeline_mode<synchronous>, transform_indices = @transform_18, window_bounds = array<i64: 6, 18>}, {pipeline_mode = #tpu.pipeline_mode<synchronous>, transform_indices = @transform_19, window_bounds = array<i64: 18, 6>}, {pipeline_mode = #tpu.pipeline_mode<synchronous>, transform_indices = @transform_20, window_bounds = array<i64: 6, 256>}, {pipeline_mode = #tpu.pipeline_mode<synchronous>, transform_indices = @transform_21, window_bounds = array<i64: 6, 256>}, {pipeline_mode = #tpu.pipeline_mode<synchronous>, transform_indices = @transform_22, window_bounds = array<i64: 6, 256>}]} {
    %c0 = arith.constant 0 : index
    %c0_0 = arith.constant 0 : index
    %0 = vector.load %arg1[%c0, %c0_0] : memref<9x1176xbf16, #tpu.memory_space<vmem>>, vector<9x1176xbf16>
    %c0_1 = arith.constant 0 : index
    %c0_2 = arith.constant 0 : index
    %1 = vector.load %arg2[%c0_1, %c0_2] : memref<9x256xbf16, #tpu.memory_space<vmem>>, vector<9x256xbf16>
    %cst = arith.constant dense<0.000000e+00> : vector<1176x256xf32>
    %2 = tpu.matmul %0, %1, %cst {dimension_numbers = #tpu.dot_dimension_numbers<[0], [0], [1], [1], [0, 1, 1, 1], [], []>} : vector<9x1176xbf16>, vector<9x256xbf16>, vector<1176x256xf32> -> vector<1176x256xf32>
    %c0_3 = arith.constant 0 : index
    %c0_4 = arith.constant 0 : index
    %3 = vector.load %arg3[%c0_3, %c0_4] : memref<1x256xf32, #tpu.memory_space<vmem>>, vector<1x256xf32>
    %4 = vector.broadcast %3 : vector<1x256xf32> to vector<1176x256xf32>
    %5 = arith.addf %2, %4 : vector<1176x256xf32>
    %c0_5 = arith.constant 0 : index
    %c0_6 = arith.constant 0 : index
    %6 = vector.load %arg8[%c0_5, %c0_6] : memref<24x1176xbf16, #tpu.memory_space<vmem>>, vector<24x1176xbf16>
    %7 = arith.truncf %5 : vector<1176x256xf32> to vector<1176x256xbf16>
    %cst_7 = arith.constant dense<0.000000e+00> : vector<24x256xf32>
    %8 = tpu.matmul %6, %7, %cst_7 {dimension_numbers = #tpu.dot_dimension_numbers<[1], [0], [0], [1], [0, 0, 1, 1], [], []>} : vector<24x1176xbf16>, vector<1176x256xbf16>, vector<24x256xf32> -> vector<24x256xf32>
    %9 = arith.extf %6 : vector<24x1176xbf16> to vector<24x1176xf32>
    %10 = arith.mulf %5, %5 : vector<1176x256xf32>
    %cst_8 = arith.constant dense<0.000000e+00> : vector<24x256xf32>
    %11 = tpu.matmul %9, %10, %cst_8 {dimension_numbers = #tpu.dot_dimension_numbers<[1], [0], [0], [1], [0, 0, 1, 1], [], []>} : vector<24x1176xf32>, vector<1176x256xf32>, vector<24x256xf32> -> vector<24x256xf32>
    %c0_9 = arith.constant 0 : index
    %c0_10 = arith.constant 0 : index
    %12 = vector.load %arg6[%c0_9, %c0_10] : memref<256x32xf32, #tpu.memory_space<vmem>>, vector<256x32xf32>
    %cst_11 = arith.constant dense<0.000000e+00> : vector<24x32xf32>
    %13 = tpu.matmul %8, %12, %cst_11 {dimension_numbers = #tpu.dot_dimension_numbers<[1], [0], [0], [1], [0, 0, 1, 1], [], []>} : vector<24x256xf32>, vector<256x32xf32>, vector<24x32xf32> -> vector<24x32xf32>
    %cst_12 = arith.constant 0.00255102036 : f32
    %14 = vector.broadcast %cst_12 : f32 to vector<24x32xf32>
    %15 = arith.mulf %13, %14 : vector<24x32xf32>
    %c0_13 = arith.constant 0 : index
    %c0_14 = arith.constant 0 : index
    %16 = vector.load %arg6[%c0_13, %c0_14] : memref<256x32xf32, #tpu.memory_space<vmem>>, vector<256x32xf32>
    %cst_15 = arith.constant dense<0.000000e+00> : vector<24x32xf32>
    %17 = tpu.matmul %11, %16, %cst_15 {dimension_numbers = #tpu.dot_dimension_numbers<[1], [0], [0], [1], [0, 0, 1, 1], [], []>} : vector<24x256xf32>, vector<256x32xf32>, vector<24x32xf32> -> vector<24x32xf32>
    %cst_16 = arith.constant 0.00255102036 : f32
    %18 = vector.broadcast %cst_16 : f32 to vector<24x32xf32>
    %19 = arith.mulf %17, %18 : vector<24x32xf32>
    %20 = arith.mulf %15, %15 : vector<24x32xf32>
    %21 = arith.subf %19, %20 : vector<24x32xf32>
    %cst_17 = arith.constant 0.000000e+00 : f32
    %22 = vector.broadcast %cst_17 : f32 to vector<24x32xf32>
    %23 = arith.maximumf %21, %22 : vector<24x32xf32>
    %cst_18 = arith.constant 9.99999974E-6 : f32
    %24 = vector.broadcast %cst_18 : f32 to vector<24x32xf32>
    %25 = arith.addf %23, %24 : vector<24x32xf32>
    %26 = math.rsqrt %25 : vector<24x32xf32>
    %c0_19 = arith.constant 0 : index
    %c0_20 = arith.constant 0 : index
    %27 = vector.load %arg7[%c0_19, %c0_20] : memref<32x256xf32, #tpu.memory_space<vmem>>, vector<32x256xf32>
    %cst_21 = arith.constant dense<0.000000e+00> : vector<24x256xf32>
    %28 = tpu.matmul %15, %27, %cst_21 {dimension_numbers = #tpu.dot_dimension_numbers<[1], [0], [0], [1], [0, 0, 1, 1], [], []>} : vector<24x32xf32>, vector<32x256xf32>, vector<24x256xf32> -> vector<24x256xf32>
    %c0_22 = arith.constant 0 : index
    %c0_23 = arith.constant 0 : index
    %29 = vector.load %arg7[%c0_22, %c0_23] : memref<32x256xf32, #tpu.memory_space<vmem>>, vector<32x256xf32>
    %cst_24 = arith.constant dense<0.000000e+00> : vector<24x256xf32>
    %30 = tpu.matmul %26, %29, %cst_24 {dimension_numbers = #tpu.dot_dimension_numbers<[1], [0], [0], [1], [0, 0, 1, 1], [], []>} : vector<24x32xf32>, vector<32x256xf32>, vector<24x256xf32> -> vector<24x256xf32>
    %c0_25 = arith.constant 0 : index
    %c0_26 = arith.constant 0 : index
    %31 = vector.load %arg4[%c0_25, %c0_26] : memref<1x256xf32, #tpu.memory_space<vmem>>, vector<1x256xf32>
    %32 = vector.broadcast %31 : vector<1x256xf32> to vector<24x256xf32>
    %33 = arith.mulf %30, %32 : vector<24x256xf32>
    %c0_27 = arith.constant 0 : index
    %c0_28 = arith.constant 0 : index
    %34 = vector.load %arg5[%c0_27, %c0_28] : memref<1x256xf32, #tpu.memory_space<vmem>>, vector<1x256xf32>
    %35 = arith.mulf %28, %33 : vector<24x256xf32>
    %36 = vector.broadcast %34 : vector<1x256xf32> to vector<24x256xf32>
    %37 = arith.subf %36, %35 : vector<24x256xf32>
    %c0_29 = arith.constant 0 : index
    %c0_30 = arith.constant 0 : index
    %38 = vector.load %arg9[%c0_29, %c0_30] : memref<1176x24xbf16, #tpu.memory_space<vmem>>, vector<1176x24xbf16>
    %39 = arith.truncf %33 : vector<24x256xf32> to vector<24x256xbf16>
    %cst_31 = arith.constant dense<0.000000e+00> : vector<1176x256xf32>
    %40 = tpu.matmul %38, %39, %cst_31 {dimension_numbers = #tpu.dot_dimension_numbers<[1], [0], [0], [1], [0, 0, 1, 1], [], []>} : vector<1176x24xbf16>, vector<24x256xbf16>, vector<1176x256xf32> -> vector<1176x256xf32>
    %41 = arith.truncf %37 : vector<24x256xf32> to vector<24x256xbf16>
    %cst_32 = arith.constant dense<0.000000e+00> : vector<1176x256xf32>
    %42 = tpu.matmul %38, %41, %cst_32 {dimension_numbers = #tpu.dot_dimension_numbers<[1], [0], [0], [1], [0, 0, 1, 1], [], []>} : vector<1176x24xbf16>, vector<24x256xbf16>, vector<1176x256xf32> -> vector<1176x256xf32>
    %43 = arith.mulf %5, %40 : vector<1176x256xf32>
    %44 = arith.addf %43, %42 : vector<1176x256xf32>
    %cst_33 = arith.constant 0.000000e+00 : f32
    %45 = vector.broadcast %cst_33 : f32 to vector<1176x256xf32>
    %46 = arith.subf %45, %44 : vector<1176x256xf32>
    %47 = math.exp %46 : vector<1176x256xf32>
    %cst_34 = arith.constant 1.000000e+00 : f32
    %48 = vector.broadcast %cst_34 : f32 to vector<1176x256xf32>
    %49 = arith.addf %48, %47 : vector<1176x256xf32>
    %50 = tpu.reciprocal %49 {approx = true} : vector<1176x256xf32> -> vector<1176x256xf32>
    %51 = arith.mulf %44, %50 : vector<1176x256xf32>
    %52 = arith.truncf %51 : vector<1176x256xf32> to vector<1176x256xbf16>
    %cst_35 = arith.constant dense<0.000000e+00> : vector<24x256xf32>
    %53 = tpu.matmul %6, %52, %cst_35 {dimension_numbers = #tpu.dot_dimension_numbers<[1], [0], [0], [1], [0, 0, 1, 1], [], []>} : vector<24x1176xbf16>, vector<1176x256xbf16>, vector<24x256xf32> -> vector<24x256xf32>
    %cst_36 = arith.constant 0.0204081628 : f32
    %54 = vector.broadcast %cst_36 : f32 to vector<24x256xf32>
    %55 = arith.mulf %53, %54 : vector<24x256xf32>
    %56 = vector.extract_strided_slice %55 {offsets = [0, 0], sizes = [6, 256], strides = [1, 1]} : vector<24x256xf32> to vector<6x256xf32>
    %57 = arith.truncf %56 : vector<6x256xf32> to vector<6x256xbf16>
    %c0_37 = arith.constant 0 : index
    %c0_38 = arith.constant 0 : index
    %58 = vector.load %arg10[%c0_37, %c0_38] : memref<256x256xbf16, #tpu.memory_space<vmem>>, vector<256x256xbf16>
    %cst_39 = arith.constant dense<0.000000e+00> : vector<6x256xf32>
    %59 = tpu.matmul %57, %58, %cst_39 {dimension_numbers = #tpu.dot_dimension_numbers<[1], [0], [0], [1], [0, 0, 1, 1], [], []>} : vector<6x256xbf16>, vector<256x256xbf16>, vector<6x256xf32> -> vector<6x256xf32>
    %c0_40 = arith.constant 0 : index
    %c0_41 = arith.constant 0 : index
    %60 = vector.load %arg11[%c0_40, %c0_41] : memref<1x256xf32, #tpu.memory_space<vmem>>, vector<1x256xf32>
    %61 = vector.broadcast %60 : vector<1x256xf32> to vector<6x256xf32>
    %62 = arith.addf %59, %61 : vector<6x256xf32>
    %63 = vector.extract_strided_slice %55 {offsets = [6, 0], sizes = [18, 256], strides = [1, 1]} : vector<24x256xf32> to vector<18x256xf32>
    %64 = arith.truncf %63 : vector<18x256xf32> to vector<18x256xbf16>
    %c0_42 = arith.constant 0 : index
    %c0_43 = arith.constant 0 : index
    %65 = vector.load %arg12[%c0_42, %c0_43] : memref<256x256xbf16, #tpu.memory_space<vmem>>, vector<256x256xbf16>
    %cst_44 = arith.constant dense<0.000000e+00> : vector<18x256xf32>
    %66 = tpu.matmul %64, %65, %cst_44 {dimension_numbers = #tpu.dot_dimension_numbers<[1], [0], [0], [1], [0, 0, 1, 1], [], []>} : vector<18x256xbf16>, vector<256x256xbf16>, vector<18x256xf32> -> vector<18x256xf32>
    %c0_45 = arith.constant 0 : index
    %c0_46 = arith.constant 0 : index
    %67 = vector.load %arg13[%c0_45, %c0_46] : memref<1x256xf32, #tpu.memory_space<vmem>>, vector<1x256xf32>
    %68 = vector.broadcast %67 : vector<1x256xf32> to vector<18x256xf32>
    %69 = arith.addf %66, %68 : vector<18x256xf32>
    %c0_47 = arith.constant 0 : index
    %c0_48 = arith.constant 0 : index
    %70 = vector.load %arg14[%c0_47, %c0_48] : memref<12x256xf32, #tpu.memory_space<vmem>>, vector<12x256xf32>
    %71 = arith.mulf %62, %62 : vector<6x256xf32>
    %cst_49 = arith.constant dense<0.000000e+00> : vector<6xf32>
    %72 = vector.multi_reduction <add>, %71, %cst_49 [1] : vector<6x256xf32> to vector<6xf32>
    %73 = vector.shape_cast %72 : vector<6xf32> to vector<6x1xf32>
    %74 = arith.truncf %62 : vector<6x256xf32> to vector<6x256xbf16>
    %75 = arith.truncf %70 : vector<12x256xf32> to vector<12x256xbf16>
    %cst_50 = arith.constant dense<0.000000e+00> : vector<6x12xf32>
    %76 = tpu.matmul %74, %75, %cst_50 {dimension_numbers = #tpu.dot_dimension_numbers<[1], [1], [0], [0], [0, 0, 1, 0], [], []>} : vector<6x256xbf16>, vector<12x256xbf16>, vector<6x12xf32> -> vector<6x12xf32>
    %c0_51 = arith.constant 0 : index
    %c0_52 = arith.constant 0 : index
    %77 = vector.load %arg15[%c0_51, %c0_52] : memref<1x12xf32, #tpu.memory_space<vmem>>, vector<1x12xf32>
    %78 = vector.broadcast %73 : vector<6x1xf32> to vector<6x12xf32>
    %79 = vector.broadcast %77 : vector<1x12xf32> to vector<6x12xf32>
    %80 = arith.addf %78, %79 : vector<6x12xf32>
    %cst_53 = arith.constant 2.000000e+00 : f32
    %81 = vector.broadcast %cst_53 : f32 to vector<6x12xf32>
    %82 = arith.mulf %81, %76 : vector<6x12xf32>
    %83 = arith.subf %80, %82 : vector<6x12xf32>
    %cst_54 = arith.constant 0.000000e+00 : f32
    %84 = vector.broadcast %cst_54 : f32 to vector<6x12xf32>
    %85 = arith.maximumf %83, %84 : vector<6x12xf32>
    %86 = math.sqrt %85 : vector<6x12xf32>
    %cst_55 = arith.constant -1.000000e+00 : f32
    %87 = vector.broadcast %cst_55 : f32 to vector<6x12xf32>
    %88 = arith.mulf %87, %86 : vector<6x12xf32>
    %89 = math.exp %88 : vector<6x12xf32>
    %cst_56 = arith.constant dense<0.000000e+00> : vector<6x256xf32>
    %90 = tpu.matmul %89, %70, %cst_56 {dimension_numbers = #tpu.dot_dimension_numbers<[1], [0], [0], [1], [0, 0, 1, 1], [], []>} : vector<6x12xf32>, vector<12x256xf32>, vector<6x256xf32> -> vector<6x256xf32>
    %c0_57 = arith.constant 0 : index
    %c0_58 = arith.constant 0 : index
    %91 = vector.load %arg22[%c0_57, %c0_58] : memref<6x256xf32, #tpu.memory_space<vmem>>, vector<6x256xf32>
    tpu.vector_store %arg22[%c0_57, %c0_58], %90 {strides = array<i32>} : memref<6x256xf32, #tpu.memory_space<vmem>>, vector<6x256xf32>,
    %c0_59 = arith.constant 0 : index
    %c0_60 = arith.constant 0 : index
    %92 = vector.load %arg16[%c0_59, %c0_60] : memref<12x256xf32, #tpu.memory_space<vmem>>, vector<12x256xf32>
    %93 = arith.mulf %69, %69 : vector<18x256xf32>
    %cst_61 = arith.constant dense<0.000000e+00> : vector<18xf32>
    %94 = vector.multi_reduction <add>, %93, %cst_61 [1] : vector<18x256xf32> to vector<18xf32>
    %95 = vector.shape_cast %94 : vector<18xf32> to vector<18x1xf32>
    %96 = arith.truncf %69 : vector<18x256xf32> to vector<18x256xbf16>
    %97 = arith.truncf %92 : vector<12x256xf32> to vector<12x256xbf16>
    %cst_62 = arith.constant dense<0.000000e+00> : vector<18x12xf32>
    %98 = tpu.matmul %96, %97, %cst_62 {dimension_numbers = #tpu.dot_dimension_numbers<[1], [1], [0], [0], [0, 0, 1, 0], [], []>} : vector<18x256xbf16>, vector<12x256xbf16>, vector<18x12xf32> -> vector<18x12xf32>
    %c0_63 = arith.constant 0 : index
    %c0_64 = arith.constant 0 : index
    %99 = vector.load %arg17[%c0_63, %c0_64] : memref<1x12xf32, #tpu.memory_space<vmem>>, vector<1x12xf32>
    %100 = vector.broadcast %95 : vector<18x1xf32> to vector<18x12xf32>
    %101 = vector.broadcast %99 : vector<1x12xf32> to vector<18x12xf32>
    %102 = arith.addf %100, %101 : vector<18x12xf32>
    %cst_65 = arith.constant 2.000000e+00 : f32
    %103 = vector.broadcast %cst_65 : f32 to vector<18x12xf32>
    %104 = arith.mulf %103, %98 : vector<18x12xf32>
    %105 = arith.subf %102, %104 : vector<18x12xf32>
    %cst_66 = arith.constant 0.000000e+00 : f32
    %106 = vector.broadcast %cst_66 : f32 to vector<18x12xf32>
    %107 = arith.maximumf %105, %106 : vector<18x12xf32>
    %108 = math.sqrt %107 : vector<18x12xf32>
    %cst_67 = arith.constant -1.000000e+00 : f32
    %109 = vector.broadcast %cst_67 : f32 to vector<18x12xf32>
    %110 = arith.mulf %109, %108 : vector<18x12xf32>
    %111 = math.exp %110 : vector<18x12xf32>
    %c0_68 = arith.constant 0 : index
    %c0_69 = arith.constant 0 : index
    %112 = vector.load %arg18[%c0_68, %c0_69] : memref<12x6xf32, #tpu.memory_space<vmem>>, vector<12x6xf32>
    %cst_70 = arith.constant dense<0.000000e+00> : vector<18x6xf32>
    %113 = tpu.matmul %111, %112, %cst_70 {dimension_numbers = #tpu.dot_dimension_numbers<[1], [0], [0], [1], [0, 0, 1, 1], [], []>} : vector<18x12xf32>, vector<12x6xf32>, vector<18x6xf32> -> vector<18x6xf32>
    %cst_71 = arith.constant dense<0.000000e+00> : vector<18xf32>
    %114 = vector.multi_reduction <add>, %113, %cst_71 [1] : vector<18x6xf32> to vector<18xf32>
    %115 = vector.shape_cast %114 : vector<18xf32> to vector<18x1xf32>
    %116 = vector.broadcast %115 : vector<18x1xf32> to vector<18x6xf32>
    %117 = arith.divf %113, %116 : vector<18x6xf32>
    %cst_72 = arith.constant dense<0xFF800000> : vector<18xf32>
    %118 = vector.multi_reduction <maximumf>, %117, %cst_72 [1] : vector<18x6xf32> to vector<18xf32>
    %119 = vector.shape_cast %118 : vector<18xf32> to vector<18x1xf32>
    %c0_73 = arith.constant 0 : index
    %c0_74 = arith.constant 0 : index
    %120 = vector.load %arg19[%c0_73, %c0_74] : memref<6x18xf32, #tpu.memory_space<vmem>>, vector<6x18xf32>
    %c0_75 = arith.constant 0 : index
    %c0_76 = arith.constant 0 : index
    %121 = vector.load %arg20[%c0_75, %c0_76] : memref<18x6xf32, #tpu.memory_space<vmem>>, vector<18x6xf32>
    %122 = vector.broadcast %119 : vector<18x1xf32> to vector<18x6xf32>
    %123 = arith.mulf %122, %121 : vector<18x6xf32>
    %cst_77 = arith.constant dense<0.000000e+00> : vector<6x6xf32>
    %124 = tpu.matmul %120, %123, %cst_77 {dimension_numbers = #tpu.dot_dimension_numbers<[1], [0], [0], [1], [0, 0, 1, 1], [], []>} : vector<6x18xf32>, vector<18x6xf32>, vector<6x6xf32> -> vector<6x6xf32>
    %c0_78 = arith.constant 0 : index
    %c0_79 = arith.constant 0 : index
    %125 = vector.load %arg21[%c0_78, %c0_79] : memref<6x256xf32, #tpu.memory_space<vmem>>, vector<6x256xf32>
    %cst_80 = arith.constant dense<0.000000e+00> : vector<6x256xf32>
    %126 = tpu.matmul %124, %125, %cst_80 {dimension_numbers = #tpu.dot_dimension_numbers<[1], [0], [0], [1], [0, 0, 1, 1], [], []>} : vector<6x6xf32>, vector<6x256xf32>, vector<6x256xf32> -> vector<6x256xf32>
    %c0_81 = arith.constant 0 : index
    %c0_82 = arith.constant 0 : index
    %127 = vector.load %arg23[%c0_81, %c0_82] : memref<6x256xf32, #tpu.memory_space<vmem>>, vector<6x256xf32>
    tpu.vector_store %arg23[%c0_81, %c0_82], %126 {strides = array<i32>} : memref<6x256xf32, #tpu.memory_space<vmem>>, vector<6x256xf32>,
    return
  }
  func.func @transform_0(%arg0: i32) -> (i32, i32) {
    %c0_i32 = arith.constant 0 : i32
    %c0_i32_0 = arith.constant 0 : i32
    %c0_i32_1 = arith.constant 0 : i32
    return %c0_i32, %c0_i32_0 : i32, i32
  }
  func.func @transform_1(%arg0: i32) -> (i32, i32) {
    %c0_i32 = arith.constant 0 : i32
    %c0_i32_0 = arith.constant 0 : i32
    %c0_i32_1 = arith.constant 0 : i32
    return %c0_i32, %c0_i32_0 : i32, i32
  }
  func.func @transform_2(%arg0: i32) -> (i32, i32) {
    %c0_i32 = arith.constant 0 : i32
    %c0_i32_0 = arith.constant 0 : i32
    %c0_i32_1 = arith.constant 0 : i32
    return %c0_i32, %c0_i32_0 : i32, i32
  }
  func.func @transform_3(%arg0: i32) -> (i32, i32) {
    %c0_i32 = arith.constant 0 : i32
    %c0_i32_0 = arith.constant 0 : i32
    %c0_i32_1 = arith.constant 0 : i32
    return %c0_i32, %c0_i32_0 : i32, i32
  }
  func.func @transform_4(%arg0: i32) -> (i32, i32) {
    %c0_i32 = arith.constant 0 : i32
    %c0_i32_0 = arith.constant 0 : i32
    %c0_i32_1 = arith.constant 0 : i32
    return %c0_i32, %c0_i32_0 : i32, i32
  }
  func.func @transform_5(%arg0: i32) -> (i32, i32) {
    %c0_i32 = arith.constant 0 : i32
    %c0_i32_0 = arith.constant 0 : i32
    %c0_i32_1 = arith.constant 0 : i32
    return %c0_i32, %c0_i32_0 : i32, i32
  }
  func.func @transform_6(%arg0: i32) -> (i32, i32) {
    %c0_i32 = arith.constant 0 : i32
    %c0_i32_0 = arith.constant 0 : i32
    %c0_i32_1 = arith.constant 0 : i32
    return %c0_i32, %c0_i32_0 : i32, i32
  }
  func.func @transform_7(%arg0: i32) -> (i32, i32) {
    %c0_i32 = arith.constant 0 : i32
    %c0_i32_0 = arith.constant 0 : i32
    %c0_i32_1 = arith.constant 0 : i32
    return %c0_i32, %c0_i32_0 : i32, i32
  }
  func.func @transform_8(%arg0: i32) -> (i32, i32) {
    %c0_i32 = arith.constant 0 : i32
    %c0_i32_0 = arith.constant 0 : i32
    %c0_i32_1 = arith.constant 0 : i32
    return %c0_i32, %c0_i32_0 : i32, i32
  }
  func.func @transform_9(%arg0: i32) -> (i32, i32) {
    %c0_i32 = arith.constant 0 : i32
    %c0_i32_0 = arith.constant 0 : i32
    %c0_i32_1 = arith.constant 0 : i32
    return %c0_i32, %c0_i32_0 : i32, i32
  }
  func.func @transform_10(%arg0: i32) -> (i32, i32) {
    %c0_i32 = arith.constant 0 : i32
    %c0_i32_0 = arith.constant 0 : i32
    %c0_i32_1 = arith.constant 0 : i32
    return %c0_i32, %c0_i32_0 : i32, i32
  }
  func.func @transform_11(%arg0: i32) -> (i32, i32) {
    %c0_i32 = arith.constant 0 : i32
    %c0_i32_0 = arith.constant 0 : i32
    %c0_i32_1 = arith.constant 0 : i32
    return %c0_i32, %c0_i32_0 : i32, i32
  }
  func.func @transform_12(%arg0: i32) -> (i32, i32) {
    %c0_i32 = arith.constant 0 : i32
    %c0_i32_0 = arith.constant 0 : i32
    %c0_i32_1 = arith.constant 0 : i32
    return %c0_i32, %c0_i32_0 : i32, i32
  }
  func.func @transform_13(%arg0: i32) -> (i32, i32) {
    %c0_i32 = arith.constant 0 : i32
    %c0_i32_0 = arith.constant 0 : i32
    %c0_i32_1 = arith.constant 0 : i32
    return %c0_i32, %c0_i32_0 : i32, i32
  }
  func.func @transform_14(%arg0: i32) -> (i32, i32) {
    %c0_i32 = arith.constant 0 : i32
    %c0_i32_0 = arith.constant 0 : i32
    %c0_i32_1 = arith.constant 0 : i32
    return %c0_i32, %c0_i32_0 : i32, i32
  }
  func.func @transform_15(%arg0: i32) -> (i32, i32) {
    %c0_i32 = arith.constant 0 : i32
    %c0_i32_0 = arith.constant 0 : i32
    %c0_i32_1 = arith.constant 0 : i32
    return %c0_i32, %c0_i32_0 : i32, i32
  }
  func.func @transform_16(%arg0: i32) -> (i32, i32) {
    %c0_i32 = arith.constant 0 : i32
    %c0_i32_0 = arith.constant 0 : i32
    %c0_i32_1 = arith.constant 0 : i32
    return %c0_i32, %c0_i32_0 : i32, i32
  }
  func.func @transform_17(%arg0: i32) -> (i32, i32) {
    %c0_i32 = arith.constant 0 : i32
    %c0_i32_0 = arith.constant 0 : i32
    %c0_i32_1 = arith.constant 0 : i32
    return %c0_i32, %c0_i32_0 : i32, i32
  }
  func.func @transform_18(%arg0: i32) -> (i32, i32) {
    %c0_i32 = arith.constant 0 : i32
    %c0_i32_0 = arith.constant 0 : i32
    %c0_i32_1 = arith.constant 0 : i32
    return %c0_i32, %c0_i32_0 : i32, i32
  }
  func.func @transform_19(%arg0: i32) -> (i32, i32) {
    %c0_i32 = arith.constant 0 : i32
    %c0_i32_0 = arith.constant 0 : i32
    %c0_i32_1 = arith.constant 0 : i32
    return %c0_i32, %c0_i32_0 : i32, i32
  }
  func.func @transform_20(%arg0: i32) -> (i32, i32) {
    %c0_i32 = arith.constant 0 : i32
    %c0_i32_0 = arith.constant 0 : i32
    %c0_i32_1 = arith.constant 0 : i32
    return %c0_i32, %c0_i32_0 : i32, i32
  }
  func.func @transform_21(%arg0: i32) -> (i32, i32) {
    %c0_i32 = arith.constant 0 : i32
    %c0_i32_0 = arith.constant 0 : i32
    %c0_i32_1 = arith.constant 0 : i32
    return %c0_i32, %c0_i32_0 : i32, i32
  }
  func.func @transform_22(%arg0: i32) -> (i32, i32) {
    %c0_i32 = arith.constant 0 : i32
    %c0_i32_0 = arith.constant 0 : i32
    %c0_i32_1 = arith.constant 0 : i32
    return %c0_i32, %c0_i32_0 : i32, i32
  }
}

</mosaic_0001>

<llo_original>
// kernel: _pmapper_forward_impl.2
$region0: #{_pmapper_forward_impl.2}
  #allocation0 [shape = 'u32[]', space=smem, size = 0x4, offset = 0x4, fixed_abs, tag = 'smem constant byte address 0x4 - core index']
  #allocation1 [shape = 'u32[144,128]{1,0:T(1,128)}', space=vmem, size = 0x12000, scoped, tag = 'internal scratch']
  %s0 = inlined_call_operand.vmem [shape: bf16[9,1176], index: 0, kind: input, shape index: {}]
  %s1 = inlined_call_operand.vmem [shape: bf16[9,256], index: 1, kind: input, shape index: {}]
  %s2 = inlined_call_operand.vmem [shape: f32[1,256], index: 2, kind: input, shape index: {}]
  %s3 = inlined_call_operand.vmem [shape: f32[1,256], index: 3, kind: input, shape index: {}]
  %s4 = inlined_call_operand.vmem [shape: f32[1,256], index: 4, kind: input, shape index: {}]
  %s5 = inlined_call_operand.vmem [shape: f32[256,32], index: 5, kind: input, shape index: {}]
  %s6 = inlined_call_operand.vmem [shape: f32[32,256], index: 6, kind: input, shape index: {}]
  %s7 = inlined_call_operand.vmem [shape: bf16[24,1176], index: 7, kind: input, shape index: {}]
  %s8 = inlined_call_operand.vmem [shape: bf16[1176,24], index: 8, kind: input, shape index: {}]
  %s9 = inlined_call_operand.vmem [shape: bf16[256,256], index: 9, kind: input, shape index: {}]
  %s10 = inlined_call_operand.vmem [shape: f32[1,256], index: 10, kind: input, shape index: {}]
  %s11 = inlined_call_operand.vmem [shape: bf16[256,256], index: 11, kind: input, shape index: {}]
  %s12 = inlined_call_operand.vmem [shape: f32[1,256], index: 12, kind: input, shape index: {}]
  %s13 = inlined_call_operand.vmem [shape: f32[12,256], index: 13, kind: input, shape index: {}]
  %s14 = inlined_call_operand.vmem [shape: f32[1,12], index: 14, kind: input, shape index: {}]
  %s15 = inlined_call_operand.vmem [shape: f32[12,256], index: 15, kind: input, shape index: {}]
  %s16 = inlined_call_operand.vmem [shape: f32[1,12], index: 16, kind: input, shape index: {}]
  %s17 = inlined_call_operand.vmem [shape: f32[12,6], index: 17, kind: input, shape index: {}]
  %s18 = inlined_call_operand.vmem [shape: f32[6,18], index: 18, kind: input, shape index: {}]
  %s19 = inlined_call_operand.vmem [shape: f32[18,6], index: 19, kind: input, shape index: {}]
  %s20 = inlined_call_operand.vmem [shape: f32[6,256], index: 20, kind: input, shape index: {}]
  %s21 = inlined_call_operand.vmem [shape: f32[6,256], index: 21, kind: output, shape index: {0}]
  %s22 = inlined_call_operand.vmem [shape: f32[6,256], index: 22, kind: output, shape index: {1}]
  %23 = xla_tuple %s21, %s22
  %s24 = sld [smem:[#allocation0]]
  $region102: #{_pmapper_forward_impl.2} parent=0
    _
  %s26 = ssub.s32 1, %s24
  %s27 = scalar_select 0, %s26, %s24
  // Predicated region
  $region2: #{_pmapper_forward_impl.2} parent=0 // pred_check
    _
  $region3: #{_pmapper_forward_impl.2} parent=0 // pred_check_branch
    %29 = sbr.rel (0) target = $region5
  $region4: #{_pmapper_forward_impl.2} parent=0 // pred_region
    _
  $region5: #{_pmapper_forward_impl.2} parent=0 // pred_fallthru
    _
  // Predicated region
  $region6: #{_pmapper_forward_impl.2} parent=0 // pred_check
    _
  $region7: #{_pmapper_forward_impl.2} parent=0 // pred_check_branch
    %31 = sbr.rel (0) target = $region9
  $region8: #{_pmapper_forward_impl.2} parent=0 // pred_region
    _
  $region9: #{_pmapper_forward_impl.2} parent=0 // pred_fallthru
    _
  // Predicated region
  $region10: #{_pmapper_forward_impl.2} parent=0 // pred_check
    _
  $region11: #{_pmapper_forward_impl.2} parent=0 // pred_check_branch
    %33 = sbr.rel (0) target = $region13
  $region12: #{_pmapper_forward_impl.2} parent=0 // pred_region
    _
  $region13: #{_pmapper_forward_impl.2} parent=0 // pred_fallthru
    _
  // Predicated region
  $region14: #{_pmapper_forward_impl.2} parent=0 // pred_check
    _
  $region15: #{_pmapper_forward_impl.2} parent=0 // pred_check_branch
    %35 = sbr.rel (0) target = $region17
  $region16: #{_pmapper_forward_impl.2} parent=0 // pred_region
    _
  $region17: #{_pmapper_forward_impl.2} parent=0 // pred_fallthru
    _
  // Predicated region
  $region18: #{_pmapper_forward_impl.2} parent=0 // pred_check
    _
  $region19: #{_pmapper_forward_impl.2} parent=0 // pred_check_branch
    %37 = sbr.rel (0) target = $region21
  $region20: #{_pmapper_forward_impl.2} parent=0 // pred_region
    _
  $region21: #{_pmapper_forward_impl.2} parent=0 // pred_fallthru
    _
  // Predicated region
  $region22: #{_pmapper_forward_impl.2} parent=0 // pred_check
    _
  $region23: #{_pmapper_forward_impl.2} parent=0 // pred_check_branch
    %39 = sbr.rel (0) target = $region25
  $region24: #{_pmapper_forward_impl.2} parent=0 // pred_region
    _
  $region25: #{_pmapper_forward_impl.2} parent=0 // pred_fallthru
    _
  // Predicated region
  $region26: #{_pmapper_forward_impl.2} parent=0 // pred_check
    _
  $region27: #{_pmapper_forward_impl.2} parent=0 // pred_check_branch
    %41 = sbr.rel (0) target = $region29
  $region28: #{_pmapper_forward_impl.2} parent=0 // pred_region
    _
  $region29: #{_pmapper_forward_impl.2} parent=0 // pred_fallthru
    _
  // Predicated region
  $region30: #{_pmapper_forward_impl.2} parent=0 // pred_check
    _
  $region31: #{_pmapper_forward_impl.2} parent=0 // pred_check_branch
    %43 = sbr.rel (0) target = $region33
  $region32: #{_pmapper_forward_impl.2} parent=0 // pred_region
    _
  $region33: #{_pmapper_forward_impl.2} parent=0 // pred_fallthru
    _
  // Predicated region
  $region34: #{_pmapper_forward_impl.2} parent=0 // pred_check
    _
  $region35: #{_pmapper_forward_impl.2} parent=0 // pred_check_branch
    %45 = sbr.rel (0) target = $region37
  $region36: #{_pmapper_forward_impl.2} parent=0 // pred_region
    _
  $region37: #{_pmapper_forward_impl.2} parent=0 // pred_fallthru
    _
  // Predicated region
  $region38: #{_pmapper_forward_impl.2} parent=0 // pred_check
    _
  $region39: #{_pmapper_forward_impl.2} parent=0 // pred_check_branch
    %47 = sbr.rel (0) target = $region41
  $region40: #{_pmapper_forward_impl.2} parent=0 // pred_region
    _
  $region41: #{_pmapper_forward_impl.2} parent=0 // pred_fallthru
    _
  // Predicated region
  $region42: #{_pmapper_forward_impl.2} parent=0 // pred_check
    _
  $region43: #{_pmapper_forward_impl.2} parent=0 // pred_check_branch
    %49 = sbr.rel (0) target = $region45
  $region44: #{_pmapper_forward_impl.2} parent=0 // pred_region
    _
  $region45: #{_pmapper_forward_impl.2} parent=0 // pred_fallthru
    _
  // Predicated region
  $region46: #{_pmapper_forward_impl.2} parent=0 // pred_check
    _
  $region47: #{_pmapper_forward_impl.2} parent=0 // pred_check_branch
    %51 = sbr.rel (0) target = $region49
  $region48: #{_pmapper_forward_impl.2} parent=0 // pred_region
    _
  $region49: #{_pmapper_forward_impl.2} parent=0 // pred_fallthru
    _
  // Predicated region
  $region50: #{_pmapper_forward_impl.2} parent=0 // pred_check
    _
  $region51: #{_pmapper_forward_impl.2} parent=0 // pred_check_branch
    %53 = sbr.rel (0) target = $region53
  $region52: #{_pmapper_forward_impl.2} parent=0 // pred_region
    _
  $region53: #{_pmapper_forward_impl.2} parent=0 // pred_fallthru
    _
  // Predicated region
  $region54: #{_pmapper_forward_impl.2} parent=0 // pred_check
    _
  $region55: #{_pmapper_forward_impl.2} parent=0 // pred_check_branch
    %55 = sbr.rel (0) target = $region57
  $region56: #{_pmapper_forward_impl.2} parent=0 // pred_region
    _
  $region57: #{_pmapper_forward_impl.2} parent=0 // pred_fallthru
    _
  // Predicated region
  $region58: #{_pmapper_forward_impl.2} parent=0 // pred_check
    _
  $region59: #{_pmapper_forward_impl.2} parent=0 // pred_check_branch
    %57 = sbr.rel (0) target = $region61
  $region60: #{_pmapper_forward_impl.2} parent=0 // pred_region
    _
  $region61: #{_pmapper_forward_impl.2} parent=0 // pred_fallthru
    _
  // Predicated region
  $region62: #{_pmapper_forward_impl.2} parent=0 // pred_check
    _
  $region63: #{_pmapper_forward_impl.2} parent=0 // pred_check_branch
    %59 = sbr.rel (0) target = $region65
  $region64: #{_pmapper_forward_impl.2} parent=0 // pred_region
    _
  $region65: #{_pmapper_forward_impl.2} parent=0 // pred_fallthru
    _
  // Predicated region
  $region66: #{_pmapper_forward_impl.2} parent=0 // pred_check
    _
  $region67: #{_pmapper_forward_impl.2} parent=0 // pred_check_branch
    %61 = sbr.rel (0) target = $region69
  $region68: #{_pmapper_forward_impl.2} parent=0 // pred_region
    _
  $region69: #{_pmapper_forward_impl.2} parent=0 // pred_fallthru
    _
  // Predicated region
  $region70: #{_pmapper_forward_impl.2} parent=0 // pred_check
    _
  $region71: #{_pmapper_forward_impl.2} parent=0 // pred_check_branch
    %63 = sbr.rel (0) target = $region73
  $region72: #{_pmapper_forward_impl.2} parent=0 // pred_region
    _
  $region73: #{_pmapper_forward_impl.2} parent=0 // pred_fallthru
    _
  // Predicated region
  $region74: #{_pmapper_forward_impl.2} parent=0 // pred_check
    _
  $region75: #{_pmapper_forward_impl.2} parent=0 // pred_check_branch
    %65 = sbr.rel (0) target = $region77
  $region76: #{_pmapper_forward_impl.2} parent=0 // pred_region
    _
  $region77: #{_pmapper_forward_impl.2} parent=0 // pred_fallthru
    _
  // Predicated region
  $region78: #{_pmapper_forward_impl.2} parent=0 // pred_check
    _
  $region79: #{_pmapper_forward_impl.2} parent=0 // pred_check_branch
    %67 = sbr.rel (0) target = $region81
  $region80: #{_pmapper_forward_impl.2} parent=0 // pred_region
    _
  $region81: #{_pmapper_forward_impl.2} parent=0 // pred_fallthru
    _
  // Predicated region
  $region82: #{_pmapper_forward_impl.2} parent=0 // pred_check
    _
  $region83: #{_pmapper_forward_impl.2} parent=0 // pred_check_branch
    %69 = sbr.rel (0) target = $region85
  $region84: #{_pmapper_forward_impl.2} parent=0 // pred_region
    _
  $region85: #{_pmapper_forward_impl.2} parent=0 // pred_fallthru
    _
  %v71 = vld [vmem:[%s0] sm:$0xff]
  %v72 = vld [vmem:[%s0 + $0x8] sm:$0xff]
  %v73 = vld [vmem:[%s0 + $0x10] sm:$0xff]
  %v74 = vld [vmem:[%s0 + $0x18] sm:$0xff]
  %v75 = vld [vmem:[%s0 + $0x20] sm:$0xff]
  %v76 = vld [vmem:[%s0 + $0x28] sm:$0x11]
  %v77 = vld [vmem:[%s0 + $0x30] sm:$0x11]
  %v78 = vld [vmem:[%s0 + $0x38] sm:$0x11]
  %v79 = vld [vmem:[%s0 + $0x40] sm:$0x11]
  %v80 = vld [vmem:[%s0 + $0x48] sm:$0x11]
  %v81 = vld [vmem:[%s1] sm:$0xff]
  %v82 = vld [vmem:[%s1 + $0x8] sm:$0x11]
  %v83 = vld [vmem:[%s2] sm:$0x3]
  %v85 = vlaneseq
  %v86 = vshrl.u32 %v85, 7
  %v87 = vsub.s32 0, %v86
  %v88 = vrot.slane %v83, %v87
  %v89 = vlaneseq
  %v90 = vshrl.u32 %v89, 7
  %v91 = vsub.s32 1, %v90
  %v92 = vrot.slane %v83, %v91
  %v105 = vunpack.c.l.b16 %v71
  %v106 = vunpack.c.h.b16 %v71
  %v107 = vunpack.c.l.b16 %v72
  %v108 = vunpack.c.h.b16 %v72
  %v109 = vunpack.c.l.b16 %v73
  %v110 = vunpack.c.h.b16 %v73
  %v111 = vunpack.c.l.b16 %v74
  %v112 = vunpack.c.h.b16 %v74
  %v113 = vunpack.c.l.b16 %v75
  %v114 = vunpack.c.h.b16 %v75
  %v115 = vunpack.c.l.b16 %v76
  %v116 = vunpack.c.h.b16 %v76
  %v117 = vunpack.c.l.b16 %v77
  %v118 = vunpack.c.h.b16 %v77
  %v119 = vunpack.c.l.b16 %v78
  %v120 = vunpack.c.h.b16 %v78
  %v121 = vunpack.c.l.b16 %v79
  %v122 = vunpack.c.h.b16 %v79
  %v123 = vunpack.c.l.b16 %v80
  %v124 = vunpack.c.h.b16 %v80
  %v125 = vpack.c.b16 %v115, %v105
  %v126 = vpack.c.b16 %v116, %v106
  %v127 = vpack.c.b16 %v117, %v107
  %v128 = vpack.c.b16 %v118, %v108
  %v129 = vpack.c.b16 %v119, %v109
  %v130 = vpack.c.b16 %v120, %v110
  %v131 = vpack.c.b16 %v121, %v111
  %v132 = vpack.c.b16 %v122, %v112
  %v133 = vpack.c.b16 %v123, %v113
  %v134 = vpack.c.b16 %v124, %v114
  %145 = vxpose.xlu0.c.b16.start [1/8] %v125, 128
  %146 = vxpose.xlu0.c.b16.cont [2/8] 0, 128
  %147 = vxpose.xlu0.c.b16.cont [3/8] 0, 128
  %148 = vxpose.xlu0.c.b16.cont [4/8] 0, 128
  %149 = vxpose.xlu0.c.b16.cont [5/8] 0, 128
  %150 = vxpose.xlu0.c.b16.cont [6/8] 0, 128
  %151 = vxpose.xlu0.c.b16.cont [7/8] 0, 128
  %152 = vxpose.xlu0.c.b16.end [8/8] 0, 128
  %v153 = vpop.trf.xlu0
  %v154 = vpop.trf.xlu0
  %v155 = vpop.trf.xlu0
  %v156 = vpop.trf.xlu0
  %v157 = vpop.trf.xlu0
  %v158 = vpop.trf.xlu0
  %v159 = vpop.trf.xlu0
  %v160 = vpop.trf.xlu0
  %161 = vxpose.xlu0.c.b16.start [1/8] %v126, 128
  %162 = vxpose.xlu0.c.b16.cont [2/8] 0, 128
  %163 = vxpose.xlu0.c.b16.cont [3/8] 0, 128
  %164 = vxpose.xlu0.c.b16.cont [4/8] 0, 128
  %165 = vxpose.xlu0.c.b16.cont [5/8] 0, 128
  %166 = vxpose.xlu0.c.b16.cont [6/8] 0, 128
  %167 = vxpose.xlu0.c.b16.cont [7/8] 0, 128
  %168 = vxpose.xlu0.c.b16.end [8/8] 0, 128
  %v169 = vpop.trf.xlu0
  %v170 = vpop.trf.xlu0
  %v171 = vpop.trf.xlu0
  %v172 = vpop.trf.xlu0
  %v173 = vpop.trf.xlu0
  %v174 = vpop.trf.xlu0
  %v175 = vpop.trf.xlu0
  %v176 = vpop.trf.xlu0
  %177 = vxpose.xlu0.c.b16.start [1/8] %v127, 128
  %178 = vxpose.xlu0.c.b16.cont [2/8] 0, 128
  %179 = vxpose.xlu0.c.b16.cont [3/8] 0, 128
  %180 = vxpose.xlu0.c.b16.cont [4/8] 0, 128
  %181 = vxpose.xlu0.c.b16.cont [5/8] 0, 128
  %182 = vxpose.xlu0.c.b16.cont [6/8] 0, 128
  %183 = vxpose.xlu0.c.b16.cont [7/8] 0, 128
  %184 = vxpose.xlu0.c.b16.end [8/8] 0, 128
  %v185 = vpop.trf.xlu0
  %v186 = vpop.trf.xlu0
  %v187 = vpop.trf.xlu0
  %v188 = vpop.trf.xlu0
  %v189 = vpop.trf.xlu0
  %v190 = vpop.trf.xlu0
  %v191 = vpop.trf.xlu0
  %v192 = vpop.trf.xlu0
  %193 = vxpose.xlu0.c.b16.start [1/8] %v128, 128
  %194 = vxpose.xlu0.c.b16.cont [2/8] 0, 128
  %195 = vxpose.xlu0.c.b16.cont [3/8] 0, 128
  %196 = vxpose.xlu0.c.b16.cont [4/8] 0, 128
  %197 = vxpose.xlu0.c.b16.cont [5/8] 0, 128
  %198 = vxpose.xlu0.c.b16.cont [6/8] 0, 128
  %199 = vxpose.xlu0.c.b16.cont [7/8] 0, 128
  %200 = vxpose.xlu0.c.b16.end [8/8] 0, 128
  %v201 = vpop.trf.xlu0
  %v202 = vpop.trf.xlu0
  %v203 = vpop.trf.xlu0
  %v204 = vpop.trf.xlu0
  %v205 = vpop.trf.xlu0
  %v206 = vpop.trf.xlu0
  %v207 = vpop.trf.xlu0
  %v208 = vpop.trf.xlu0
  %209 = vxpose.xlu0.c.b16.start [1/8] %v129, 128
  %210 = vxpose.xlu0.c.b16.cont [2/8] 0, 128
  %211 = vxpose.xlu0.c.b16.cont [3/8] 0, 128
  %212 = vxpose.xlu0.c.b16.cont [4/8] 0, 128
  %213 = vxpose.xlu0.c.b16.cont [5/8] 0, 128
  %214 = vxpose.xlu0.c.b16.cont [6/8] 0, 128
  %215 = vxpose.xlu0.c.b16.cont [7/8] 0, 128
  %216 = vxpose.xlu0.c.b16.end [8/8] 0, 128
  %v217 = vpop.trf.xlu0
  %v218 = vpop.trf.xlu0
  %v219 = vpop.trf.xlu0
  %v220 = vpop.trf.xlu0
  %v221 = vpop.trf.xlu0
  %v222 = vpop.trf.xlu0
  %v223 = vpop.trf.xlu0
  %v224 = vpop.trf.xlu0
  %225 = vxpose.xlu0.c.b16.start [1/8] %v130, 128
  %226 = vxpose.xlu0.c.b16.cont [2/8] 0, 128
  %227 = vxpose.xlu0.c.b16.cont [3/8] 0, 128
  %228 = vxpose.xlu0.c.b16.cont [4/8] 0, 128
  %229 = vxpose.xlu0.c.b16.cont [5/8] 0, 128
  %230 = vxpose.xlu0.c.b16.cont [6/8] 0, 128
  %231 = vxpose.xlu0.c.b16.cont [7/8] 0, 128
  %232 = vxpose.xlu0.c.b16.end [8/8] 0, 128
  %v233 = vpop.trf.xlu0
  %v234 = vpop.trf.xlu0
  %v235 = vpop.trf.xlu0
  %v236 = vpop.trf.xlu0
  %v237 = vpop.trf.xlu0
  %v238 = vpop.trf.xlu0
  %v239 = vpop.trf.xlu0
  %v240 = vpop.trf.xlu0
  %241 = vxpose.xlu0.c.b16.start [1/8] %v131, 128
  %242 = vxpose.xlu0.c.b16.cont [2/8] 0, 128
  %243 = vxpose.xlu0.c.b16.cont [3/8] 0, 128
  %244 = vxpose.xlu0.c.b16.cont [4/8] 0, 128
  %245 = vxpose.xlu0.c.b16.cont [5/8] 0, 128
  %246 = vxpose.xlu0.c.b16.cont [6/8] 0, 128
  %247 = vxpose.xlu0.c.b16.cont [7/8] 0, 128
  %248 = vxpose.xlu0.c.b16.end [8/8] 0, 128
  %v249 = vpop.trf.xlu0
  %v250 = vpop.trf.xlu0
  %v251 = vpop.trf.xlu0
  %v252 = vpop.trf.xlu0
  %v253 = vpop.trf.xlu0
  %v254 = vpop.trf.xlu0
  %v255 = vpop.trf.xlu0
  %v256 = vpop.trf.xlu0
  %257 = vxpose.xlu0.c.b16.start [1/8] %v132, 128
  %258 = vxpose.xlu0.c.b16.cont [2/8] 0, 128
  %259 = vxpose.xlu0.c.b16.cont [3/8] 0, 128
  %260 = vxpose.xlu0.c.b16.cont [4/8] 0, 128
  %261 = vxpose.xlu0.c.b16.cont [5/8] 0, 128
  %262 = vxpose.xlu0.c.b16.cont [6/8] 0, 128
  %263 = vxpose.xlu0.c.b16.cont [7/8] 0, 128
  %264 = vxpose.xlu0.c.b16.end [8/8] 0, 128
  %v265 = vpop.trf.xlu0
  %v266 = vpop.trf.xlu0
  %v267 = vpop.trf.xlu0
  %v268 = vpop.trf.xlu0
  %v269 = vpop.trf.xlu0
  %v270 = vpop.trf.xlu0
  %v271 = vpop.trf.xlu0
  %v272 = vpop.trf.xlu0
  %273 = vxpose.xlu0.c.b16.start [1/8] %v133, 128
  %274 = vxpose.xlu0.c.b16.cont [2/8] 0, 128
  %275 = vxpose.xlu0.c.b16.cont [3/8] 0, 128
  %276 = vxpose.xlu0.c.b16.cont [4/8] 0, 128
  %277 = vxpose.xlu0.c.b16.cont [5/8] 0, 128
  %278 = vxpose.xlu0.c.b16.cont [6/8] 0, 128
  %279 = vxpose.xlu0.c.b16.cont [7/8] 0, 128
  %280 = vxpose.xlu0.c.b16.end [8/8] 0, 128
  %v281 = vpop.trf.xlu0
  %v282 = vpop.trf.xlu0
  %v283 = vpop.trf.xlu0
  %v284 = vpop.trf.xlu0
  %v285 = vpop.trf.xlu0
  %v286 = vpop.trf.xlu0
  %v287 = vpop.trf.xlu0
  %v288 = vpop.trf.xlu0
  %289 = vxpose.xlu0.c.b16.start [1/8] %v134, 128
  %290 = vxpose.xlu0.c.b16.cont [2/8] 0, 128
  %291 = vxpose.xlu0.c.b16.cont [3/8] 0, 128
  %292 = vxpose.xlu0.c.b16.cont [4/8] 0, 128
  %293 = vxpose.xlu0.c.b16.cont [5/8] 0, 128
  %294 = vxpose.xlu0.c.b16.cont [6/8] 0, 128
  %295 = vxpose.xlu0.c.b16.cont [7/8] 0, 128
  %296 = vxpose.xlu0.c.b16.end [8/8] 0, 128
  %v297 = vpop.trf.xlu0
  %v298 = vpop.trf.xlu0
  %v299 = vpop.trf.xlu0
  %v300 = vpop.trf.xlu0
  %v301 = vpop.trf.xlu0
  %v302 = vpop.trf.xlu0
  %v303 = vpop.trf.xlu0
  %v304 = vpop.trf.xlu0
  %v307 = vunpack.c.l.b16 %v81
  %v308 = vunpack.c.h.b16 %v81
  %v309 = vunpack.c.l.b16 %v82
  %v310 = vunpack.c.h.b16 %v82
  %v311 = vpack.c.b16 %v309, %v307
  %v312 = vpack.c.b16 %v310, %v308
  %vm313 = vcmask 72704
  %v315 = vsel %vm313, %v153, 0
  %v318 = vsel %vm313, %v154, 0
  %v321 = vsel %vm313, %v155, 0
  %v324 = vsel %vm313, %v156, 0
  %v327 = vsel %vm313, %v157, 0
  %v330 = vsel %vm313, %v158, 0
  %v333 = vsel %vm313, %v159, 0
  %v336 = vsel %vm313, %v160, 0
  %v339 = vsel %vm313, %v169, 0
  %v342 = vsel %vm313, %v170, 0
  %v345 = vsel %vm313, %v171, 0
  %v348 = vsel %vm313, %v172, 0
  %v351 = vsel %vm313, %v173, 0
  %v354 = vsel %vm313, %v174, 0
  %v357 = vsel %vm313, %v175, 0
  %v360 = vsel %vm313, %v176, 0
  %v363 = vsel %vm313, %v185, 0
  %v366 = vsel %vm313, %v186, 0
  %v369 = vsel %vm313, %v187, 0
  %v372 = vsel %vm313, %v188, 0
  %v375 = vsel %vm313, %v189, 0
  %v378 = vsel %vm313, %v190, 0
  %v381 = vsel %vm313, %v191, 0
  %v384 = vsel %vm313, %v192, 0
  %v387 = vsel %vm313, %v201, 0
  %v390 = vsel %vm313, %v202, 0
  %v393 = vsel %vm313, %v203, 0
  %v396 = vsel %vm313, %v204, 0
  %v399 = vsel %vm313, %v205, 0
  %v402 = vsel %vm313, %v206, 0
  %v405 = vsel %vm313, %v207, 0
  %v408 = vsel %vm313, %v208, 0
  %v411 = vsel %vm313, %v217, 0
  %v414 = vsel %vm313, %v218, 0
  %v417 = vsel %vm313, %v219, 0
  %v420 = vsel %vm313, %v220, 0
  %v423 = vsel %vm313, %v221, 0
  %v426 = vsel %vm313, %v222, 0
  %v429 = vsel %vm313, %v223, 0
  %v432 = vsel %vm313, %v224, 0
  %v435 = vsel %vm313, %v233, 0
  %v438 = vsel %vm313, %v234, 0
  %v441 = vsel %vm313, %v235, 0
  %v444 = vsel %vm313, %v236, 0
  %v447 = vsel %vm313, %v237, 0
  %v450 = vsel %vm313, %v238, 0
  %v453 = vsel %vm313, %v239, 0
  %v456 = vsel %vm313, %v240, 0
  %v459 = vsel %vm313, %v249, 0
  %v462 = vsel %vm313, %v250, 0
  %v465 = vsel %vm313, %v251, 0
  %v468 = vsel %vm313, %v252, 0
  %v471 = vsel %vm313, %v253, 0
  %v474 = vsel %vm313, %v254, 0
  %v477 = vsel %vm313, %v255, 0
  %v480 = vsel %vm313, %v256, 0
  %v483 = vsel %vm313, %v265, 0
  %v486 = vsel %vm313, %v266, 0
  %v489 = vsel %vm313, %v267, 0
  %v492 = vsel %vm313, %v268, 0
  %v495 = vsel %vm313, %v269, 0
  %v498 = vsel %vm313, %v270, 0
  %v501 = vsel %vm313, %v271, 0
  %v504 = vsel %vm313, %v272, 0
  %v507 = vsel %vm313, %v281, 0
  %v510 = vsel %vm313, %v282, 0
  %v513 = vsel %vm313, %v283, 0
  %v516 = vsel %vm313, %v284, 0
  %v519 = vsel %vm313, %v285, 0
  %v522 = vsel %vm313, %v286, 0
  %v525 = vsel %vm313, %v287, 0
  %v528 = vsel %vm313, %v288, 0
  %v531 = vsel %vm313, %v297, 0
  %v534 = vsel %vm313, %v298, 0
  %vm536 = vcmask 1043456
  %vm537 = vcmask 1044480
  %v538 = vsel %vm536, 4294967295, 65535
  %v539 = vsel %vm537, %v538, 0
  %v541 = vand.u32 %v311, %v539
  %v544 = vand.u32 %v312, %v539
  %546 = vmatprep.subr.bf16.mxu0 %v544
  %547 = vmatpush1.bf16.msra.mxu0 %v541
  %548 = vmatprep.subr.bf16.mxu0 0
  %549 = vmatpush1.bf16.msra.mxu0 0
  %550 = vmatprep.subr.bf16.mxu0 0
  %551 = vmatpush1.bf16.msra.mxu0 0
  %552 = vmatprep.subr.bf16.mxu0 0
  %553 = vmatpush1.bf16.msra.mxu0 0
  %554 = vmatprep.subr.bf16.mxu0 0
  %555 = vmatpush1.bf16.msra.mxu0 0
  %556 = vmatprep.subr.bf16.mxu0 0
  %557 = vmatpush1.bf16.msra.mxu0 0
  %558 = vmatprep.subr.bf16.mxu0 0
  %559 = vmatpush1.bf16.msra.mxu0 0
  %560 = vmatprep.subr.bf16.mxu0 0
  %561 = vmatpush1.bf16.msra.mxu0 0
  %562 = vmatprep.subr.bf16.mxu0 0
  %563 = vmatpush1.bf16.msra.mxu0 0
  %564 = vmatprep.subr.bf16.mxu0 0
  %565 = vmatpush1.bf16.msra.mxu0 0
  %566 = vmatprep.subr.bf16.mxu0 0
  %567 = vmatpush1.bf16.msra.mxu0 0
  %568 = vmatprep.subr.bf16.mxu0 0
  %569 = vmatpush1.bf16.msra.mxu0 0
  %570 = vmatprep.subr.bf16.mxu0 0
  %571 = vmatpush1.bf16.msra.mxu0 0
  %572 = vmatprep.subr.bf16.mxu0 0
  %573 = vmatpush1.bf16.msra.mxu0 0
  %574 = vmatprep.subr.bf16.mxu0 0
  %575 = vmatpush1.bf16.msra.mxu0 0
  %576 = vmatprep.subr.bf16.mxu0 0
  %577 = vmatpush1.bf16.msra.mxu0 0
  %578 = vmatprep.mubr.bf16.mxu0 0
  %579 = vmatmul.mubr.bf16.gmra.mrb[0].mxu0 %v315
  %v580 = vpop.f32.mrb[0].mxu0
  %v581 = vadd.f32 %v88, %v580
  %v582 = vpop.f32.mrb[0].mxu0
  %v583 = vadd.f32 %v92, %v582
  %v584 = vpop.f32.mrb[0].mxu0
  %v585 = vadd.f32 %v88, %v584
  %v586 = vpop.f32.mrb[0].mxu0
  %v587 = vadd.f32 %v92, %v586
  %588 = vmatprep.mubr.bf16.mxu0 0
  %589 = vmatmul.mubr.bf16.gmra.mrb[0].mxu0 %v318
  %v590 = vpop.f32.mrb[0].mxu0
  %v591 = vadd.f32 %v88, %v590
  %v592 = vpop.f32.mrb[0].mxu0
  %v593 = vadd.f32 %v92, %v592
  %v594 = vpop.f32.mrb[0].mxu0
  %v595 = vadd.f32 %v88, %v594
  %v596 = vpop.f32.mrb[0].mxu0
  %v597 = vadd.f32 %v92, %v596
  %598 = vmatprep.mubr.bf16.mxu0 0
  %599 = vmatmul.mubr.bf16.gmra.mrb[0].mxu0 %v321
  %v600 = vpop.f32.mrb[0].mxu0
  %v601 = vadd.f32 %v88, %v600
  %v602 = vpop.f32.mrb[0].mxu0
  %v603 = vadd.f32 %v92, %v602
  %v604 = vpop.f32.mrb[0].mxu0
  %v605 = vadd.f32 %v88, %v604
  %v606 = vpop.f32.mrb[0].mxu0
  %v607 = vadd.f32 %v92, %v606
  %608 = vmatprep.mubr.bf16.mxu0 0
  %609 = vmatmul.mubr.bf16.gmra.mrb[0].mxu0 %v324
  %v610 = vpop.f32.mrb[0].mxu0
  %v611 = vadd.f32 %v88, %v610
  %v612 = vpop.f32.mrb[0].mxu0
  %v613 = vadd.f32 %v92, %v612
  %v614 = vpop.f32.mrb[0].mxu0
  %v615 = vadd.f32 %v88, %v614
  %v616 = vpop.f32.mrb[0].mxu0
  %v617 = vadd.f32 %v92, %v616
  %618 = vmatprep.mubr.bf16.mxu0 0
  %619 = vmatmul.mubr.bf16.gmra.mrb[0].mxu0 %v327
  %v620 = vpop.f32.mrb[0].mxu0
  %v621 = vadd.f32 %v88, %v620
  %v622 = vpop.f32.mrb[0].mxu0
  %v623 = vadd.f32 %v92, %v622
  %v624 = vpop.f32.mrb[0].mxu0
  %v625 = vadd.f32 %v88, %v624
  %v626 = vpop.f32.mrb[0].mxu0
  %v627 = vadd.f32 %v92, %v626
  %628 = vmatprep.mubr.bf16.mxu0 0
  %629 = vmatmul.mubr.bf16.gmra.mrb[0].mxu0 %v330
  %v630 = vpop.f32.mrb[0].mxu0
  %v631 = vadd.f32 %v88, %v630
  %v632 = vpop.f32.mrb[0].mxu0
  %v633 = vadd.f32 %v92, %v632
  %v634 = vpop.f32.mrb[0].mxu0
  %v635 = vadd.f32 %v88, %v634
  %v636 = vpop.f32.mrb[0].mxu0
  %v637 = vadd.f32 %v92, %v636
  %638 = vmatprep.mubr.bf16.mxu0 0
  %639 = vmatmul.mubr.bf16.gmra.mrb[0].mxu0 %v333
  %v640 = vpop.f32.mrb[0].mxu0
  %v641 = vadd.f32 %v88, %v640
  %v642 = vpop.f32.mrb[0].mxu0
  %v643 = vadd.f32 %v92, %v642
  %v644 = vpop.f32.mrb[0].mxu0
  %v645 = vadd.f32 %v88, %v644
  %v646 = vpop.f32.mrb[0].mxu0
  %v647 = vadd.f32 %v92, %v646
  %648 = vmatprep.mubr.bf16.mxu0 0
  %649 = vmatmul.mubr.bf16.gmra.mrb[0].mxu0 %v336
  %v650 = vpop.f32.mrb[0].mxu0
  %v651 = vadd.f32 %v88, %v650
  %v652 = vpop.f32.mrb[0].mxu0
  %v653 = vadd.f32 %v92, %v652
  %v654 = vpop.f32.mrb[0].mxu0
  %v655 = vadd.f32 %v88, %v654
  %v656 = vpop.f32.mrb[0].mxu0
  %v657 = vadd.f32 %v92, %v656
  %658 = vmatprep.mubr.bf16.mxu0 0
  %659 = vmatmul.mubr.bf16.gmra.mrb[0].mxu0 %v339
  %v660 = vpop.f32.mrb[0].mxu0
  %v661 = vadd.f32 %v88, %v660
  %v662 = vpop.f32.mrb[0].mxu0
  %v663 = vadd.f32 %v92, %v662
  %v664 = vpop.f32.mrb[0].mxu0
  %v665 = vadd.f32 %v88, %v664
  %v666 = vpop.f32.mrb[0].mxu0
  %v667 = vadd.f32 %v92, %v666
  %668 = vmatprep.mubr.bf16.mxu0 0
  %669 = vmatmul.mubr.bf16.gmra.mrb[0].mxu0 %v342
  %v670 = vpop.f32.mrb[0].mxu0
  %v671 = vadd.f32 %v88, %v670
  %v672 = vpop.f32.mrb[0].mxu0
  %v673 = vadd.f32 %v92, %v672
  %v674 = vpop.f32.mrb[0].mxu0
  %v675 = vadd.f32 %v88, %v674
  %v676 = vpop.f32.mrb[0].mxu0
  %v677 = vadd.f32 %v92, %v676
  %678 = vmatprep.mubr.bf16.mxu0 0
  %679 = vmatmul.mubr.bf16.gmra.mrb[0].mxu0 %v345
  %v680 = vpop.f32.mrb[0].mxu0
  %v681 = vadd.f32 %v88, %v680
  %v682 = vpop.f32.mrb[0].mxu0
  %v683 = vadd.f32 %v92, %v682
  %v684 = vpop.f32.mrb[0].mxu0
  %v685 = vadd.f32 %v88, %v684
  %v686 = vpop.f32.mrb[0].mxu0
  %v687 = vadd.f32 %v92, %v686
  %688 = vmatprep.mubr.bf16.mxu0 0
  %689 = vmatmul.mubr.bf16.gmra.mrb[0].mxu0 %v348
  %v690 = vpop.f32.mrb[0].mxu0
  %v691 = vadd.f32 %v88, %v690
  %v692 = vpop.f32.mrb[0].mxu0
  %v693 = vadd.f32 %v92, %v692
  %v694 = vpop.f32.mrb[0].mxu0
  %v695 = vadd.f32 %v88, %v694
  %v696 = vpop.f32.mrb[0].mxu0
  %v697 = vadd.f32 %v92, %v696
  %698 = vmatprep.mubr.bf16.mxu0 0
  %699 = vmatmul.mubr.bf16.gmra.mrb[0].mxu0 %v351
  %v700 = vpop.f32.mrb[0].mxu0
  %v701 = vadd.f32 %v88, %v700
  %v702 = vpop.f32.mrb[0].mxu0
  %v703 = vadd.f32 %v92, %v702
  %v704 = vpop.f32.mrb[0].mxu0
  %v705 = vadd.f32 %v88, %v704
  %v706 = vpop.f32.mrb[0].mxu0
  %v707 = vadd.f32 %v92, %v706
  %708 = vmatprep.mubr.bf16.mxu0 0
  %709 = vmatmul.mubr.bf16.gmra.mrb[0].mxu0 %v354
  %v710 = vpop.f32.mrb[0].mxu0
  %v711 = vadd.f32 %v88, %v710
  %v712 = vpop.f32.mrb[0].mxu0
  %v713 = vadd.f32 %v92, %v712
  %v714 = vpop.f32.mrb[0].mxu0
  %v715 = vadd.f32 %v88, %v714
  %v716 = vpop.f32.mrb[0].mxu0
  %v717 = vadd.f32 %v92, %v716
  %718 = vmatprep.mubr.bf16.mxu0 0
  %719 = vmatmul.mubr.bf16.gmra.mrb[0].mxu0 %v357
  %v720 = vpop.f32.mrb[0].mxu0
  %v721 = vadd.f32 %v88, %v720
  %v722 = vpop.f32.mrb[0].mxu0
  %v723 = vadd.f32 %v92, %v722
  %v724 = vpop.f32.mrb[0].mxu0
  %v725 = vadd.f32 %v88, %v724
  %v726 = vpop.f32.mrb[0].mxu0
  %v727 = vadd.f32 %v92, %v726
  %728 = vmatprep.mubr.bf16.mxu0 0
  %729 = vmatmul.mubr.bf16.gmra.mrb[0].mxu0 %v360
  %v730 = vpop.f32.mrb[0].mxu0
  %v731 = vadd.f32 %v88, %v730
  %v732 = vpop.f32.mrb[0].mxu0
  %v733 = vadd.f32 %v92, %v732
  %v734 = vpop.f32.mrb[0].mxu0
  %v735 = vadd.f32 %v88, %v734
  %v736 = vpop.f32.mrb[0].mxu0
  %v737 = vadd.f32 %v92, %v736
  %738 = vmatprep.mubr.bf16.mxu0 0
  %739 = vmatmul.mubr.bf16.gmra.mrb[0].mxu0 %v363
  %v740 = vpop.f32.mrb[0].mxu0
  %v741 = vadd.f32 %v88, %v740
  %v742 = vpop.f32.mrb[0].mxu0
  %v743 = vadd.f32 %v92, %v742
  %v744 = vpop.f32.mrb[0].mxu0
  %v745 = vadd.f32 %v88, %v744
  %v746 = vpop.f32.mrb[0].mxu0
  %v747 = vadd.f32 %v92, %v746
  %748 = vmatprep.mubr.bf16.mxu0 0
  %749 = vmatmul.mubr.bf16.gmra.mrb[0].mxu0 %v366
  %v750 = vpop.f32.mrb[0].mxu0
  %v751 = vadd.f32 %v88, %v750
  %v752 = vpop.f32.mrb[0].mxu0
  %v753 = vadd.f32 %v92, %v752
  %v754 = vpop.f32.mrb[0].mxu0
  %v755 = vadd.f32 %v88, %v754
  %v756 = vpop.f32.mrb[0].mxu0
  %v757 = vadd.f32 %v92, %v756
  %758 = vmatprep.mubr.bf16.mxu0 0
  %759 = vmatmul.mubr.bf16.gmra.mrb[0].mxu0 %v369
  %v760 = vpop.f32.mrb[0].mxu0
  %v761 = vadd.f32 %v88, %v760
  %v762 = vpop.f32.mrb[0].mxu0
  %v763 = vadd.f32 %v92, %v762
  %v764 = vpop.f32.mrb[0].mxu0
  %v765 = vadd.f32 %v88, %v764
  %v766 = vpop.f32.mrb[0].mxu0
  %v767 = vadd.f32 %v92, %v766
  %768 = vmatprep.mubr.bf16.mxu0 0
  %769 = vmatmul.mubr.bf16.gmra.mrb[0].mxu0 %v372
  %v770 = vpop.f32.mrb[0].mxu0
  %v771 = vadd.f32 %v88, %v770
  %v772 = vpop.f32.mrb[0].mxu0
  %v773 = vadd.f32 %v92, %v772
  %v774 = vpop.f32.mrb[0].mxu0
  %v775 = vadd.f32 %v88, %v774
  %v776 = vpop.f32.mrb[0].mxu0
  %v777 = vadd.f32 %v92, %v776
  %778 = vmatprep.mubr.bf16.mxu0 0
  %779 = vmatmul.mubr.bf16.gmra.mrb[0].mxu0 %v375
  %v780 = vpop.f32.mrb[0].mxu0
  %v781 = vadd.f32 %v88, %v780
  %v782 = vpop.f32.mrb[0].mxu0
  %v783 = vadd.f32 %v92, %v782
  %v784 = vpop.f32.mrb[0].mxu0
  %v785 = vadd.f32 %v88, %v784
  %v786 = vpop.f32.mrb[0].mxu0
  %v787 = vadd.f32 %v92, %v786
  %788 = vmatprep.mubr.bf16.mxu0 0
  %789 = vmatmul.mubr.bf16.gmra.mrb[0].mxu0 %v378
  %v790 = vpop.f32.mrb[0].mxu0
  %v791 = vadd.f32 %v88, %v790
  %v792 = vpop.f32.mrb[0].mxu0
  %v793 = vadd.f32 %v92, %v792
  %v794 = vpop.f32.mrb[0].mxu0
  %v795 = vadd.f32 %v88, %v794
  %v796 = vpop.f32.mrb[0].mxu0
  %v797 = vadd.f32 %v92, %v796
  %798 = vmatprep.mubr.bf16.mxu0 0
  %799 = vmatmul.mubr.bf16.gmra.mrb[0].mxu0 %v381
  %v800 = vpop.f32.mrb[0].mxu0
  %v801 = vadd.f32 %v88, %v800
  %v802 = vpop.f32.mrb[0].mxu0
  %v803 = vadd.f32 %v92, %v802
  %v804 = vpop.f32.mrb[0].mxu0
  %v805 = vadd.f32 %v88, %v804
  %v806 = vpop.f32.mrb[0].mxu0
  %v807 = vadd.f32 %v92, %v806
  %808 = vmatprep.mubr.bf16.mxu0 0
  %809 = vmatmul.mubr.bf16.gmra.mrb[0].mxu0 %v384
  %v810 = vpop.f32.mrb[0].mxu0
  %v811 = vadd.f32 %v88, %v810
  %v812 = vpop.f32.mrb[0].mxu0
  %v813 = vadd.f32 %v92, %v812
  %v814 = vpop.f32.mrb[0].mxu0
  %v815 = vadd.f32 %v88, %v814
  %v816 = vpop.f32.mrb[0].mxu0
  %v817 = vadd.f32 %v92, %v816
  %818 = vmatprep.mubr.bf16.mxu0 0
  %819 = vmatmul.mubr.bf16.gmra.mrb[0].mxu0 %v387
  %v820 = vpop.f32.mrb[0].mxu0
  %v821 = vadd.f32 %v88, %v820
  %v822 = vpop.f32.mrb[0].mxu0
  %v823 = vadd.f32 %v92, %v822
  %v824 = vpop.f32.mrb[0].mxu0
  %v825 = vadd.f32 %v88, %v824
  %v826 = vpop.f32.mrb[0].mxu0
  %v827 = vadd.f32 %v92, %v826
  %828 = vmatprep.mubr.bf16.mxu0 0
  %829 = vmatmul.mubr.bf16.gmra.mrb[0].mxu0 %v390
  %v830 = vpop.f32.mrb[0].mxu0
  %v831 = vadd.f32 %v88, %v830
  %v832 = vpop.f32.mrb[0].mxu0
  %v833 = vadd.f32 %v92, %v832
  %v834 = vpop.f32.mrb[0].mxu0
  %v835 = vadd.f32 %v88, %v834
  %v836 = vpop.f32.mrb[0].mxu0
  %v837 = vadd.f32 %v92, %v836
  %838 = vmatprep.mubr.bf16.mxu0 0
  %839 = vmatmul.mubr.bf16.gmra.mrb[0].mxu0 %v393
  %v840 = vpop.f32.mrb[0].mxu0
  %v841 = vadd.f32 %v88, %v840
  %v842 = vpop.f32.mrb[0].mxu0
  %v843 = vadd.f32 %v92, %v842
  %v844 = vpop.f32.mrb[0].mxu0
  %v845 = vadd.f32 %v88, %v844
  %v846 = vpop.f32.mrb[0].mxu0
  %v847 = vadd.f32 %v92, %v846
  %848 = vmatprep.mubr.bf16.mxu0 0
  %849 = vmatmul.mubr.bf16.gmra.mrb[0].mxu0 %v396
  %v850 = vpop.f32.mrb[0].mxu0
  %v851 = vadd.f32 %v88, %v850
  %v852 = vpop.f32.mrb[0].mxu0
  %v853 = vadd.f32 %v92, %v852
  %v854 = vpop.f32.mrb[0].mxu0
  %v855 = vadd.f32 %v88, %v854
  %v856 = vpop.f32.mrb[0].mxu0
  %v857 = vadd.f32 %v92, %v856
  %858 = vmatprep.mubr.bf16.mxu0 0
  %859 = vmatmul.mubr.bf16.gmra.mrb[0].mxu0 %v399
  %v860 = vpop.f32.mrb[0].mxu0
  %v861 = vadd.f32 %v88, %v860
  %v862 = vpop.f32.mrb[0].mxu0
  %v863 = vadd.f32 %v92, %v862
  %v864 = vpop.f32.mrb[0].mxu0
  %v865 = vadd.f32 %v88, %v864
  %v866 = vpop.f32.mrb[0].mxu0
  %v867 = vadd.f32 %v92, %v866
  %868 = vmatprep.mubr.bf16.mxu0 0
  %869 = vmatmul.mubr.bf16.gmra.mrb[0].mxu0 %v402
  %v870 = vpop.f32.mrb[0].mxu0
  %v871 = vadd.f32 %v88, %v870
  %v872 = vpop.f32.mrb[0].mxu0
  %v873 = vadd.f32 %v92, %v872
  %v874 = vpop.f32.mrb[0].mxu0
  %v875 = vadd.f32 %v88, %v874
  %v876 = vpop.f32.mrb[0].mxu0
  %v877 = vadd.f32 %v92, %v876
  %878 = vmatprep.mubr.bf16.mxu0 0
  %879 = vmatmul.mubr.bf16.gmra.mrb[0].mxu0 %v405
  %v880 = vpop.f32.mrb[0].mxu0
  %v881 = vadd.f32 %v88, %v880
  %v882 = vpop.f32.mrb[0].mxu0
  %v883 = vadd.f32 %v92, %v882
  %v884 = vpop.f32.mrb[0].mxu0
  %v885 = vadd.f32 %v88, %v884
  %v886 = vpop.f32.mrb[0].mxu0
  %v887 = vadd.f32 %v92, %v886
  %888 = vmatprep.mubr.bf16.mxu0 0
  %889 = vmatmul.mubr.bf16.gmra.mrb[0].mxu0 %v408
  %v890 = vpop.f32.mrb[0].mxu0
  %v891 = vadd.f32 %v88, %v890
  %v892 = vpop.f32.mrb[0].mxu0
  %v893 = vadd.f32 %v92, %v892
  %v894 = vpop.f32.mrb[0].mxu0
  %v895 = vadd.f32 %v88, %v894
  %v896 = vpop.f32.mrb[0].mxu0
  %v897 = vadd.f32 %v92, %v896
  %898 = vmatprep.mubr.bf16.mxu0 0
  %899 = vmatmul.mubr.bf16.gmra.mrb[0].mxu0 %v411
  %v900 = vpop.f32.mrb[0].mxu0
  %v901 = vadd.f32 %v88, %v900
  %v902 = vpop.f32.mrb[0].mxu0
  %v903 = vadd.f32 %v92, %v902
  %v904 = vpop.f32.mrb[0].mxu0
  %v905 = vadd.f32 %v88, %v904
  %v906 = vpop.f32.mrb[0].mxu0
  %v907 = vadd.f32 %v92, %v906
  %908 = vmatprep.mubr.bf16.mxu0 0
  %909 = vmatmul.mubr.bf16.gmra.mrb[0].mxu0 %v414
  %v910 = vpop.f32.mrb[0].mxu0
  %v911 = vadd.f32 %v88, %v910
  %v912 = vpop.f32.mrb[0].mxu0
  %v913 = vadd.f32 %v92, %v912
  %v914 = vpop.f32.mrb[0].mxu0
  %v915 = vadd.f32 %v88, %v914
  %v916 = vpop.f32.mrb[0].mxu0
  %v917 = vadd.f32 %v92, %v916
  %918 = vmatprep.mubr.bf16.mxu0 0
  %919 = vmatmul.mubr.bf16.gmra.mrb[0].mxu0 %v417
  %v920 = vpop.f32.mrb[0].mxu0
  %v921 = vadd.f32 %v88, %v920
  %v922 = vpop.f32.mrb[0].mxu0
  %v923 = vadd.f32 %v92, %v922
  %v924 = vpop.f32.mrb[0].mxu0
  %v925 = vadd.f32 %v88, %v924
  %v926 = vpop.f32.mrb[0].mxu0
  %v927 = vadd.f32 %v92, %v926
  %928 = vmatprep.mubr.bf16.mxu0 0
  %929 = vmatmul.mubr.bf16.gmra.mrb[0].mxu0 %v420
  %v930 = vpop.f32.mrb[0].mxu0
  %v931 = vadd.f32 %v88, %v930
  %v932 = vpop.f32.mrb[0].mxu0
  %v933 = vadd.f32 %v92, %v932
  %v934 = vpop.f32.mrb[0].mxu0
  %v935 = vadd.f32 %v88, %v934
  %v936 = vpop.f32.mrb[0].mxu0
  %v937 = vadd.f32 %v92, %v936
  %938 = vmatprep.mubr.bf16.mxu0 0
  %939 = vmatmul.mubr.bf16.gmra.mrb[0].mxu0 %v423
  %v940 = vpop.f32.mrb[0].mxu0
  %v941 = vadd.f32 %v88, %v940
  %v942 = vpop.f32.mrb[0].mxu0
  %v943 = vadd.f32 %v92, %v942
  %v944 = vpop.f32.mrb[0].mxu0
  %v945 = vadd.f32 %v88, %v944
  %v946 = vpop.f32.mrb[0].mxu0
  %v947 = vadd.f32 %v92, %v946
  %948 = vmatprep.mubr.bf16.mxu0 0
  %949 = vmatmul.mubr.bf16.gmra.mrb[0].mxu0 %v426
  %v950 = vpop.f32.mrb[0].mxu0
  %v951 = vadd.f32 %v88, %v950
  %v952 = vpop.f32.mrb[0].mxu0
  %v953 = vadd.f32 %v92, %v952
  %v954 = vpop.f32.mrb[0].mxu0
  %v955 = vadd.f32 %v88, %v954
  %v956 = vpop.f32.mrb[0].mxu0
  %v957 = vadd.f32 %v92, %v956
  %958 = vmatprep.mubr.bf16.mxu0 0
  %959 = vmatmul.mubr.bf16.gmra.mrb[0].mxu0 %v429
  %v960 = vpop.f32.mrb[0].mxu0
  %v961 = vadd.f32 %v88, %v960
  %v962 = vpop.f32.mrb[0].mxu0
  %v963 = vadd.f32 %v92, %v962
  %v964 = vpop.f32.mrb[0].mxu0
  %v965 = vadd.f32 %v88, %v964
  %v966 = vpop.f32.mrb[0].mxu0
  %v967 = vadd.f32 %v92, %v966
  %968 = vmatprep.mubr.bf16.mxu0 0
  %969 = vmatmul.mubr.bf16.gmra.mrb[0].mxu0 %v432
  %v970 = vpop.f32.mrb[0].mxu0
  %v971 = vadd.f32 %v88, %v970
  %v972 = vpop.f32.mrb[0].mxu0
  %v973 = vadd.f32 %v92, %v972
  %v974 = vpop.f32.mrb[0].mxu0
  %v975 = vadd.f32 %v88, %v974
  %v976 = vpop.f32.mrb[0].mxu0
  %v977 = vadd.f32 %v92, %v976
  %978 = vmatprep.mubr.bf16.mxu0 0
  %979 = vmatmul.mubr.bf16.gmra.mrb[0].mxu0 %v435
  %v980 = vpop.f32.mrb[0].mxu0
  %v981 = vadd.f32 %v88, %v980
  %v982 = vpop.f32.mrb[0].mxu0
  %v983 = vadd.f32 %v92, %v982
  %v984 = vpop.f32.mrb[0].mxu0
  %v985 = vadd.f32 %v88, %v984
  %v986 = vpop.f32.mrb[0].mxu0
  %v987 = vadd.f32 %v92, %v986
  %988 = vmatprep.mubr.bf16.mxu0 0
  %989 = vmatmul.mubr.bf16.gmra.mrb[0].mxu0 %v438
  %v990 = vpop.f32.mrb[0].mxu0
  %v991 = vadd.f32 %v88, %v990
  %v992 = vpop.f32.mrb[0].mxu0
  %v993 = vadd.f32 %v92, %v992
  %v994 = vpop.f32.mrb[0].mxu0
  %v995 = vadd.f32 %v88, %v994
  %v996 = vpop.f32.mrb[0].mxu0
  %v997 = vadd.f32 %v92, %v996
  %998 = vmatprep.mubr.bf16.mxu0 0
  %999 = vmatmul.mubr.bf16.gmra.mrb[0].mxu0 %v441
  %v1000 = vpop.f32.mrb[0].mxu0
  %v1001 = vadd.f32 %v88, %v1000
  %v1002 = vpop.f32.mrb[0].mxu0
  %v1003 = vadd.f32 %v92, %v1002
  %v1004 = vpop.f32.mrb[0].mxu0
  %v1005 = vadd.f32 %v88, %v1004
  %v1006 = vpop.f32.mrb[0].mxu0
  %v1007 = vadd.f32 %v92, %v1006
  %1008 = vmatprep.mubr.bf16.mxu0 0
  %1009 = vmatmul.mubr.bf16.gmra.mrb[0].mxu0 %v444
  %v1010 = vpop.f32.mrb[0].mxu0
  %v1011 = vadd.f32 %v88, %v1010
  %v1012 = vpop.f32.mrb[0].mxu0
  %v1013 = vadd.f32 %v92, %v1012
  %v1014 = vpop.f32.mrb[0].mxu0
  %v1015 = vadd.f32 %v88, %v1014
  %v1016 = vpop.f32.mrb[0].mxu0
  %v1017 = vadd.f32 %v92, %v1016
  %1018 = vmatprep.mubr.bf16.mxu0 0
  %1019 = vmatmul.mubr.bf16.gmra.mrb[0].mxu0 %v447
  %v1020 = vpop.f32.mrb[0].mxu0
  %v1021 = vadd.f32 %v88, %v1020
  %v1022 = vpop.f32.mrb[0].mxu0
  %v1023 = vadd.f32 %v92, %v1022
  %v1024 = vpop.f32.mrb[0].mxu0
  %v1025 = vadd.f32 %v88, %v1024
  %v1026 = vpop.f32.mrb[0].mxu0
  %v1027 = vadd.f32 %v92, %v1026
  %1028 = vmatprep.mubr.bf16.mxu0 0
  %1029 = vmatmul.mubr.bf16.gmra.mrb[0].mxu0 %v450
  %v1030 = vpop.f32.mrb[0].mxu0
  %v1031 = vadd.f32 %v88, %v1030
  %v1032 = vpop.f32.mrb[0].mxu0
  %v1033 = vadd.f32 %v92, %v1032
  %v1034 = vpop.f32.mrb[0].mxu0
  %v1035 = vadd.f32 %v88, %v1034
  %v1036 = vpop.f32.mrb[0].mxu0
  %v1037 = vadd.f32 %v92, %v1036
  %1038 = vmatprep.mubr.bf16.mxu0 0
  %1039 = vmatmul.mubr.bf16.gmra.mrb[0].mxu0 %v453
  %v1040 = vpop.f32.mrb[0].mxu0
  %v1041 = vadd.f32 %v88, %v1040
  %v1042 = vpop.f32.mrb[0].mxu0
  %v1043 = vadd.f32 %v92, %v1042
  %v1044 = vpop.f32.mrb[0].mxu0
  %v1045 = vadd.f32 %v88, %v1044
  %v1046 = vpop.f32.mrb[0].mxu0
  %v1047 = vadd.f32 %v92, %v1046
  %1048 = vmatprep.mubr.bf16.mxu0 0
  %1049 = vmatmul.mubr.bf16.gmra.mrb[0].mxu0 %v456
  %v1050 = vpop.f32.mrb[0].mxu0
  %v1051 = vadd.f32 %v88, %v1050
  %v1052 = vpop.f32.mrb[0].mxu0
  %v1053 = vadd.f32 %v92, %v1052
  %v1054 = vpop.f32.mrb[0].mxu0
  %v1055 = vadd.f32 %v88, %v1054
  %v1056 = vpop.f32.mrb[0].mxu0
  %v1057 = vadd.f32 %v92, %v1056
  %1058 = vmatprep.mubr.bf16.mxu0 0
  %1059 = vmatmul.mubr.bf16.gmra.mrb[0].mxu0 %v459
  %v1060 = vpop.f32.mrb[0].mxu0
  %v1061 = vadd.f32 %v88, %v1060
  %v1062 = vpop.f32.mrb[0].mxu0
  %v1063 = vadd.f32 %v92, %v1062
  %v1064 = vpop.f32.mrb[0].mxu0
  %v1065 = vadd.f32 %v88, %v1064
  %v1066 = vpop.f32.mrb[0].mxu0
  %v1067 = vadd.f32 %v92, %v1066
  %1068 = vmatprep.mubr.bf16.mxu0 0
  %1069 = vmatmul.mubr.bf16.gmra.mrb[0].mxu0 %v462
  %v1070 = vpop.f32.mrb[0].mxu0
  %v1071 = vadd.f32 %v88, %v1070
  %v1072 = vpop.f32.mrb[0].mxu0
  %v1073 = vadd.f32 %v92, %v1072
  %v1074 = vpop.f32.mrb[0].mxu0
  %v1075 = vadd.f32 %v88, %v1074
  %v1076 = vpop.f32.mrb[0].mxu0
  %v1077 = vadd.f32 %v92, %v1076
  %1078 = vmatprep.mubr.bf16.mxu0 0
  %1079 = vmatmul.mubr.bf16.gmra.mrb[0].mxu0 %v465
  %v1080 = vpop.f32.mrb[0].mxu0
  %v1081 = vadd.f32 %v88, %v1080
  %v1082 = vpop.f32.mrb[0].mxu0
  %v1083 = vadd.f32 %v92, %v1082
  %v1084 = vpop.f32.mrb[0].mxu0
  %v1085 = vadd.f32 %v88, %v1084
  %v1086 = vpop.f32.mrb[0].mxu0
  %v1087 = vadd.f32 %v92, %v1086
  %1088 = vmatprep.mubr.bf16.mxu0 0
  %1089 = vmatmul.mubr.bf16.gmra.mrb[0].mxu0 %v468
  %v1090 = vpop.f32.mrb[0].mxu0
  %v1091 = vadd.f32 %v88, %v1090
  %v1092 = vpop.f32.mrb[0].mxu0
  %v1093 = vadd.f32 %v92, %v1092
  %v1094 = vpop.f32.mrb[0].mxu0
  %v1095 = vadd.f32 %v88, %v1094
  %v1096 = vpop.f32.mrb[0].mxu0
  %v1097 = vadd.f32 %v92, %v1096
  %1098 = vmatprep.mubr.bf16.mxu0 0
  %1099 = vmatmul.mubr.bf16.gmra.mrb[0].mxu0 %v471
  %v1100 = vpop.f32.mrb[0].mxu0
  %v1101 = vadd.f32 %v88, %v1100
  %v1102 = vpop.f32.mrb[0].mxu0
  %v1103 = vadd.f32 %v92, %v1102
  %v1104 = vpop.f32.mrb[0].mxu0
  %v1105 = vadd.f32 %v88, %v1104
  %v1106 = vpop.f32.mrb[0].mxu0
  %v1107 = vadd.f32 %v92, %v1106
  %1108 = vmatprep.mubr.bf16.mxu0 0
  %1109 = vmatmul.mubr.bf16.gmra.mrb[0].mxu0 %v474
  %v1110 = vpop.f32.mrb[0].mxu0
  %v1111 = vadd.f32 %v88, %v1110
  %v1112 = vpop.f32.mrb[0].mxu0
  %v1113 = vadd.f32 %v92, %v1112
  %v1114 = vpop.f32.mrb[0].mxu0
  %v1115 = vadd.f32 %v88, %v1114
  %v1116 = vpop.f32.mrb[0].mxu0
  %v1117 = vadd.f32 %v92, %v1116
  %1118 = vmatprep.mubr.bf16.mxu0 0
  %1119 = vmatmul.mubr.bf16.gmra.mrb[0].mxu0 %v477
  %v1120 = vpop.f32.mrb[0].mxu0
  %v1121 = vadd.f32 %v88, %v1120
  %v1122 = vpop.f32.mrb[0].mxu0
  %v1123 = vadd.f32 %v92, %v1122
  %v1124 = vpop.f32.mrb[0].mxu0
  %v1125 = vadd.f32 %v88, %v1124
  %v1126 = vpop.f32.mrb[0].mxu0
  %v1127 = vadd.f32 %v92, %v1126
  %1128 = vmatprep.mubr.bf16.mxu0 0
  %1129 = vmatmul.mubr.bf16.gmra.mrb[0].mxu0 %v480
  %v1130 = vpop.f32.mrb[0].mxu0
  %v1131 = vadd.f32 %v88, %v1130
  %v1132 = vpop.f32.mrb[0].mxu0
  %v1133 = vadd.f32 %v92, %v1132
  %v1134 = vpop.f32.mrb[0].mxu0
  %v1135 = vadd.f32 %v88, %v1134
  %v1136 = vpop.f32.mrb[0].mxu0
  %v1137 = vadd.f32 %v92, %v1136
  %1138 = vmatprep.mubr.bf16.mxu0 0
  %1139 = vmatmul.mubr.bf16.gmra.mrb[0].mxu0 %v483
  %v1140 = vpop.f32.mrb[0].mxu0
  %v1141 = vadd.f32 %v88, %v1140
  %v1142 = vpop.f32.mrb[0].mxu0
  %v1143 = vadd.f32 %v92, %v1142
  %v1144 = vpop.f32.mrb[0].mxu0
  %v1145 = vadd.f32 %v88, %v1144
  %v1146 = vpop.f32.mrb[0].mxu0
  %v1147 = vadd.f32 %v92, %v1146
  %1148 = vmatprep.mubr.bf16.mxu0 0
  %1149 = vmatmul.mubr.bf16.gmra.mrb[0].mxu0 %v486
  %v1150 = vpop.f32.mrb[0].mxu0
  %v1151 = vadd.f32 %v88, %v1150
  %v1152 = vpop.f32.mrb[0].mxu0
  %v1153 = vadd.f32 %v92, %v1152
  %v1154 = vpop.f32.mrb[0].mxu0
  %v1155 = vadd.f32 %v88, %v1154
  %v1156 = vpop.f32.mrb[0].mxu0
  %v1157 = vadd.f32 %v92, %v1156
  %1158 = vmatprep.mubr.bf16.mxu0 0
  %1159 = vmatmul.mubr.bf16.gmra.mrb[0].mxu0 %v489
  %v1160 = vpop.f32.mrb[0].mxu0
  %v1161 = vadd.f32 %v88, %v1160
  %v1162 = vpop.f32.mrb[0].mxu0
  %v1163 = vadd.f32 %v92, %v1162
  %v1164 = vpop.f32.mrb[0].mxu0
  %v1165 = vadd.f32 %v88, %v1164
  %v1166 = vpop.f32.mrb[0].mxu0
  %v1167 = vadd.f32 %v92, %v1166
  %1168 = vmatprep.mubr.bf16.mxu0 0
  %1169 = vmatmul.mubr.bf16.gmra.mrb[0].mxu0 %v492
  %v1170 = vpop.f32.mrb[0].mxu0
  %v1171 = vadd.f32 %v88, %v1170
  %v1172 = vpop.f32.mrb[0].mxu0
  %v1173 = vadd.f32 %v92, %v1172
  %v1174 = vpop.f32.mrb[0].mxu0
  %v1175 = vadd.f32 %v88, %v1174
  %v1176 = vpop.f32.mrb[0].mxu0
  %v1177 = vadd.f32 %v92, %v1176
  %1178 = vmatprep.mubr.bf16.mxu0 0
  %1179 = vmatmul.mubr.bf16.gmra.mrb[0].mxu0 %v495
  %v1180 = vpop.f32.mrb[0].mxu0
  %v1181 = vadd.f32 %v88, %v1180
  %v1182 = vpop.f32.mrb[0].mxu0
  %v1183 = vadd.f32 %v92, %v1182
  %v1184 = vpop.f32.mrb[0].mxu0
  %v1185 = vadd.f32 %v88, %v1184
  %v1186 = vpop.f32.mrb[0].mxu0
  %v1187 = vadd.f32 %v92, %v1186
  %1188 = vmatprep.mubr.bf16.mxu0 0
  %1189 = vmatmul.mubr.bf16.gmra.mrb[0].mxu0 %v498
  %v1190 = vpop.f32.mrb[0].mxu0
  %v1191 = vadd.f32 %v88, %v1190
  %v1192 = vpop.f32.mrb[0].mxu0
  %v1193 = vadd.f32 %v92, %v1192
  %v1194 = vpop.f32.mrb[0].mxu0
  %v1195 = vadd.f32 %v88, %v1194
  %v1196 = vpop.f32.mrb[0].mxu0
  %v1197 = vadd.f32 %v92, %v1196
  %1198 = vmatprep.mubr.bf16.mxu0 0
  %1199 = vmatmul.mubr.bf16.gmra.mrb[0].mxu0 %v501
  %v1200 = vpop.f32.mrb[0].mxu0
  %v1201 = vadd.f32 %v88, %v1200
  %v1202 = vpop.f32.mrb[0].mxu0
  %v1203 = vadd.f32 %v92, %v1202
  %v1204 = vpop.f32.mrb[0].mxu0
  %v1205 = vadd.f32 %v88, %v1204
  %v1206 = vpop.f32.mrb[0].mxu0
  %v1207 = vadd.f32 %v92, %v1206
  %1208 = vmatprep.mubr.bf16.mxu0 0
  %1209 = vmatmul.mubr.bf16.gmra.mrb[0].mxu0 %v504
  %v1210 = vpop.f32.mrb[0].mxu0
  %v1211 = vadd.f32 %v88, %v1210
  %v1212 = vpop.f32.mrb[0].mxu0
  %v1213 = vadd.f32 %v92, %v1212
  %v1214 = vpop.f32.mrb[0].mxu0
  %v1215 = vadd.f32 %v88, %v1214
  %v1216 = vpop.f32.mrb[0].mxu0
  %v1217 = vadd.f32 %v92, %v1216
  %1218 = vmatprep.mubr.bf16.mxu0 0
  %1219 = vmatmul.mubr.bf16.gmra.mrb[0].mxu0 %v507
  %v1220 = vpop.f32.mrb[0].mxu0
  %v1221 = vadd.f32 %v88, %v1220
  %v1222 = vpop.f32.mrb[0].mxu0
  %v1223 = vadd.f32 %v92, %v1222
  %v1224 = vpop.f32.mrb[0].mxu0
  %v1225 = vadd.f32 %v88, %v1224
  %v1226 = vpop.f32.mrb[0].mxu0
  %v1227 = vadd.f32 %v92, %v1226
  %1228 = vmatprep.mubr.bf16.mxu0 0
  %1229 = vmatmul.mubr.bf16.gmra.mrb[0].mxu0 %v510
  %v1230 = vpop.f32.mrb[0].mxu0
  %v1231 = vadd.f32 %v88, %v1230
  %v1232 = vpop.f32.mrb[0].mxu0
  %v1233 = vadd.f32 %v92, %v1232
  %v1234 = vpop.f32.mrb[0].mxu0
  %v1235 = vadd.f32 %v88, %v1234
  %v1236 = vpop.f32.mrb[0].mxu0
  %v1237 = vadd.f32 %v92, %v1236
  %1238 = vmatprep.mubr.bf16.mxu0 0
  %1239 = vmatmul.mubr.bf16.gmra.mrb[0].mxu0 %v513
  %v1240 = vpop.f32.mrb[0].mxu0
  %v1241 = vadd.f32 %v88, %v1240
  %v1242 = vpop.f32.mrb[0].mxu0
  %v1243 = vadd.f32 %v92, %v1242
  %v1244 = vpop.f32.mrb[0].mxu0
  %v1245 = vadd.f32 %v88, %v1244
  %v1246 = vpop.f32.mrb[0].mxu0
  %v1247 = vadd.f32 %v92, %v1246
  %1248 = vmatprep.mubr.bf16.mxu0 0
  %1249 = vmatmul.mubr.bf16.gmra.mrb[0].mxu0 %v516
  %v1250 = vpop.f32.mrb[0].mxu0
  %v1251 = vadd.f32 %v88, %v1250
  %v1252 = vpop.f32.mrb[0].mxu0
  %v1253 = vadd.f32 %v92, %v1252
  %v1254 = vpop.f32.mrb[0].mxu0
  %v1255 = vadd.f32 %v88, %v1254
  %v1256 = vpop.f32.mrb[0].mxu0
  %v1257 = vadd.f32 %v92, %v1256
  %1258 = vmatprep.mubr.bf16.mxu0 0
  %1259 = vmatmul.mubr.bf16.gmra.mrb[0].mxu0 %v519
  %v1260 = vpop.f32.mrb[0].mxu0
  %v1261 = vadd.f32 %v88, %v1260
  %v1262 = vpop.f32.mrb[0].mxu0
  %v1263 = vadd.f32 %v92, %v1262
  %v1264 = vpop.f32.mrb[0].mxu0
  %v1265 = vadd.f32 %v88, %v1264
  %v1266 = vpop.f32.mrb[0].mxu0
  %v1267 = vadd.f32 %v92, %v1266
  %1268 = vmatprep.mubr.bf16.mxu0 0
  %1269 = vmatmul.mubr.bf16.gmra.mrb[0].mxu0 %v522
  %v1270 = vpop.f32.mrb[0].mxu0
  %v1271 = vadd.f32 %v88, %v1270
  %v1272 = vpop.f32.mrb[0].mxu0
  %v1273 = vadd.f32 %v92, %v1272
  %v1274 = vpop.f32.mrb[0].mxu0
  %v1275 = vadd.f32 %v88, %v1274
  %v1276 = vpop.f32.mrb[0].mxu0
  %v1277 = vadd.f32 %v92, %v1276
  %1278 = vmatprep.mubr.bf16.mxu0 0
  %1279 = vmatmul.mubr.bf16.gmra.mrb[0].mxu0 %v525
  %v1280 = vpop.f32.mrb[0].mxu0
  %v1281 = vadd.f32 %v88, %v1280
  %v1282 = vpop.f32.mrb[0].mxu0
  %v1283 = vadd.f32 %v92, %v1282
  %v1284 = vpop.f32.mrb[0].mxu0
  %v1285 = vadd.f32 %v88, %v1284
  %v1286 = vpop.f32.mrb[0].mxu0
  %v1287 = vadd.f32 %v92, %v1286
  %1288 = vmatprep.mubr.bf16.mxu0 0
  %1289 = vmatmul.mubr.bf16.gmra.mrb[0].mxu0 %v528
  %v1290 = vpop.f32.mrb[0].mxu0
  %v1291 = vadd.f32 %v88, %v1290
  %v1292 = vpop.f32.mrb[0].mxu0
  %v1293 = vadd.f32 %v92, %v1292
  %v1294 = vpop.f32.mrb[0].mxu0
  %v1295 = vadd.f32 %v88, %v1294
  %v1296 = vpop.f32.mrb[0].mxu0
  %v1297 = vadd.f32 %v92, %v1296
  %1298 = vmatprep.mubr.bf16.mxu0 0
  %1299 = vmatmul.mubr.bf16.gmra.mrb[0].mxu0 %v531
  %v1300 = vpop.f32.mrb[0].mxu0
  %v1301 = vadd.f32 %v88, %v1300
  %v1302 = vpop.f32.mrb[0].mxu0
  %v1303 = vadd.f32 %v92, %v1302
  %v1304 = vpop.f32.mrb[0].mxu0
  %v1305 = vadd.f32 %v88, %v1304
  %v1306 = vpop.f32.mrb[0].mxu0
  %v1307 = vadd.f32 %v92, %v1306
  %1308 = vmatprep.mubr.bf16.mxu0 0
  %1309 = vmatmul.mubr.bf16.gmra.mrb[0].mxu0 %v534
  %v1310 = vpop.f32.mrb[0].mxu0
  %v1311 = vadd.f32 %v88, %v1310
  %v1312 = vpop.f32.mrb[0].mxu0
  %v1313 = vadd.f32 %v92, %v1312
  %v1314 = vpop.f32.mrb[0].mxu0
  %v1315 = vpop.f32.mrb[0].mxu0
  %1316 = vdwg.mxu0
  %v1317 = vld [vmem:[%s7] sm:$0xff]
  %v1318 = vld [vmem:[%s7 + $0x8] sm:$0xff]
  %v1319 = vld [vmem:[%s7 + $0x10] sm:$0xff]
  %v1320 = vld [vmem:[%s7 + $0x18] sm:$0xff]
  %v1321 = vld [vmem:[%s7 + $0x20] sm:$0xff]
  %v1322 = vld [vmem:[%s7 + $0x28] sm:$0xff]
  %v1323 = vld [vmem:[%s7 + $0x30] sm:$0xff]
  %v1324 = vld [vmem:[%s7 + $0x38] sm:$0xff]
  %v1325 = vld [vmem:[%s7 + $0x40] sm:$0xff]
  %v1326 = vld [vmem:[%s7 + $0x48] sm:$0xff]
  %v1327 = vld [vmem:[%s7 + $0x50] sm:$0xff]
  %v1328 = vld [vmem:[%s7 + $0x58] sm:$0xff]
  %v1329 = vld [vmem:[%s7 + $0x60] sm:$0xff]
  %v1330 = vld [vmem:[%s7 + $0x68] sm:$0xff]
  %v1331 = vld [vmem:[%s7 + $0x70] sm:$0xff]
  %v1332 = vpack.c.bf16 %v585, %v581
  %v1333 = vpack.c.bf16 %v587, %v583
  %v1334 = vpack.c.bf16 %v595, %v591
  %v1335 = vpack.c.bf16 %v597, %v593
  %v1336 = vpack.c.bf16 %v605, %v601
  %v1337 = vpack.c.bf16 %v607, %v603
  %v1338 = vpack.c.bf16 %v615, %v611
  %v1339 = vpack.c.bf16 %v617, %v613
  %v1340 = vpack.c.bf16 %v625, %v621
  %v1341 = vpack.c.bf16 %v627, %v623
  %v1342 = vpack.c.bf16 %v635, %v631
  %v1343 = vpack.c.bf16 %v637, %v633
  %v1344 = vpack.c.bf16 %v645, %v641
  %v1345 = vpack.c.bf16 %v647, %v643
  %v1346 = vpack.c.bf16 %v655, %v651
  %v1347 = vpack.c.bf16 %v657, %v653
  %v1348 = vpack.c.bf16 %v665, %v661
  %v1349 = vpack.c.bf16 %v667, %v663
  %v1350 = vpack.c.bf16 %v675, %v671
  %v1351 = vpack.c.bf16 %v677, %v673
  %v1352 = vpack.c.bf16 %v685, %v681
  %v1353 = vpack.c.bf16 %v687, %v683
  %v1354 = vpack.c.bf16 %v695, %v691
  %v1355 = vpack.c.bf16 %v697, %v693
  %v1356 = vpack.c.bf16 %v705, %v701
  %v1357 = vpack.c.bf16 %v707, %v703
  %v1358 = vpack.c.bf16 %v715, %v711
  %v1359 = vpack.c.bf16 %v717, %v713
  %v1360 = vpack.c.bf16 %v725, %v721
  %v1361 = vpack.c.bf16 %v727, %v723
  %v1362 = vpack.c.bf16 %v735, %v731
  %v1363 = vpack.c.bf16 %v737, %v733
  %v1364 = vpack.c.bf16 %v745, %v741
  %v1365 = vpack.c.bf16 %v747, %v743
  %v1366 = vpack.c.bf16 %v755, %v751
  %v1367 = vpack.c.bf16 %v757, %v753
  %v1368 = vpack.c.bf16 %v765, %v761
  %v1369 = vpack.c.bf16 %v767, %v763
  %v1370 = vpack.c.bf16 %v775, %v771
  %v1371 = vpack.c.bf16 %v777, %v773
  %v1372 = vpack.c.bf16 %v785, %v781
  %v1373 = vpack.c.bf16 %v787, %v783
  %v1374 = vpack.c.bf16 %v795, %v791
  %v1375 = vpack.c.bf16 %v797, %v793
  %v1376 = vpack.c.bf16 %v805, %v801
  %v1377 = vpack.c.bf16 %v807, %v803
  %v1378 = vpack.c.bf16 %v815, %v811
  %v1379 = vpack.c.bf16 %v817, %v813
  %v1380 = vpack.c.bf16 %v825, %v821
  %v1381 = vpack.c.bf16 %v827, %v823
  %v1382 = vpack.c.bf16 %v835, %v831
  %v1383 = vpack.c.bf16 %v837, %v833
  %v1384 = vpack.c.bf16 %v845, %v841
  %v1385 = vpack.c.bf16 %v847, %v843
  %v1386 = vpack.c.bf16 %v855, %v851
  %v1387 = vpack.c.bf16 %v857, %v853
  %v1388 = vpack.c.bf16 %v865, %v861
  %v1389 = vpack.c.bf16 %v867, %v863
  %v1390 = vpack.c.bf16 %v875, %v871
  %v1391 = vpack.c.bf16 %v877, %v873
  %v1392 = vpack.c.bf16 %v885, %v881
  %v1393 = vpack.c.bf16 %v887, %v883
  %v1394 = vpack.c.bf16 %v895, %v891
  %v1395 = vpack.c.bf16 %v897, %v893
  %v1396 = vpack.c.bf16 %v905, %v901
  %v1397 = vpack.c.bf16 %v907, %v903
  %v1398 = vpack.c.bf16 %v915, %v911
  %v1399 = vpack.c.bf16 %v917, %v913
  %v1400 = vpack.c.bf16 %v925, %v921
  %v1401 = vpack.c.bf16 %v927, %v923
  %v1402 = vpack.c.bf16 %v935, %v931
  %v1403 = vpack.c.bf16 %v937, %v933
  %v1404 = vpack.c.bf16 %v945, %v941
  %v1405 = vpack.c.bf16 %v947, %v943
  %v1406 = vpack.c.bf16 %v955, %v951
  %v1407 = vpack.c.bf16 %v957, %v953
  %v1408 = vpack.c.bf16 %v965, %v961
  %v1409 = vpack.c.bf16 %v967, %v963
  %v1410 = vpack.c.bf16 %v975, %v971
  %v1411 = vpack.c.bf16 %v977, %v973
  %v1412 = vpack.c.bf16 %v985, %v981
  %v1413 = vpack.c.bf16 %v987, %v983
  %v1414 = vpack.c.bf16 %v995, %v991
  %v1415 = vpack.c.bf16 %v997, %v993
  %v1416 = vpack.c.bf16 %v1005, %v1001
  %v1417 = vpack.c.bf16 %v1007, %v1003
  %v1418 = vpack.c.bf16 %v1015, %v1011
  %v1419 = vpack.c.bf16 %v1017, %v1013
  %v1420 = vpack.c.bf16 %v1025, %v1021
  %v1421 = vpack.c.bf16 %v1027, %v1023
  %v1422 = vpack.c.bf16 %v1035, %v1031
  %v1423 = vpack.c.bf16 %v1037, %v1033
  %v1424 = vpack.c.bf16 %v1045, %v1041
  %v1425 = vpack.c.bf16 %v1047, %v1043
  %v1426 = vpack.c.bf16 %v1055, %v1051
  %v1427 = vpack.c.bf16 %v1057, %v1053
  %v1428 = vpack.c.bf16 %v1065, %v1061
  %v1429 = vpack.c.bf16 %v1067, %v1063
  %v1430 = vpack.c.bf16 %v1075, %v1071
  %v1431 = vpack.c.bf16 %v1077, %v1073
  %v1432 = vpack.c.bf16 %v1085, %v1081
  %v1433 = vpack.c.bf16 %v1087, %v1083
  %v1434 = vpack.c.bf16 %v1095, %v1091
  %v1435 = vpack.c.bf16 %v1097, %v1093
  %v1436 = vpack.c.bf16 %v1105, %v1101
  %v1437 = vpack.c.bf16 %v1107, %v1103
  %v1438 = vpack.c.bf16 %v1115, %v1111
  %v1439 = vpack.c.bf16 %v1117, %v1113
  %v1440 = vpack.c.bf16 %v1125, %v1121
  %v1441 = vpack.c.bf16 %v1127, %v1123
  %v1442 = vpack.c.bf16 %v1135, %v1131
  %v1443 = vpack.c.bf16 %v1137, %v1133
  %v1444 = vpack.c.bf16 %v1145, %v1141
  %v1445 = vpack.c.bf16 %v1147, %v1143
  %v1446 = vpack.c.bf16 %v1155, %v1151
  %v1447 = vpack.c.bf16 %v1157, %v1153
  %v1448 = vpack.c.bf16 %v1165, %v1161
  %v1449 = vpack.c.bf16 %v1167, %v1163
  %v1450 = vpack.c.bf16 %v1175, %v1171
  %v1451 = vpack.c.bf16 %v1177, %v1173
  %v1452 = vpack.c.bf16 %v1185, %v1181
  %v1453 = vpack.c.bf16 %v1187, %v1183
  %v1454 = vpack.c.bf16 %v1195, %v1191
  %v1455 = vpack.c.bf16 %v1197, %v1193
  %v1456 = vpack.c.bf16 %v1205, %v1201
  %v1457 = vpack.c.bf16 %v1207, %v1203
  %v1458 = vpack.c.bf16 %v1215, %v1211
  %v1459 = vpack.c.bf16 %v1217, %v1213
  %v1460 = vpack.c.bf16 %v1225, %v1221
  %v1461 = vpack.c.bf16 %v1227, %v1223
  %v1462 = vpack.c.bf16 %v1235, %v1231
  %v1463 = vpack.c.bf16 %v1237, %v1233
  %v1464 = vpack.c.bf16 %v1245, %v1241
  %v1465 = vpack.c.bf16 %v1247, %v1243
  %v1466 = vpack.c.bf16 %v1255, %v1251
  %v1467 = vpack.c.bf16 %v1257, %v1253
  %v1468 = vpack.c.bf16 %v1265, %v1261
  %v1469 = vpack.c.bf16 %v1267, %v1263
  %v1470 = vpack.c.bf16 %v1275, %v1271
  %v1471 = vpack.c.bf16 %v1277, %v1273
  %v1472 = vpack.c.bf16 %v1285, %v1281
  %v1473 = vpack.c.bf16 %v1287, %v1283
  %v1474 = vpack.c.bf16 %v1295, %v1291
  %v1475 = vpack.c.bf16 %v1297, %v1293
  %v1476 = vpack.c.bf16 %v1305, %v1301
  %v1477 = vpack.c.bf16 %v1307, %v1303
  %v1478 = vpack.c.bf16 %v1311, %v1311
  %v1479 = vpack.c.bf16 %v1313, %v1313
  %v1495 = vunpack.c.l.b16 %v1317
  %v1496 = vunpack.c.h.b16 %v1317
  %v1497 = vunpack.c.l.b16 %v1318
  %v1498 = vunpack.c.h.b16 %v1318
  %v1499 = vunpack.c.l.b16 %v1319
  %v1500 = vunpack.c.h.b16 %v1319
  %v1501 = vunpack.c.l.b16 %v1320
  %v1502 = vunpack.c.h.b16 %v1320
  %v1503 = vunpack.c.l.b16 %v1321
  %v1504 = vunpack.c.h.b16 %v1321
  %v1505 = vunpack.c.l.b16 %v1322
  %v1506 = vunpack.c.h.b16 %v1322
  %v1507 = vunpack.c.l.b16 %v1323
  %v1508 = vunpack.c.h.b16 %v1323
  %v1509 = vunpack.c.l.b16 %v1324
  %v1510 = vunpack.c.h.b16 %v1324
  %v1511 = vunpack.c.l.b16 %v1325
  %v1512 = vunpack.c.h.b16 %v1325
  %v1513 = vunpack.c.l.b16 %v1326
  %v1514 = vunpack.c.h.b16 %v1326
  %v1515 = vunpack.c.l.b16 %v1327
  %v1516 = vunpack.c.h.b16 %v1327
  %v1517 = vunpack.c.l.b16 %v1328
  %v1518 = vunpack.c.h.b16 %v1328
  %v1519 = vunpack.c.l.b16 %v1329
  %v1520 = vunpack.c.h.b16 %v1329
  %v1521 = vunpack.c.l.b16 %v1330
  %v1522 = vunpack.c.h.b16 %v1330
  %v1523 = vunpack.c.l.b16 %v1331
  %v1524 = vunpack.c.h.b16 %v1331
  %v1525 = vpack.c.b16 %v1505, %v1495
  %v1526 = vpack.c.b16 %v1506, %v1496
  %v1527 = vpack.c.b16 %v1507, %v1497
  %v1528 = vpack.c.b16 %v1508, %v1498
  %v1529 = vpack.c.b16 %v1509, %v1499
  %v1530 = vpack.c.b16 %v1510, %v1500
  %v1531 = vpack.c.b16 %v1511, %v1501
  %v1532 = vpack.c.b16 %v1512, %v1502
  %v1533 = vpack.c.b16 %v1513, %v1503
  %v1534 = vpack.c.b16 %v1514, %v1504
  %v1535 = vpack.c.b16 %v1515, %v1515
  %v1536 = vpack.c.b16 %v1516, %v1516
  %v1537 = vpack.c.b16 %v1517, %v1517
  %v1538 = vpack.c.b16 %v1518, %v1518
  %v1539 = vpack.c.b16 %v1519, %v1519
  %v1540 = vpack.c.b16 %v1520, %v1520
  %v1541 = vpack.c.b16 %v1521, %v1521
  %v1542 = vpack.c.b16 %v1522, %v1522
  %v1543 = vpack.c.b16 %v1523, %v1523
  %v1544 = vpack.c.b16 %v1524, %v1524
  %vm1563 = vcmask 195584
  %v1565 = vsel %vm1563, %v1534, 0
  %v1568 = vsel %vm1563, %v1544, 0
  %v1571 = vsel %vm536, %v1478, 0
  %v1574 = vsel %vm536, %v1479, 0
  %1576 = vmatprep.subr.bf16.mxu0 %v1333
  %1577 = vmatpush1.bf16.msra.mxu0 %v1332
  %1578 = vmatprep.subr.bf16.mxu0 %v1335
  %1579 = vmatpush1.bf16.msra.mxu0 %v1334
  %1580 = vmatprep.subr.bf16.mxu0 %v1337
  %1581 = vmatpush1.bf16.msra.mxu0 %v1336
  %1582 = vmatprep.subr.bf16.mxu0 %v1339
  %1583 = vmatpush1.bf16.msra.mxu0 %v1338
  %1584 = vmatprep.subr.bf16.mxu0 %v1341
  %1585 = vmatpush1.bf16.msra.mxu0 %v1340
  %1586 = vmatprep.subr.bf16.mxu0 %v1343
  %1587 = vmatpush1.bf16.msra.mxu0 %v1342
  %1588 = vmatprep.subr.bf16.mxu0 %v1345
  %1589 = vmatpush1.bf16.msra.mxu0 %v1344
  %1590 = vmatprep.subr.bf16.mxu0 %v1347
  %1591 = vmatpush1.bf16.msra.mxu0 %v1346
  %1592 = vmatprep.subr.bf16.mxu0 %v1349
  %1593 = vmatpush1.bf16.msra.mxu0 %v1348
  %1594 = vmatprep.subr.bf16.mxu0 %v1351
  %1595 = vmatpush1.bf16.msra.mxu0 %v1350
  %1596 = vmatprep.subr.bf16.mxu0 %v1353
  %1597 = vmatpush1.bf16.msra.mxu0 %v1352
  %1598 = vmatprep.subr.bf16.mxu0 %v1355
  %1599 = vmatpush1.bf16.msra.mxu0 %v1354
  %1600 = vmatprep.subr.bf16.mxu0 %v1357
  %1601 = vmatpush1.bf16.msra.mxu0 %v1356
  %1602 = vmatprep.subr.bf16.mxu0 %v1359
  %1603 = vmatpush1.bf16.msra.mxu0 %v1358
  %1604 = vmatprep.subr.bf16.mxu0 %v1361
  %1605 = vmatpush1.bf16.msra.mxu0 %v1360
  %1606 = vmatprep.subr.bf16.mxu0 %v1363
  %1607 = vmatpush1.bf16.msra.mxu0 %v1362
  %1608 = vmatprep.mubr.bf16.mxu0 %v1526
  %1609 = vmatmul.mubr.bf16.gmra.mrb[0].mxu0 %v1525
  %v1610 = vpop.f32.mrb[0].mxu0
  %v1611 = vadd.f32 0.0, %v1610
  %v1612 = vpop.f32.mrb[0].mxu0
  %v1613 = vadd.f32 0.0, %v1612
  %v1614 = vpop.f32.mrb[0].mxu0
  %v1615 = vadd.f32 0.0, %v1614
  %v1616 = vpop.f32.mrb[0].mxu0
  %v1617 = vadd.f32 0.0, %v1616
  %1618 = vmatprep.mubr.bf16.mxu0 %v1536
  %1619 = vmatmul.mubr.bf16.gmra.mrb[0].mxu0 %v1535
  %v1620 = vpop.f32.mrb[0].mxu0
  %v1621 = vadd.f32 0.0, %v1620
  %v1622 = vpop.f32.mrb[0].mxu0
  %v1623 = vadd.f32 0.0, %v1622
  %v1624 = vpop.f32.mrb[0].mxu0
  %v1625 = vpop.f32.mrb[0].mxu0
  %1626 = vdwg.mxu0
  %1627 = vmatprep.subr.bf16.mxu0 %v1365
  %1628 = vmatpush1.bf16.msra.mxu0 %v1364
  %1629 = vmatprep.subr.bf16.mxu0 %v1367
  %1630 = vmatpush1.bf16.msra.mxu0 %v1366
  %1631 = vmatprep.subr.bf16.mxu0 %v1369
  %1632 = vmatpush1.bf16.msra.mxu0 %v1368
  %1633 = vmatprep.subr.bf16.mxu0 %v1371
  %1634 = vmatpush1.bf16.msra.mxu0 %v1370
  %1635 = vmatprep.subr.bf16.mxu0 %v1373
  %1636 = vmatpush1.bf16.msra.mxu0 %v1372
  %1637 = vmatprep.subr.bf16.mxu0 %v1375
  %1638 = vmatpush1.bf16.msra.mxu0 %v1374
  %1639 = vmatprep.subr.bf16.mxu0 %v1377
  %1640 = vmatpush1.bf16.msra.mxu0 %v1376
  %1641 = vmatprep.subr.bf16.mxu0 %v1379
  %1642 = vmatpush1.bf16.msra.mxu0 %v1378
  %1643 = vmatprep.subr.bf16.mxu0 %v1381
  %1644 = vmatpush1.bf16.msra.mxu0 %v1380
  %1645 = vmatprep.subr.bf16.mxu0 %v1383
  %1646 = vmatpush1.bf16.msra.mxu0 %v1382
  %1647 = vmatprep.subr.bf16.mxu0 %v1385
  %1648 = vmatpush1.bf16.msra.mxu0 %v1384
  %1649 = vmatprep.subr.bf16.mxu0 %v1387
  %1650 = vmatpush1.bf16.msra.mxu0 %v1386
  %1651 = vmatprep.subr.bf16.mxu0 %v1389
  %1652 = vmatpush1.bf16.msra.mxu0 %v1388
  %1653 = vmatprep.subr.bf16.mxu0 %v1391
  %1654 = vmatpush1.bf16.msra.mxu0 %v1390
  %1655 = vmatprep.subr.bf16.mxu0 %v1393
  %1656 = vmatpush1.bf16.msra.mxu0 %v1392
  %1657 = vmatprep.subr.bf16.mxu0 %v1395
  %1658 = vmatpush1.bf16.msra.mxu0 %v1394
  %1659 = vmatprep.mubr.bf16.mxu0 %v1528
  %1660 = vmatmul.mubr.bf16.gmra.mrb[0].mxu0 %v1527
  %v1661 = vpop.f32.mrb[0].mxu0
  %v1662 = vadd.f32 %v1611, %v1661
  %v1663 = vpop.f32.mrb[0].mxu0
  %v1664 = vadd.f32 %v1613, %v1663
  %v1665 = vpop.f32.mrb[0].mxu0
  %v1666 = vadd.f32 %v1615, %v1665
  %v1667 = vpop.f32.mrb[0].mxu0
  %v1668 = vadd.f32 %v1617, %v1667
  %1669 = vmatprep.mubr.bf16.mxu0 %v1538
  %1670 = vmatmul.mubr.bf16.gmra.mrb[0].mxu0 %v1537
  %v1671 = vpop.f32.mrb[0].mxu0
  %v1672 = vadd.f32 %v1621, %v1671
  %v1673 = vpop.f32.mrb[0].mxu0
  %v1674 = vadd.f32 %v1623, %v1673
  %v1675 = vpop.f32.mrb[0].mxu0
  %v1676 = vpop.f32.mrb[0].mxu0
  %1677 = vdwg.mxu0
  %1678 = vmatprep.subr.bf16.mxu0 %v1397
  %1679 = vmatpush1.bf16.msra.mxu0 %v1396
  %1680 = vmatprep.subr.bf16.mxu0 %v1399
  %1681 = vmatpush1.bf16.msra.mxu0 %v1398
  %1682 = vmatprep.subr.bf16.mxu0 %v1401
  %1683 = vmatpush1.bf16.msra.mxu0 %v1400
  %1684 = vmatprep.subr.bf16.mxu0 %v1403
  %1685 = vmatpush1.bf16.msra.mxu0 %v1402
  %1686 = vmatprep.subr.bf16.mxu0 %v1405
  %1687 = vmatpush1.bf16.msra.mxu0 %v1404
  %1688 = vmatprep.subr.bf16.mxu0 %v1407
  %1689 = vmatpush1.bf16.msra.mxu0 %v1406
  %1690 = vmatprep.subr.bf16.mxu0 %v1409
  %1691 = vmatpush1.bf16.msra.mxu0 %v1408
  %1692 = vmatprep.subr.bf16.mxu0 %v1411
  %1693 = vmatpush1.bf16.msra.mxu0 %v1410
  %1694 = vmatprep.subr.bf16.mxu0 %v1413
  %1695 = vmatpush1.bf16.msra.mxu0 %v1412
  %1696 = vmatprep.subr.bf16.mxu0 %v1415
  %1697 = vmatpush1.bf16.msra.mxu0 %v1414
  %1698 = vmatprep.subr.bf16.mxu0 %v1417
  %1699 = vmatpush1.bf16.msra.mxu0 %v1416
  %1700 = vmatprep.subr.bf16.mxu0 %v1419
  %1701 = vmatpush1.bf16.msra.mxu0 %v1418
  %1702 = vmatprep.subr.bf16.mxu0 %v1421
  %1703 = vmatpush1.bf16.msra.mxu0 %v1420
  %1704 = vmatprep.subr.bf16.mxu0 %v1423
  %1705 = vmatpush1.bf16.msra.mxu0 %v1422
  %1706 = vmatprep.subr.bf16.mxu0 %v1425
  %1707 = vmatpush1.bf16.msra.mxu0 %v1424
  %1708 = vmatprep.subr.bf16.mxu0 %v1427
  %1709 = vmatpush1.bf16.msra.mxu0 %v1426
  %1710 = vmatprep.mubr.bf16.mxu0 %v1530
  %1711 = vmatmul.mubr.bf16.gmra.mrb[0].mxu0 %v1529
  %v1712 = vpop.f32.mrb[0].mxu0
  %v1713 = vadd.f32 %v1662, %v1712
  %v1714 = vpop.f32.mrb[0].mxu0
  %v1715 = vadd.f32 %v1664, %v1714
  %v1716 = vpop.f32.mrb[0].mxu0
  %v1717 = vadd.f32 %v1666, %v1716
  %v1718 = vpop.f32.mrb[0].mxu0
  %v1719 = vadd.f32 %v1668, %v1718
  %1720 = vmatprep.mubr.bf16.mxu0 %v1540
  %1721 = vmatmul.mubr.bf16.gmra.mrb[0].mxu0 %v1539
  %v1722 = vpop.f32.mrb[0].mxu0
  %v1723 = vadd.f32 %v1672, %v1722
  %v1724 = vpop.f32.mrb[0].mxu0
  %v1725 = vadd.f32 %v1674, %v1724
  %v1726 = vpop.f32.mrb[0].mxu0
  %v1727 = vpop.f32.mrb[0].mxu0
  %1728 = vdwg.mxu0
  %1729 = vmatprep.subr.bf16.mxu0 %v1429
  %1730 = vmatpush1.bf16.msra.mxu0 %v1428
  %1731 = vmatprep.subr.bf16.mxu0 %v1431
  %1732 = vmatpush1.bf16.msra.mxu0 %v1430
  %1733 = vmatprep.subr.bf16.mxu0 %v1433
  %1734 = vmatpush1.bf16.msra.mxu0 %v1432
  %1735 = vmatprep.subr.bf16.mxu0 %v1435
  %1736 = vmatpush1.bf16.msra.mxu0 %v1434
  %1737 = vmatprep.subr.bf16.mxu0 %v1437
  %1738 = vmatpush1.bf16.msra.mxu0 %v1436
  %1739 = vmatprep.subr.bf16.mxu0 %v1439
  %1740 = vmatpush1.bf16.msra.mxu0 %v1438
  %1741 = vmatprep.subr.bf16.mxu0 %v1441
  %1742 = vmatpush1.bf16.msra.mxu0 %v1440
  %1743 = vmatprep.subr.bf16.mxu0 %v1443
  %1744 = vmatpush1.bf16.msra.mxu0 %v1442
  %1745 = vmatprep.subr.bf16.mxu0 %v1445
  %1746 = vmatpush1.bf16.msra.mxu0 %v1444
  %1747 = vmatprep.subr.bf16.mxu0 %v1447
  %1748 = vmatpush1.bf16.msra.mxu0 %v1446
  %1749 = vmatprep.subr.bf16.mxu0 %v1449
  %1750 = vmatpush1.bf16.msra.mxu0 %v1448
  %1751 = vmatprep.subr.bf16.mxu0 %v1451
  %1752 = vmatpush1.bf16.msra.mxu0 %v1450
  %1753 = vmatprep.subr.bf16.mxu0 %v1453
  %1754 = vmatpush1.bf16.msra.mxu0 %v1452
  %1755 = vmatprep.subr.bf16.mxu0 %v1455
  %1756 = vmatpush1.bf16.msra.mxu0 %v1454
  %1757 = vmatprep.subr.bf16.mxu0 %v1457
  %1758 = vmatpush1.bf16.msra.mxu0 %v1456
  %1759 = vmatprep.subr.bf16.mxu0 %v1459
  %1760 = vmatpush1.bf16.msra.mxu0 %v1458
  %1761 = vmatprep.mubr.bf16.mxu0 %v1532
  %1762 = vmatmul.mubr.bf16.gmra.mrb[0].mxu0 %v1531
  %v1763 = vpop.f32.mrb[0].mxu0
  %v1764 = vadd.f32 %v1713, %v1763
  %v1765 = vpop.f32.mrb[0].mxu0
  %v1766 = vadd.f32 %v1715, %v1765
  %v1767 = vpop.f32.mrb[0].mxu0
  %v1768 = vadd.f32 %v1717, %v1767
  %v1769 = vpop.f32.mrb[0].mxu0
  %v1770 = vadd.f32 %v1719, %v1769
  %1771 = vmatprep.mubr.bf16.mxu0 %v1542
  %1772 = vmatmul.mubr.bf16.gmra.mrb[0].mxu0 %v1541
  %v1773 = vpop.f32.mrb[0].mxu0
  %v1774 = vadd.f32 %v1723, %v1773
  %v1775 = vpop.f32.mrb[0].mxu0
  %v1776 = vadd.f32 %v1725, %v1775
  %v1777 = vpop.f32.mrb[0].mxu0
  %v1778 = vpop.f32.mrb[0].mxu0
  %1779 = vdwg.mxu0
  %1780 = vmatprep.subr.bf16.mxu0 %v1461
  %1781 = vmatpush1.bf16.msra.mxu0 %v1460
  %1782 = vmatprep.subr.bf16.mxu0 %v1463
  %1783 = vmatpush1.bf16.msra.mxu0 %v1462
  %1784 = vmatprep.subr.bf16.mxu0 %v1465
  %1785 = vmatpush1.bf16.msra.mxu0 %v1464
  %1786 = vmatprep.subr.bf16.mxu0 %v1467
  %1787 = vmatpush1.bf16.msra.mxu0 %v1466
  %1788 = vmatprep.subr.bf16.mxu0 %v1469
  %1789 = vmatpush1.bf16.msra.mxu0 %v1468
  %1790 = vmatprep.subr.bf16.mxu0 %v1471
  %1791 = vmatpush1.bf16.msra.mxu0 %v1470
  %1792 = vmatprep.subr.bf16.mxu0 %v1473
  %1793 = vmatpush1.bf16.msra.mxu0 %v1472
  %1794 = vmatprep.subr.bf16.mxu0 %v1475
  %1795 = vmatpush1.bf16.msra.mxu0 %v1474
  %1796 = vmatprep.subr.bf16.mxu0 %v1477
  %1797 = vmatpush1.bf16.msra.mxu0 %v1476
  %1798 = vmatprep.subr.bf16.mxu0 %v1574
  %1799 = vmatpush1.bf16.msra.mxu0 %v1571
  %1800 = vmatprep.subr.bf16.mxu0 0
  %1801 = vmatpush1.bf16.msra.mxu0 0
  %1802 = vmatprep.subr.bf16.mxu0 0
  %1803 = vmatpush1.bf16.msra.mxu0 0
  %1804 = vmatprep.subr.bf16.mxu0 0
  %1805 = vmatpush1.bf16.msra.mxu0 0
  %1806 = vmatprep.subr.bf16.mxu0 0
  %1807 = vmatpush1.bf16.msra.mxu0 0
  %1808 = vmatprep.subr.bf16.mxu0 0
  %1809 = vmatpush1.bf16.msra.mxu0 0
  %1810 = vmatprep.subr.bf16.mxu0 0
  %1811 = vmatpush1.bf16.msra.mxu0 0
  %1812 = vmatprep.mubr.bf16.mxu0 %v1565
  %1813 = vmatmul.mubr.bf16.gmra.mrb[0].mxu0 %v1533
  %v1814 = vpop.f32.mrb[0].mxu0
  %v1815 = vadd.f32 %v1764, %v1814
  %v1816 = vpop.f32.mrb[0].mxu0
  %v1817 = vadd.f32 %v1766, %v1816
  %v1818 = vpop.f32.mrb[0].mxu0
  %v1819 = vadd.f32 %v1768, %v1818
  %v1820 = vpop.f32.mrb[0].mxu0
  %v1821 = vadd.f32 %v1770, %v1820
  %1822 = vmatprep.mubr.bf16.mxu0 %v1568
  %1823 = vmatmul.mubr.bf16.gmra.mrb[0].mxu0 %v1543
  %v1824 = vpop.f32.mrb[0].mxu0
  %v1825 = vadd.f32 %v1774, %v1824
  %v1826 = vpop.f32.mrb[0].mxu0
  %v1827 = vadd.f32 %v1776, %v1826
  %v1828 = vpop.f32.mrb[0].mxu0
  %v1829 = vpop.f32.mrb[0].mxu0
  %1830 = vdwg.mxu0
  %v1831 = vunpack.c.l.bf16 %v1317
  %v1832 = vunpack.c.h.bf16 %v1317
  %v1833 = vunpack.c.l.bf16 %v1318
  %v1834 = vunpack.c.h.bf16 %v1318
  %v1835 = vunpack.c.l.bf16 %v1319
  %v1836 = vunpack.c.h.bf16 %v1319
  %v1837 = vunpack.c.l.bf16 %v1320
  %v1838 = vunpack.c.h.bf16 %v1320
  %v1839 = vunpack.c.l.bf16 %v1321
  %v1840 = vunpack.c.h.bf16 %v1321
  %v1841 = vunpack.c.l.bf16 %v1322
  %v1842 = vunpack.c.h.bf16 %v1322
  %v1843 = vunpack.c.l.bf16 %v1323
  %v1844 = vunpack.c.h.bf16 %v1323
  %v1845 = vunpack.c.l.bf16 %v1324
  %v1846 = vunpack.c.h.bf16 %v1324
  %v1847 = vunpack.c.l.bf16 %v1325
  %v1848 = vunpack.c.h.bf16 %v1325
  %v1849 = vunpack.c.l.bf16 %v1326
  %v1850 = vunpack.c.h.bf16 %v1326
  %v1851 = vunpack.c.l.bf16 %v1327
  %v1852 = vunpack.c.h.bf16 %v1327
  %v1853 = vunpack.c.l.bf16 %v1328
  %v1854 = vunpack.c.h.bf16 %v1328
  %v1855 = vunpack.c.l.bf16 %v1329
  %v1856 = vunpack.c.h.bf16 %v1329
  %v1857 = vunpack.c.l.bf16 %v1330
  %v1858 = vunpack.c.h.bf16 %v1330
  %v1859 = vunpack.c.l.bf16 %v1331
  %v1860 = vunpack.c.h.bf16 %v1331
  %v1861 = vmul.f32 %v581, %v581
  %v1862 = vmul.f32 %v583, %v583
  %v1863 = vmul.f32 %v585, %v585
  %v1864 = vmul.f32 %v587, %v587
  %v1865 = vmul.f32 %v591, %v591
  %v1866 = vmul.f32 %v593, %v593
  %v1867 = vmul.f32 %v595, %v595
  %v1868 = vmul.f32 %v597, %v597
  %v1869 = vmul.f32 %v601, %v601
  %v1870 = vmul.f32 %v603, %v603
  %v1871 = vmul.f32 %v605, %v605
  %v1872 = vmul.f32 %v607, %v607
  %v1873 = vmul.f32 %v611, %v611
  %v1874 = vmul.f32 %v613, %v613
  %v1875 = vmul.f32 %v615, %v615
  %v1876 = vmul.f32 %v617, %v617
  %v1877 = vmul.f32 %v621, %v621
  %v1878 = vmul.f32 %v623, %v623
  %v1879 = vmul.f32 %v625, %v625
  %v1880 = vmul.f32 %v627, %v627
  %v1881 = vmul.f32 %v631, %v631
  %v1882 = vmul.f32 %v633, %v633
  %v1883 = vmul.f32 %v635, %v635
  %v1884 = vmul.f32 %v637, %v637
  %v1885 = vmul.f32 %v641, %v641
  %v1886 = vmul.f32 %v643, %v643
  %v1887 = vmul.f32 %v645, %v645
  %v1888 = vmul.f32 %v647, %v647
  %v1889 = vmul.f32 %v651, %v651
  %v1890 = vmul.f32 %v653, %v653
  %v1891 = vmul.f32 %v655, %v655
  %v1892 = vmul.f32 %v657, %v657
  %v1893 = vmul.f32 %v661, %v661
  %v1894 = vmul.f32 %v663, %v663
  %v1895 = vmul.f32 %v665, %v665
  %v1896 = vmul.f32 %v667, %v667
  %v1897 = vmul.f32 %v671, %v671
  %v1898 = vmul.f32 %v673, %v673
  %v1899 = vmul.f32 %v675, %v675
  %v1900 = vmul.f32 %v677, %v677
  %v1901 = vmul.f32 %v681, %v681
  %v1902 = vmul.f32 %v683, %v683
  %v1903 = vmul.f32 %v685, %v685
  %v1904 = vmul.f32 %v687, %v687
  %v1905 = vmul.f32 %v691, %v691
  %v1906 = vmul.f32 %v693, %v693
  %v1907 = vmul.f32 %v695, %v695
  %v1908 = vmul.f32 %v697, %v697
  %v1909 = vmul.f32 %v701, %v701
  %v1910 = vmul.f32 %v703, %v703
  %v1911 = vmul.f32 %v705, %v705
  %v1912 = vmul.f32 %v707, %v707
  %v1913 = vmul.f32 %v711, %v711
  %v1914 = vmul.f32 %v713, %v713
  %v1915 = vmul.f32 %v715, %v715
  %v1916 = vmul.f32 %v717, %v717
  %v1917 = vmul.f32 %v721, %v721
  %v1918 = vmul.f32 %v723, %v723
  %v1919 = vmul.f32 %v725, %v725
  %v1920 = vmul.f32 %v727, %v727
  %v1921 = vmul.f32 %v731, %v731
  %v1922 = vmul.f32 %v733, %v733
  %v1923 = vmul.f32 %v735, %v735
  %v1924 = vmul.f32 %v737, %v737
  %v1925 = vmul.f32 %v741, %v741
  %v1926 = vmul.f32 %v743, %v743
  %v1927 = vmul.f32 %v745, %v745
  %v1928 = vmul.f32 %v747, %v747
  %v1929 = vmul.f32 %v751, %v751
  %v1930 = vmul.f32 %v753, %v753
  %v1931 = vmul.f32 %v755, %v755
  %v1932 = vmul.f32 %v757, %v757
  %v1933 = vmul.f32 %v761, %v761
  %v1934 = vmul.f32 %v763, %v763
  %v1935 = vmul.f32 %v765, %v765
  %v1936 = vmul.f32 %v767, %v767
  %v1937 = vmul.f32 %v771, %v771
  %v1938 = vmul.f32 %v773, %v773
  %v1939 = vmul.f32 %v775, %v775
  %v1940 = vmul.f32 %v777, %v777
  %v1941 = vmul.f32 %v781, %v781
  %v1942 = vmul.f32 %v783, %v783
  %v1943 = vmul.f32 %v785, %v785
  %v1944 = vmul.f32 %v787, %v787
  %v1945 = vmul.f32 %v791, %v791
  %v1946 = vmul.f32 %v793, %v793
  %v1947 = vmul.f32 %v795, %v795
  %v1948 = vmul.f32 %v797, %v797
  %v1949 = vmul.f32 %v801, %v801
  %v1950 = vmul.f32 %v803, %v803
  %v1951 = vmul.f32 %v805, %v805
  %v1952 = vmul.f32 %v807, %v807
  %v1953 = vmul.f32 %v811, %v811
  %v1954 = vmul.f32 %v813, %v813
  %v1955 = vmul.f32 %v815, %v815
  %v1956 = vmul.f32 %v817, %v817
  %v1957 = vmul.f32 %v821, %v821
  %v1958 = vmul.f32 %v823, %v823
  %v1959 = vmul.f32 %v825, %v825
  %v1960 = vmul.f32 %v827, %v827
  %v1961 = vmul.f32 %v831, %v831
  %v1962 = vmul.f32 %v833, %v833
  %v1963 = vmul.f32 %v835, %v835
  %v1964 = vmul.f32 %v837, %v837
  %v1965 = vmul.f32 %v841, %v841
  %v1966 = vmul.f32 %v843, %v843
  %v1967 = vmul.f32 %v845, %v845
  %v1968 = vmul.f32 %v847, %v847
  %v1969 = vmul.f32 %v851, %v851
  %v1970 = vmul.f32 %v853, %v853
  %v1971 = vmul.f32 %v855, %v855
  %v1972 = vmul.f32 %v857, %v857
  %v1973 = vmul.f32 %v861, %v861
  %v1974 = vmul.f32 %v863, %v863
  %v1975 = vmul.f32 %v865, %v865
  %v1976 = vmul.f32 %v867, %v867
  %v1977 = vmul.f32 %v871, %v871
  %v1978 = vmul.f32 %v873, %v873
  %v1979 = vmul.f32 %v875, %v875
  %v1980 = vmul.f32 %v877, %v877
  %v1981 = vmul.f32 %v881, %v881
  %v1982 = vmul.f32 %v883, %v883
  %v1983 = vmul.f32 %v885, %v885
  %v1984 = vmul.f32 %v887, %v887
  %v1985 = vmul.f32 %v891, %v891
  %v1986 = vmul.f32 %v893, %v893
  %v1987 = vmul.f32 %v895, %v895
  %v1988 = vmul.f32 %v897, %v897
  %v1989 = vmul.f32 %v901, %v901
  %v1990 = vmul.f32 %v903, %v903
  %v1991 = vmul.f32 %v905, %v905
  %v1992 = vmul.f32 %v907, %v907
  %v1993 = vmul.f32 %v911, %v911
  %v1994 = vmul.f32 %v913, %v913
  %v1995 = vmul.f32 %v915, %v915
  %v1996 = vmul.f32 %v917, %v917
  %v1997 = vmul.f32 %v921, %v921
  %v1998 = vmul.f32 %v923, %v923
  %v1999 = vmul.f32 %v925, %v925
  %v2000 = vmul.f32 %v927, %v927
  %v2001 = vmul.f32 %v931, %v931
  %v2002 = vmul.f32 %v933, %v933
  %v2003 = vmul.f32 %v935, %v935
  %v2004 = vmul.f32 %v937, %v937
  %v2005 = vmul.f32 %v941, %v941
  %v2006 = vmul.f32 %v943, %v943
  %v2007 = vmul.f32 %v945, %v945
  %v2008 = vmul.f32 %v947, %v947
  %v2009 = vmul.f32 %v951, %v951
  %v2010 = vmul.f32 %v953, %v953
  %v2011 = vmul.f32 %v955, %v955
  %v2012 = vmul.f32 %v957, %v957
  %v2013 = vmul.f32 %v961, %v961
  %v2014 = vmul.f32 %v963, %v963
  %v2015 = vmul.f32 %v965, %v965
  %v2016 = vmul.f32 %v967, %v967
  %v2017 = vmul.f32 %v971, %v971
  %v2018 = vmul.f32 %v973, %v973
  %v2019 = vmul.f32 %v975, %v975
  %v2020 = vmul.f32 %v977, %v977
  %v2021 = vmul.f32 %v981, %v981
  %v2022 = vmul.f32 %v983, %v983
  %v2023 = vmul.f32 %v985, %v985
  %v2024 = vmul.f32 %v987, %v987
  %v2025 = vmul.f32 %v991, %v991
  %v2026 = vmul.f32 %v993, %v993
  %v2027 = vmul.f32 %v995, %v995
  %v2028 = vmul.f32 %v997, %v997
  %v2029 = vmul.f32 %v1001, %v1001
  %v2030 = vmul.f32 %v1003, %v1003
  %v2031 = vmul.f32 %v1005, %v1005
  %v2032 = vmul.f32 %v1007, %v1007
  %v2033 = vmul.f32 %v1011, %v1011
  %v2034 = vmul.f32 %v1013, %v1013
  %v2035 = vmul.f32 %v1015, %v1015
  %v2036 = vmul.f32 %v1017, %v1017
  %v2037 = vmul.f32 %v1021, %v1021
  %v2038 = vmul.f32 %v1023, %v1023
  %v2039 = vmul.f32 %v1025, %v1025
  %v2040 = vmul.f32 %v1027, %v1027
  %v2041 = vmul.f32 %v1031, %v1031
  %v2042 = vmul.f32 %v1033, %v1033
  %v2043 = vmul.f32 %v1035, %v1035
  %v2044 = vmul.f32 %v1037, %v1037
  %v2045 = vmul.f32 %v1041, %v1041
  %v2046 = vmul.f32 %v1043, %v1043
  %v2047 = vmul.f32 %v1045, %v1045
  %v2048 = vmul.f32 %v1047, %v1047
  %v2049 = vmul.f32 %v1051, %v1051
  %v2050 = vmul.f32 %v1053, %v1053
  %v2051 = vmul.f32 %v1055, %v1055
  %v2052 = vmul.f32 %v1057, %v1057
  %v2053 = vmul.f32 %v1061, %v1061
  %v2054 = vmul.f32 %v1063, %v1063
  %v2055 = vmul.f32 %v1065, %v1065
  %v2056 = vmul.f32 %v1067, %v1067
  %v2057 = vmul.f32 %v1071, %v1071
  %v2058 = vmul.f32 %v1073, %v1073
  %v2059 = vmul.f32 %v1075, %v1075
  %v2060 = vmul.f32 %v1077, %v1077
  %v2061 = vmul.f32 %v1081, %v1081
  %v2062 = vmul.f32 %v1083, %v1083
  %v2063 = vmul.f32 %v1085, %v1085
  %v2064 = vmul.f32 %v1087, %v1087
  %v2065 = vmul.f32 %v1091, %v1091
  %v2066 = vmul.f32 %v1093, %v1093
  %v2067 = vmul.f32 %v1095, %v1095
  %v2068 = vmul.f32 %v1097, %v1097
  %v2069 = vmul.f32 %v1101, %v1101
  %v2070 = vmul.f32 %v1103, %v1103
  %v2071 = vmul.f32 %v1105, %v1105
  %v2072 = vmul.f32 %v1107, %v1107
  %v2073 = vmul.f32 %v1111, %v1111
  %v2074 = vmul.f32 %v1113, %v1113
  %v2075 = vmul.f32 %v1115, %v1115
  %v2076 = vmul.f32 %v1117, %v1117
  %v2077 = vmul.f32 %v1121, %v1121
  %v2078 = vmul.f32 %v1123, %v1123
  %v2079 = vmul.f32 %v1125, %v1125
  %v2080 = vmul.f32 %v1127, %v1127
  %v2081 = vmul.f32 %v1131, %v1131
  %v2082 = vmul.f32 %v1133, %v1133
  %v2083 = vmul.f32 %v1135, %v1135
  %v2084 = vmul.f32 %v1137, %v1137
  %v2085 = vmul.f32 %v1141, %v1141
  %v2086 = vmul.f32 %v1143, %v1143
  %v2087 = vmul.f32 %v1145, %v1145
  %v2088 = vmul.f32 %v1147, %v1147
  %v2089 = vmul.f32 %v1151, %v1151
  %v2090 = vmul.f32 %v1153, %v1153
  %v2091 = vmul.f32 %v1155, %v1155
  %v2092 = vmul.f32 %v1157, %v1157
  %v2093 = vmul.f32 %v1161, %v1161
  %v2094 = vmul.f32 %v1163, %v1163
  %v2095 = vmul.f32 %v1165, %v1165
  %v2096 = vmul.f32 %v1167, %v1167
  %v2097 = vmul.f32 %v1171, %v1171
  %v2098 = vmul.f32 %v1173, %v1173
  %v2099 = vmul.f32 %v1175, %v1175
  %v2100 = vmul.f32 %v1177, %v1177
  %v2101 = vmul.f32 %v1181, %v1181
  %v2102 = vmul.f32 %v1183, %v1183
  %v2103 = vmul.f32 %v1185, %v1185
  %v2104 = vmul.f32 %v1187, %v1187
  %v2105 = vmul.f32 %v1191, %v1191
  %v2106 = vmul.f32 %v1193, %v1193
  %v2107 = vmul.f32 %v1195, %v1195
  %v2108 = vmul.f32 %v1197, %v1197
  %v2109 = vmul.f32 %v1201, %v1201
  %v2110 = vmul.f32 %v1203, %v1203
  %v2111 = vmul.f32 %v1205, %v1205
  %v2112 = vmul.f32 %v1207, %v1207
  %v2113 = vmul.f32 %v1211, %v1211
  %v2114 = vmul.f32 %v1213, %v1213
  %v2115 = vmul.f32 %v1215, %v1215
  %v2116 = vmul.f32 %v1217, %v1217
  %v2117 = vmul.f32 %v1221, %v1221
  %v2118 = vmul.f32 %v1223, %v1223
  %v2119 = vmul.f32 %v1225, %v1225
  %v2120 = vmul.f32 %v1227, %v1227
  %v2121 = vmul.f32 %v1231, %v1231
  %v2122 = vmul.f32 %v1233, %v1233
  %v2123 = vmul.f32 %v1235, %v1235
  %v2124 = vmul.f32 %v1237, %v1237
  %v2125 = vmul.f32 %v1241, %v1241
  %v2126 = vmul.f32 %v1243, %v1243
  %v2127 = vmul.f32 %v1245, %v1245
  %v2128 = vmul.f32 %v1247, %v1247
  %v2129 = vmul.f32 %v1251, %v1251
  %v2130 = vmul.f32 %v1253, %v1253
  %v2131 = vmul.f32 %v1255, %v1255
  %v2132 = vmul.f32 %v1257, %v1257
  %v2133 = vmul.f32 %v1261, %v1261
  %v2134 = vmul.f32 %v1263, %v1263
  %v2135 = vmul.f32 %v1265, %v1265
  %v2136 = vmul.f32 %v1267, %v1267
  %v2137 = vmul.f32 %v1271, %v1271
  %v2138 = vmul.f32 %v1273, %v1273
  %v2139 = vmul.f32 %v1275, %v1275
  %v2140 = vmul.f32 %v1277, %v1277
  %v2141 = vmul.f32 %v1281, %v1281
  %v2142 = vmul.f32 %v1283, %v1283
  %v2143 = vmul.f32 %v1285, %v1285
  %v2144 = vmul.f32 %v1287, %v1287
  %v2145 = vmul.f32 %v1291, %v1291
  %v2146 = vmul.f32 %v1293, %v1293
  %v2147 = vmul.f32 %v1295, %v1295
  %v2148 = vmul.f32 %v1297, %v1297
  %v2149 = vmul.f32 %v1301, %v1301
  %v2150 = vmul.f32 %v1303, %v1303
  %v2151 = vmul.f32 %v1305, %v1305
  %v2152 = vmul.f32 %v1307, %v1307
  %v2153 = vmul.f32 %v1311, %v1311
  %v2154 = vmul.f32 %v1313, %v1313
  %v2156 = vsel %vm1563, %v1840, 0
  %v2159 = vsel %vm1563, %v1850, 0
  %v2162 = vsel %vm1563, %v1860, 0
  %2164 = vmatprep.subr.mxu0 %v1862
  %2165 = vmatpush1.msra.mxu0 %v1861
  %2166 = vmatprep.subr.mxu0 %v1864
  %2167 = vmatpush1.msra.mxu0 %v1863
  %2168 = vmatprep.subr.mxu0 %v1866
  %2169 = vmatpush1.msra.mxu0 %v1865
  %2170 = vmatprep.subr.mxu0 %v1868
  %2171 = vmatpush1.msra.mxu0 %v1867
  %2172 = vmatprep.subr.mxu0 %v1870
  %2173 = vmatpush1.msra.mxu0 %v1869
  %2174 = vmatprep.subr.mxu0 %v1872
  %2175 = vmatpush1.msra.mxu0 %v1871
  %2176 = vmatprep.subr.mxu0 %v1874
  %2177 = vmatpush1.msra.mxu0 %v1873
  %2178 = vmatprep.subr.mxu0 %v1876
  %2179 = vmatpush1.msra.mxu0 %v1875
  %2180 = vmatprep.subr.mxu0 %v1878
  %2181 = vmatpush1.msra.mxu0 %v1877
  %2182 = vmatprep.subr.mxu0 %v1880
  %2183 = vmatpush1.msra.mxu0 %v1879
  %2184 = vmatprep.subr.mxu0 %v1882
  %2185 = vmatpush1.msra.mxu0 %v1881
  %2186 = vmatprep.subr.mxu0 %v1884
  %2187 = vmatpush1.msra.mxu0 %v1883
  %2188 = vmatprep.subr.mxu0 %v1886
  %2189 = vmatpush1.msra.mxu0 %v1885
  %2190 = vmatprep.subr.mxu0 %v1888
  %2191 = vmatpush1.msra.mxu0 %v1887
  %2192 = vmatprep.subr.mxu0 %v1890
  %2193 = vmatpush1.msra.mxu0 %v1889
  %2194 = vmatprep.subr.mxu0 %v1892
  %2195 = vmatpush1.msra.mxu0 %v1891
  %2196 = vmatprep.subr.mxu0 %v1894
  %2197 = vmatpush1.msra.mxu0 %v1893
  %2198 = vmatprep.subr.mxu0 %v1896
  %2199 = vmatpush1.msra.mxu0 %v1895
  %2200 = vmatprep.subr.mxu0 %v1898
  %2201 = vmatpush1.msra.mxu0 %v1897
  %2202 = vmatprep.subr.mxu0 %v1900
  %2203 = vmatpush1.msra.mxu0 %v1899
  %2204 = vmatprep.subr.mxu0 %v1902
  %2205 = vmatpush1.msra.mxu0 %v1901
  %2206 = vmatprep.subr.mxu0 %v1904
  %2207 = vmatpush1.msra.mxu0 %v1903
  %2208 = vmatprep.subr.mxu0 %v1906
  %2209 = vmatpush1.msra.mxu0 %v1905
  %2210 = vmatprep.subr.mxu0 %v1908
  %2211 = vmatpush1.msra.mxu0 %v1907
  %2212 = vmatprep.subr.mxu0 %v1910
  %2213 = vmatpush1.msra.mxu0 %v1909
  %2214 = vmatprep.subr.mxu0 %v1912
  %2215 = vmatpush1.msra.mxu0 %v1911
  %2216 = vmatprep.subr.mxu0 %v1914
  %2217 = vmatpush1.msra.mxu0 %v1913
  %2218 = vmatprep.subr.mxu0 %v1916
  %2219 = vmatpush1.msra.mxu0 %v1915
  %2220 = vmatprep.subr.mxu0 %v1918
  %2221 = vmatpush1.msra.mxu0 %v1917
  %2222 = vmatprep.subr.mxu0 %v1920
  %2223 = vmatpush1.msra.mxu0 %v1919
  %2224 = vmatprep.subr.mxu0 %v1922
  %2225 = vmatpush1.msra.mxu0 %v1921
  %2226 = vmatprep.subr.mxu0 %v1924
  %2227 = vmatpush1.msra.mxu0 %v1923
  %2228 = vmatprep.mubr.f32.mxu0 %v1832
  %2229 = vmatmul.mubr.f32.gmra.mrb[0].mxu0 %v1831
  %v2230 = vpop.f32.mrb[0].mxu0
  %v2231 = vadd.f32 0.0, %v2230
  %v2232 = vpop.f32.mrb[0].mxu0
  %v2233 = vadd.f32 0.0, %v2232
  %2234 = vmatprep.mubr.f32.mxu0 %v1842
  %2235 = vmatmul.mubr.f32.gmra.mrb[0].mxu0 %v1841
  %v2236 = vpop.f32.mrb[0].mxu0
  %v2237 = vadd.f32 0.0, %v2236
  %v2238 = vpop.f32.mrb[0].mxu0
  %v2239 = vadd.f32 0.0, %v2238
  %2240 = vmatprep.mubr.f32.mxu0 %v1852
  %2241 = vmatmul.mubr.f32.gmra.mrb[0].mxu0 %v1851
  %v2242 = vpop.f32.mrb[0].mxu0
  %v2243 = vadd.f32 0.0, %v2242
  %v2244 = vpop.f32.mrb[0].mxu0
  %v2245 = vadd.f32 0.0, %v2244
  %2246 = vdwg.mxu0
  %2247 = vmatprep.subr.mxu0 %v1926
  %2248 = vmatpush1.msra.mxu0 %v1925
  %2249 = vmatprep.subr.mxu0 %v1928
  %2250 = vmatpush1.msra.mxu0 %v1927
  %2251 = vmatprep.subr.mxu0 %v1930
  %2252 = vmatpush1.msra.mxu0 %v1929
  %2253 = vmatprep.subr.mxu0 %v1932
  %2254 = vmatpush1.msra.mxu0 %v1931
  %2255 = vmatprep.subr.mxu0 %v1934
  %2256 = vmatpush1.msra.mxu0 %v1933
  %2257 = vmatprep.subr.mxu0 %v1936
  %2258 = vmatpush1.msra.mxu0 %v1935
  %2259 = vmatprep.subr.mxu0 %v1938
  %2260 = vmatpush1.msra.mxu0 %v1937
  %2261 = vmatprep.subr.mxu0 %v1940
  %2262 = vmatpush1.msra.mxu0 %v1939
  %2263 = vmatprep.subr.mxu0 %v1942
  %2264 = vmatpush1.msra.mxu0 %v1941
  %2265 = vmatprep.subr.mxu0 %v1944
  %2266 = vmatpush1.msra.mxu0 %v1943
  %2267 = vmatprep.subr.mxu0 %v1946
  %2268 = vmatpush1.msra.mxu0 %v1945
  %2269 = vmatprep.subr.mxu0 %v1948
  %2270 = vmatpush1.msra.mxu0 %v1947
  %2271 = vmatprep.subr.mxu0 %v1950
  %2272 = vmatpush1.msra.mxu0 %v1949
  %2273 = vmatprep.subr.mxu0 %v1952
  %2274 = vmatpush1.msra.mxu0 %v1951
  %2275 = vmatprep.subr.mxu0 %v1954
  %2276 = vmatpush1.msra.mxu0 %v1953
  %2277 = vmatprep.subr.mxu0 %v1956
  %2278 = vmatpush1.msra.mxu0 %v1955
  %2279 = vmatprep.subr.mxu0 %v1958
  %2280 = vmatpush1.msra.mxu0 %v1957
  %2281 = vmatprep.subr.mxu0 %v1960
  %2282 = vmatpush1.msra.mxu0 %v1959
  %2283 = vmatprep.subr.mxu0 %v1962
  %2284 = vmatpush1.msra.mxu0 %v1961
  %2285 = vmatprep.subr.mxu0 %v1964
  %2286 = vmatpush1.msra.mxu0 %v1963
  %2287 = vmatprep.subr.mxu0 %v1966
  %2288 = vmatpush1.msra.mxu0 %v1965
  %2289 = vmatprep.subr.mxu0 %v1968
  %2290 = vmatpush1.msra.mxu0 %v1967
  %2291 = vmatprep.subr.mxu0 %v1970
  %2292 = vmatpush1.msra.mxu0 %v1969
  %2293 = vmatprep.subr.mxu0 %v1972
  %2294 = vmatpush1.msra.mxu0 %v1971
  %2295 = vmatprep.subr.mxu0 %v1974
  %2296 = vmatpush1.msra.mxu0 %v1973
  %2297 = vmatprep.subr.mxu0 %v1976
  %2298 = vmatpush1.msra.mxu0 %v1975
  %2299 = vmatprep.subr.mxu0 %v1978
  %2300 = vmatpush1.msra.mxu0 %v1977
  %2301 = vmatprep.subr.mxu0 %v1980
  %2302 = vmatpush1.msra.mxu0 %v1979
  %2303 = vmatprep.subr.mxu0 %v1982
  %2304 = vmatpush1.msra.mxu0 %v1981
  %2305 = vmatprep.subr.mxu0 %v1984
  %2306 = vmatpush1.msra.mxu0 %v1983
  %2307 = vmatprep.subr.mxu0 %v1986
  %2308 = vmatpush1.msra.mxu0 %v1985
  %2309 = vmatprep.subr.mxu0 %v1988
  %2310 = vmatpush1.msra.mxu0 %v1987
  %2311 = vmatprep.mubr.f32.mxu0 %v1834
  %2312 = vmatmul.mubr.f32.gmra.mrb[0].mxu0 %v1833
  %v2313 = vpop.f32.mrb[0].mxu0
  %v2314 = vadd.f32 %v2231, %v2313
  %v2315 = vpop.f32.mrb[0].mxu0
  %v2316 = vadd.f32 %v2233, %v2315
  %2317 = vmatprep.mubr.f32.mxu0 %v1844
  %2318 = vmatmul.mubr.f32.gmra.mrb[0].mxu0 %v1843
  %v2319 = vpop.f32.mrb[0].mxu0
  %v2320 = vadd.f32 %v2237, %v2319
  %v2321 = vpop.f32.mrb[0].mxu0
  %v2322 = vadd.f32 %v2239, %v2321
  %2323 = vmatprep.mubr.f32.mxu0 %v1854
  %2324 = vmatmul.mubr.f32.gmra.mrb[0].mxu0 %v1853
  %v2325 = vpop.f32.mrb[0].mxu0
  %v2326 = vadd.f32 %v2243, %v2325
  %v2327 = vpop.f32.mrb[0].mxu0
  %v2328 = vadd.f32 %v2245, %v2327
  %2329 = vdwg.mxu0
  %2330 = vmatprep.subr.mxu0 %v1990
  %2331 = vmatpush1.msra.mxu0 %v1989
  %2332 = vmatprep.subr.mxu0 %v1992
  %2333 = vmatpush1.msra.mxu0 %v1991
  %2334 = vmatprep.subr.mxu0 %v1994
  %2335 = vmatpush1.msra.mxu0 %v1993
  %2336 = vmatprep.subr.mxu0 %v1996
  %2337 = vmatpush1.msra.mxu0 %v1995
  %2338 = vmatprep.subr.mxu0 %v1998
  %2339 = vmatpush1.msra.mxu0 %v1997
  %2340 = vmatprep.subr.mxu0 %v2000
  %2341 = vmatpush1.msra.mxu0 %v1999
  %2342 = vmatprep.subr.mxu0 %v2002
  %2343 = vmatpush1.msra.mxu0 %v2001
  %2344 = vmatprep.subr.mxu0 %v2004
  %2345 = vmatpush1.msra.mxu0 %v2003
  %2346 = vmatprep.subr.mxu0 %v2006
  %2347 = vmatpush1.msra.mxu0 %v2005
  %2348 = vmatprep.subr.mxu0 %v2008
  %2349 = vmatpush1.msra.mxu0 %v2007
  %2350 = vmatprep.subr.mxu0 %v2010
  %2351 = vmatpush1.msra.mxu0 %v2009
  %2352 = vmatprep.subr.mxu0 %v2012
  %2353 = vmatpush1.msra.mxu0 %v2011
  %2354 = vmatprep.subr.mxu0 %v2014
  %2355 = vmatpush1.msra.mxu0 %v2013
  %2356 = vmatprep.subr.mxu0 %v2016
  %2357 = vmatpush1.msra.mxu0 %v2015
  %2358 = vmatprep.subr.mxu0 %v2018
  %2359 = vmatpush1.msra.mxu0 %v2017
  %2360 = vmatprep.subr.mxu0 %v2020
  %2361 = vmatpush1.msra.mxu0 %v2019
  %2362 = vmatprep.subr.mxu0 %v2022
  %2363 = vmatpush1.msra.mxu0 %v2021
  %2364 = vmatprep.subr.mxu0 %v2024
  %2365 = vmatpush1.msra.mxu0 %v2023
  %2366 = vmatprep.subr.mxu0 %v2026
  %2367 = vmatpush1.msra.mxu0 %v2025
  %2368 = vmatprep.subr.mxu0 %v2028
  %2369 = vmatpush1.msra.mxu0 %v2027
  %2370 = vmatprep.subr.mxu0 %v2030
  %2371 = vmatpush1.msra.mxu0 %v2029
  %2372 = vmatprep.subr.mxu0 %v2032
  %2373 = vmatpush1.msra.mxu0 %v2031
  %2374 = vmatprep.subr.mxu0 %v2034
  %2375 = vmatpush1.msra.mxu0 %v2033
  %2376 = vmatprep.subr.mxu0 %v2036
  %2377 = vmatpush1.msra.mxu0 %v2035
  %2378 = vmatprep.subr.mxu0 %v2038
  %2379 = vmatpush1.msra.mxu0 %v2037
  %2380 = vmatprep.subr.mxu0 %v2040
  %2381 = vmatpush1.msra.mxu0 %v2039
  %2382 = vmatprep.subr.mxu0 %v2042
  %2383 = vmatpush1.msra.mxu0 %v2041
  %2384 = vmatprep.subr.mxu0 %v2044
  %2385 = vmatpush1.msra.mxu0 %v2043
  %2386 = vmatprep.subr.mxu0 %v2046
  %2387 = vmatpush1.msra.mxu0 %v2045
  %2388 = vmatprep.subr.mxu0 %v2048
  %2389 = vmatpush1.msra.mxu0 %v2047
  %2390 = vmatprep.subr.mxu0 %v2050
  %2391 = vmatpush1.msra.mxu0 %v2049
  %2392 = vmatprep.subr.mxu0 %v2052
  %2393 = vmatpush1.msra.mxu0 %v2051
  %2394 = vmatprep.mubr.f32.mxu0 %v1836
  %2395 = vmatmul.mubr.f32.gmra.mrb[0].mxu0 %v1835
  %v2396 = vpop.f32.mrb[0].mxu0
  %v2397 = vadd.f32 %v2314, %v2396
  %v2398 = vpop.f32.mrb[0].mxu0
  %v2399 = vadd.f32 %v2316, %v2398
  %2400 = vmatprep.mubr.f32.mxu0 %v1846
  %2401 = vmatmul.mubr.f32.gmra.mrb[0].mxu0 %v1845
  %v2402 = vpop.f32.mrb[0].mxu0
  %v2403 = vadd.f32 %v2320, %v2402
  %v2404 = vpop.f32.mrb[0].mxu0
  %v2405 = vadd.f32 %v2322, %v2404
  %2406 = vmatprep.mubr.f32.mxu0 %v1856
  %2407 = vmatmul.mubr.f32.gmra.mrb[0].mxu0 %v1855
  %v2408 = vpop.f32.mrb[0].mxu0
  %v2409 = vadd.f32 %v2326, %v2408
  %v2410 = vpop.f32.mrb[0].mxu0
  %v2411 = vadd.f32 %v2328, %v2410
  %2412 = vdwg.mxu0
  %2413 = vmatprep.subr.mxu0 %v2054
  %2414 = vmatpush1.msra.mxu0 %v2053
  %2415 = vmatprep.subr.mxu0 %v2056
  %2416 = vmatpush1.msra.mxu0 %v2055
  %2417 = vmatprep.subr.mxu0 %v2058
  %2418 = vmatpush1.msra.mxu0 %v2057
  %2419 = vmatprep.subr.mxu0 %v2060
  %2420 = vmatpush1.msra.mxu0 %v2059
  %2421 = vmatprep.subr.mxu0 %v2062
  %2422 = vmatpush1.msra.mxu0 %v2061
  %2423 = vmatprep.subr.mxu0 %v2064
  %2424 = vmatpush1.msra.mxu0 %v2063
  %2425 = vmatprep.subr.mxu0 %v2066
  %2426 = vmatpush1.msra.mxu0 %v2065
  %2427 = vmatprep.subr.mxu0 %v2068
  %2428 = vmatpush1.msra.mxu0 %v2067
  %2429 = vmatprep.subr.mxu0 %v2070
  %2430 = vmatpush1.msra.mxu0 %v2069
  %2431 = vmatprep.subr.mxu0 %v2072
  %2432 = vmatpush1.msra.mxu0 %v2071
  %2433 = vmatprep.subr.mxu0 %v2074
  %2434 = vmatpush1.msra.mxu0 %v2073
  %2435 = vmatprep.subr.mxu0 %v2076
  %2436 = vmatpush1.msra.mxu0 %v2075
  %2437 = vmatprep.subr.mxu0 %v2078
  %2438 = vmatpush1.msra.mxu0 %v2077
  %2439 = vmatprep.subr.mxu0 %v2080
  %2440 = vmatpush1.msra.mxu0 %v2079
  %2441 = vmatprep.subr.mxu0 %v2082
  %2442 = vmatpush1.msra.mxu0 %v2081
  %2443 = vmatprep.subr.mxu0 %v2084
  %2444 = vmatpush1.msra.mxu0 %v2083
  %2445 = vmatprep.subr.mxu0 %v2086
  %2446 = vmatpush1.msra.mxu0 %v2085
  %2447 = vmatprep.subr.mxu0 %v2088
  %2448 = vmatpush1.msra.mxu0 %v2087
  %2449 = vmatprep.subr.mxu0 %v2090
  %2450 = vmatpush1.msra.mxu0 %v2089
  %2451 = vmatprep.subr.mxu0 %v2092
  %2452 = vmatpush1.msra.mxu0 %v2091
  %2453 = vmatprep.subr.mxu0 %v2094
  %2454 = vmatpush1.msra.mxu0 %v2093
  %2455 = vmatprep.subr.mxu0 %v2096
  %2456 = vmatpush1.msra.mxu0 %v2095
  %2457 = vmatprep.subr.mxu0 %v2098
  %2458 = vmatpush1.msra.mxu0 %v2097
  %2459 = vmatprep.subr.mxu0 %v2100
  %2460 = vmatpush1.msra.mxu0 %v2099
  %2461 = vmatprep.subr.mxu0 %v2102
  %2462 = vmatpush1.msra.mxu0 %v2101
  %2463 = vmatprep.subr.mxu0 %v2104
  %2464 = vmatpush1.msra.mxu0 %v2103
  %2465 = vmatprep.subr.mxu0 %v2106
  %2466 = vmatpush1.msra.mxu0 %v2105
  %2467 = vmatprep.subr.mxu0 %v2108
  %2468 = vmatpush1.msra.mxu0 %v2107
  %2469 = vmatprep.subr.mxu0 %v2110
  %2470 = vmatpush1.msra.mxu0 %v2109
  %2471 = vmatprep.subr.mxu0 %v2112
  %2472 = vmatpush1.msra.mxu0 %v2111
  %2473 = vmatprep.subr.mxu0 %v2114
  %2474 = vmatpush1.msra.mxu0 %v2113
  %2475 = vmatprep.subr.mxu0 %v2116
  %2476 = vmatpush1.msra.mxu0 %v2115
  %2477 = vmatprep.mubr.f32.mxu0 %v1838
  %2478 = vmatmul.mubr.f32.gmra.mrb[0].mxu0 %v1837
  %v2479 = vpop.f32.mrb[0].mxu0
  %v2480 = vadd.f32 %v2397, %v2479
  %v2481 = vpop.f32.mrb[0].mxu0
  %v2482 = vadd.f32 %v2399, %v2481
  %2483 = vmatprep.mubr.f32.mxu0 %v1848
  %2484 = vmatmul.mubr.f32.gmra.mrb[0].mxu0 %v1847
  %v2485 = vpop.f32.mrb[0].mxu0
  %v2486 = vadd.f32 %v2403, %v2485
  %v2487 = vpop.f32.mrb[0].mxu0
  %v2488 = vadd.f32 %v2405, %v2487
  %2489 = vmatprep.mubr.f32.mxu0 %v1858
  %2490 = vmatmul.mubr.f32.gmra.mrb[0].mxu0 %v1857
  %v2491 = vpop.f32.mrb[0].mxu0
  %v2492 = vadd.f32 %v2409, %v2491
  %v2493 = vpop.f32.mrb[0].mxu0
  %v2494 = vadd.f32 %v2411, %v2493
  %2495 = vdwg.mxu0
  %2496 = vmatprep.subr.mxu0 %v2118
  %2497 = vmatpush1.msra.mxu0 %v2117
  %2498 = vmatprep.subr.mxu0 %v2120
  %2499 = vmatpush1.msra.mxu0 %v2119
  %2500 = vmatprep.subr.mxu0 %v2122
  %2501 = vmatpush1.msra.mxu0 %v2121
  %2502 = vmatprep.subr.mxu0 %v2124
  %2503 = vmatpush1.msra.mxu0 %v2123
  %2504 = vmatprep.subr.mxu0 %v2126
  %2505 = vmatpush1.msra.mxu0 %v2125
  %2506 = vmatprep.subr.mxu0 %v2128
  %2507 = vmatpush1.msra.mxu0 %v2127
  %2508 = vmatprep.subr.mxu0 %v2130
  %2509 = vmatpush1.msra.mxu0 %v2129
  %2510 = vmatprep.subr.mxu0 %v2132
  %2511 = vmatpush1.msra.mxu0 %v2131
  %2512 = vmatprep.subr.mxu0 %v2134
  %2513 = vmatpush1.msra.mxu0 %v2133
  %2514 = vmatprep.subr.mxu0 %v2136
  %2515 = vmatpush1.msra.mxu0 %v2135
  %2516 = vmatprep.subr.mxu0 %v2138
  %2517 = vmatpush1.msra.mxu0 %v2137
  %2518 = vmatprep.subr.mxu0 %v2140
  %2519 = vmatpush1.msra.mxu0 %v2139
  %2520 = vmatprep.subr.mxu0 %v2142
  %2521 = vmatpush1.msra.mxu0 %v2141
  %2522 = vmatprep.subr.mxu0 %v2144
  %2523 = vmatpush1.msra.mxu0 %v2143
  %2524 = vmatprep.subr.mxu0 %v2146
  %2525 = vmatpush1.msra.mxu0 %v2145
  %2526 = vmatprep.subr.mxu0 %v2148
  %2527 = vmatpush1.msra.mxu0 %v2147
  %2528 = vmatprep.subr.mxu0 %v2150
  %2529 = vmatpush1.msra.mxu0 %v2149
  %2530 = vmatprep.subr.mxu0 %v2152
  %2531 = vmatpush1.msra.mxu0 %v2151
  %2532 = vmatprep.subr.mxu0 %v2154
  %2533 = vmatpush1.msra.mxu0 %v2153
  %2534 = vmatprep.subr.mxu0 0.0
  %2535 = vmatpush1.msra.mxu0 0.0
  %2536 = vmatprep.subr.mxu0 0.0
  %2537 = vmatpush1.msra.mxu0 0.0
  %2538 = vmatprep.subr.mxu0 0.0
  %2539 = vmatpush1.msra.mxu0 0.0
  %2540 = vmatprep.subr.mxu0 0.0
  %2541 = vmatpush1.msra.mxu0 0.0
  %2542 = vmatprep.subr.mxu0 0.0
  %2543 = vmatpush1.msra.mxu0 0.0
  %2544 = vmatprep.subr.mxu0 0.0
  %2545 = vmatpush1.msra.mxu0 0.0
  %2546 = vmatprep.subr.mxu0 0.0
  %2547 = vmatpush1.msra.mxu0 0.0
  %2548 = vmatprep.subr.mxu0 0.0
  %2549 = vmatpush1.msra.mxu0 0.0
  %2550 = vmatprep.subr.mxu0 0.0
  %2551 = vmatpush1.msra.mxu0 0.0
  %2552 = vmatprep.subr.mxu0 0.0
  %2553 = vmatpush1.msra.mxu0 0.0
  %2554 = vmatprep.subr.mxu0 0.0
  %2555 = vmatpush1.msra.mxu0 0.0
  %2556 = vmatprep.subr.mxu0 0.0
  %2557 = vmatpush1.msra.mxu0 0.0
  %2558 = vmatprep.subr.mxu0 0.0
  %2559 = vmatpush1.msra.mxu0 0.0
  %2560 = vmatprep.mubr.f32.mxu0 %v2156
  %2561 = vmatmul.mubr.f32.gmra.mrb[0].mxu0 %v1839
  %v2562 = vpop.f32.mrb[0].mxu0
  %v2563 = vadd.f32 %v2480, %v2562
  %v2564 = vpop.f32.mrb[0].mxu0
  %v2565 = vadd.f32 %v2482, %v2564
  %2566 = vmatprep.mubr.f32.mxu0 %v2159
  %2567 = vmatmul.mubr.f32.gmra.mrb[0].mxu0 %v1849
  %v2568 = vpop.f32.mrb[0].mxu0
  %v2569 = vadd.f32 %v2486, %v2568
  %v2570 = vpop.f32.mrb[0].mxu0
  %v2571 = vadd.f32 %v2488, %v2570
  %2572 = vmatprep.mubr.f32.mxu0 %v2162
  %2573 = vmatmul.mubr.f32.gmra.mrb[0].mxu0 %v1859
  %v2574 = vpop.f32.mrb[0].mxu0
  %v2575 = vadd.f32 %v2492, %v2574
  %v2576 = vpop.f32.mrb[0].mxu0
  %v2577 = vadd.f32 %v2494, %v2576
  %2578 = vdwg.mxu0
  %v2579 = vld [vmem:[%s5] sm:$0xff]
  %v2580 = vld [vmem:[%s5 + $0x8] sm:$0xff]
  %v2581 = vld [vmem:[%s5 + $0x10] sm:$0xff]
  %v2582 = vld [vmem:[%s5 + $0x18] sm:$0xff]
  %v2583 = vld [vmem:[%s5 + $0x20] sm:$0xff]
  %v2584 = vld [vmem:[%s5 + $0x28] sm:$0xff]
  %v2585 = vld [vmem:[%s5 + $0x30] sm:$0xff]
  %v2586 = vld [vmem:[%s5 + $0x38] sm:$0xff]
  %v2587 = vld [vmem:[%s5 + $0x40] sm:$0xff]
  %v2588 = vld [vmem:[%s5 + $0x48] sm:$0xff]
  %v2589 = vld [vmem:[%s5 + $0x50] sm:$0xff]
  %v2590 = vld [vmem:[%s5 + $0x58] sm:$0xff]
  %v2591 = vld [vmem:[%s5 + $0x60] sm:$0xff]
  %v2592 = vld [vmem:[%s5 + $0x68] sm:$0xff]
  %v2593 = vld [vmem:[%s5 + $0x70] sm:$0xff]
  %v2594 = vld [vmem:[%s5 + $0x78] sm:$0xff]
  %v2595 = vld [vmem:[%s5 + $0x80] sm:$0xff]
  %v2596 = vld [vmem:[%s5 + $0x88] sm:$0xff]
  %v2597 = vld [vmem:[%s5 + $0x90] sm:$0xff]
  %v2598 = vld [vmem:[%s5 + $0x98] sm:$0xff]
  %v2599 = vld [vmem:[%s5 + $0xa0] sm:$0xff]
  %v2600 = vld [vmem:[%s5 + $0xa8] sm:$0xff]
  %v2601 = vld [vmem:[%s5 + $0xb0] sm:$0xff]
  %v2602 = vld [vmem:[%s5 + $0xb8] sm:$0xff]
  %v2603 = vld [vmem:[%s5 + $0xc0] sm:$0xff]
  %v2604 = vld [vmem:[%s5 + $0xc8] sm:$0xff]
  %v2605 = vld [vmem:[%s5 + $0xd0] sm:$0xff]
  %v2606 = vld [vmem:[%s5 + $0xd8] sm:$0xff]
  %v2607 = vld [vmem:[%s5 + $0xe0] sm:$0xff]
  %v2608 = vld [vmem:[%s5 + $0xe8] sm:$0xff]
  %v2609 = vld [vmem:[%s5 + $0xf0] sm:$0xff]
  %v2610 = vld [vmem:[%s5 + $0xf8] sm:$0xff]
  %2611 = vmatprep.subr.mxu0 0.0
  %2612 = vmatpush1.msra.mxu0 %v2579
  %2613 = vmatprep.subr.mxu0 0.0
  %2614 = vmatpush1.msra.mxu0 %v2580
  %2615 = vmatprep.subr.mxu0 0.0
  %2616 = vmatpush1.msra.mxu0 %v2581
  %2617 = vmatprep.subr.mxu0 0.0
  %2618 = vmatpush1.msra.mxu0 %v2582
  %2619 = vmatprep.subr.mxu0 0.0
  %2620 = vmatpush1.msra.mxu0 %v2583
  %2621 = vmatprep.subr.mxu0 0.0
  %2622 = vmatpush1.msra.mxu0 %v2584
  %2623 = vmatprep.subr.mxu0 0.0
  %2624 = vmatpush1.msra.mxu0 %v2585
  %2625 = vmatprep.subr.mxu0 0.0
  %2626 = vmatpush1.msra.mxu0 %v2586
  %2627 = vmatprep.subr.mxu0 0.0
  %2628 = vmatpush1.msra.mxu0 %v2587
  %2629 = vmatprep.subr.mxu0 0.0
  %2630 = vmatpush1.msra.mxu0 %v2588
  %2631 = vmatprep.subr.mxu0 0.0
  %2632 = vmatpush1.msra.mxu0 %v2589
  %2633 = vmatprep.subr.mxu0 0.0
  %2634 = vmatpush1.msra.mxu0 %v2590
  %2635 = vmatprep.subr.mxu0 0.0
  %2636 = vmatpush1.msra.mxu0 %v2591
  %2637 = vmatprep.subr.mxu0 0.0
  %2638 = vmatpush1.msra.mxu0 %v2592
  %2639 = vmatprep.subr.mxu0 0.0
  %2640 = vmatpush1.msra.mxu0 %v2593
  %2641 = vmatprep.subr.mxu0 0.0
  %2642 = vmatpush1.msra.mxu0 %v2594
  %2643 = vmatprep.subr.mxu0 0.0
  %2644 = vmatpush1.msra.mxu0 %v2595
  %2645 = vmatprep.subr.mxu0 0.0
  %2646 = vmatpush1.msra.mxu0 %v2596
  %2647 = vmatprep.subr.mxu0 0.0
  %2648 = vmatpush1.msra.mxu0 %v2597
  %2649 = vmatprep.subr.mxu0 0.0
  %2650 = vmatpush1.msra.mxu0 %v2598
  %2651 = vmatprep.subr.mxu0 0.0
  %2652 = vmatpush1.msra.mxu0 %v2599
  %2653 = vmatprep.subr.mxu0 0.0
  %2654 = vmatpush1.msra.mxu0 %v2600
  %2655 = vmatprep.subr.mxu0 0.0
  %2656 = vmatpush1.msra.mxu0 %v2601
  %2657 = vmatprep.subr.mxu0 0.0
  %2658 = vmatpush1.msra.mxu0 %v2602
  %2659 = vmatprep.subr.mxu0 0.0
  %2660 = vmatpush1.msra.mxu0 %v2603
  %2661 = vmatprep.subr.mxu0 0.0
  %2662 = vmatpush1.msra.mxu0 %v2604
  %2663 = vmatprep.subr.mxu0 0.0
  %2664 = vmatpush1.msra.mxu0 %v2605
  %2665 = vmatprep.subr.mxu0 0.0
  %2666 = vmatpush1.msra.mxu0 %v2606
  %2667 = vmatprep.subr.mxu0 0.0
  %2668 = vmatpush1.msra.mxu0 %v2607
  %2669 = vmatprep.subr.mxu0 0.0
  %2670 = vmatpush1.msra.mxu0 %v2608
  %2671 = vmatprep.subr.mxu0 0.0
  %2672 = vmatpush1.msra.mxu0 %v2609
  %2673 = vmatprep.subr.mxu0 0.0
  %2674 = vmatpush1.msra.mxu0 %v2610
  %2675 = vmatprep.mubr.f32.mxu0 %v1817
  %2676 = vmatmul.mubr.f32.gmra.mrb[0].mxu0 %v1815
  %v2677 = vpop.f32.mrb[0].mxu0
  %v2678 = vadd.f32 0.0, %v2677
  %v2679 = vpop.f32.mrb[0].mxu0
  %2680 = vmatprep.mubr.f32.mxu0 %v1821
  %2681 = vmatmul.mubr.f32.gmra.mrb[0].mxu0 %v1819
  %v2682 = vpop.f32.mrb[0].mxu0
  %v2683 = vadd.f32 0.0, %v2682
  %v2684 = vpop.f32.mrb[0].mxu0
  %2685 = vmatprep.mubr.f32.mxu0 %v1827
  %2686 = vmatmul.mubr.f32.gmra.mrb[0].mxu0 %v1825
  %v2687 = vpop.f32.mrb[0].mxu0
  %v2688 = vadd.f32 0.0, %v2687
  %v2689 = vpop.f32.mrb[0].mxu0
  %2690 = vdwg.mxu0
  %v2691 = vmul.f32 %v2678, 0.0025510204
  %v2692 = vmul.f32 %v2683, 0.0025510204
  %v2693 = vmul.f32 %v2688, 0.0025510204
  %2694 = vmatprep.subr.mxu0 0.0
  %2695 = vmatpush1.msra.mxu0 %v2579
  %2696 = vmatprep.subr.mxu0 0.0
  %2697 = vmatpush1.msra.mxu0 %v2580
  %2698 = vmatprep.subr.mxu0 0.0
  %2699 = vmatpush1.msra.mxu0 %v2581
  %2700 = vmatprep.subr.mxu0 0.0
  %2701 = vmatpush1.msra.mxu0 %v2582
  %2702 = vmatprep.subr.mxu0 0.0
  %2703 = vmatpush1.msra.mxu0 %v2583
  %2704 = vmatprep.subr.mxu0 0.0
  %2705 = vmatpush1.msra.mxu0 %v2584
  %2706 = vmatprep.subr.mxu0 0.0
  %2707 = vmatpush1.msra.mxu0 %v2585
  %2708 = vmatprep.subr.mxu0 0.0
  %2709 = vmatpush1.msra.mxu0 %v2586
  %2710 = vmatprep.subr.mxu0 0.0
  %2711 = vmatpush1.msra.mxu0 %v2587
  %2712 = vmatprep.subr.mxu0 0.0
  %2713 = vmatpush1.msra.mxu0 %v2588
  %2714 = vmatprep.subr.mxu0 0.0
  %2715 = vmatpush1.msra.mxu0 %v2589
  %2716 = vmatprep.subr.mxu0 0.0
  %2717 = vmatpush1.msra.mxu0 %v2590
  %2718 = vmatprep.subr.mxu0 0.0
  %2719 = vmatpush1.msra.mxu0 %v2591
  %2720 = vmatprep.subr.mxu0 0.0
  %2721 = vmatpush1.msra.mxu0 %v2592
  %2722 = vmatprep.subr.mxu0 0.0
  %2723 = vmatpush1.msra.mxu0 %v2593
  %2724 = vmatprep.subr.mxu0 0.0
  %2725 = vmatpush1.msra.mxu0 %v2594
  %2726 = vmatprep.subr.mxu0 0.0
  %2727 = vmatpush1.msra.mxu0 %v2595
  %2728 = vmatprep.subr.mxu0 0.0
  %2729 = vmatpush1.msra.mxu0 %v2596
  %2730 = vmatprep.subr.mxu0 0.0
  %2731 = vmatpush1.msra.mxu0 %v2597
  %2732 = vmatprep.subr.mxu0 0.0
  %2733 = vmatpush1.msra.mxu0 %v2598
  %2734 = vmatprep.subr.mxu0 0.0
  %2735 = vmatpush1.msra.mxu0 %v2599
  %2736 = vmatprep.subr.mxu0 0.0
  %2737 = vmatpush1.msra.mxu0 %v2600
  %2738 = vmatprep.subr.mxu0 0.0
  %2739 = vmatpush1.msra.mxu0 %v2601
  %2740 = vmatprep.subr.mxu0 0.0
  %2741 = vmatpush1.msra.mxu0 %v2602
  %2742 = vmatprep.subr.mxu0 0.0
  %2743 = vmatpush1.msra.mxu0 %v2603
  %2744 = vmatprep.subr.mxu0 0.0
  %2745 = vmatpush1.msra.mxu0 %v2604
  %2746 = vmatprep.subr.mxu0 0.0
  %2747 = vmatpush1.msra.mxu0 %v2605
  %2748 = vmatprep.subr.mxu0 0.0
  %2749 = vmatpush1.msra.mxu0 %v2606
  %2750 = vmatprep.subr.mxu0 0.0
  %2751 = vmatpush1.msra.mxu0 %v2607
  %2752 = vmatprep.subr.mxu0 0.0
  %2753 = vmatpush1.msra.mxu0 %v2608
  %2754 = vmatprep.subr.mxu0 0.0
  %2755 = vmatpush1.msra.mxu0 %v2609
  %2756 = vmatprep.subr.mxu0 0.0
  %2757 = vmatpush1.msra.mxu0 %v2610
  %2758 = vmatprep.mubr.f32.mxu0 %v2565
  %2759 = vmatmul.mubr.f32.gmra.mrb[0].mxu0 %v2563
  %v2760 = vpop.f32.mrb[0].mxu0
  %v2761 = vadd.f32 0.0, %v2760
  %v2762 = vpop.f32.mrb[0].mxu0
  %2763 = vmatprep.mubr.f32.mxu0 %v2571
  %2764 = vmatmul.mubr.f32.gmra.mrb[0].mxu0 %v2569
  %v2765 = vpop.f32.mrb[0].mxu0
  %v2766 = vadd.f32 0.0, %v2765
  %v2767 = vpop.f32.mrb[0].mxu0
  %2768 = vmatprep.mubr.f32.mxu0 %v2577
  %2769 = vmatmul.mubr.f32.gmra.mrb[0].mxu0 %v2575
  %v2770 = vpop.f32.mrb[0].mxu0
  %v2771 = vadd.f32 0.0, %v2770
  %v2772 = vpop.f32.mrb[0].mxu0
  %2773 = vdwg.mxu0
  %v2774 = vmul.f32 %v2761, 0.0025510204
  %v2775 = vmul.f32 %v2766, 0.0025510204
  %v2776 = vmul.f32 %v2771, 0.0025510204
  %v2777 = vmul.f32 %v2691, %v2691
  %v2778 = vmul.f32 %v2692, %v2692
  %v2779 = vmul.f32 %v2693, %v2693
  %v2780 = vsub.f32 %v2774, %v2777
  %v2781 = vsub.f32 %v2775, %v2778
  %v2782 = vsub.f32 %v2776, %v2779
  %v2783 = vmax.f32 %v2780, 0.0
  %v2784 = vmax.f32 %v2781, 0.0
  %v2785 = vmax.f32 %v2782, 0.0
  %v2786 = vadd.f32 %v2783, 1e-05
  %v2787 = vadd.f32 %v2784, 1e-05
  %v2788 = vadd.f32 %v2785, 1e-05
  %v2789 = vrsqrt.pop %v2786
  %v2790 = vrsqrt.pop %v2787
  %v2791 = vrsqrt.pop %v2788
  %v2792 = vld [vmem:[%s6] sm:$0xff]
  %v2793 = vld [vmem:[%s6 + $0x8] sm:$0xff]
  %v2794 = vld [vmem:[%s6 + $0x10] sm:$0xff]
  %v2795 = vld [vmem:[%s6 + $0x18] sm:$0xff]
  %v2796 = vld [vmem:[%s6 + $0x20] sm:$0xff]
  %v2797 = vld [vmem:[%s6 + $0x28] sm:$0xff]
  %v2798 = vld [vmem:[%s6 + $0x30] sm:$0xff]
  %v2799 = vld [vmem:[%s6 + $0x38] sm:$0xff]
  %vm2800 = vcmask 261120
  %v2802 = vsel %vm2800, %v2691, 0
  %v2805 = vsel %vm2800, %v2692, 0
  %v2808 = vsel %vm2800, %v2693, 0
  %2810 = vmatprep.subr.mxu0 %v2793
  %2811 = vmatpush1.msra.mxu0 %v2792
  %2812 = vmatprep.subr.mxu0 %v2795
  %2813 = vmatpush1.msra.mxu0 %v2794
  %2814 = vmatprep.subr.mxu0 %v2797
  %2815 = vmatpush1.msra.mxu0 %v2796
  %2816 = vmatprep.subr.mxu0 %v2799
  %2817 = vmatpush1.msra.mxu0 %v2798
  %2818 = vmatprep.subr.mxu0 0.0
  %2819 = vmatpush1.msra.mxu0 0.0
  %2820 = vmatprep.subr.mxu0 0.0
  %2821 = vmatpush1.msra.mxu0 0.0
  %2822 = vmatprep.subr.mxu0 0.0
  %2823 = vmatpush1.msra.mxu0 0.0
  %2824 = vmatprep.subr.mxu0 0.0
  %2825 = vmatpush1.msra.mxu0 0.0
  %2826 = vmatprep.subr.mxu0 0.0
  %2827 = vmatpush1.msra.mxu0 0.0
  %2828 = vmatprep.subr.mxu0 0.0
  %2829 = vmatpush1.msra.mxu0 0.0
  %2830 = vmatprep.subr.mxu0 0.0
  %2831 = vmatpush1.msra.mxu0 0.0
  %2832 = vmatprep.subr.mxu0 0.0
  %2833 = vmatpush1.msra.mxu0 0.0
  %2834 = vmatprep.subr.mxu0 0.0
  %2835 = vmatpush1.msra.mxu0 0.0
  %2836 = vmatprep.subr.mxu0 0.0
  %2837 = vmatpush1.msra.mxu0 0.0
  %2838 = vmatprep.subr.mxu0 0.0
  %2839 = vmatpush1.msra.mxu0 0.0
  %2840 = vmatprep.subr.mxu0 0.0
  %2841 = vmatpush1.msra.mxu0 0.0
  %2842 = vmatprep.subr.mxu0 0.0
  %2843 = vmatpush1.msra.mxu0 0.0
  %2844 = vmatprep.subr.mxu0 0.0
  %2845 = vmatpush1.msra.mxu0 0.0
  %2846 = vmatprep.subr.mxu0 0.0
  %2847 = vmatpush1.msra.mxu0 0.0
  %2848 = vmatprep.subr.mxu0 0.0
  %2849 = vmatpush1.msra.mxu0 0.0
  %2850 = vmatprep.subr.mxu0 0.0
  %2851 = vmatpush1.msra.mxu0 0.0
  %2852 = vmatprep.subr.mxu0 0.0
  %2853 = vmatpush1.msra.mxu0 0.0
  %2854 = vmatprep.subr.mxu0 0.0
  %2855 = vmatpush1.msra.mxu0 0.0
  %2856 = vmatprep.subr.mxu0 0.0
  %2857 = vmatpush1.msra.mxu0 0.0
  %2858 = vmatprep.subr.mxu0 0.0
  %2859 = vmatpush1.msra.mxu0 0.0
  %2860 = vmatprep.subr.mxu0 0.0
  %2861 = vmatpush1.msra.mxu0 0.0
  %2862 = vmatprep.subr.mxu0 0.0
  %2863 = vmatpush1.msra.mxu0 0.0
  %2864 = vmatprep.subr.mxu0 0.0
  %2865 = vmatpush1.msra.mxu0 0.0
  %2866 = vmatprep.subr.mxu0 0.0
  %2867 = vmatpush1.msra.mxu0 0.0
  %2868 = vmatprep.subr.mxu0 0.0
  %2869 = vmatpush1.msra.mxu0 0.0
  %2870 = vmatprep.subr.mxu0 0.0
  %2871 = vmatpush1.msra.mxu0 0.0
  %2872 = vmatprep.subr.mxu0 0.0
  %2873 = vmatpush1.msra.mxu0 0.0
  %2874 = vmatprep.mubr.f32.mxu0 0.0
  %2875 = vmatmul.mubr.f32.gmra.mrb[0].mxu0 %v2802
  %v2876 = vpop.f32.mrb[0].mxu0
  %v2877 = vadd.f32 0.0, %v2876
  %v2878 = vpop.f32.mrb[0].mxu0
  %v2879 = vadd.f32 0.0, %v2878
  %2880 = vmatprep.mubr.f32.mxu0 0.0
  %2881 = vmatmul.mubr.f32.gmra.mrb[0].mxu0 %v2805
  %v2882 = vpop.f32.mrb[0].mxu0
  %v2883 = vadd.f32 0.0, %v2882
  %v2884 = vpop.f32.mrb[0].mxu0
  %v2885 = vadd.f32 0.0, %v2884
  %2886 = vmatprep.mubr.f32.mxu0 0.0
  %2887 = vmatmul.mubr.f32.gmra.mrb[0].mxu0 %v2808
  %v2888 = vpop.f32.mrb[0].mxu0
  %v2889 = vadd.f32 0.0, %v2888
  %v2890 = vpop.f32.mrb[0].mxu0
  %v2891 = vadd.f32 0.0, %v2890
  %2892 = vdwg.mxu0
  %v2894 = vsel %vm2800, %v2789, 0
  %v2897 = vsel %vm2800, %v2790, 0
  %v2900 = vsel %vm2800, %v2791, 0
  %2902 = vmatprep.subr.mxu0 %v2793
  %2903 = vmatpush1.msra.mxu0 %v2792
  %2904 = vmatprep.subr.mxu0 %v2795
  %2905 = vmatpush1.msra.mxu0 %v2794
  %2906 = vmatprep.subr.mxu0 %v2797
  %2907 = vmatpush1.msra.mxu0 %v2796
  %2908 = vmatprep.subr.mxu0 %v2799
  %2909 = vmatpush1.msra.mxu0 %v2798
  %2910 = vmatprep.subr.mxu0 0.0
  %2911 = vmatpush1.msra.mxu0 0.0
  %2912 = vmatprep.subr.mxu0 0.0
  %2913 = vmatpush1.msra.mxu0 0.0
  %2914 = vmatprep.subr.mxu0 0.0
  %2915 = vmatpush1.msra.mxu0 0.0
  %2916 = vmatprep.subr.mxu0 0.0
  %2917 = vmatpush1.msra.mxu0 0.0
  %2918 = vmatprep.subr.mxu0 0.0
  %2919 = vmatpush1.msra.mxu0 0.0
  %2920 = vmatprep.subr.mxu0 0.0
  %2921 = vmatpush1.msra.mxu0 0.0
  %2922 = vmatprep.subr.mxu0 0.0
  %2923 = vmatpush1.msra.mxu0 0.0
  %2924 = vmatprep.subr.mxu0 0.0
  %2925 = vmatpush1.msra.mxu0 0.0
  %2926 = vmatprep.subr.mxu0 0.0
  %2927 = vmatpush1.msra.mxu0 0.0
  %2928 = vmatprep.subr.mxu0 0.0
  %2929 = vmatpush1.msra.mxu0 0.0
  %2930 = vmatprep.subr.mxu0 0.0
  %2931 = vmatpush1.msra.mxu0 0.0
  %2932 = vmatprep.subr.mxu0 0.0
  %2933 = vmatpush1.msra.mxu0 0.0
  %2934 = vmatprep.subr.mxu0 0.0
  %2935 = vmatpush1.msra.mxu0 0.0
  %2936 = vmatprep.subr.mxu0 0.0
  %2937 = vmatpush1.msra.mxu0 0.0
  %2938 = vmatprep.subr.mxu0 0.0
  %2939 = vmatpush1.msra.mxu0 0.0
  %2940 = vmatprep.subr.mxu0 0.0
  %2941 = vmatpush1.msra.mxu0 0.0
  %2942 = vmatprep.subr.mxu0 0.0
  %2943 = vmatpush1.msra.mxu0 0.0
  %2944 = vmatprep.subr.mxu0 0.0
  %2945 = vmatpush1.msra.mxu0 0.0
  %2946 = vmatprep.subr.mxu0 0.0
  %2947 = vmatpush1.msra.mxu0 0.0
  %2948 = vmatprep.subr.mxu0 0.0
  %2949 = vmatpush1.msra.mxu0 0.0
  %2950 = vmatprep.subr.mxu0 0.0
  %2951 = vmatpush1.msra.mxu0 0.0
  %2952 = vmatprep.subr.mxu0 0.0
  %2953 = vmatpush1.msra.mxu0 0.0
  %2954 = vmatprep.subr.mxu0 0.0
  %2955 = vmatpush1.msra.mxu0 0.0
  %2956 = vmatprep.subr.mxu0 0.0
  %2957 = vmatpush1.msra.mxu0 0.0
  %2958 = vmatprep.subr.mxu0 0.0
  %2959 = vmatpush1.msra.mxu0 0.0
  %2960 = vmatprep.subr.mxu0 0.0
  %2961 = vmatpush1.msra.mxu0 0.0
  %2962 = vmatprep.subr.mxu0 0.0
  %2963 = vmatpush1.msra.mxu0 0.0
  %2964 = vmatprep.subr.mxu0 0.0
  %2965 = vmatpush1.msra.mxu0 0.0
  %2966 = vmatprep.mubr.f32.mxu0 0.0
  %2967 = vmatmul.mubr.f32.gmra.mrb[0].mxu0 %v2894
  %v2968 = vpop.f32.mrb[0].mxu0
  %v2969 = vadd.f32 0.0, %v2968
  %v2970 = vpop.f32.mrb[0].mxu0
  %v2971 = vadd.f32 0.0, %v2970
  %2972 = vmatprep.mubr.f32.mxu0 0.0
  %2973 = vmatmul.mubr.f32.gmra.mrb[0].mxu0 %v2897
  %v2974 = vpop.f32.mrb[0].mxu0
  %v2975 = vadd.f32 0.0, %v2974
  %v2976 = vpop.f32.mrb[0].mxu0
  %v2977 = vadd.f32 0.0, %v2976
  %2978 = vmatprep.mubr.f32.mxu0 0.0
  %2979 = vmatmul.mubr.f32.gmra.mrb[0].mxu0 %v2900
  %v2980 = vpop.f32.mrb[0].mxu0
  %v2981 = vadd.f32 0.0, %v2980
  %v2982 = vpop.f32.mrb[0].mxu0
  %v2983 = vadd.f32 0.0, %v2982
  %2984 = vdwg.mxu0
  %v2985 = vld [vmem:[%s3] sm:$0x3]
  %v2987 = vlaneseq
  %v2988 = vshrl.u32 %v2987, 7
  %v2989 = vsub.s32 0, %v2988
  %v2990 = vrot.slane %v2985, %v2989
  %v2991 = vlaneseq
  %v2992 = vshrl.u32 %v2991, 7
  %v2993 = vsub.s32 1, %v2992
  %v2994 = vrot.slane %v2985, %v2993
  %v2997 = vmul.f32 %v2969, %v2990
  %v2998 = vmul.f32 %v2971, %v2994
  %v2999 = vmul.f32 %v2975, %v2990
  %v3000 = vmul.f32 %v2977, %v2994
  %v3001 = vmul.f32 %v2981, %v2990
  %v3002 = vmul.f32 %v2983, %v2994
  %v3003 = vld [vmem:[%s4] sm:$0x3]
  %v3004 = vmul.f32 %v2877, %v2997
  %v3005 = vmul.f32 %v2879, %v2998
  %v3006 = vmul.f32 %v2883, %v2999
  %v3007 = vmul.f32 %v2885, %v3000
  %v3008 = vmul.f32 %v2889, %v3001
  %v3009 = vmul.f32 %v2891, %v3002
  %v3011 = vlaneseq
  %v3012 = vshrl.u32 %v3011, 7
  %v3013 = vsub.s32 0, %v3012
  %v3014 = vrot.slane %v3003, %v3013
  %v3015 = vlaneseq
  %v3016 = vshrl.u32 %v3015, 7
  %v3017 = vsub.s32 1, %v3016
  %v3018 = vrot.slane %v3003, %v3017
  %v3021 = vsub.f32 %v3014, %v3004
  %v3022 = vsub.f32 %v3018, %v3005
  %v3023 = vsub.f32 %v3014, %v3006
  %v3024 = vsub.f32 %v3018, %v3007
  %v3025 = vsub.f32 %v3014, %v3008
  %v3026 = vsub.f32 %v3018, %v3009
  %v3027 = vld [vmem:[%s8] sm:$0xf]
  %v3028 = vld [vmem:[%s8 + $0x4] sm:$0xf]
  %v3029 = vld [vmem:[%s8 + $0x8] sm:$0xf]
  %v3030 = vld [vmem:[%s8 + $0xc] sm:$0xf]
  %v3031 = vld [vmem:[%s8 + $0x10] sm:$0xf]
  %v3032 = vld [vmem:[%s8 + $0x14] sm:$0xf]
  %v3033 = vld [vmem:[%s8 + $0x18] sm:$0xf]
  %v3034 = vld [vmem:[%s8 + $0x1c] sm:$0xf]
  %v3035 = vld [vmem:[%s8 + $0x20] sm:$0xf]
  %v3036 = vld [vmem:[%s8 + $0x24] sm:$0xf]
  %v3037 = vld [vmem:[%s8 + $0x28] sm:$0xf]
  %v3038 = vld [vmem:[%s8 + $0x2c] sm:$0xf]
  %v3039 = vld [vmem:[%s8 + $0x30] sm:$0xf]
  %v3040 = vld [vmem:[%s8 + $0x34] sm:$0xf]
  %v3041 = vld [vmem:[%s8 + $0x38] sm:$0xf]
  %v3042 = vld [vmem:[%s8 + $0x3c] sm:$0xf]
  %v3043 = vld [vmem:[%s8 + $0x40] sm:$0xf]
  %v3044 = vld [vmem:[%s8 + $0x44] sm:$0xf]
  %v3045 = vld [vmem:[%s8 + $0x48] sm:$0xf]
  %v3046 = vld [vmem:[%s8 + $0x4c] sm:$0xf]
  %v3047 = vld [vmem:[%s8 + $0x50] sm:$0xf]
  %v3048 = vld [vmem:[%s8 + $0x54] sm:$0xf]
  %v3049 = vld [vmem:[%s8 + $0x58] sm:$0xf]
  %v3050 = vld [vmem:[%s8 + $0x5c] sm:$0xf]
  %v3051 = vld [vmem:[%s8 + $0x60] sm:$0xf]
  %v3052 = vld [vmem:[%s8 + $0x64] sm:$0xf]
  %v3053 = vld [vmem:[%s8 + $0x68] sm:$0xf]
  %v3054 = vld [vmem:[%s8 + $0x6c] sm:$0xf]
  %v3055 = vld [vmem:[%s8 + $0x70] sm:$0xf]
  %v3056 = vld [vmem:[%s8 + $0x74] sm:$0xf]
  %v3057 = vld [vmem:[%s8 + $0x78] sm:$0xf]
  %v3058 = vld [vmem:[%s8 + $0x7c] sm:$0xf]
  %v3059 = vld [vmem:[%s8 + $0x80] sm:$0xf]
  %v3060 = vld [vmem:[%s8 + $0x84] sm:$0xf]
  %v3061 = vld [vmem:[%s8 + $0x88] sm:$0xf]
  %v3062 = vld [vmem:[%s8 + $0x8c] sm:$0xf]
  %v3063 = vld [vmem:[%s8 + $0x90] sm:$0xf]
  %v3064 = vld [vmem:[%s8 + $0x94] sm:$0xf]
  %v3065 = vld [vmem:[%s8 + $0x98] sm:$0xf]
  %v3066 = vld [vmem:[%s8 + $0x9c] sm:$0xf]
  %v3067 = vld [vmem:[%s8 + $0xa0] sm:$0xf]
  %v3068 = vld [vmem:[%s8 + $0xa4] sm:$0xf]
  %v3069 = vld [vmem:[%s8 + $0xa8] sm:$0xf]
  %v3070 = vld [vmem:[%s8 + $0xac] sm:$0xf]
  %v3071 = vld [vmem:[%s8 + $0xb0] sm:$0xf]
  %v3072 = vld [vmem:[%s8 + $0xb4] sm:$0xf]
  %v3073 = vld [vmem:[%s8 + $0xb8] sm:$0xf]
  %v3074 = vld [vmem:[%s8 + $0xbc] sm:$0xf]
  %v3075 = vld [vmem:[%s8 + $0xc0] sm:$0xf]
  %v3076 = vld [vmem:[%s8 + $0xc4] sm:$0xf]
  %v3077 = vld [vmem:[%s8 + $0xc8] sm:$0xf]
  %v3078 = vld [vmem:[%s8 + $0xcc] sm:$0xf]
  %v3079 = vld [vmem:[%s8 + $0xd0] sm:$0xf]
  %v3080 = vld [vmem:[%s8 + $0xd4] sm:$0xf]
  %v3081 = vld [vmem:[%s8 + $0xd8] sm:$0xf]
  %v3082 = vld [vmem:[%s8 + $0xdc] sm:$0xf]
  %v3083 = vld [vmem:[%s8 + $0xe0] sm:$0xf]
  %v3084 = vld [vmem:[%s8 + $0xe4] sm:$0xf]
  %v3085 = vld [vmem:[%s8 + $0xe8] sm:$0xf]
  %v3086 = vld [vmem:[%s8 + $0xec] sm:$0xf]
  %v3087 = vld [vmem:[%s8 + $0xf0] sm:$0xf]
  %v3088 = vld [vmem:[%s8 + $0xf4] sm:$0xf]
  %v3089 = vld [vmem:[%s8 + $0xf8] sm:$0xf]
  %v3090 = vld [vmem:[%s8 + $0xfc] sm:$0xf]
  %v3091 = vld [vmem:[%s8 + $0x100] sm:$0xf]
  %v3092 = vld [vmem:[%s8 + $0x104] sm:$0xf]
  %v3093 = vld [vmem:[%s8 + $0x108] sm:$0xf]
  %v3094 = vld [vmem:[%s8 + $0x10c] sm:$0xf]
  %v3095 = vld [vmem:[%s8 + $0x110] sm:$0xf]
  %v3096 = vld [vmem:[%s8 + $0x114] sm:$0xf]
  %v3097 = vld [vmem:[%s8 + $0x118] sm:$0xf]
  %v3098 = vld [vmem:[%s8 + $0x11c] sm:$0xf]
  %v3099 = vld [vmem:[%s8 + $0x120] sm:$0xf]
  %v3100 = vld [vmem:[%s8 + $0x124] sm:$0xf]
  %v3101 = vld [vmem:[%s8 + $0x128] sm:$0xf]
  %v3102 = vld [vmem:[%s8 + $0x12c] sm:$0xf]
  %v3103 = vld [vmem:[%s8 + $0x130] sm:$0xf]
  %v3104 = vld [vmem:[%s8 + $0x134] sm:$0xf]
  %v3105 = vld [vmem:[%s8 + $0x138] sm:$0xf]
  %v3106 = vld [vmem:[%s8 + $0x13c] sm:$0xf]
  %v3107 = vld [vmem:[%s8 + $0x140] sm:$0xf]
  %v3108 = vld [vmem:[%s8 + $0x144] sm:$0xf]
  %v3109 = vld [vmem:[%s8 + $0x148] sm:$0xf]
  %v3110 = vld [vmem:[%s8 + $0x14c] sm:$0xf]
  %v3111 = vld [vmem:[%s8 + $0x150] sm:$0xf]
  %v3112 = vld [vmem:[%s8 + $0x154] sm:$0xf]
  %v3113 = vld [vmem:[%s8 + $0x158] sm:$0xf]
  %v3114 = vld [vmem:[%s8 + $0x15c] sm:$0xf]
  %v3115 = vld [vmem:[%s8 + $0x160] sm:$0xf]
  %v3116 = vld [vmem:[%s8 + $0x164] sm:$0xf]
  %v3117 = vld [vmem:[%s8 + $0x168] sm:$0xf]
  %v3118 = vld [vmem:[%s8 + $0x16c] sm:$0xf]
  %v3119 = vld [vmem:[%s8 + $0x170] sm:$0xf]
  %v3120 = vld [vmem:[%s8 + $0x174] sm:$0xf]
  %v3121 = vld [vmem:[%s8 + $0x178] sm:$0xf]
  %v3122 = vld [vmem:[%s8 + $0x17c] sm:$0xf]
  %v3123 = vld [vmem:[%s8 + $0x180] sm:$0xf]
  %v3124 = vld [vmem:[%s8 + $0x184] sm:$0xf]
  %v3125 = vld [vmem:[%s8 + $0x188] sm:$0xf]
  %v3126 = vld [vmem:[%s8 + $0x18c] sm:$0xf]
  %v3127 = vld [vmem:[%s8 + $0x190] sm:$0xf]
  %v3128 = vld [vmem:[%s8 + $0x194] sm:$0xf]
  %v3129 = vld [vmem:[%s8 + $0x198] sm:$0xf]
  %v3130 = vld [vmem:[%s8 + $0x19c] sm:$0xf]
  %v3131 = vld [vmem:[%s8 + $0x1a0] sm:$0xf]
  %v3132 = vld [vmem:[%s8 + $0x1a4] sm:$0xf]
  %v3133 = vld [vmem:[%s8 + $0x1a8] sm:$0xf]
  %v3134 = vld [vmem:[%s8 + $0x1ac] sm:$0xf]
  %v3135 = vld [vmem:[%s8 + $0x1b0] sm:$0xf]
  %v3136 = vld [vmem:[%s8 + $0x1b4] sm:$0xf]
  %v3137 = vld [vmem:[%s8 + $0x1b8] sm:$0xf]
  %v3138 = vld [vmem:[%s8 + $0x1bc] sm:$0xf]
  %v3139 = vld [vmem:[%s8 + $0x1c0] sm:$0xf]
  %v3140 = vld [vmem:[%s8 + $0x1c4] sm:$0xf]
  %v3141 = vld [vmem:[%s8 + $0x1c8] sm:$0xf]
  %v3142 = vld [vmem:[%s8 + $0x1cc] sm:$0xf]
  %v3143 = vld [vmem:[%s8 + $0x1d0] sm:$0xf]
  %v3144 = vld [vmem:[%s8 + $0x1d4] sm:$0xf]
  %v3145 = vld [vmem:[%s8 + $0x1d8] sm:$0xf]
  %v3146 = vld [vmem:[%s8 + $0x1dc] sm:$0xf]
  %v3147 = vld [vmem:[%s8 + $0x1e0] sm:$0xf]
  %v3148 = vld [vmem:[%s8 + $0x1e4] sm:$0xf]
  %v3149 = vld [vmem:[%s8 + $0x1e8] sm:$0xf]
  %v3150 = vld [vmem:[%s8 + $0x1ec] sm:$0xf]
  %v3151 = vld [vmem:[%s8 + $0x1f0] sm:$0xf]
  %v3152 = vld [vmem:[%s8 + $0x1f4] sm:$0xf]
  %v3153 = vld [vmem:[%s8 + $0x1f8] sm:$0xf]
  %v3154 = vld [vmem:[%s8 + $0x1fc] sm:$0xf]
  %v3155 = vld [vmem:[%s8 + $0x200] sm:$0xf]
  %v3156 = vld [vmem:[%s8 + $0x204] sm:$0xf]
  %v3157 = vld [vmem:[%s8 + $0x208] sm:$0xf]
  %v3158 = vld [vmem:[%s8 + $0x20c] sm:$0xf]
  %v3159 = vld [vmem:[%s8 + $0x210] sm:$0xf]
  %v3160 = vld [vmem:[%s8 + $0x214] sm:$0xf]
  %v3161 = vld [vmem:[%s8 + $0x218] sm:$0xf]
  %v3162 = vld [vmem:[%s8 + $0x21c] sm:$0xf]
  %v3163 = vld [vmem:[%s8 + $0x220] sm:$0xf]
  %v3164 = vld [vmem:[%s8 + $0x224] sm:$0xf]
  %v3165 = vld [vmem:[%s8 + $0x228] sm:$0xf]
  %v3166 = vld [vmem:[%s8 + $0x22c] sm:$0xf]
  %v3167 = vld [vmem:[%s8 + $0x230] sm:$0xf]
  %v3168 = vld [vmem:[%s8 + $0x234] sm:$0xf]
  %v3169 = vld [vmem:[%s8 + $0x238] sm:$0xf]
  %v3170 = vld [vmem:[%s8 + $0x23c] sm:$0xf]
  %v3171 = vld [vmem:[%s8 + $0x240] sm:$0xf]
  %v3172 = vld [vmem:[%s8 + $0x244] sm:$0xf]
  %v3173 = vld [vmem:[%s8 + $0x248] sm:$0xf]
  %v3174 = vpack.c.bf16 %v2999, %v2997
  %v3175 = vpack.c.bf16 %v3000, %v2998
  %v3176 = vpack.c.bf16 %v3001, %v3001
  %v3177 = vpack.c.bf16 %v3002, %v3002
  %v3325 = vunpack.c.l.b16 %v3027
  %v3326 = vunpack.c.l.b16 %v3028
  %v3327 = vunpack.c.l.b16 %v3029
  %v3328 = vunpack.c.l.b16 %v3030
  %v3329 = vunpack.c.l.b16 %v3031
  %v3330 = vunpack.c.l.b16 %v3032
  %v3331 = vunpack.c.l.b16 %v3033
  %v3332 = vunpack.c.l.b16 %v3034
  %v3333 = vunpack.c.l.b16 %v3035
  %v3334 = vunpack.c.l.b16 %v3036
  %v3335 = vunpack.c.l.b16 %v3037
  %v3336 = vunpack.c.l.b16 %v3038
  %v3337 = vunpack.c.l.b16 %v3039
  %v3338 = vunpack.c.l.b16 %v3040
  %v3339 = vunpack.c.l.b16 %v3041
  %v3340 = vunpack.c.l.b16 %v3042
  %v3341 = vunpack.c.l.b16 %v3043
  %v3342 = vunpack.c.l.b16 %v3044
  %v3343 = vunpack.c.l.b16 %v3045
  %v3344 = vunpack.c.l.b16 %v3046
  %v3345 = vunpack.c.l.b16 %v3047
  %v3346 = vunpack.c.l.b16 %v3048
  %v3347 = vunpack.c.l.b16 %v3049
  %v3348 = vunpack.c.l.b16 %v3050
  %v3349 = vunpack.c.l.b16 %v3051
  %v3350 = vunpack.c.l.b16 %v3052
  %v3351 = vunpack.c.l.b16 %v3053
  %v3352 = vunpack.c.l.b16 %v3054
  %v3353 = vunpack.c.l.b16 %v3055
  %v3354 = vunpack.c.l.b16 %v3056
  %v3355 = vunpack.c.l.b16 %v3057
  %v3356 = vunpack.c.l.b16 %v3058
  %v3357 = vunpack.c.l.b16 %v3059
  %v3358 = vunpack.c.l.b16 %v3060
  %v3359 = vunpack.c.l.b16 %v3061
  %v3360 = vunpack.c.l.b16 %v3062
  %v3361 = vunpack.c.l.b16 %v3063
  %v3362 = vunpack.c.l.b16 %v3064
  %v3363 = vunpack.c.l.b16 %v3065
  %v3364 = vunpack.c.l.b16 %v3066
  %v3365 = vunpack.c.l.b16 %v3067
  %v3366 = vunpack.c.l.b16 %v3068
  %v3367 = vunpack.c.l.b16 %v3069
  %v3368 = vunpack.c.l.b16 %v3070
  %v3369 = vunpack.c.l.b16 %v3071
  %v3370 = vunpack.c.l.b16 %v3072
  %v3371 = vunpack.c.l.b16 %v3073
  %v3372 = vunpack.c.l.b16 %v3074
  %v3373 = vunpack.c.l.b16 %v3075
  %v3374 = vunpack.c.l.b16 %v3076
  %v3375 = vunpack.c.l.b16 %v3077
  %v3376 = vunpack.c.l.b16 %v3078
  %v3377 = vunpack.c.l.b16 %v3079
  %v3378 = vunpack.c.l.b16 %v3080
  %v3379 = vunpack.c.l.b16 %v3081
  %v3380 = vunpack.c.l.b16 %v3082
  %v3381 = vunpack.c.l.b16 %v3083
  %v3382 = vunpack.c.l.b16 %v3084
  %v3383 = vunpack.c.l.b16 %v3085
  %v3384 = vunpack.c.l.b16 %v3086
  %v3385 = vunpack.c.l.b16 %v3087
  %v3386 = vunpack.c.l.b16 %v3088
  %v3387 = vunpack.c.l.b16 %v3089
  %v3388 = vunpack.c.l.b16 %v3090
  %v3389 = vunpack.c.l.b16 %v3091
  %v3390 = vunpack.c.l.b16 %v3092
  %v3391 = vunpack.c.l.b16 %v3093
  %v3392 = vunpack.c.l.b16 %v3094
  %v3393 = vunpack.c.l.b16 %v3095
  %v3394 = vunpack.c.l.b16 %v3096
  %v3395 = vunpack.c.l.b16 %v3097
  %v3396 = vunpack.c.l.b16 %v3098
  %v3397 = vunpack.c.l.b16 %v3099
  %v3398 = vunpack.c.l.b16 %v3100
  %v3399 = vunpack.c.l.b16 %v3101
  %v3400 = vunpack.c.l.b16 %v3102
  %v3401 = vunpack.c.l.b16 %v3103
  %v3402 = vunpack.c.l.b16 %v3104
  %v3403 = vunpack.c.l.b16 %v3105
  %v3404 = vunpack.c.l.b16 %v3106
  %v3405 = vunpack.c.l.b16 %v3107
  %v3406 = vunpack.c.l.b16 %v3108
  %v3407 = vunpack.c.l.b16 %v3109
  %v3408 = vunpack.c.l.b16 %v3110
  %v3409 = vunpack.c.l.b16 %v3111
  %v3410 = vunpack.c.l.b16 %v3112
  %v3411 = vunpack.c.l.b16 %v3113
  %v3412 = vunpack.c.l.b16 %v3114
  %v3413 = vunpack.c.l.b16 %v3115
  %v3414 = vunpack.c.l.b16 %v3116
  %v3415 = vunpack.c.l.b16 %v3117
  %v3416 = vunpack.c.l.b16 %v3118
  %v3417 = vunpack.c.l.b16 %v3119
  %v3418 = vunpack.c.l.b16 %v3120
  %v3419 = vunpack.c.l.b16 %v3121
  %v3420 = vunpack.c.l.b16 %v3122
  %v3421 = vunpack.c.l.b16 %v3123
  %v3422 = vunpack.c.l.b16 %v3124
  %v3423 = vunpack.c.l.b16 %v3125
  %v3424 = vunpack.c.l.b16 %v3126
  %v3425 = vunpack.c.l.b16 %v3127
  %v3426 = vunpack.c.l.b16 %v3128
  %v3427 = vunpack.c.l.b16 %v3129
  %v3428 = vunpack.c.l.b16 %v3130
  %v3429 = vunpack.c.l.b16 %v3131
  %v3430 = vunpack.c.l.b16 %v3132
  %v3431 = vunpack.c.l.b16 %v3133
  %v3432 = vunpack.c.l.b16 %v3134
  %v3433 = vunpack.c.l.b16 %v3135
  %v3434 = vunpack.c.l.b16 %v3136
  %v3435 = vunpack.c.l.b16 %v3137
  %v3436 = vunpack.c.l.b16 %v3138
  %v3437 = vunpack.c.l.b16 %v3139
  %v3438 = vunpack.c.l.b16 %v3140
  %v3439 = vunpack.c.l.b16 %v3141
  %v3440 = vunpack.c.l.b16 %v3142
  %v3441 = vunpack.c.l.b16 %v3143
  %v3442 = vunpack.c.l.b16 %v3144
  %v3443 = vunpack.c.l.b16 %v3145
  %v3444 = vunpack.c.l.b16 %v3146
  %v3445 = vunpack.c.l.b16 %v3147
  %v3446 = vunpack.c.l.b16 %v3148
  %v3447 = vunpack.c.l.b16 %v3149
  %v3448 = vunpack.c.l.b16 %v3150
  %v3449 = vunpack.c.l.b16 %v3151
  %v3450 = vunpack.c.l.b16 %v3152
  %v3451 = vunpack.c.l.b16 %v3153
  %v3452 = vunpack.c.l.b16 %v3154
  %v3453 = vunpack.c.l.b16 %v3155
  %v3454 = vunpack.c.l.b16 %v3156
  %v3455 = vunpack.c.l.b16 %v3157
  %v3456 = vunpack.c.l.b16 %v3158
  %v3457 = vunpack.c.l.b16 %v3159
  %v3458 = vunpack.c.l.b16 %v3160
  %v3459 = vunpack.c.l.b16 %v3161
  %v3460 = vunpack.c.l.b16 %v3162
  %v3461 = vunpack.c.l.b16 %v3163
  %v3462 = vunpack.c.l.b16 %v3164
  %v3463 = vunpack.c.l.b16 %v3165
  %v3464 = vunpack.c.l.b16 %v3166
  %v3465 = vunpack.c.l.b16 %v3167
  %v3466 = vunpack.c.l.b16 %v3168
  %v3467 = vunpack.c.l.b16 %v3169
  %v3468 = vunpack.c.l.b16 %v3170
  %v3469 = vunpack.c.l.b16 %v3171
  %v3470 = vunpack.c.l.b16 %v3172
  %v3471 = vunpack.c.l.b16 %v3173
  %v3472 = vpack.c.b16 %v3326, %v3325
  %v3473 = vpack.c.b16 %v3328, %v3327
  %v3474 = vpack.c.b16 %v3330, %v3329
  %v3475 = vpack.c.b16 %v3332, %v3331
  %v3476 = vpack.c.b16 %v3334, %v3333
  %v3477 = vpack.c.b16 %v3336, %v3335
  %v3478 = vpack.c.b16 %v3338, %v3337
  %v3479 = vpack.c.b16 %v3340, %v3339
  %v3480 = vpack.c.b16 %v3342, %v3341
  %v3481 = vpack.c.b16 %v3344, %v3343
  %v3482 = vpack.c.b16 %v3346, %v3345
  %v3483 = vpack.c.b16 %v3348, %v3347
  %v3484 = vpack.c.b16 %v3350, %v3349
  %v3485 = vpack.c.b16 %v3352, %v3351
  %v3486 = vpack.c.b16 %v3354, %v3353
  %v3487 = vpack.c.b16 %v3356, %v3355
  %v3488 = vpack.c.b16 %v3358, %v3357
  %v3489 = vpack.c.b16 %v3360, %v3359
  %v3490 = vpack.c.b16 %v3362, %v3361
  %v3491 = vpack.c.b16 %v3364, %v3363
  %v3492 = vpack.c.b16 %v3366, %v3365
  %v3493 = vpack.c.b16 %v3368, %v3367
  %v3494 = vpack.c.b16 %v3370, %v3369
  %v3495 = vpack.c.b16 %v3372, %v3371
  %v3496 = vpack.c.b16 %v3374, %v3373
  %v3497 = vpack.c.b16 %v3376, %v3375
  %v3498 = vpack.c.b16 %v3378, %v3377
  %v3499 = vpack.c.b16 %v3380, %v3379
  %v3500 = vpack.c.b16 %v3382, %v3381
  %v3501 = vpack.c.b16 %v3384, %v3383
  %v3502 = vpack.c.b16 %v3386, %v3385
  %v3503 = vpack.c.b16 %v3388, %v3387
  %v3504 = vpack.c.b16 %v3390, %v3389
  %v3505 = vpack.c.b16 %v3392, %v3391
  %v3506 = vpack.c.b16 %v3394, %v3393
  %v3507 = vpack.c.b16 %v3396, %v3395
  %v3508 = vpack.c.b16 %v3398, %v3397
  %v3509 = vpack.c.b16 %v3400, %v3399
  %v3510 = vpack.c.b16 %v3402, %v3401
  %v3511 = vpack.c.b16 %v3404, %v3403
  %v3512 = vpack.c.b16 %v3406, %v3405
  %v3513 = vpack.c.b16 %v3408, %v3407
  %v3514 = vpack.c.b16 %v3410, %v3409
  %v3515 = vpack.c.b16 %v3412, %v3411
  %v3516 = vpack.c.b16 %v3414, %v3413
  %v3517 = vpack.c.b16 %v3416, %v3415
  %v3518 = vpack.c.b16 %v3418, %v3417
  %v3519 = vpack.c.b16 %v3420, %v3419
  %v3520 = vpack.c.b16 %v3422, %v3421
  %v3521 = vpack.c.b16 %v3424, %v3423
  %v3522 = vpack.c.b16 %v3426, %v3425
  %v3523 = vpack.c.b16 %v3428, %v3427
  %v3524 = vpack.c.b16 %v3430, %v3429
  %v3525 = vpack.c.b16 %v3432, %v3431
  %v3526 = vpack.c.b16 %v3434, %v3433
  %v3527 = vpack.c.b16 %v3436, %v3435
  %v3528 = vpack.c.b16 %v3438, %v3437
  %v3529 = vpack.c.b16 %v3440, %v3439
  %v3530 = vpack.c.b16 %v3442, %v3441
  %v3531 = vpack.c.b16 %v3444, %v3443
  %v3532 = vpack.c.b16 %v3446, %v3445
  %v3533 = vpack.c.b16 %v3448, %v3447
  %v3534 = vpack.c.b16 %v3450, %v3449
  %v3535 = vpack.c.b16 %v3452, %v3451
  %v3536 = vpack.c.b16 %v3454, %v3453
  %v3537 = vpack.c.b16 %v3456, %v3455
  %v3538 = vpack.c.b16 %v3458, %v3457
  %v3539 = vpack.c.b16 %v3460, %v3459
  %v3540 = vpack.c.b16 %v3462, %v3461
  %v3541 = vpack.c.b16 %v3464, %v3463
  %v3542 = vpack.c.b16 %v3466, %v3465
  %v3543 = vpack.c.b16 %v3468, %v3467
  %v3544 = vpack.c.b16 %v3470, %v3469
  %v3545 = vpack.c.b16 %v3471, %v3471
  %v3547 = vsel %vm1563, %v3472, 0
  %v3550 = vsel %vm1563, %v3473, 0
  %v3553 = vsel %vm1563, %v3474, 0
  %v3556 = vsel %vm1563, %v3475, 0
  %v3559 = vsel %vm1563, %v3476, 0
  %v3562 = vsel %vm1563, %v3477, 0
  %v3565 = vsel %vm1563, %v3478, 0
  %v3568 = vsel %vm1563, %v3479, 0
  %v3571 = vsel %vm1563, %v3480, 0
  %v3574 = vsel %vm1563, %v3481, 0
  %v3577 = vsel %vm1563, %v3482, 0
  %v3580 = vsel %vm1563, %v3483, 0
  %v3583 = vsel %vm1563, %v3484, 0
  %v3586 = vsel %vm1563, %v3485, 0
  %v3589 = vsel %vm1563, %v3486, 0
  %v3592 = vsel %vm1563, %v3487, 0
  %v3595 = vsel %vm1563, %v3488, 0
  %v3598 = vsel %vm1563, %v3489, 0
  %v3601 = vsel %vm1563, %v3490, 0
  %v3604 = vsel %vm1563, %v3491, 0
  %v3607 = vsel %vm1563, %v3492, 0
  %v3610 = vsel %vm1563, %v3493, 0
  %v3613 = vsel %vm1563, %v3494, 0
  %v3616 = vsel %vm1563, %v3495, 0
  %v3619 = vsel %vm1563, %v3496, 0
  %v3622 = vsel %vm1563, %v3497, 0
  %v3625 = vsel %vm1563, %v3498, 0
  %v3628 = vsel %vm1563, %v3499, 0
  %v3631 = vsel %vm1563, %v3500, 0
  %v3634 = vsel %vm1563, %v3501, 0
  %v3637 = vsel %vm1563, %v3502, 0
  %v3640 = vsel %vm1563, %v3503, 0
  %v3643 = vsel %vm1563, %v3504, 0
  %v3646 = vsel %vm1563, %v3505, 0
  %v3649 = vsel %vm1563, %v3506, 0
  %v3652 = vsel %vm1563, %v3507, 0
  %v3655 = vsel %vm1563, %v3508, 0
  %v3658 = vsel %vm1563, %v3509, 0
  %v3661 = vsel %vm1563, %v3510, 0
  %v3664 = vsel %vm1563, %v3511, 0
  %v3667 = vsel %vm1563, %v3512, 0
  %v3670 = vsel %vm1563, %v3513, 0
  %v3673 = vsel %vm1563, %v3514, 0
  %v3676 = vsel %vm1563, %v3515, 0
  %v3679 = vsel %vm1563, %v3516, 0
  %v3682 = vsel %vm1563, %v3517, 0
  %v3685 = vsel %vm1563, %v3518, 0
  %v3688 = vsel %vm1563, %v3519, 0
  %v3691 = vsel %vm1563, %v3520, 0
  %v3694 = vsel %vm1563, %v3521, 0
  %v3697 = vsel %vm1563, %v3522, 0
  %v3700 = vsel %vm1563, %v3523, 0
  %v3703 = vsel %vm1563, %v3524, 0
  %v3706 = vsel %vm1563, %v3525, 0
  %v3709 = vsel %vm1563, %v3526, 0
  %v3712 = vsel %vm1563, %v3527, 0
  %v3715 = vsel %vm1563, %v3528, 0
  %v3718 = vsel %vm1563, %v3529, 0
  %v3721 = vsel %vm1563, %v3530, 0
  %v3724 = vsel %vm1563, %v3531, 0
  %v3727 = vsel %vm1563, %v3532, 0
  %v3730 = vsel %vm1563, %v3533, 0
  %v3733 = vsel %vm1563, %v3534, 0
  %v3736 = vsel %vm1563, %v3535, 0
  %v3739 = vsel %vm1563, %v3536, 0
  %v3742 = vsel %vm1563, %v3537, 0
  %v3745 = vsel %vm1563, %v3538, 0
  %v3748 = vsel %vm1563, %v3539, 0
  %v3751 = vsel %vm1563, %v3540, 0
  %v3754 = vsel %vm1563, %v3541, 0
  %v3757 = vsel %vm1563, %v3542, 0
  %v3760 = vsel %vm1563, %v3543, 0
  %v3763 = vsel %vm1563, %v3544, 0
  %v3766 = vsel %vm1563, %v3545, 0
  %v3769 = vsel %vm536, %v3176, 0
  %v3772 = vsel %vm536, %v3177, 0
  %3774 = vmatprep.subr.bf16.mxu0 %v3175
  %3775 = vmatpush1.bf16.msra.mxu0 %v3174
  %3776 = vmatprep.subr.bf16.mxu0 %v3772
  %3777 = vmatpush1.bf16.msra.mxu0 %v3769
  %3778 = vmatprep.subr.bf16.mxu0 0
  %3779 = vmatpush1.bf16.msra.mxu0 0
  %3780 = vmatprep.subr.bf16.mxu0 0
  %3781 = vmatpush1.bf16.msra.mxu0 0
  %3782 = vmatprep.subr.bf16.mxu0 0
  %3783 = vmatpush1.bf16.msra.mxu0 0
  %3784 = vmatprep.subr.bf16.mxu0 0
  %3785 = vmatpush1.bf16.msra.mxu0 0
  %3786 = vmatprep.subr.bf16.mxu0 0
  %3787 = vmatpush1.bf16.msra.mxu0 0
  %3788 = vmatprep.subr.bf16.mxu0 0
  %3789 = vmatpush1.bf16.msra.mxu0 0
  %3790 = vmatprep.subr.bf16.mxu0 0
  %3791 = vmatpush1.bf16.msra.mxu0 0
  %3792 = vmatprep.subr.bf16.mxu0 0
  %3793 = vmatpush1.bf16.msra.mxu0 0
  %3794 = vmatprep.subr.bf16.mxu0 0
  %3795 = vmatpush1.bf16.msra.mxu0 0
  %3796 = vmatprep.subr.bf16.mxu0 0
  %3797 = vmatpush1.bf16.msra.mxu0 0
  %3798 = vmatprep.subr.bf16.mxu0 0
  %3799 = vmatpush1.bf16.msra.mxu0 0
  %3800 = vmatprep.subr.bf16.mxu0 0
  %3801 = vmatpush1.bf16.msra.mxu0 0
  %3802 = vmatprep.subr.bf16.mxu0 0
  %3803 = vmatpush1.bf16.msra.mxu0 0
  %3804 = vmatprep.subr.bf16.mxu0 0
  %3805 = vmatpush1.bf16.msra.mxu0 0
  %3806 = vmatprep.mubr.bf16.mxu0 0
  %3807 = vmatmul.mubr.bf16.gmra.mrb[0].mxu0 %v3547
  %v3808 = vpop.f32.mrb[0].mxu0
  %v3809 = vadd.f32 0.0, %v3808
  %v3810 = vpop.f32.mrb[0].mxu0
  %v3811 = vadd.f32 0.0, %v3810
  %v3812 = vpop.f32.mrb[0].mxu0
  %v3813 = vadd.f32 0.0, %v3812
  %v3814 = vpop.f32.mrb[0].mxu0
  %v3815 = vadd.f32 0.0, %v3814
  %3816 = vmatprep.mubr.bf16.mxu0 0
  %3817 = vmatmul.mubr.bf16.gmra.mrb[0].mxu0 %v3550
  %v3818 = vpop.f32.mrb[0].mxu0
  %v3819 = vadd.f32 0.0, %v3818
  %v3820 = vpop.f32.mrb[0].mxu0
  %v3821 = vadd.f32 0.0, %v3820
  %v3822 = vpop.f32.mrb[0].mxu0
  %v3823 = vadd.f32 0.0, %v3822
  %v3824 = vpop.f32.mrb[0].mxu0
  %v3825 = vadd.f32 0.0, %v3824
  %3826 = vmatprep.mubr.bf16.mxu0 0
  %3827 = vmatmul.mubr.bf16.gmra.mrb[0].mxu0 %v3553
  %v3828 = vpop.f32.mrb[0].mxu0
  %v3829 = vadd.f32 0.0, %v3828
  %v3830 = vpop.f32.mrb[0].mxu0
  %v3831 = vadd.f32 0.0, %v3830
  %v3832 = vpop.f32.mrb[0].mxu0
  %v3833 = vadd.f32 0.0, %v3832
  %v3834 = vpop.f32.mrb[0].mxu0
  %v3835 = vadd.f32 0.0, %v3834
  %3836 = vmatprep.mubr.bf16.mxu0 0
  %3837 = vmatmul.mubr.bf16.gmra.mrb[0].mxu0 %v3556
  %v3838 = vpop.f32.mrb[0].mxu0
  %v3839 = vadd.f32 0.0, %v3838
  %v3840 = vpop.f32.mrb[0].mxu0
  %v3841 = vadd.f32 0.0, %v3840
  %v3842 = vpop.f32.mrb[0].mxu0
  %v3843 = vadd.f32 0.0, %v3842
  %v3844 = vpop.f32.mrb[0].mxu0
  %v3845 = vadd.f32 0.0, %v3844
  %3846 = vmatprep.mubr.bf16.mxu0 0
  %3847 = vmatmul.mubr.bf16.gmra.mrb[0].mxu0 %v3559
  %v3848 = vpop.f32.mrb[0].mxu0
  %v3849 = vadd.f32 0.0, %v3848
  %v3850 = vpop.f32.mrb[0].mxu0
  %v3851 = vadd.f32 0.0, %v3850
  %v3852 = vpop.f32.mrb[0].mxu0
  %v3853 = vadd.f32 0.0, %v3852
  %v3854 = vpop.f32.mrb[0].mxu0
  %v3855 = vadd.f32 0.0, %v3854
  %3856 = vmatprep.mubr.bf16.mxu0 0
  %3857 = vmatmul.mubr.bf16.gmra.mrb[0].mxu0 %v3562
  %v3858 = vpop.f32.mrb[0].mxu0
  %v3859 = vadd.f32 0.0, %v3858
  %v3860 = vpop.f32.mrb[0].mxu0
  %v3861 = vadd.f32 0.0, %v3860
  %v3862 = vpop.f32.mrb[0].mxu0
  %v3863 = vadd.f32 0.0, %v3862
  %v3864 = vpop.f32.mrb[0].mxu0
  %v3865 = vadd.f32 0.0, %v3864
  %3866 = vmatprep.mubr.bf16.mxu0 0
  %3867 = vmatmul.mubr.bf16.gmra.mrb[0].mxu0 %v3565
  %v3868 = vpop.f32.mrb[0].mxu0
  %v3869 = vadd.f32 0.0, %v3868
  %v3870 = vpop.f32.mrb[0].mxu0
  %v3871 = vadd.f32 0.0, %v3870
  %v3872 = vpop.f32.mrb[0].mxu0
  %v3873 = vadd.f32 0.0, %v3872
  %v3874 = vpop.f32.mrb[0].mxu0
  %v3875 = vadd.f32 0.0, %v3874
  %3876 = vmatprep.mubr.bf16.mxu0 0
  %3877 = vmatmul.mubr.bf16.gmra.mrb[0].mxu0 %v3568
  %v3878 = vpop.f32.mrb[0].mxu0
  %v3879 = vadd.f32 0.0, %v3878
  %v3880 = vpop.f32.mrb[0].mxu0
  %v3881 = vadd.f32 0.0, %v3880
  %v3882 = vpop.f32.mrb[0].mxu0
  %v3883 = vadd.f32 0.0, %v3882
  %v3884 = vpop.f32.mrb[0].mxu0
  %v3885 = vadd.f32 0.0, %v3884
  %3886 = vmatprep.mubr.bf16.mxu0 0
  %3887 = vmatmul.mubr.bf16.gmra.mrb[0].mxu0 %v3571
  %v3888 = vpop.f32.mrb[0].mxu0
  %v3889 = vadd.f32 0.0, %v3888
  %v3890 = vpop.f32.mrb[0].mxu0
  %v3891 = vadd.f32 0.0, %v3890
  %v3892 = vpop.f32.mrb[0].mxu0
  %v3893 = vadd.f32 0.0, %v3892
  %v3894 = vpop.f32.mrb[0].mxu0
  %v3895 = vadd.f32 0.0, %v3894
  %3896 = vmatprep.mubr.bf16.mxu0 0
  %3897 = vmatmul.mubr.bf16.gmra.mrb[0].mxu0 %v3574
  %v3898 = vpop.f32.mrb[0].mxu0
  %v3899 = vadd.f32 0.0, %v3898
  %v3900 = vpop.f32.mrb[0].mxu0
  %v3901 = vadd.f32 0.0, %v3900
  %v3902 = vpop.f32.mrb[0].mxu0
  %v3903 = vadd.f32 0.0, %v3902
  %v3904 = vpop.f32.mrb[0].mxu0
  %v3905 = vadd.f32 0.0, %v3904
  %3906 = vmatprep.mubr.bf16.mxu0 0
  %3907 = vmatmul.mubr.bf16.gmra.mrb[0].mxu0 %v3577
  %v3908 = vpop.f32.mrb[0].mxu0
  %v3909 = vadd.f32 0.0, %v3908
  %v3910 = vpop.f32.mrb[0].mxu0
  %v3911 = vadd.f32 0.0, %v3910
  %v3912 = vpop.f32.mrb[0].mxu0
  %v3913 = vadd.f32 0.0, %v3912
  %v3914 = vpop.f32.mrb[0].mxu0
  %v3915 = vadd.f32 0.0, %v3914
  %3916 = vmatprep.mubr.bf16.mxu0 0
  %3917 = vmatmul.mubr.bf16.gmra.mrb[0].mxu0 %v3580
  %v3918 = vpop.f32.mrb[0].mxu0
  %v3919 = vadd.f32 0.0, %v3918
  %v3920 = vpop.f32.mrb[0].mxu0
  %v3921 = vadd.f32 0.0, %v3920
  %v3922 = vpop.f32.mrb[0].mxu0
  %v3923 = vadd.f32 0.0, %v3922
  %v3924 = vpop.f32.mrb[0].mxu0
  %v3925 = vadd.f32 0.0, %v3924
  %3926 = vmatprep.mubr.bf16.mxu0 0
  %3927 = vmatmul.mubr.bf16.gmra.mrb[0].mxu0 %v3583
  %v3928 = vpop.f32.mrb[0].mxu0
  %v3929 = vadd.f32 0.0, %v3928
  %v3930 = vpop.f32.mrb[0].mxu0
  %v3931 = vadd.f32 0.0, %v3930
  %v3932 = vpop.f32.mrb[0].mxu0
  %v3933 = vadd.f32 0.0, %v3932
  %v3934 = vpop.f32.mrb[0].mxu0
  %v3935 = vadd.f32 0.0, %v3934
  %3936 = vmatprep.mubr.bf16.mxu0 0
  %3937 = vmatmul.mubr.bf16.gmra.mrb[0].mxu0 %v3586
  %v3938 = vpop.f32.mrb[0].mxu0
  %v3939 = vadd.f32 0.0, %v3938
  %v3940 = vpop.f32.mrb[0].mxu0
  %v3941 = vadd.f32 0.0, %v3940
  %v3942 = vpop.f32.mrb[0].mxu0
  %v3943 = vadd.f32 0.0, %v3942
  %v3944 = vpop.f32.mrb[0].mxu0
  %v3945 = vadd.f32 0.0, %v3944
  %3946 = vmatprep.mubr.bf16.mxu0 0
  %3947 = vmatmul.mubr.bf16.gmra.mrb[0].mxu0 %v3589
  %v3948 = vpop.f32.mrb[0].mxu0
  %v3949 = vadd.f32 0.0, %v3948
  %v3950 = vpop.f32.mrb[0].mxu0
  %v3951 = vadd.f32 0.0, %v3950
  %v3952 = vpop.f32.mrb[0].mxu0
  %v3953 = vadd.f32 0.0, %v3952
  %v3954 = vpop.f32.mrb[0].mxu0
  %v3955 = vadd.f32 0.0, %v3954
  %3956 = vmatprep.mubr.bf16.mxu0 0
  %3957 = vmatmul.mubr.bf16.gmra.mrb[0].mxu0 %v3592
  %v3958 = vpop.f32.mrb[0].mxu0
  %v3959 = vadd.f32 0.0, %v3958
  %v3960 = vpop.f32.mrb[0].mxu0
  %v3961 = vadd.f32 0.0, %v3960
  %v3962 = vpop.f32.mrb[0].mxu0
  %v3963 = vadd.f32 0.0, %v3962
  %v3964 = vpop.f32.mrb[0].mxu0
  %v3965 = vadd.f32 0.0, %v3964
  %3966 = vmatprep.mubr.bf16.mxu0 0
  %3967 = vmatmul.mubr.bf16.gmra.mrb[0].mxu0 %v3595
  %v3968 = vpop.f32.mrb[0].mxu0
  %v3969 = vadd.f32 0.0, %v3968
  %v3970 = vpop.f32.mrb[0].mxu0
  %v3971 = vadd.f32 0.0, %v3970
  %v3972 = vpop.f32.mrb[0].mxu0
  %v3973 = vadd.f32 0.0, %v3972
  %v3974 = vpop.f32.mrb[0].mxu0
  %v3975 = vadd.f32 0.0, %v3974
  %3976 = vmatprep.mubr.bf16.mxu0 0
  %3977 = vmatmul.mubr.bf16.gmra.mrb[0].mxu0 %v3598
  %v3978 = vpop.f32.mrb[0].mxu0
  %v3979 = vadd.f32 0.0, %v3978
  %v3980 = vpop.f32.mrb[0].mxu0
  %v3981 = vadd.f32 0.0, %v3980
  %v3982 = vpop.f32.mrb[0].mxu0
  %v3983 = vadd.f32 0.0, %v3982
  %v3984 = vpop.f32.mrb[0].mxu0
  %v3985 = vadd.f32 0.0, %v3984
  %3986 = vmatprep.mubr.bf16.mxu0 0
  %3987 = vmatmul.mubr.bf16.gmra.mrb[0].mxu0 %v3601
  %v3988 = vpop.f32.mrb[0].mxu0
  %v3989 = vadd.f32 0.0, %v3988
  %v3990 = vpop.f32.mrb[0].mxu0
  %v3991 = vadd.f32 0.0, %v3990
  %v3992 = vpop.f32.mrb[0].mxu0
  %v3993 = vadd.f32 0.0, %v3992
  %v3994 = vpop.f32.mrb[0].mxu0
  %v3995 = vadd.f32 0.0, %v3994
  %3996 = vmatprep.mubr.bf16.mxu0 0
  %3997 = vmatmul.mubr.bf16.gmra.mrb[0].mxu0 %v3604
  %v3998 = vpop.f32.mrb[0].mxu0
  %v3999 = vadd.f32 0.0, %v3998
  %v4000 = vpop.f32.mrb[0].mxu0
  %v4001 = vadd.f32 0.0, %v4000
  %v4002 = vpop.f32.mrb[0].mxu0
  %v4003 = vadd.f32 0.0, %v4002
  %v4004 = vpop.f32.mrb[0].mxu0
  %v4005 = vadd.f32 0.0, %v4004
  %4006 = vmatprep.mubr.bf16.mxu0 0
  %4007 = vmatmul.mubr.bf16.gmra.mrb[0].mxu0 %v3607
  %v4008 = vpop.f32.mrb[0].mxu0
  %v4009 = vadd.f32 0.0, %v4008
  %v4010 = vpop.f32.mrb[0].mxu0
  %v4011 = vadd.f32 0.0, %v4010
  %v4012 = vpop.f32.mrb[0].mxu0
  %v4013 = vadd.f32 0.0, %v4012
  %v4014 = vpop.f32.mrb[0].mxu0
  %v4015 = vadd.f32 0.0, %v4014
  %4016 = vmatprep.mubr.bf16.mxu0 0
  %4017 = vmatmul.mubr.bf16.gmra.mrb[0].mxu0 %v3610
  %v4018 = vpop.f32.mrb[0].mxu0
  %v4019 = vadd.f32 0.0, %v4018
  %v4020 = vpop.f32.mrb[0].mxu0
  %v4021 = vadd.f32 0.0, %v4020
  %v4022 = vpop.f32.mrb[0].mxu0
  %v4023 = vadd.f32 0.0, %v4022
  %v4024 = vpop.f32.mrb[0].mxu0
  %v4025 = vadd.f32 0.0, %v4024
  %4026 = vmatprep.mubr.bf16.mxu0 0
  %4027 = vmatmul.mubr.bf16.gmra.mrb[0].mxu0 %v3613
  %v4028 = vpop.f32.mrb[0].mxu0
  %v4029 = vadd.f32 0.0, %v4028
  %v4030 = vpop.f32.mrb[0].mxu0
  %v4031 = vadd.f32 0.0, %v4030
  %v4032 = vpop.f32.mrb[0].mxu0
  %v4033 = vadd.f32 0.0, %v4032
  %v4034 = vpop.f32.mrb[0].mxu0
  %v4035 = vadd.f32 0.0, %v4034
  %4036 = vmatprep.mubr.bf16.mxu0 0
  %4037 = vmatmul.mubr.bf16.gmra.mrb[0].mxu0 %v3616
  %v4038 = vpop.f32.mrb[0].mxu0
  %v4039 = vadd.f32 0.0, %v4038
  %v4040 = vpop.f32.mrb[0].mxu0
  %v4041 = vadd.f32 0.0, %v4040
  %v4042 = vpop.f32.mrb[0].mxu0
  %v4043 = vadd.f32 0.0, %v4042
  %v4044 = vpop.f32.mrb[0].mxu0
  %v4045 = vadd.f32 0.0, %v4044
  %4046 = vmatprep.mubr.bf16.mxu0 0
  %4047 = vmatmul.mubr.bf16.gmra.mrb[0].mxu0 %v3619
  %v4048 = vpop.f32.mrb[0].mxu0
  %v4049 = vadd.f32 0.0, %v4048
  %v4050 = vpop.f32.mrb[0].mxu0
  %v4051 = vadd.f32 0.0, %v4050
  %v4052 = vpop.f32.mrb[0].mxu0
  %v4053 = vadd.f32 0.0, %v4052
  %v4054 = vpop.f32.mrb[0].mxu0
  %v4055 = vadd.f32 0.0, %v4054
  %4056 = vmatprep.mubr.bf16.mxu0 0
  %4057 = vmatmul.mubr.bf16.gmra.mrb[0].mxu0 %v3622
  %v4058 = vpop.f32.mrb[0].mxu0
  %v4059 = vadd.f32 0.0, %v4058
  %v4060 = vpop.f32.mrb[0].mxu0
  %v4061 = vadd.f32 0.0, %v4060
  %v4062 = vpop.f32.mrb[0].mxu0
  %v4063 = vadd.f32 0.0, %v4062
  %v4064 = vpop.f32.mrb[0].mxu0
  %v4065 = vadd.f32 0.0, %v4064
  %4066 = vmatprep.mubr.bf16.mxu0 0
  %4067 = vmatmul.mubr.bf16.gmra.mrb[0].mxu0 %v3625
  %v4068 = vpop.f32.mrb[0].mxu0
  %v4069 = vadd.f32 0.0, %v4068
  %v4070 = vpop.f32.mrb[0].mxu0
  %v4071 = vadd.f32 0.0, %v4070
  %v4072 = vpop.f32.mrb[0].mxu0
  %v4073 = vadd.f32 0.0, %v4072
  %v4074 = vpop.f32.mrb[0].mxu0
  %v4075 = vadd.f32 0.0, %v4074
  %4076 = vmatprep.mubr.bf16.mxu0 0
  %4077 = vmatmul.mubr.bf16.gmra.mrb[0].mxu0 %v3628
  %v4078 = vpop.f32.mrb[0].mxu0
  %v4079 = vadd.f32 0.0, %v4078
  %v4080 = vpop.f32.mrb[0].mxu0
  %v4081 = vadd.f32 0.0, %v4080
  %v4082 = vpop.f32.mrb[0].mxu0
  %v4083 = vadd.f32 0.0, %v4082
  %v4084 = vpop.f32.mrb[0].mxu0
  %v4085 = vadd.f32 0.0, %v4084
  %4086 = vmatprep.mubr.bf16.mxu0 0
  %4087 = vmatmul.mubr.bf16.gmra.mrb[0].mxu0 %v3631
  %v4088 = vpop.f32.mrb[0].mxu0
  %v4089 = vadd.f32 0.0, %v4088
  %v4090 = vpop.f32.mrb[0].mxu0
  %v4091 = vadd.f32 0.0, %v4090
  %v4092 = vpop.f32.mrb[0].mxu0
  %v4093 = vadd.f32 0.0, %v4092
  %v4094 = vpop.f32.mrb[0].mxu0
  %v4095 = vadd.f32 0.0, %v4094
  %4096 = vmatprep.mubr.bf16.mxu0 0
  %4097 = vmatmul.mubr.bf16.gmra.mrb[0].mxu0 %v3634
  %v4098 = vpop.f32.mrb[0].mxu0
  %v4099 = vadd.f32 0.0, %v4098
  %v4100 = vpop.f32.mrb[0].mxu0
  %v4101 = vadd.f32 0.0, %v4100
  %v4102 = vpop.f32.mrb[0].mxu0
  %v4103 = vadd.f32 0.0, %v4102
  %v4104 = vpop.f32.mrb[0].mxu0
  %v4105 = vadd.f32 0.0, %v4104
  %4106 = vmatprep.mubr.bf16.mxu0 0
  %4107 = vmatmul.mubr.bf16.gmra.mrb[0].mxu0 %v3637
  %v4108 = vpop.f32.mrb[0].mxu0
  %v4109 = vadd.f32 0.0, %v4108
  %v4110 = vpop.f32.mrb[0].mxu0
  %v4111 = vadd.f32 0.0, %v4110
  %v4112 = vpop.f32.mrb[0].mxu0
  %v4113 = vadd.f32 0.0, %v4112
  %v4114 = vpop.f32.mrb[0].mxu0
  %v4115 = vadd.f32 0.0, %v4114
  %4116 = vmatprep.mubr.bf16.mxu0 0
  %4117 = vmatmul.mubr.bf16.gmra.mrb[0].mxu0 %v3640
  %v4118 = vpop.f32.mrb[0].mxu0
  %v4119 = vadd.f32 0.0, %v4118
  %v4120 = vpop.f32.mrb[0].mxu0
  %v4121 = vadd.f32 0.0, %v4120
  %v4122 = vpop.f32.mrb[0].mxu0
  %v4123 = vadd.f32 0.0, %v4122
  %v4124 = vpop.f32.mrb[0].mxu0
  %v4125 = vadd.f32 0.0, %v4124
  %4126 = vmatprep.mubr.bf16.mxu0 0
  %4127 = vmatmul.mubr.bf16.gmra.mrb[0].mxu0 %v3643
  %v4128 = vpop.f32.mrb[0].mxu0
  %v4129 = vadd.f32 0.0, %v4128
  %v4130 = vpop.f32.mrb[0].mxu0
  %v4131 = vadd.f32 0.0, %v4130
  %v4132 = vpop.f32.mrb[0].mxu0
  %v4133 = vadd.f32 0.0, %v4132
  %v4134 = vpop.f32.mrb[0].mxu0
  %v4135 = vadd.f32 0.0, %v4134
  %4136 = vmatprep.mubr.bf16.mxu0 0
  %4137 = vmatmul.mubr.bf16.gmra.mrb[0].mxu0 %v3646
  %v4138 = vpop.f32.mrb[0].mxu0
  %v4139 = vadd.f32 0.0, %v4138
  %v4140 = vpop.f32.mrb[0].mxu0
  %v4141 = vadd.f32 0.0, %v4140
  %v4142 = vpop.f32.mrb[0].mxu0
  %v4143 = vadd.f32 0.0, %v4142
  %v4144 = vpop.f32.mrb[0].mxu0
  %v4145 = vadd.f32 0.0, %v4144
  %4146 = vmatprep.mubr.bf16.mxu0 0
  %4147 = vmatmul.mubr.bf16.gmra.mrb[0].mxu0 %v3649
  %v4148 = vpop.f32.mrb[0].mxu0
  %v4149 = vadd.f32 0.0, %v4148
  %v4150 = vpop.f32.mrb[0].mxu0
  %v4151 = vadd.f32 0.0, %v4150
  %v4152 = vpop.f32.mrb[0].mxu0
  %v4153 = vadd.f32 0.0, %v4152
  %v4154 = vpop.f32.mrb[0].mxu0
  %v4155 = vadd.f32 0.0, %v4154
  %4156 = vmatprep.mubr.bf16.mxu0 0
  %4157 = vmatmul.mubr.bf16.gmra.mrb[0].mxu0 %v3652
  %v4158 = vpop.f32.mrb[0].mxu0
  %v4159 = vadd.f32 0.0, %v4158
  %v4160 = vpop.f32.mrb[0].mxu0
  %v4161 = vadd.f32 0.0, %v4160
  %v4162 = vpop.f32.mrb[0].mxu0
  %v4163 = vadd.f32 0.0, %v4162
  %v4164 = vpop.f32.mrb[0].mxu0
  %v4165 = vadd.f32 0.0, %v4164
  %4166 = vmatprep.mubr.bf16.mxu0 0
  %4167 = vmatmul.mubr.bf16.gmra.mrb[0].mxu0 %v3655
  %v4168 = vpop.f32.mrb[0].mxu0
  %v4169 = vadd.f32 0.0, %v4168
  %v4170 = vpop.f32.mrb[0].mxu0
  %v4171 = vadd.f32 0.0, %v4170
  %v4172 = vpop.f32.mrb[0].mxu0
  %v4173 = vadd.f32 0.0, %v4172
  %v4174 = vpop.f32.mrb[0].mxu0
  %v4175 = vadd.f32 0.0, %v4174
  %4176 = vmatprep.mubr.bf16.mxu0 0
  %4177 = vmatmul.mubr.bf16.gmra.mrb[0].mxu0 %v3658
  %v4178 = vpop.f32.mrb[0].mxu0
  %v4179 = vadd.f32 0.0, %v4178
  %v4180 = vpop.f32.mrb[0].mxu0
  %v4181 = vadd.f32 0.0, %v4180
  %v4182 = vpop.f32.mrb[0].mxu0
  %v4183 = vadd.f32 0.0, %v4182
  %v4184 = vpop.f32.mrb[0].mxu0
  %v4185 = vadd.f32 0.0, %v4184
  %4186 = vmatprep.mubr.bf16.mxu0 0
  %4187 = vmatmul.mubr.bf16.gmra.mrb[0].mxu0 %v3661
  %v4188 = vpop.f32.mrb[0].mxu0
  %v4189 = vadd.f32 0.0, %v4188
  %v4190 = vpop.f32.mrb[0].mxu0
  %v4191 = vadd.f32 0.0, %v4190
  %v4192 = vpop.f32.mrb[0].mxu0
  %v4193 = vadd.f32 0.0, %v4192
  %v4194 = vpop.f32.mrb[0].mxu0
  %v4195 = vadd.f32 0.0, %v4194
  %4196 = vmatprep.mubr.bf16.mxu0 0
  %4197 = vmatmul.mubr.bf16.gmra.mrb[0].mxu0 %v3664
  %v4198 = vpop.f32.mrb[0].mxu0
  %v4199 = vadd.f32 0.0, %v4198
  %v4200 = vpop.f32.mrb[0].mxu0
  %v4201 = vadd.f32 0.0, %v4200
  %v4202 = vpop.f32.mrb[0].mxu0
  %v4203 = vadd.f32 0.0, %v4202
  %v4204 = vpop.f32.mrb[0].mxu0
  %v4205 = vadd.f32 0.0, %v4204
  %4206 = vmatprep.mubr.bf16.mxu0 0
  %4207 = vmatmul.mubr.bf16.gmra.mrb[0].mxu0 %v3667
  %v4208 = vpop.f32.mrb[0].mxu0
  %v4209 = vadd.f32 0.0, %v4208
  %v4210 = vpop.f32.mrb[0].mxu0
  %v4211 = vadd.f32 0.0, %v4210
  %v4212 = vpop.f32.mrb[0].mxu0
  %v4213 = vadd.f32 0.0, %v4212
  %v4214 = vpop.f32.mrb[0].mxu0
  %v4215 = vadd.f32 0.0, %v4214
  %4216 = vmatprep.mubr.bf16.mxu0 0
  %4217 = vmatmul.mubr.bf16.gmra.mrb[0].mxu0 %v3670
  %v4218 = vpop.f32.mrb[0].mxu0
  %v4219 = vadd.f32 0.0, %v4218
  %v4220 = vpop.f32.mrb[0].mxu0
  %v4221 = vadd.f32 0.0, %v4220
  %v4222 = vpop.f32.mrb[0].mxu0
  %v4223 = vadd.f32 0.0, %v4222
  %v4224 = vpop.f32.mrb[0].mxu0
  %v4225 = vadd.f32 0.0, %v4224
  %4226 = vmatprep.mubr.bf16.mxu0 0
  %4227 = vmatmul.mubr.bf16.gmra.mrb[0].mxu0 %v3673
  %v4228 = vpop.f32.mrb[0].mxu0
  %v4229 = vadd.f32 0.0, %v4228
  %v4230 = vpop.f32.mrb[0].mxu0
  %v4231 = vadd.f32 0.0, %v4230
  %v4232 = vpop.f32.mrb[0].mxu0
  %v4233 = vadd.f32 0.0, %v4232
  %v4234 = vpop.f32.mrb[0].mxu0
  %v4235 = vadd.f32 0.0, %v4234
  %4236 = vmatprep.mubr.bf16.mxu0 0
  %4237 = vmatmul.mubr.bf16.gmra.mrb[0].mxu0 %v3676
  %v4238 = vpop.f32.mrb[0].mxu0
  %v4239 = vadd.f32 0.0, %v4238
  %v4240 = vpop.f32.mrb[0].mxu0
  %v4241 = vadd.f32 0.0, %v4240
  %v4242 = vpop.f32.mrb[0].mxu0
  %v4243 = vadd.f32 0.0, %v4242
  %v4244 = vpop.f32.mrb[0].mxu0
  %v4245 = vadd.f32 0.0, %v4244
  %4246 = vmatprep.mubr.bf16.mxu0 0
  %4247 = vmatmul.mubr.bf16.gmra.mrb[0].mxu0 %v3679
  %v4248 = vpop.f32.mrb[0].mxu0
  %v4249 = vadd.f32 0.0, %v4248
  %v4250 = vpop.f32.mrb[0].mxu0
  %v4251 = vadd.f32 0.0, %v4250
  %v4252 = vpop.f32.mrb[0].mxu0
  %v4253 = vadd.f32 0.0, %v4252
  %v4254 = vpop.f32.mrb[0].mxu0
  %v4255 = vadd.f32 0.0, %v4254
  %4256 = vmatprep.mubr.bf16.mxu0 0
  %4257 = vmatmul.mubr.bf16.gmra.mrb[0].mxu0 %v3682
  %v4258 = vpop.f32.mrb[0].mxu0
  %v4259 = vadd.f32 0.0, %v4258
  %v4260 = vpop.f32.mrb[0].mxu0
  %v4261 = vadd.f32 0.0, %v4260
  %v4262 = vpop.f32.mrb[0].mxu0
  %v4263 = vadd.f32 0.0, %v4262
  %v4264 = vpop.f32.mrb[0].mxu0
  %v4265 = vadd.f32 0.0, %v4264
  %4266 = vmatprep.mubr.bf16.mxu0 0
  %4267 = vmatmul.mubr.bf16.gmra.mrb[0].mxu0 %v3685
  %v4268 = vpop.f32.mrb[0].mxu0
  %v4269 = vadd.f32 0.0, %v4268
  %v4270 = vpop.f32.mrb[0].mxu0
  %v4271 = vadd.f32 0.0, %v4270
  %v4272 = vpop.f32.mrb[0].mxu0
  %v4273 = vadd.f32 0.0, %v4272
  %v4274 = vpop.f32.mrb[0].mxu0
  %v4275 = vadd.f32 0.0, %v4274
  %4276 = vmatprep.mubr.bf16.mxu0 0
  %4277 = vmatmul.mubr.bf16.gmra.mrb[0].mxu0 %v3688
  %v4278 = vpop.f32.mrb[0].mxu0
  %v4279 = vadd.f32 0.0, %v4278
  %v4280 = vpop.f32.mrb[0].mxu0
  %v4281 = vadd.f32 0.0, %v4280
  %v4282 = vpop.f32.mrb[0].mxu0
  %v4283 = vadd.f32 0.0, %v4282
  %v4284 = vpop.f32.mrb[0].mxu0
  %v4285 = vadd.f32 0.0, %v4284
  %4286 = vmatprep.mubr.bf16.mxu0 0
  %4287 = vmatmul.mubr.bf16.gmra.mrb[0].mxu0 %v3691
  %v4288 = vpop.f32.mrb[0].mxu0
  %v4289 = vadd.f32 0.0, %v4288
  %v4290 = vpop.f32.mrb[0].mxu0
  %v4291 = vadd.f32 0.0, %v4290
  %v4292 = vpop.f32.mrb[0].mxu0
  %v4293 = vadd.f32 0.0, %v4292
  %v4294 = vpop.f32.mrb[0].mxu0
  %v4295 = vadd.f32 0.0, %v4294
  %4296 = vmatprep.mubr.bf16.mxu0 0
  %4297 = vmatmul.mubr.bf16.gmra.mrb[0].mxu0 %v3694
  %v4298 = vpop.f32.mrb[0].mxu0
  %v4299 = vadd.f32 0.0, %v4298
  %v4300 = vpop.f32.mrb[0].mxu0
  %v4301 = vadd.f32 0.0, %v4300
  %v4302 = vpop.f32.mrb[0].mxu0
  %v4303 = vadd.f32 0.0, %v4302
  %v4304 = vpop.f32.mrb[0].mxu0
  %v4305 = vadd.f32 0.0, %v4304
  %4306 = vmatprep.mubr.bf16.mxu0 0
  %4307 = vmatmul.mubr.bf16.gmra.mrb[0].mxu0 %v3697
  %v4308 = vpop.f32.mrb[0].mxu0
  %v4309 = vadd.f32 0.0, %v4308
  %v4310 = vpop.f32.mrb[0].mxu0
  %v4311 = vadd.f32 0.0, %v4310
  %v4312 = vpop.f32.mrb[0].mxu0
  %v4313 = vadd.f32 0.0, %v4312
  %v4314 = vpop.f32.mrb[0].mxu0
  %v4315 = vadd.f32 0.0, %v4314
  %4316 = vmatprep.mubr.bf16.mxu0 0
  %4317 = vmatmul.mubr.bf16.gmra.mrb[0].mxu0 %v3700
  %v4318 = vpop.f32.mrb[0].mxu0
  %v4319 = vadd.f32 0.0, %v4318
  %v4320 = vpop.f32.mrb[0].mxu0
  %v4321 = vadd.f32 0.0, %v4320
  %v4322 = vpop.f32.mrb[0].mxu0
  %v4323 = vadd.f32 0.0, %v4322
  %v4324 = vpop.f32.mrb[0].mxu0
  %v4325 = vadd.f32 0.0, %v4324
  %4326 = vmatprep.mubr.bf16.mxu0 0
  %4327 = vmatmul.mubr.bf16.gmra.mrb[0].mxu0 %v3703
  %v4328 = vpop.f32.mrb[0].mxu0
  %v4329 = vadd.f32 0.0, %v4328
  %v4330 = vpop.f32.mrb[0].mxu0
  %v4331 = vadd.f32 0.0, %v4330
  %v4332 = vpop.f32.mrb[0].mxu0
  %v4333 = vadd.f32 0.0, %v4332
  %v4334 = vpop.f32.mrb[0].mxu0
  %v4335 = vadd.f32 0.0, %v4334
  %4336 = vmatprep.mubr.bf16.mxu0 0
  %4337 = vmatmul.mubr.bf16.gmra.mrb[0].mxu0 %v3706
  %v4338 = vpop.f32.mrb[0].mxu0
  %v4339 = vadd.f32 0.0, %v4338
  %v4340 = vpop.f32.mrb[0].mxu0
  %v4341 = vadd.f32 0.0, %v4340
  %v4342 = vpop.f32.mrb[0].mxu0
  %v4343 = vadd.f32 0.0, %v4342
  %v4344 = vpop.f32.mrb[0].mxu0
  %v4345 = vadd.f32 0.0, %v4344
  %4346 = vmatprep.mubr.bf16.mxu0 0
  %4347 = vmatmul.mubr.bf16.gmra.mrb[0].mxu0 %v3709
  %v4348 = vpop.f32.mrb[0].mxu0
  %v4349 = vadd.f32 0.0, %v4348
  %v4350 = vpop.f32.mrb[0].mxu0
  %v4351 = vadd.f32 0.0, %v4350
  %v4352 = vpop.f32.mrb[0].mxu0
  %v4353 = vadd.f32 0.0, %v4352
  %v4354 = vpop.f32.mrb[0].mxu0
  %v4355 = vadd.f32 0.0, %v4354
  %4356 = vmatprep.mubr.bf16.mxu0 0
  %4357 = vmatmul.mubr.bf16.gmra.mrb[0].mxu0 %v3712
  %v4358 = vpop.f32.mrb[0].mxu0
  %v4359 = vadd.f32 0.0, %v4358
  %v4360 = vpop.f32.mrb[0].mxu0
  %v4361 = vadd.f32 0.0, %v4360
  %v4362 = vpop.f32.mrb[0].mxu0
  %v4363 = vadd.f32 0.0, %v4362
  %v4364 = vpop.f32.mrb[0].mxu0
  %v4365 = vadd.f32 0.0, %v4364
  %4366 = vmatprep.mubr.bf16.mxu0 0
  %4367 = vmatmul.mubr.bf16.gmra.mrb[0].mxu0 %v3715
  %v4368 = vpop.f32.mrb[0].mxu0
  %v4369 = vadd.f32 0.0, %v4368
  %v4370 = vpop.f32.mrb[0].mxu0
  %v4371 = vadd.f32 0.0, %v4370
  %v4372 = vpop.f32.mrb[0].mxu0
  %v4373 = vadd.f32 0.0, %v4372
  %v4374 = vpop.f32.mrb[0].mxu0
  %v4375 = vadd.f32 0.0, %v4374
  %4376 = vmatprep.mubr.bf16.mxu0 0
  %4377 = vmatmul.mubr.bf16.gmra.mrb[0].mxu0 %v3718
  %v4378 = vpop.f32.mrb[0].mxu0
  %v4379 = vadd.f32 0.0, %v4378
  %v4380 = vpop.f32.mrb[0].mxu0
  %v4381 = vadd.f32 0.0, %v4380
  %v4382 = vpop.f32.mrb[0].mxu0
  %v4383 = vadd.f32 0.0, %v4382
  %v4384 = vpop.f32.mrb[0].mxu0
  %v4385 = vadd.f32 0.0, %v4384
  %4386 = vmatprep.mubr.bf16.mxu0 0
  %4387 = vmatmul.mubr.bf16.gmra.mrb[0].mxu0 %v3721
  %v4388 = vpop.f32.mrb[0].mxu0
  %v4389 = vadd.f32 0.0, %v4388
  %v4390 = vpop.f32.mrb[0].mxu0
  %v4391 = vadd.f32 0.0, %v4390
  %v4392 = vpop.f32.mrb[0].mxu0
  %v4393 = vadd.f32 0.0, %v4392
  %v4394 = vpop.f32.mrb[0].mxu0
  %v4395 = vadd.f32 0.0, %v4394
  %4396 = vmatprep.mubr.bf16.mxu0 0
  %4397 = vmatmul.mubr.bf16.gmra.mrb[0].mxu0 %v3724
  %v4398 = vpop.f32.mrb[0].mxu0
  %v4399 = vadd.f32 0.0, %v4398
  %v4400 = vpop.f32.mrb[0].mxu0
  %v4401 = vadd.f32 0.0, %v4400
  %v4402 = vpop.f32.mrb[0].mxu0
  %v4403 = vadd.f32 0.0, %v4402
  %v4404 = vpop.f32.mrb[0].mxu0
  %v4405 = vadd.f32 0.0, %v4404
  %4406 = vmatprep.mubr.bf16.mxu0 0
  %4407 = vmatmul.mubr.bf16.gmra.mrb[0].mxu0 %v3727
  %v4408 = vpop.f32.mrb[0].mxu0
  %v4409 = vadd.f32 0.0, %v4408
  %v4410 = vpop.f32.mrb[0].mxu0
  %v4411 = vadd.f32 0.0, %v4410
  %v4412 = vpop.f32.mrb[0].mxu0
  %v4413 = vadd.f32 0.0, %v4412
  %v4414 = vpop.f32.mrb[0].mxu0
  %v4415 = vadd.f32 0.0, %v4414
  %4416 = vmatprep.mubr.bf16.mxu0 0
  %4417 = vmatmul.mubr.bf16.gmra.mrb[0].mxu0 %v3730
  %v4418 = vpop.f32.mrb[0].mxu0
  %v4419 = vadd.f32 0.0, %v4418
  %v4420 = vpop.f32.mrb[0].mxu0
  %v4421 = vadd.f32 0.0, %v4420
  %v4422 = vpop.f32.mrb[0].mxu0
  %v4423 = vadd.f32 0.0, %v4422
  %v4424 = vpop.f32.mrb[0].mxu0
  %v4425 = vadd.f32 0.0, %v4424
  %4426 = vmatprep.mubr.bf16.mxu0 0
  %4427 = vmatmul.mubr.bf16.gmra.mrb[0].mxu0 %v3733
  %v4428 = vpop.f32.mrb[0].mxu0
  %v4429 = vadd.f32 0.0, %v4428
  %v4430 = vpop.f32.mrb[0].mxu0
  %v4431 = vadd.f32 0.0, %v4430
  %v4432 = vpop.f32.mrb[0].mxu0
  %v4433 = vadd.f32 0.0, %v4432
  %v4434 = vpop.f32.mrb[0].mxu0
  %v4435 = vadd.f32 0.0, %v4434
  %4436 = vmatprep.mubr.bf16.mxu0 0
  %4437 = vmatmul.mubr.bf16.gmra.mrb[0].mxu0 %v3736
  %v4438 = vpop.f32.mrb[0].mxu0
  %v4439 = vadd.f32 0.0, %v4438
  %v4440 = vpop.f32.mrb[0].mxu0
  %v4441 = vadd.f32 0.0, %v4440
  %v4442 = vpop.f32.mrb[0].mxu0
  %v4443 = vadd.f32 0.0, %v4442
  %v4444 = vpop.f32.mrb[0].mxu0
  %v4445 = vadd.f32 0.0, %v4444
  %4446 = vmatprep.mubr.bf16.mxu0 0
  %4447 = vmatmul.mubr.bf16.gmra.mrb[0].mxu0 %v3739
  %v4448 = vpop.f32.mrb[0].mxu0
  %v4449 = vadd.f32 0.0, %v4448
  %v4450 = vpop.f32.mrb[0].mxu0
  %v4451 = vadd.f32 0.0, %v4450
  %v4452 = vpop.f32.mrb[0].mxu0
  %v4453 = vadd.f32 0.0, %v4452
  %v4454 = vpop.f32.mrb[0].mxu0
  %v4455 = vadd.f32 0.0, %v4454
  %4456 = vmatprep.mubr.bf16.mxu0 0
  %4457 = vmatmul.mubr.bf16.gmra.mrb[0].mxu0 %v3742
  %v4458 = vpop.f32.mrb[0].mxu0
  %v4459 = vadd.f32 0.0, %v4458
  %v4460 = vpop.f32.mrb[0].mxu0
  %v4461 = vadd.f32 0.0, %v4460
  %v4462 = vpop.f32.mrb[0].mxu0
  %v4463 = vadd.f32 0.0, %v4462
  %v4464 = vpop.f32.mrb[0].mxu0
  %v4465 = vadd.f32 0.0, %v4464
  %4466 = vmatprep.mubr.bf16.mxu0 0
  %4467 = vmatmul.mubr.bf16.gmra.mrb[0].mxu0 %v3745
  %v4468 = vpop.f32.mrb[0].mxu0
  %v4469 = vadd.f32 0.0, %v4468
  %v4470 = vpop.f32.mrb[0].mxu0
  %v4471 = vadd.f32 0.0, %v4470
  %v4472 = vpop.f32.mrb[0].mxu0
  %v4473 = vadd.f32 0.0, %v4472
  %v4474 = vpop.f32.mrb[0].mxu0
  %v4475 = vadd.f32 0.0, %v4474
  %4476 = vmatprep.mubr.bf16.mxu0 0
  %4477 = vmatmul.mubr.bf16.gmra.mrb[0].mxu0 %v3748
  %v4478 = vpop.f32.mrb[0].mxu0
  %v4479 = vadd.f32 0.0, %v4478
  %v4480 = vpop.f32.mrb[0].mxu0
  %v4481 = vadd.f32 0.0, %v4480
  %v4482 = vpop.f32.mrb[0].mxu0
  %v4483 = vadd.f32 0.0, %v4482
  %v4484 = vpop.f32.mrb[0].mxu0
  %v4485 = vadd.f32 0.0, %v4484
  %4486 = vmatprep.mubr.bf16.mxu0 0
  %4487 = vmatmul.mubr.bf16.gmra.mrb[0].mxu0 %v3751
  %v4488 = vpop.f32.mrb[0].mxu0
  %v4489 = vadd.f32 0.0, %v4488
  %v4490 = vpop.f32.mrb[0].mxu0
  %v4491 = vadd.f32 0.0, %v4490
  %v4492 = vpop.f32.mrb[0].mxu0
  %v4493 = vadd.f32 0.0, %v4492
  %v4494 = vpop.f32.mrb[0].mxu0
  %v4495 = vadd.f32 0.0, %v4494
  %4496 = vmatprep.mubr.bf16.mxu0 0
  %4497 = vmatmul.mubr.bf16.gmra.mrb[0].mxu0 %v3754
  %v4498 = vpop.f32.mrb[0].mxu0
  %v4499 = vadd.f32 0.0, %v4498
  %v4500 = vpop.f32.mrb[0].mxu0
  %v4501 = vadd.f32 0.0, %v4500
  %v4502 = vpop.f32.mrb[0].mxu0
  %v4503 = vadd.f32 0.0, %v4502
  %v4504 = vpop.f32.mrb[0].mxu0
  %v4505 = vadd.f32 0.0, %v4504
  %4506 = vmatprep.mubr.bf16.mxu0 0
  %4507 = vmatmul.mubr.bf16.gmra.mrb[0].mxu0 %v3757
  %v4508 = vpop.f32.mrb[0].mxu0
  %v4509 = vadd.f32 0.0, %v4508
  %v4510 = vpop.f32.mrb[0].mxu0
  %v4511 = vadd.f32 0.0, %v4510
  %v4512 = vpop.f32.mrb[0].mxu0
  %v4513 = vadd.f32 0.0, %v4512
  %v4514 = vpop.f32.mrb[0].mxu0
  %v4515 = vadd.f32 0.0, %v4514
  %4516 = vmatprep.mubr.bf16.mxu0 0
  %4517 = vmatmul.mubr.bf16.gmra.mrb[0].mxu0 %v3760
  %v4518 = vpop.f32.mrb[0].mxu0
  %v4519 = vadd.f32 0.0, %v4518
  %v4520 = vpop.f32.mrb[0].mxu0
  %v4521 = vadd.f32 0.0, %v4520
  %v4522 = vpop.f32.mrb[0].mxu0
  %v4523 = vadd.f32 0.0, %v4522
  %v4524 = vpop.f32.mrb[0].mxu0
  %v4525 = vadd.f32 0.0, %v4524
  %4526 = vmatprep.mubr.bf16.mxu0 0
  %4527 = vmatmul.mubr.bf16.gmra.mrb[0].mxu0 %v3763
  %v4528 = vpop.f32.mrb[0].mxu0
  %v4529 = vadd.f32 0.0, %v4528
  %v4530 = vpop.f32.mrb[0].mxu0
  %v4531 = vadd.f32 0.0, %v4530
  %v4532 = vpop.f32.mrb[0].mxu0
  %v4533 = vadd.f32 0.0, %v4532
  %v4534 = vpop.f32.mrb[0].mxu0
  %v4535 = vadd.f32 0.0, %v4534
  %4536 = vmatprep.mubr.bf16.mxu0 0
  %4537 = vmatmul.mubr.bf16.gmra.mrb[0].mxu0 %v3766
  %v4538 = vpop.f32.mrb[0].mxu0
  %v4539 = vadd.f32 0.0, %v4538
  %v4540 = vpop.f32.mrb[0].mxu0
  %v4541 = vadd.f32 0.0, %v4540
  %v4542 = vpop.f32.mrb[0].mxu0
  %v4543 = vpop.f32.mrb[0].mxu0
  %4544 = vdwg.mxu0
  %v4545 = vpack.c.bf16 %v3023, %v3021
  %v4546 = vpack.c.bf16 %v3024, %v3022
  %v4547 = vpack.c.bf16 %v3025, %v3025
  %v4548 = vpack.c.bf16 %v3026, %v3026
  %v4550 = vsel %vm536, %v4547, 0
  %v4553 = vsel %vm536, %v4548, 0
  %4555 = vmatprep.subr.bf16.mxu0 %v4546
  %4556 = vmatpush1.bf16.msra.mxu0 %v4545
  %4557 = vmatprep.subr.bf16.mxu0 %v4553
  %4558 = vmatpush1.bf16.msra.mxu0 %v4550
  %4559 = vmatprep.subr.bf16.mxu0 0
  %4560 = vmatpush1.bf16.msra.mxu0 0
  %4561 = vmatprep.subr.bf16.mxu0 0
  %4562 = vmatpush1.bf16.msra.mxu0 0
  %4563 = vmatprep.subr.bf16.mxu0 0
  %4564 = vmatpush1.bf16.msra.mxu0 0
  %4565 = vmatprep.subr.bf16.mxu0 0
  %4566 = vmatpush1.bf16.msra.mxu0 0
  %4567 = vmatprep.subr.bf16.mxu0 0
  %4568 = vmatpush1.bf16.msra.mxu0 0
  %4569 = vmatprep.subr.bf16.mxu0 0
  %4570 = vmatpush1.bf16.msra.mxu0 0
  %4571 = vmatprep.subr.bf16.mxu0 0
  %4572 = vmatpush1.bf16.msra.mxu0 0
  %4573 = vmatprep.subr.bf16.mxu0 0
  %4574 = vmatpush1.bf16.msra.mxu0 0
  %4575 = vmatprep.subr.bf16.mxu0 0
  %4576 = vmatpush1.bf16.msra.mxu0 0
  %4577 = vmatprep.subr.bf16.mxu0 0
  %4578 = vmatpush1.bf16.msra.mxu0 0
  %4579 = vmatprep.subr.bf16.mxu0 0
  %4580 = vmatpush1.bf16.msra.mxu0 0
  %4581 = vmatprep.subr.bf16.mxu0 0
  %4582 = vmatpush1.bf16.msra.mxu0 0
  %4583 = vmatprep.subr.bf16.mxu0 0
  %4584 = vmatpush1.bf16.msra.mxu0 0
  %4585 = vmatprep.subr.bf16.mxu0 0
  %4586 = vmatpush1.bf16.msra.mxu0 0
  %4587 = vmatprep.mubr.bf16.mxu0 0
  %4588 = vmatmul.mubr.bf16.gmra.mrb[0].mxu0 %v3547
  %v4589 = vpop.f32.mrb[0].mxu0
  %v4590 = vadd.f32 0.0, %v4589
  %v4591 = vpop.f32.mrb[0].mxu0
  %v4592 = vadd.f32 0.0, %v4591
  %v4593 = vpop.f32.mrb[0].mxu0
  %v4594 = vadd.f32 0.0, %v4593
  %v4595 = vpop.f32.mrb[0].mxu0
  %v4596 = vadd.f32 0.0, %v4595
  %4597 = vmatprep.mubr.bf16.mxu0 0
  %4598 = vmatmul.mubr.bf16.gmra.mrb[0].mxu0 %v3550
  %v4599 = vpop.f32.mrb[0].mxu0
  %v4600 = vadd.f32 0.0, %v4599
  %v4601 = vpop.f32.mrb[0].mxu0
  %v4602 = vadd.f32 0.0, %v4601
  %v4603 = vpop.f32.mrb[0].mxu0
  %v4604 = vadd.f32 0.0, %v4603
  %v4605 = vpop.f32.mrb[0].mxu0
  %v4606 = vadd.f32 0.0, %v4605
  %4607 = vmatprep.mubr.bf16.mxu0 0
  %4608 = vmatmul.mubr.bf16.gmra.mrb[0].mxu0 %v3553
  %v4609 = vpop.f32.mrb[0].mxu0
  %v4610 = vadd.f32 0.0, %v4609
  %v4611 = vpop.f32.mrb[0].mxu0
  %v4612 = vadd.f32 0.0, %v4611
  %v4613 = vpop.f32.mrb[0].mxu0
  %v4614 = vadd.f32 0.0, %v4613
  %v4615 = vpop.f32.mrb[0].mxu0
  %v4616 = vadd.f32 0.0, %v4615
  %4617 = vmatprep.mubr.bf16.mxu0 0
  %4618 = vmatmul.mubr.bf16.gmra.mrb[0].mxu0 %v3556
  %v4619 = vpop.f32.mrb[0].mxu0
  %v4620 = vadd.f32 0.0, %v4619
  %v4621 = vpop.f32.mrb[0].mxu0
  %v4622 = vadd.f32 0.0, %v4621
  %v4623 = vpop.f32.mrb[0].mxu0
  %v4624 = vadd.f32 0.0, %v4623
  %v4625 = vpop.f32.mrb[0].mxu0
  %v4626 = vadd.f32 0.0, %v4625
  %4627 = vmatprep.mubr.bf16.mxu0 0
  %4628 = vmatmul.mubr.bf16.gmra.mrb[0].mxu0 %v3559
  %v4629 = vpop.f32.mrb[0].mxu0
  %v4630 = vadd.f32 0.0, %v4629
  %v4631 = vpop.f32.mrb[0].mxu0
  %v4632 = vadd.f32 0.0, %v4631
  %v4633 = vpop.f32.mrb[0].mxu0
  %v4634 = vadd.f32 0.0, %v4633
  %v4635 = vpop.f32.mrb[0].mxu0
  %v4636 = vadd.f32 0.0, %v4635
  %4637 = vmatprep.mubr.bf16.mxu0 0
  %4638 = vmatmul.mubr.bf16.gmra.mrb[0].mxu0 %v3562
  %v4639 = vpop.f32.mrb[0].mxu0
  %v4640 = vadd.f32 0.0, %v4639
  %v4641 = vpop.f32.mrb[0].mxu0
  %v4642 = vadd.f32 0.0, %v4641
  %v4643 = vpop.f32.mrb[0].mxu0
  %v4644 = vadd.f32 0.0, %v4643
  %v4645 = vpop.f32.mrb[0].mxu0
  %v4646 = vadd.f32 0.0, %v4645
  %4647 = vmatprep.mubr.bf16.mxu0 0
  %4648 = vmatmul.mubr.bf16.gmra.mrb[0].mxu0 %v3565
  %v4649 = vpop.f32.mrb[0].mxu0
  %v4650 = vadd.f32 0.0, %v4649
  %v4651 = vpop.f32.mrb[0].mxu0
  %v4652 = vadd.f32 0.0, %v4651
  %v4653 = vpop.f32.mrb[0].mxu0
  %v4654 = vadd.f32 0.0, %v4653
  %v4655 = vpop.f32.mrb[0].mxu0
  %v4656 = vadd.f32 0.0, %v4655
  %4657 = vmatprep.mubr.bf16.mxu0 0
  %4658 = vmatmul.mubr.bf16.gmra.mrb[0].mxu0 %v3568
  %v4659 = vpop.f32.mrb[0].mxu0
  %v4660 = vadd.f32 0.0, %v4659
  %v4661 = vpop.f32.mrb[0].mxu0
  %v4662 = vadd.f32 0.0, %v4661
  %v4663 = vpop.f32.mrb[0].mxu0
  %v4664 = vadd.f32 0.0, %v4663
  %v4665 = vpop.f32.mrb[0].mxu0
  %v4666 = vadd.f32 0.0, %v4665
  %4667 = vmatprep.mubr.bf16.mxu0 0
  %4668 = vmatmul.mubr.bf16.gmra.mrb[0].mxu0 %v3571
  %v4669 = vpop.f32.mrb[0].mxu0
  %v4670 = vadd.f32 0.0, %v4669
  %v4671 = vpop.f32.mrb[0].mxu0
  %v4672 = vadd.f32 0.0, %v4671
  %v4673 = vpop.f32.mrb[0].mxu0
  %v4674 = vadd.f32 0.0, %v4673
  %v4675 = vpop.f32.mrb[0].mxu0
  %v4676 = vadd.f32 0.0, %v4675
  %4677 = vmatprep.mubr.bf16.mxu0 0
  %4678 = vmatmul.mubr.bf16.gmra.mrb[0].mxu0 %v3574
  %v4679 = vpop.f32.mrb[0].mxu0
  %v4680 = vadd.f32 0.0, %v4679
  %v4681 = vpop.f32.mrb[0].mxu0
  %v4682 = vadd.f32 0.0, %v4681
  %v4683 = vpop.f32.mrb[0].mxu0
  %v4684 = vadd.f32 0.0, %v4683
  %v4685 = vpop.f32.mrb[0].mxu0
  %v4686 = vadd.f32 0.0, %v4685
  %4687 = vmatprep.mubr.bf16.mxu0 0
  %4688 = vmatmul.mubr.bf16.gmra.mrb[0].mxu0 %v3577
  %v4689 = vpop.f32.mrb[0].mxu0
  %v4690 = vadd.f32 0.0, %v4689
  %v4691 = vpop.f32.mrb[0].mxu0
  %v4692 = vadd.f32 0.0, %v4691
  %v4693 = vpop.f32.mrb[0].mxu0
  %v4694 = vadd.f32 0.0, %v4693
  %v4695 = vpop.f32.mrb[0].mxu0
  %v4696 = vadd.f32 0.0, %v4695
  %4697 = vmatprep.mubr.bf16.mxu0 0
  %4698 = vmatmul.mubr.bf16.gmra.mrb[0].mxu0 %v3580
  %v4699 = vpop.f32.mrb[0].mxu0
  %v4700 = vadd.f32 0.0, %v4699
  %v4701 = vpop.f32.mrb[0].mxu0
  %v4702 = vadd.f32 0.0, %v4701
  %v4703 = vpop.f32.mrb[0].mxu0
  %v4704 = vadd.f32 0.0, %v4703
  %v4705 = vpop.f32.mrb[0].mxu0
  %v4706 = vadd.f32 0.0, %v4705
  %4707 = vmatprep.mubr.bf16.mxu0 0
  %4708 = vmatmul.mubr.bf16.gmra.mrb[0].mxu0 %v3583
  %v4709 = vpop.f32.mrb[0].mxu0
  %v4710 = vadd.f32 0.0, %v4709
  %v4711 = vpop.f32.mrb[0].mxu0
  %v4712 = vadd.f32 0.0, %v4711
  %v4713 = vpop.f32.mrb[0].mxu0
  %v4714 = vadd.f32 0.0, %v4713
  %v4715 = vpop.f32.mrb[0].mxu0
  %v4716 = vadd.f32 0.0, %v4715
  %4717 = vmatprep.mubr.bf16.mxu0 0
  %4718 = vmatmul.mubr.bf16.gmra.mrb[0].mxu0 %v3586
  %v4719 = vpop.f32.mrb[0].mxu0
  %v4720 = vadd.f32 0.0, %v4719
  %v4721 = vpop.f32.mrb[0].mxu0
  %v4722 = vadd.f32 0.0, %v4721
  %v4723 = vpop.f32.mrb[0].mxu0
  %v4724 = vadd.f32 0.0, %v4723
  %v4725 = vpop.f32.mrb[0].mxu0
  %v4726 = vadd.f32 0.0, %v4725
  %4727 = vmatprep.mubr.bf16.mxu0 0
  %4728 = vmatmul.mubr.bf16.gmra.mrb[0].mxu0 %v3589
  %v4729 = vpop.f32.mrb[0].mxu0
  %v4730 = vadd.f32 0.0, %v4729
  %v4731 = vpop.f32.mrb[0].mxu0
  %v4732 = vadd.f32 0.0, %v4731
  %v4733 = vpop.f32.mrb[0].mxu0
  %v4734 = vadd.f32 0.0, %v4733
  %v4735 = vpop.f32.mrb[0].mxu0
  %v4736 = vadd.f32 0.0, %v4735
  %4737 = vmatprep.mubr.bf16.mxu0 0
  %4738 = vmatmul.mubr.bf16.gmra.mrb[0].mxu0 %v3592
  %v4739 = vpop.f32.mrb[0].mxu0
  %v4740 = vadd.f32 0.0, %v4739
  %v4741 = vpop.f32.mrb[0].mxu0
  %v4742 = vadd.f32 0.0, %v4741
  %v4743 = vpop.f32.mrb[0].mxu0
  %v4744 = vadd.f32 0.0, %v4743
  %v4745 = vpop.f32.mrb[0].mxu0
  %v4746 = vadd.f32 0.0, %v4745
  %4747 = vmatprep.mubr.bf16.mxu0 0
  %4748 = vmatmul.mubr.bf16.gmra.mrb[0].mxu0 %v3595
  %v4749 = vpop.f32.mrb[0].mxu0
  %v4750 = vadd.f32 0.0, %v4749
  %v4751 = vpop.f32.mrb[0].mxu0
  %v4752 = vadd.f32 0.0, %v4751
  %v4753 = vpop.f32.mrb[0].mxu0
  %v4754 = vadd.f32 0.0, %v4753
  %v4755 = vpop.f32.mrb[0].mxu0
  %v4756 = vadd.f32 0.0, %v4755
  %4757 = vmatprep.mubr.bf16.mxu0 0
  %4758 = vmatmul.mubr.bf16.gmra.mrb[0].mxu0 %v3598
  %v4759 = vpop.f32.mrb[0].mxu0
  %v4760 = vadd.f32 0.0, %v4759
  %v4761 = vpop.f32.mrb[0].mxu0
  %v4762 = vadd.f32 0.0, %v4761
  %v4763 = vpop.f32.mrb[0].mxu0
  %v4764 = vadd.f32 0.0, %v4763
  %v4765 = vpop.f32.mrb[0].mxu0
  %v4766 = vadd.f32 0.0, %v4765
  %4767 = vmatprep.mubr.bf16.mxu0 0
  %4768 = vmatmul.mubr.bf16.gmra.mrb[0].mxu0 %v3601
  %v4769 = vpop.f32.mrb[0].mxu0
  %v4770 = vadd.f32 0.0, %v4769
  %v4771 = vpop.f32.mrb[0].mxu0
  %v4772 = vadd.f32 0.0, %v4771
  %v4773 = vpop.f32.mrb[0].mxu0
  %v4774 = vadd.f32 0.0, %v4773
  %v4775 = vpop.f32.mrb[0].mxu0
  %v4776 = vadd.f32 0.0, %v4775
  %4777 = vmatprep.mubr.bf16.mxu0 0
  %4778 = vmatmul.mubr.bf16.gmra.mrb[0].mxu0 %v3604
  %v4779 = vpop.f32.mrb[0].mxu0
  %v4780 = vadd.f32 0.0, %v4779
  %v4781 = vpop.f32.mrb[0].mxu0
  %v4782 = vadd.f32 0.0, %v4781
  %v4783 = vpop.f32.mrb[0].mxu0
  %v4784 = vadd.f32 0.0, %v4783
  %v4785 = vpop.f32.mrb[0].mxu0
  %v4786 = vadd.f32 0.0, %v4785
  %4787 = vmatprep.mubr.bf16.mxu0 0
  %4788 = vmatmul.mubr.bf16.gmra.mrb[0].mxu0 %v3607
  %v4789 = vpop.f32.mrb[0].mxu0
  %v4790 = vadd.f32 0.0, %v4789
  %v4791 = vpop.f32.mrb[0].mxu0
  %v4792 = vadd.f32 0.0, %v4791
  %v4793 = vpop.f32.mrb[0].mxu0
  %v4794 = vadd.f32 0.0, %v4793
  %v4795 = vpop.f32.mrb[0].mxu0
  %v4796 = vadd.f32 0.0, %v4795
  %4797 = vmatprep.mubr.bf16.mxu0 0
  %4798 = vmatmul.mubr.bf16.gmra.mrb[0].mxu0 %v3610
  %v4799 = vpop.f32.mrb[0].mxu0
  %v4800 = vadd.f32 0.0, %v4799
  %v4801 = vpop.f32.mrb[0].mxu0
  %v4802 = vadd.f32 0.0, %v4801
  %v4803 = vpop.f32.mrb[0].mxu0
  %v4804 = vadd.f32 0.0, %v4803
  %v4805 = vpop.f32.mrb[0].mxu0
  %v4806 = vadd.f32 0.0, %v4805
  %4807 = vmatprep.mubr.bf16.mxu0 0
  %4808 = vmatmul.mubr.bf16.gmra.mrb[0].mxu0 %v3613
  %v4809 = vpop.f32.mrb[0].mxu0
  %v4810 = vadd.f32 0.0, %v4809
  %v4811 = vpop.f32.mrb[0].mxu0
  %v4812 = vadd.f32 0.0, %v4811
  %v4813 = vpop.f32.mrb[0].mxu0
  %v4814 = vadd.f32 0.0, %v4813
  %v4815 = vpop.f32.mrb[0].mxu0
  %v4816 = vadd.f32 0.0, %v4815
  %4817 = vmatprep.mubr.bf16.mxu0 0
  %4818 = vmatmul.mubr.bf16.gmra.mrb[0].mxu0 %v3616
  %v4819 = vpop.f32.mrb[0].mxu0
  %v4820 = vadd.f32 0.0, %v4819
  %v4821 = vpop.f32.mrb[0].mxu0
  %v4822 = vadd.f32 0.0, %v4821
  %v4823 = vpop.f32.mrb[0].mxu0
  %v4824 = vadd.f32 0.0, %v4823
  %v4825 = vpop.f32.mrb[0].mxu0
  %v4826 = vadd.f32 0.0, %v4825
  %4827 = vmatprep.mubr.bf16.mxu0 0
  %4828 = vmatmul.mubr.bf16.gmra.mrb[0].mxu0 %v3619
  %v4829 = vpop.f32.mrb[0].mxu0
  %v4830 = vadd.f32 0.0, %v4829
  %v4831 = vpop.f32.mrb[0].mxu0
  %v4832 = vadd.f32 0.0, %v4831
  %v4833 = vpop.f32.mrb[0].mxu0
  %v4834 = vadd.f32 0.0, %v4833
  %v4835 = vpop.f32.mrb[0].mxu0
  %v4836 = vadd.f32 0.0, %v4835
  %4837 = vmatprep.mubr.bf16.mxu0 0
  %4838 = vmatmul.mubr.bf16.gmra.mrb[0].mxu0 %v3622
  %v4839 = vpop.f32.mrb[0].mxu0
  %v4840 = vadd.f32 0.0, %v4839
  %v4841 = vpop.f32.mrb[0].mxu0
  %v4842 = vadd.f32 0.0, %v4841
  %v4843 = vpop.f32.mrb[0].mxu0
  %v4844 = vadd.f32 0.0, %v4843
  %v4845 = vpop.f32.mrb[0].mxu0
  %v4846 = vadd.f32 0.0, %v4845
  %4847 = vmatprep.mubr.bf16.mxu0 0
  %4848 = vmatmul.mubr.bf16.gmra.mrb[0].mxu0 %v3625
  %v4849 = vpop.f32.mrb[0].mxu0
  %v4850 = vadd.f32 0.0, %v4849
  %v4851 = vpop.f32.mrb[0].mxu0
  %v4852 = vadd.f32 0.0, %v4851
  %v4853 = vpop.f32.mrb[0].mxu0
  %v4854 = vadd.f32 0.0, %v4853
  %v4855 = vpop.f32.mrb[0].mxu0
  %v4856 = vadd.f32 0.0, %v4855
  %4857 = vmatprep.mubr.bf16.mxu0 0
  %4858 = vmatmul.mubr.bf16.gmra.mrb[0].mxu0 %v3628
  %v4859 = vpop.f32.mrb[0].mxu0
  %v4860 = vadd.f32 0.0, %v4859
  %v4861 = vpop.f32.mrb[0].mxu0
  %v4862 = vadd.f32 0.0, %v4861
  %v4863 = vpop.f32.mrb[0].mxu0
  %v4864 = vadd.f32 0.0, %v4863
  %v4865 = vpop.f32.mrb[0].mxu0
  %v4866 = vadd.f32 0.0, %v4865
  %4867 = vmatprep.mubr.bf16.mxu0 0
  %4868 = vmatmul.mubr.bf16.gmra.mrb[0].mxu0 %v3631
  %v4869 = vpop.f32.mrb[0].mxu0
  %v4870 = vadd.f32 0.0, %v4869
  %v4871 = vpop.f32.mrb[0].mxu0
  %v4872 = vadd.f32 0.0, %v4871
  %v4873 = vpop.f32.mrb[0].mxu0
  %v4874 = vadd.f32 0.0, %v4873
  %v4875 = vpop.f32.mrb[0].mxu0
  %v4876 = vadd.f32 0.0, %v4875
  %4877 = vmatprep.mubr.bf16.mxu0 0
  %4878 = vmatmul.mubr.bf16.gmra.mrb[0].mxu0 %v3634
  %v4879 = vpop.f32.mrb[0].mxu0
  %v4880 = vadd.f32 0.0, %v4879
  %v4881 = vpop.f32.mrb[0].mxu0
  %v4882 = vadd.f32 0.0, %v4881
  %v4883 = vpop.f32.mrb[0].mxu0
  %v4884 = vadd.f32 0.0, %v4883
  %v4885 = vpop.f32.mrb[0].mxu0
  %v4886 = vadd.f32 0.0, %v4885
  %4887 = vmatprep.mubr.bf16.mxu0 0
  %4888 = vmatmul.mubr.bf16.gmra.mrb[0].mxu0 %v3637
  %v4889 = vpop.f32.mrb[0].mxu0
  %v4890 = vadd.f32 0.0, %v4889
  %v4891 = vpop.f32.mrb[0].mxu0
  %v4892 = vadd.f32 0.0, %v4891
  %v4893 = vpop.f32.mrb[0].mxu0
  %v4894 = vadd.f32 0.0, %v4893
  %v4895 = vpop.f32.mrb[0].mxu0
  %v4896 = vadd.f32 0.0, %v4895
  %4897 = vmatprep.mubr.bf16.mxu0 0
  %4898 = vmatmul.mubr.bf16.gmra.mrb[0].mxu0 %v3640
  %v4899 = vpop.f32.mrb[0].mxu0
  %v4900 = vadd.f32 0.0, %v4899
  %v4901 = vpop.f32.mrb[0].mxu0
  %v4902 = vadd.f32 0.0, %v4901
  %v4903 = vpop.f32.mrb[0].mxu0
  %v4904 = vadd.f32 0.0, %v4903
  %v4905 = vpop.f32.mrb[0].mxu0
  %v4906 = vadd.f32 0.0, %v4905
  %4907 = vmatprep.mubr.bf16.mxu0 0
  %4908 = vmatmul.mubr.bf16.gmra.mrb[0].mxu0 %v3643
  %v4909 = vpop.f32.mrb[0].mxu0
  %v4910 = vadd.f32 0.0, %v4909
  %v4911 = vpop.f32.mrb[0].mxu0
  %v4912 = vadd.f32 0.0, %v4911
  %v4913 = vpop.f32.mrb[0].mxu0
  %v4914 = vadd.f32 0.0, %v4913
  %v4915 = vpop.f32.mrb[0].mxu0
  %v4916 = vadd.f32 0.0, %v4915
  %4917 = vmatprep.mubr.bf16.mxu0 0
  %4918 = vmatmul.mubr.bf16.gmra.mrb[0].mxu0 %v3646
  %v4919 = vpop.f32.mrb[0].mxu0
  %v4920 = vadd.f32 0.0, %v4919
  %v4921 = vpop.f32.mrb[0].mxu0
  %v4922 = vadd.f32 0.0, %v4921
  %v4923 = vpop.f32.mrb[0].mxu0
  %v4924 = vadd.f32 0.0, %v4923
  %v4925 = vpop.f32.mrb[0].mxu0
  %v4926 = vadd.f32 0.0, %v4925
  %4927 = vmatprep.mubr.bf16.mxu0 0
  %4928 = vmatmul.mubr.bf16.gmra.mrb[0].mxu0 %v3649
  %v4929 = vpop.f32.mrb[0].mxu0
  %v4930 = vadd.f32 0.0, %v4929
  %v4931 = vpop.f32.mrb[0].mxu0
  %v4932 = vadd.f32 0.0, %v4931
  %v4933 = vpop.f32.mrb[0].mxu0
  %v4934 = vadd.f32 0.0, %v4933
  %v4935 = vpop.f32.mrb[0].mxu0
  %v4936 = vadd.f32 0.0, %v4935
  %4937 = vmatprep.mubr.bf16.mxu0 0
  %4938 = vmatmul.mubr.bf16.gmra.mrb[0].mxu0 %v3652
  %v4939 = vpop.f32.mrb[0].mxu0
  %v4940 = vadd.f32 0.0, %v4939
  %v4941 = vpop.f32.mrb[0].mxu0
  %v4942 = vadd.f32 0.0, %v4941
  %v4943 = vpop.f32.mrb[0].mxu0
  %v4944 = vadd.f32 0.0, %v4943
  %v4945 = vpop.f32.mrb[0].mxu0
  %v4946 = vadd.f32 0.0, %v4945
  %4947 = vmatprep.mubr.bf16.mxu0 0
  %4948 = vmatmul.mubr.bf16.gmra.mrb[0].mxu0 %v3655
  %v4949 = vpop.f32.mrb[0].mxu0
  %v4950 = vadd.f32 0.0, %v4949
  %v4951 = vpop.f32.mrb[0].mxu0
  %v4952 = vadd.f32 0.0, %v4951
  %v4953 = vpop.f32.mrb[0].mxu0
  %v4954 = vadd.f32 0.0, %v4953
  %v4955 = vpop.f32.mrb[0].mxu0
  %v4956 = vadd.f32 0.0, %v4955
  %4957 = vmatprep.mubr.bf16.mxu0 0
  %4958 = vmatmul.mubr.bf16.gmra.mrb[0].mxu0 %v3658
  %v4959 = vpop.f32.mrb[0].mxu0
  %v4960 = vadd.f32 0.0, %v4959
  %v4961 = vpop.f32.mrb[0].mxu0
  %v4962 = vadd.f32 0.0, %v4961
  %v4963 = vpop.f32.mrb[0].mxu0
  %v4964 = vadd.f32 0.0, %v4963
  %v4965 = vpop.f32.mrb[0].mxu0
  %v4966 = vadd.f32 0.0, %v4965
  %4967 = vmatprep.mubr.bf16.mxu0 0
  %4968 = vmatmul.mubr.bf16.gmra.mrb[0].mxu0 %v3661
  %v4969 = vpop.f32.mrb[0].mxu0
  %v4970 = vadd.f32 0.0, %v4969
  %v4971 = vpop.f32.mrb[0].mxu0
  %v4972 = vadd.f32 0.0, %v4971
  %v4973 = vpop.f32.mrb[0].mxu0
  %v4974 = vadd.f32 0.0, %v4973
  %v4975 = vpop.f32.mrb[0].mxu0
  %v4976 = vadd.f32 0.0, %v4975
  %4977 = vmatprep.mubr.bf16.mxu0 0
  %4978 = vmatmul.mubr.bf16.gmra.mrb[0].mxu0 %v3664
  %v4979 = vpop.f32.mrb[0].mxu0
  %v4980 = vadd.f32 0.0, %v4979
  %v4981 = vpop.f32.mrb[0].mxu0
  %v4982 = vadd.f32 0.0, %v4981
  %v4983 = vpop.f32.mrb[0].mxu0
  %v4984 = vadd.f32 0.0, %v4983
  %v4985 = vpop.f32.mrb[0].mxu0
  %v4986 = vadd.f32 0.0, %v4985
  %4987 = vmatprep.mubr.bf16.mxu0 0
  %4988 = vmatmul.mubr.bf16.gmra.mrb[0].mxu0 %v3667
  %v4989 = vpop.f32.mrb[0].mxu0
  %v4990 = vadd.f32 0.0, %v4989
  %v4991 = vpop.f32.mrb[0].mxu0
  %v4992 = vadd.f32 0.0, %v4991
  %v4993 = vpop.f32.mrb[0].mxu0
  %v4994 = vadd.f32 0.0, %v4993
  %v4995 = vpop.f32.mrb[0].mxu0
  %v4996 = vadd.f32 0.0, %v4995
  %4997 = vmatprep.mubr.bf16.mxu0 0
  %4998 = vmatmul.mubr.bf16.gmra.mrb[0].mxu0 %v3670
  %v4999 = vpop.f32.mrb[0].mxu0
  %v5000 = vadd.f32 0.0, %v4999
  %v5001 = vpop.f32.mrb[0].mxu0
  %v5002 = vadd.f32 0.0, %v5001
  %v5003 = vpop.f32.mrb[0].mxu0
  %v5004 = vadd.f32 0.0, %v5003
  %v5005 = vpop.f32.mrb[0].mxu0
  %v5006 = vadd.f32 0.0, %v5005
  %5007 = vmatprep.mubr.bf16.mxu0 0
  %5008 = vmatmul.mubr.bf16.gmra.mrb[0].mxu0 %v3673
  %v5009 = vpop.f32.mrb[0].mxu0
  %v5010 = vadd.f32 0.0, %v5009
  %v5011 = vpop.f32.mrb[0].mxu0
  %v5012 = vadd.f32 0.0, %v5011
  %v5013 = vpop.f32.mrb[0].mxu0
  %v5014 = vadd.f32 0.0, %v5013
  %v5015 = vpop.f32.mrb[0].mxu0
  %v5016 = vadd.f32 0.0, %v5015
  %5017 = vmatprep.mubr.bf16.mxu0 0
  %5018 = vmatmul.mubr.bf16.gmra.mrb[0].mxu0 %v3676
  %v5019 = vpop.f32.mrb[0].mxu0
  %v5020 = vadd.f32 0.0, %v5019
  %v5021 = vpop.f32.mrb[0].mxu0
  %v5022 = vadd.f32 0.0, %v5021
  %v5023 = vpop.f32.mrb[0].mxu0
  %v5024 = vadd.f32 0.0, %v5023
  %v5025 = vpop.f32.mrb[0].mxu0
  %v5026 = vadd.f32 0.0, %v5025
  %5027 = vmatprep.mubr.bf16.mxu0 0
  %5028 = vmatmul.mubr.bf16.gmra.mrb[0].mxu0 %v3679
  %v5029 = vpop.f32.mrb[0].mxu0
  %v5030 = vadd.f32 0.0, %v5029
  %v5031 = vpop.f32.mrb[0].mxu0
  %v5032 = vadd.f32 0.0, %v5031
  %v5033 = vpop.f32.mrb[0].mxu0
  %v5034 = vadd.f32 0.0, %v5033
  %v5035 = vpop.f32.mrb[0].mxu0
  %v5036 = vadd.f32 0.0, %v5035
  %5037 = vmatprep.mubr.bf16.mxu0 0
  %5038 = vmatmul.mubr.bf16.gmra.mrb[0].mxu0 %v3682
  %v5039 = vpop.f32.mrb[0].mxu0
  %v5040 = vadd.f32 0.0, %v5039
  %v5041 = vpop.f32.mrb[0].mxu0
  %v5042 = vadd.f32 0.0, %v5041
  %v5043 = vpop.f32.mrb[0].mxu0
  %v5044 = vadd.f32 0.0, %v5043
  %v5045 = vpop.f32.mrb[0].mxu0
  %v5046 = vadd.f32 0.0, %v5045
  %5047 = vmatprep.mubr.bf16.mxu0 0
  %5048 = vmatmul.mubr.bf16.gmra.mrb[0].mxu0 %v3685
  %v5049 = vpop.f32.mrb[0].mxu0
  %v5050 = vadd.f32 0.0, %v5049
  %v5051 = vpop.f32.mrb[0].mxu0
  %v5052 = vadd.f32 0.0, %v5051
  %v5053 = vpop.f32.mrb[0].mxu0
  %v5054 = vadd.f32 0.0, %v5053
  %v5055 = vpop.f32.mrb[0].mxu0
  %v5056 = vadd.f32 0.0, %v5055
  %5057 = vmatprep.mubr.bf16.mxu0 0
  %5058 = vmatmul.mubr.bf16.gmra.mrb[0].mxu0 %v3688
  %v5059 = vpop.f32.mrb[0].mxu0
  %v5060 = vadd.f32 0.0, %v5059
  %v5061 = vpop.f32.mrb[0].mxu0
  %v5062 = vadd.f32 0.0, %v5061
  %v5063 = vpop.f32.mrb[0].mxu0
  %v5064 = vadd.f32 0.0, %v5063
  %v5065 = vpop.f32.mrb[0].mxu0
  %v5066 = vadd.f32 0.0, %v5065
  %5067 = vmatprep.mubr.bf16.mxu0 0
  %5068 = vmatmul.mubr.bf16.gmra.mrb[0].mxu0 %v3691
  %v5069 = vpop.f32.mrb[0].mxu0
  %v5070 = vadd.f32 0.0, %v5069
  %v5071 = vpop.f32.mrb[0].mxu0
  %v5072 = vadd.f32 0.0, %v5071
  %v5073 = vpop.f32.mrb[0].mxu0
  %v5074 = vadd.f32 0.0, %v5073
  %v5075 = vpop.f32.mrb[0].mxu0
  %v5076 = vadd.f32 0.0, %v5075
  %5077 = vmatprep.mubr.bf16.mxu0 0
  %5078 = vmatmul.mubr.bf16.gmra.mrb[0].mxu0 %v3694
  %v5079 = vpop.f32.mrb[0].mxu0
  %v5080 = vadd.f32 0.0, %v5079
  %v5081 = vpop.f32.mrb[0].mxu0
  %v5082 = vadd.f32 0.0, %v5081
  %v5083 = vpop.f32.mrb[0].mxu0
  %v5084 = vadd.f32 0.0, %v5083
  %v5085 = vpop.f32.mrb[0].mxu0
  %v5086 = vadd.f32 0.0, %v5085
  %5087 = vmatprep.mubr.bf16.mxu0 0
  %5088 = vmatmul.mubr.bf16.gmra.mrb[0].mxu0 %v3697
  %v5089 = vpop.f32.mrb[0].mxu0
  %v5090 = vadd.f32 0.0, %v5089
  %v5091 = vpop.f32.mrb[0].mxu0
  %v5092 = vadd.f32 0.0, %v5091
  %v5093 = vpop.f32.mrb[0].mxu0
  %v5094 = vadd.f32 0.0, %v5093
  %v5095 = vpop.f32.mrb[0].mxu0
  %v5096 = vadd.f32 0.0, %v5095
  %5097 = vmatprep.mubr.bf16.mxu0 0
  %5098 = vmatmul.mubr.bf16.gmra.mrb[0].mxu0 %v3700
  %v5099 = vpop.f32.mrb[0].mxu0
  %v5100 = vadd.f32 0.0, %v5099
  %v5101 = vpop.f32.mrb[0].mxu0
  %v5102 = vadd.f32 0.0, %v5101
  %v5103 = vpop.f32.mrb[0].mxu0
  %v5104 = vadd.f32 0.0, %v5103
  %v5105 = vpop.f32.mrb[0].mxu0
  %v5106 = vadd.f32 0.0, %v5105
  %5107 = vmatprep.mubr.bf16.mxu0 0
  %5108 = vmatmul.mubr.bf16.gmra.mrb[0].mxu0 %v3703
  %v5109 = vpop.f32.mrb[0].mxu0
  %v5110 = vadd.f32 0.0, %v5109
  %v5111 = vpop.f32.mrb[0].mxu0
  %v5112 = vadd.f32 0.0, %v5111
  %v5113 = vpop.f32.mrb[0].mxu0
  %v5114 = vadd.f32 0.0, %v5113
  %v5115 = vpop.f32.mrb[0].mxu0
  %v5116 = vadd.f32 0.0, %v5115
  %5117 = vmatprep.mubr.bf16.mxu0 0
  %5118 = vmatmul.mubr.bf16.gmra.mrb[0].mxu0 %v3706
  %v5119 = vpop.f32.mrb[0].mxu0
  %v5120 = vadd.f32 0.0, %v5119
  %v5121 = vpop.f32.mrb[0].mxu0
  %v5122 = vadd.f32 0.0, %v5121
  %v5123 = vpop.f32.mrb[0].mxu0
  %v5124 = vadd.f32 0.0, %v5123
  %v5125 = vpop.f32.mrb[0].mxu0
  %v5126 = vadd.f32 0.0, %v5125
  %5127 = vmatprep.mubr.bf16.mxu0 0
  %5128 = vmatmul.mubr.bf16.gmra.mrb[0].mxu0 %v3709
  %v5129 = vpop.f32.mrb[0].mxu0
  %v5130 = vadd.f32 0.0, %v5129
  %v5131 = vpop.f32.mrb[0].mxu0
  %v5132 = vadd.f32 0.0, %v5131
  %v5133 = vpop.f32.mrb[0].mxu0
  %v5134 = vadd.f32 0.0, %v5133
  %v5135 = vpop.f32.mrb[0].mxu0
  %v5136 = vadd.f32 0.0, %v5135
  %5137 = vmatprep.mubr.bf16.mxu0 0
  %5138 = vmatmul.mubr.bf16.gmra.mrb[0].mxu0 %v3712
  %v5139 = vpop.f32.mrb[0].mxu0
  %v5140 = vadd.f32 0.0, %v5139
  %v5141 = vpop.f32.mrb[0].mxu0
  %v5142 = vadd.f32 0.0, %v5141
  %v5143 = vpop.f32.mrb[0].mxu0
  %v5144 = vadd.f32 0.0, %v5143
  %v5145 = vpop.f32.mrb[0].mxu0
  %v5146 = vadd.f32 0.0, %v5145
  %5147 = vmatprep.mubr.bf16.mxu0 0
  %5148 = vmatmul.mubr.bf16.gmra.mrb[0].mxu0 %v3715
  %v5149 = vpop.f32.mrb[0].mxu0
  %v5150 = vadd.f32 0.0, %v5149
  %v5151 = vpop.f32.mrb[0].mxu0
  %v5152 = vadd.f32 0.0, %v5151
  %v5153 = vpop.f32.mrb[0].mxu0
  %v5154 = vadd.f32 0.0, %v5153
  %v5155 = vpop.f32.mrb[0].mxu0
  %v5156 = vadd.f32 0.0, %v5155
  %5157 = vmatprep.mubr.bf16.mxu0 0
  %5158 = vmatmul.mubr.bf16.gmra.mrb[0].mxu0 %v3718
  %v5159 = vpop.f32.mrb[0].mxu0
  %v5160 = vadd.f32 0.0, %v5159
  %v5161 = vpop.f32.mrb[0].mxu0
  %v5162 = vadd.f32 0.0, %v5161
  %v5163 = vpop.f32.mrb[0].mxu0
  %v5164 = vadd.f32 0.0, %v5163
  %v5165 = vpop.f32.mrb[0].mxu0
  %v5166 = vadd.f32 0.0, %v5165
  %5167 = vmatprep.mubr.bf16.mxu0 0
  %5168 = vmatmul.mubr.bf16.gmra.mrb[0].mxu0 %v3721
  %v5169 = vpop.f32.mrb[0].mxu0
  %v5170 = vadd.f32 0.0, %v5169
  %v5171 = vpop.f32.mrb[0].mxu0
  %v5172 = vadd.f32 0.0, %v5171
  %v5173 = vpop.f32.mrb[0].mxu0
  %v5174 = vadd.f32 0.0, %v5173
  %v5175 = vpop.f32.mrb[0].mxu0
  %v5176 = vadd.f32 0.0, %v5175
  %5177 = vmatprep.mubr.bf16.mxu0 0
  %5178 = vmatmul.mubr.bf16.gmra.mrb[0].mxu0 %v3724
  %v5179 = vpop.f32.mrb[0].mxu0
  %v5180 = vadd.f32 0.0, %v5179
  %v5181 = vpop.f32.mrb[0].mxu0
  %v5182 = vadd.f32 0.0, %v5181
  %v5183 = vpop.f32.mrb[0].mxu0
  %v5184 = vadd.f32 0.0, %v5183
  %v5185 = vpop.f32.mrb[0].mxu0
  %v5186 = vadd.f32 0.0, %v5185
  %5187 = vmatprep.mubr.bf16.mxu0 0
  %5188 = vmatmul.mubr.bf16.gmra.mrb[0].mxu0 %v3727
  %v5189 = vpop.f32.mrb[0].mxu0
  %v5190 = vadd.f32 0.0, %v5189
  %v5191 = vpop.f32.mrb[0].mxu0
  %v5192 = vadd.f32 0.0, %v5191
  %v5193 = vpop.f32.mrb[0].mxu0
  %v5194 = vadd.f32 0.0, %v5193
  %v5195 = vpop.f32.mrb[0].mxu0
  %v5196 = vadd.f32 0.0, %v5195
  %5197 = vmatprep.mubr.bf16.mxu0 0
  %5198 = vmatmul.mubr.bf16.gmra.mrb[0].mxu0 %v3730
  %v5199 = vpop.f32.mrb[0].mxu0
  %v5200 = vadd.f32 0.0, %v5199
  %v5201 = vpop.f32.mrb[0].mxu0
  %v5202 = vadd.f32 0.0, %v5201
  %v5203 = vpop.f32.mrb[0].mxu0
  %v5204 = vadd.f32 0.0, %v5203
  %v5205 = vpop.f32.mrb[0].mxu0
  %v5206 = vadd.f32 0.0, %v5205
  %5207 = vmatprep.mubr.bf16.mxu0 0
  %5208 = vmatmul.mubr.bf16.gmra.mrb[0].mxu0 %v3733
  %v5209 = vpop.f32.mrb[0].mxu0
  %v5210 = vadd.f32 0.0, %v5209
  %v5211 = vpop.f32.mrb[0].mxu0
  %v5212 = vadd.f32 0.0, %v5211
  %v5213 = vpop.f32.mrb[0].mxu0
  %v5214 = vadd.f32 0.0, %v5213
  %v5215 = vpop.f32.mrb[0].mxu0
  %v5216 = vadd.f32 0.0, %v5215
  %5217 = vmatprep.mubr.bf16.mxu0 0
  %5218 = vmatmul.mubr.bf16.gmra.mrb[0].mxu0 %v3736
  %v5219 = vpop.f32.mrb[0].mxu0
  %v5220 = vadd.f32 0.0, %v5219
  %v5221 = vpop.f32.mrb[0].mxu0
  %v5222 = vadd.f32 0.0, %v5221
  %v5223 = vpop.f32.mrb[0].mxu0
  %v5224 = vadd.f32 0.0, %v5223
  %v5225 = vpop.f32.mrb[0].mxu0
  %v5226 = vadd.f32 0.0, %v5225
  %5227 = vmatprep.mubr.bf16.mxu0 0
  %5228 = vmatmul.mubr.bf16.gmra.mrb[0].mxu0 %v3739
  %v5229 = vpop.f32.mrb[0].mxu0
  %v5230 = vadd.f32 0.0, %v5229
  %v5231 = vpop.f32.mrb[0].mxu0
  %v5232 = vadd.f32 0.0, %v5231
  %v5233 = vpop.f32.mrb[0].mxu0
  %v5234 = vadd.f32 0.0, %v5233
  %v5235 = vpop.f32.mrb[0].mxu0
  %v5236 = vadd.f32 0.0, %v5235
  %5237 = vmatprep.mubr.bf16.mxu0 0
  %5238 = vmatmul.mubr.bf16.gmra.mrb[0].mxu0 %v3742
  %v5239 = vpop.f32.mrb[0].mxu0
  %v5240 = vadd.f32 0.0, %v5239
  %v5241 = vpop.f32.mrb[0].mxu0
  %v5242 = vadd.f32 0.0, %v5241
  %v5243 = vpop.f32.mrb[0].mxu0
  %v5244 = vadd.f32 0.0, %v5243
  %v5245 = vpop.f32.mrb[0].mxu0
  %v5246 = vadd.f32 0.0, %v5245
  %5247 = vmatprep.mubr.bf16.mxu0 0
  %5248 = vmatmul.mubr.bf16.gmra.mrb[0].mxu0 %v3745
  %v5249 = vpop.f32.mrb[0].mxu0
  %v5250 = vadd.f32 0.0, %v5249
  %v5251 = vpop.f32.mrb[0].mxu0
  %v5252 = vadd.f32 0.0, %v5251
  %v5253 = vpop.f32.mrb[0].mxu0
  %v5254 = vadd.f32 0.0, %v5253
  %v5255 = vpop.f32.mrb[0].mxu0
  %v5256 = vadd.f32 0.0, %v5255
  %5257 = vmatprep.mubr.bf16.mxu0 0
  %5258 = vmatmul.mubr.bf16.gmra.mrb[0].mxu0 %v3748
  %v5259 = vpop.f32.mrb[0].mxu0
  %v5260 = vadd.f32 0.0, %v5259
  %v5261 = vpop.f32.mrb[0].mxu0
  %v5262 = vadd.f32 0.0, %v5261
  %v5263 = vpop.f32.mrb[0].mxu0
  %v5264 = vadd.f32 0.0, %v5263
  %v5265 = vpop.f32.mrb[0].mxu0
  %v5266 = vadd.f32 0.0, %v5265
  %5267 = vmatprep.mubr.bf16.mxu0 0
  %5268 = vmatmul.mubr.bf16.gmra.mrb[0].mxu0 %v3751
  %v5269 = vpop.f32.mrb[0].mxu0
  %v5270 = vadd.f32 0.0, %v5269
  %v5271 = vpop.f32.mrb[0].mxu0
  %v5272 = vadd.f32 0.0, %v5271
  %v5273 = vpop.f32.mrb[0].mxu0
  %v5274 = vadd.f32 0.0, %v5273
  %v5275 = vpop.f32.mrb[0].mxu0
  %v5276 = vadd.f32 0.0, %v5275
  %5277 = vmatprep.mubr.bf16.mxu0 0
  %5278 = vmatmul.mubr.bf16.gmra.mrb[0].mxu0 %v3754
  %v5279 = vpop.f32.mrb[0].mxu0
  %v5280 = vadd.f32 0.0, %v5279
  %v5281 = vpop.f32.mrb[0].mxu0
  %v5282 = vadd.f32 0.0, %v5281
  %v5283 = vpop.f32.mrb[0].mxu0
  %v5284 = vadd.f32 0.0, %v5283
  %v5285 = vpop.f32.mrb[0].mxu0
  %v5286 = vadd.f32 0.0, %v5285
  %5287 = vmatprep.mubr.bf16.mxu0 0
  %5288 = vmatmul.mubr.bf16.gmra.mrb[0].mxu0 %v3757
  %v5289 = vpop.f32.mrb[0].mxu0
  %v5290 = vadd.f32 0.0, %v5289
  %v5291 = vpop.f32.mrb[0].mxu0
  %v5292 = vadd.f32 0.0, %v5291
  %v5293 = vpop.f32.mrb[0].mxu0
  %v5294 = vadd.f32 0.0, %v5293
  %v5295 = vpop.f32.mrb[0].mxu0
  %v5296 = vadd.f32 0.0, %v5295
  %5297 = vmatprep.mubr.bf16.mxu0 0
  %5298 = vmatmul.mubr.bf16.gmra.mrb[0].mxu0 %v3760
  %v5299 = vpop.f32.mrb[0].mxu0
  %v5300 = vadd.f32 0.0, %v5299
  %v5301 = vpop.f32.mrb[0].mxu0
  %v5302 = vadd.f32 0.0, %v5301
  %v5303 = vpop.f32.mrb[0].mxu0
  %v5304 = vadd.f32 0.0, %v5303
  %v5305 = vpop.f32.mrb[0].mxu0
  %v5306 = vadd.f32 0.0, %v5305
  %5307 = vmatprep.mubr.bf16.mxu0 0
  %5308 = vmatmul.mubr.bf16.gmra.mrb[0].mxu0 %v3763
  %v5309 = vpop.f32.mrb[0].mxu0
  %v5310 = vadd.f32 0.0, %v5309
  %v5311 = vpop.f32.mrb[0].mxu0
  %v5312 = vadd.f32 0.0, %v5311
  %v5313 = vpop.f32.mrb[0].mxu0
  %v5314 = vadd.f32 0.0, %v5313
  %v5315 = vpop.f32.mrb[0].mxu0
  %v5316 = vadd.f32 0.0, %v5315
  %5317 = vmatprep.mubr.bf16.mxu0 0
  %5318 = vmatmul.mubr.bf16.gmra.mrb[0].mxu0 %v3766
  %v5319 = vpop.f32.mrb[0].mxu0
  %v5320 = vadd.f32 0.0, %v5319
  %v5321 = vpop.f32.mrb[0].mxu0
  %v5322 = vadd.f32 0.0, %v5321
  %v5323 = vpop.f32.mrb[0].mxu0
  %v5324 = vpop.f32.mrb[0].mxu0
  %5325 = vdwg.mxu0
  %v5326 = vmul.f32 %v581, %v3809
  %v5327 = vmul.f32 %v583, %v3811
  %v5328 = vmul.f32 %v585, %v3813
  %v5329 = vmul.f32 %v587, %v3815
  %v5330 = vmul.f32 %v591, %v3819
  %v5331 = vmul.f32 %v593, %v3821
  %v5332 = vmul.f32 %v595, %v3823
  %v5333 = vmul.f32 %v597, %v3825
  %v5334 = vmul.f32 %v601, %v3829
  %v5335 = vmul.f32 %v603, %v3831
  %v5336 = vmul.f32 %v605, %v3833
  %v5337 = vmul.f32 %v607, %v3835
  %v5338 = vmul.f32 %v611, %v3839
  %v5339 = vmul.f32 %v613, %v3841
  %v5340 = vmul.f32 %v615, %v3843
  %v5341 = vmul.f32 %v617, %v3845
  %v5342 = vmul.f32 %v621, %v3849
  %v5343 = vmul.f32 %v623, %v3851
  %v5344 = vmul.f32 %v625, %v3853
  %v5345 = vmul.f32 %v627, %v3855
  %v5346 = vmul.f32 %v631, %v3859
  %v5347 = vmul.f32 %v633, %v3861
  %v5348 = vmul.f32 %v635, %v3863
  %v5349 = vmul.f32 %v637, %v3865
  %v5350 = vmul.f32 %v641, %v3869
  %v5351 = vmul.f32 %v643, %v3871
  %v5352 = vmul.f32 %v645, %v3873
  %v5353 = vmul.f32 %v647, %v3875
  %v5354 = vmul.f32 %v651, %v3879
  %v5355 = vmul.f32 %v653, %v3881
  %v5356 = vmul.f32 %v655, %v3883
  %v5357 = vmul.f32 %v657, %v3885
  %v5358 = vmul.f32 %v661, %v3889
  %v5359 = vmul.f32 %v663, %v3891
  %v5360 = vmul.f32 %v665, %v3893
  %v5361 = vmul.f32 %v667, %v3895
  %v5362 = vmul.f32 %v671, %v3899
  %v5363 = vmul.f32 %v673, %v3901
  %v5364 = vmul.f32 %v675, %v3903
  %v5365 = vmul.f32 %v677, %v3905
  %v5366 = vmul.f32 %v681, %v3909
  %v5367 = vmul.f32 %v683, %v3911
  %v5368 = vmul.f32 %v685, %v3913
  %v5369 = vmul.f32 %v687, %v3915
  %v5370 = vmul.f32 %v691, %v3919
  %v5371 = vmul.f32 %v693, %v3921
  %v5372 = vmul.f32 %v695, %v3923
  %v5373 = vmul.f32 %v697, %v3925
  %v5374 = vmul.f32 %v701, %v3929
  %v5375 = vmul.f32 %v703, %v3931
  %v5376 = vmul.f32 %v705, %v3933
  %v5377 = vmul.f32 %v707, %v3935
  %v5378 = vmul.f32 %v711, %v3939
  %v5379 = vmul.f32 %v713, %v3941
  %v5380 = vmul.f32 %v715, %v3943
  %v5381 = vmul.f32 %v717, %v3945
  %v5382 = vmul.f32 %v721, %v3949
  %v5383 = vmul.f32 %v723, %v3951
  %v5384 = vmul.f32 %v725, %v3953
  %v5385 = vmul.f32 %v727, %v3955
  %v5386 = vmul.f32 %v731, %v3959
  %v5387 = vmul.f32 %v733, %v3961
  %v5388 = vmul.f32 %v735, %v3963
  %v5389 = vmul.f32 %v737, %v3965
  %v5390 = vmul.f32 %v741, %v3969
  %v5391 = vmul.f32 %v743, %v3971
  %v5392 = vmul.f32 %v745, %v3973
  %v5393 = vmul.f32 %v747, %v3975
  %v5394 = vmul.f32 %v751, %v3979
  %v5395 = vmul.f32 %v753, %v3981
  %v5396 = vmul.f32 %v755, %v3983
  %v5397 = vmul.f32 %v757, %v3985
  %v5398 = vmul.f32 %v761, %v3989
  %v5399 = vmul.f32 %v763, %v3991
  %v5400 = vmul.f32 %v765, %v3993
  %v5401 = vmul.f32 %v767, %v3995
  %v5402 = vmul.f32 %v771, %v3999
  %v5403 = vmul.f32 %v773, %v4001
  %v5404 = vmul.f32 %v775, %v4003
  %v5405 = vmul.f32 %v777, %v4005
  %v5406 = vmul.f32 %v781, %v4009
  %v5407 = vmul.f32 %v783, %v4011
  %v5408 = vmul.f32 %v785, %v4013
  %v5409 = vmul.f32 %v787, %v4015
  %v5410 = vmul.f32 %v791, %v4019
  %v5411 = vmul.f32 %v793, %v4021
  %v5412 = vmul.f32 %v795, %v4023
  %v5413 = vmul.f32 %v797, %v4025
  %v5414 = vmul.f32 %v801, %v4029
  %v5415 = vmul.f32 %v803, %v4031
  %v5416 = vmul.f32 %v805, %v4033
  %v5417 = vmul.f32 %v807, %v4035
  %v5418 = vmul.f32 %v811, %v4039
  %v5419 = vmul.f32 %v813, %v4041
  %v5420 = vmul.f32 %v815, %v4043
  %v5421 = vmul.f32 %v817, %v4045
  %v5422 = vmul.f32 %v821, %v4049
  %v5423 = vmul.f32 %v823, %v4051
  %v5424 = vmul.f32 %v825, %v4053
  %v5425 = vmul.f32 %v827, %v4055
  %v5426 = vmul.f32 %v831, %v4059
  %v5427 = vmul.f32 %v833, %v4061
  %v5428 = vmul.f32 %v835, %v4063
  %v5429 = vmul.f32 %v837, %v4065
  %v5430 = vmul.f32 %v841, %v4069
  %v5431 = vmul.f32 %v843, %v4071
  %v5432 = vmul.f32 %v845, %v4073
  %v5433 = vmul.f32 %v847, %v4075
  %v5434 = vmul.f32 %v851, %v4079
  %v5435 = vmul.f32 %v853, %v4081
  %v5436 = vmul.f32 %v855, %v4083
  %v5437 = vmul.f32 %v857, %v4085
  %v5438 = vmul.f32 %v861, %v4089
  %v5439 = vmul.f32 %v863, %v4091
  %v5440 = vmul.f32 %v865, %v4093
  %v5441 = vmul.f32 %v867, %v4095
  %v5442 = vmul.f32 %v871, %v4099
  %v5443 = vmul.f32 %v873, %v4101
  %v5444 = vmul.f32 %v875, %v4103
  %v5445 = vmul.f32 %v877, %v4105
  %v5446 = vmul.f32 %v881, %v4109
  %v5447 = vmul.f32 %v883, %v4111
  %v5448 = vmul.f32 %v885, %v4113
  %v5449 = vmul.f32 %v887, %v4115
  %v5450 = vmul.f32 %v891, %v4119
  %v5451 = vmul.f32 %v893, %v4121
  %v5452 = vmul.f32 %v895, %v4123
  %v5453 = vmul.f32 %v897, %v4125
  %v5454 = vmul.f32 %v901, %v4129
  %v5455 = vmul.f32 %v903, %v4131
  %v5456 = vmul.f32 %v905, %v4133
  %v5457 = vmul.f32 %v907, %v4135
  %v5458 = vmul.f32 %v911, %v4139
  %v5459 = vmul.f32 %v913, %v4141
  %v5460 = vmul.f32 %v915, %v4143
  %v5461 = vmul.f32 %v917, %v4145
  %v5462 = vmul.f32 %v921, %v4149
  %v5463 = vmul.f32 %v923, %v4151
  %v5464 = vmul.f32 %v925, %v4153
  %v5465 = vmul.f32 %v927, %v4155
  %v5466 = vmul.f32 %v931, %v4159
  %v5467 = vmul.f32 %v933, %v4161
  %v5468 = vmul.f32 %v935, %v4163
  %v5469 = vmul.f32 %v937, %v4165
  %v5470 = vmul.f32 %v941, %v4169
  %v5471 = vmul.f32 %v943, %v4171
  %v5472 = vmul.f32 %v945, %v4173
  %v5473 = vmul.f32 %v947, %v4175
  %v5474 = vmul.f32 %v951, %v4179
  %v5475 = vmul.f32 %v953, %v4181
  %v5476 = vmul.f32 %v955, %v4183
  %v5477 = vmul.f32 %v957, %v4185
  %v5478 = vmul.f32 %v961, %v4189
  %v5479 = vmul.f32 %v963, %v4191
  %v5480 = vmul.f32 %v965, %v4193
  %v5481 = vmul.f32 %v967, %v4195
  %v5482 = vmul.f32 %v971, %v4199
  %v5483 = vmul.f32 %v973, %v4201
  %v5484 = vmul.f32 %v975, %v4203
  %v5485 = vmul.f32 %v977, %v4205
  %v5486 = vmul.f32 %v981, %v4209
  %v5487 = vmul.f32 %v983, %v4211
  %v5488 = vmul.f32 %v985, %v4213
  %v5489 = vmul.f32 %v987, %v4215
  %v5490 = vmul.f32 %v991, %v4219
  %v5491 = vmul.f32 %v993, %v4221
  %v5492 = vmul.f32 %v995, %v4223
  %v5493 = vmul.f32 %v997, %v4225
  %v5494 = vmul.f32 %v1001, %v4229
  %v5495 = vmul.f32 %v1003, %v4231
  %v5496 = vmul.f32 %v1005, %v4233
  %v5497 = vmul.f32 %v1007, %v4235
  %v5498 = vmul.f32 %v1011, %v4239
  %v5499 = vmul.f32 %v1013, %v4241
  %v5500 = vmul.f32 %v1015, %v4243
  %v5501 = vmul.f32 %v1017, %v4245
  %v5502 = vmul.f32 %v1021, %v4249
  %v5503 = vmul.f32 %v1023, %v4251
  %v5504 = vmul.f32 %v1025, %v4253
  %v5505 = vmul.f32 %v1027, %v4255
  %v5506 = vmul.f32 %v1031, %v4259
  %v5507 = vmul.f32 %v1033, %v4261
  %v5508 = vmul.f32 %v1035, %v4263
  %v5509 = vmul.f32 %v1037, %v4265
  %v5510 = vmul.f32 %v1041, %v4269
  %v5511 = vmul.f32 %v1043, %v4271
  %v5512 = vmul.f32 %v1045, %v4273
  %v5513 = vmul.f32 %v1047, %v4275
  %v5514 = vmul.f32 %v1051, %v4279
  %v5515 = vmul.f32 %v1053, %v4281
  %v5516 = vmul.f32 %v1055, %v4283
  %v5517 = vmul.f32 %v1057, %v4285
  %v5518 = vmul.f32 %v1061, %v4289
  %v5519 = vmul.f32 %v1063, %v4291
  %v5520 = vmul.f32 %v1065, %v4293
  %v5521 = vmul.f32 %v1067, %v4295
  %v5522 = vmul.f32 %v1071, %v4299
  %v5523 = vmul.f32 %v1073, %v4301
  %v5524 = vmul.f32 %v1075, %v4303
  %v5525 = vmul.f32 %v1077, %v4305
  %v5526 = vmul.f32 %v1081, %v4309
  %v5527 = vmul.f32 %v1083, %v4311
  %v5528 = vmul.f32 %v1085, %v4313
  %v5529 = vmul.f32 %v1087, %v4315
  %v5530 = vmul.f32 %v1091, %v4319
  %v5531 = vmul.f32 %v1093, %v4321
  %v5532 = vmul.f32 %v1095, %v4323
  %v5533 = vmul.f32 %v1097, %v4325
  %v5534 = vmul.f32 %v1101, %v4329
  %v5535 = vmul.f32 %v1103, %v4331
  %v5536 = vmul.f32 %v1105, %v4333
  %v5537 = vmul.f32 %v1107, %v4335
  %v5538 = vmul.f32 %v1111, %v4339
  %v5539 = vmul.f32 %v1113, %v4341
  %v5540 = vmul.f32 %v1115, %v4343
  %v5541 = vmul.f32 %v1117, %v4345
  %v5542 = vmul.f32 %v1121, %v4349
  %v5543 = vmul.f32 %v1123, %v4351
  %v5544 = vmul.f32 %v1125, %v4353
  %v5545 = vmul.f32 %v1127, %v4355
  %v5546 = vmul.f32 %v1131, %v4359
  %v5547 = vmul.f32 %v1133, %v4361
  %v5548 = vmul.f32 %v1135, %v4363
  %v5549 = vmul.f32 %v1137, %v4365
  %v5550 = vmul.f32 %v1141, %v4369
  %v5551 = vmul.f32 %v1143, %v4371
  %v5552 = vmul.f32 %v1145, %v4373
  %v5553 = vmul.f32 %v1147, %v4375
  %v5554 = vmul.f32 %v1151, %v4379
  %v5555 = vmul.f32 %v1153, %v4381
  %v5556 = vmul.f32 %v1155, %v4383
  %v5557 = vmul.f32 %v1157, %v4385
  %v5558 = vmul.f32 %v1161, %v4389
  %v5559 = vmul.f32 %v1163, %v4391
  %v5560 = vmul.f32 %v1165, %v4393
  %v5561 = vmul.f32 %v1167, %v4395
  %v5562 = vmul.f32 %v1171, %v4399
  %v5563 = vmul.f32 %v1173, %v4401
  %v5564 = vmul.f32 %v1175, %v4403
  %v5565 = vmul.f32 %v1177, %v4405
  %v5566 = vmul.f32 %v1181, %v4409
  %v5567 = vmul.f32 %v1183, %v4411
  %v5568 = vmul.f32 %v1185, %v4413
  %v5569 = vmul.f32 %v1187, %v4415
  %v5570 = vmul.f32 %v1191, %v4419
  %v5571 = vmul.f32 %v1193, %v4421
  %v5572 = vmul.f32 %v1195, %v4423
  %v5573 = vmul.f32 %v1197, %v4425
  %v5574 = vmul.f32 %v1201, %v4429
  %v5575 = vmul.f32 %v1203, %v4431
  %v5576 = vmul.f32 %v1205, %v4433
  %v5577 = vmul.f32 %v1207, %v4435
  %v5578 = vmul.f32 %v1211, %v4439
  %v5579 = vmul.f32 %v1213, %v4441
  %v5580 = vmul.f32 %v1215, %v4443
  %v5581 = vmul.f32 %v1217, %v4445
  %v5582 = vmul.f32 %v1221, %v4449
  %v5583 = vmul.f32 %v1223, %v4451
  %v5584 = vmul.f32 %v1225, %v4453
  %v5585 = vmul.f32 %v1227, %v4455
  %v5586 = vmul.f32 %v1231, %v4459
  %v5587 = vmul.f32 %v1233, %v4461
  %v5588 = vmul.f32 %v1235, %v4463
  %v5589 = vmul.f32 %v1237, %v4465
  %v5590 = vmul.f32 %v1241, %v4469
  %v5591 = vmul.f32 %v1243, %v4471
  %v5592 = vmul.f32 %v1245, %v4473
  %v5593 = vmul.f32 %v1247, %v4475
  %v5594 = vmul.f32 %v1251, %v4479
  %v5595 = vmul.f32 %v1253, %v4481
  %v5596 = vmul.f32 %v1255, %v4483
  %v5597 = vmul.f32 %v1257, %v4485
  %v5598 = vmul.f32 %v1261, %v4489
  %v5599 = vmul.f32 %v1263, %v4491
  %v5600 = vmul.f32 %v1265, %v4493
  %v5601 = vmul.f32 %v1267, %v4495
  %v5602 = vmul.f32 %v1271, %v4499
  %v5603 = vmul.f32 %v1273, %v4501
  %v5604 = vmul.f32 %v1275, %v4503
  %v5605 = vmul.f32 %v1277, %v4505
  %v5606 = vmul.f32 %v1281, %v4509
  %v5607 = vmul.f32 %v1283, %v4511
  %v5608 = vmul.f32 %v1285, %v4513
  %v5609 = vmul.f32 %v1287, %v4515
  %v5610 = vmul.f32 %v1291, %v4519
  %v5611 = vmul.f32 %v1293, %v4521
  %v5612 = vmul.f32 %v1295, %v4523
  %v5613 = vmul.f32 %v1297, %v4525
  %v5614 = vmul.f32 %v1301, %v4529
  %v5615 = vmul.f32 %v1303, %v4531
  %v5616 = vmul.f32 %v1305, %v4533
  %v5617 = vmul.f32 %v1307, %v4535
  %v5618 = vmul.f32 %v1311, %v4539
  %v5619 = vmul.f32 %v1313, %v4541
  %v5620 = vadd.f32 %v5326, %v4590
  %v5621 = vadd.f32 %v5327, %v4592
  %v5622 = vadd.f32 %v5328, %v4594
  %v5623 = vadd.f32 %v5329, %v4596
  %v5624 = vadd.f32 %v5330, %v4600
  %v5625 = vadd.f32 %v5331, %v4602
  %v5626 = vadd.f32 %v5332, %v4604
  %v5627 = vadd.f32 %v5333, %v4606
  %v5628 = vadd.f32 %v5334, %v4610
  %v5629 = vadd.f32 %v5335, %v4612
  %v5630 = vadd.f32 %v5336, %v4614
  %v5631 = vadd.f32 %v5337, %v4616
  %v5632 = vadd.f32 %v5338, %v4620
  %v5633 = vadd.f32 %v5339, %v4622
  %v5634 = vadd.f32 %v5340, %v4624
  %v5635 = vadd.f32 %v5341, %v4626
  %v5636 = vadd.f32 %v5342, %v4630
  %v5637 = vadd.f32 %v5343, %v4632
  %v5638 = vadd.f32 %v5344, %v4634
  %v5639 = vadd.f32 %v5345, %v4636
  %v5640 = vadd.f32 %v5346, %v4640
  %v5641 = vadd.f32 %v5347, %v4642
  %v5642 = vadd.f32 %v5348, %v4644
  %v5643 = vadd.f32 %v5349, %v4646
  %v5644 = vadd.f32 %v5350, %v4650
  %v5645 = vadd.f32 %v5351, %v4652
  %v5646 = vadd.f32 %v5352, %v4654
  %v5647 = vadd.f32 %v5353, %v4656
  %v5648 = vadd.f32 %v5354, %v4660
  %v5649 = vadd.f32 %v5355, %v4662
  %v5650 = vadd.f32 %v5356, %v4664
  %v5651 = vadd.f32 %v5357, %v4666
  %v5652 = vadd.f32 %v5358, %v4670
  %v5653 = vadd.f32 %v5359, %v4672
  %v5654 = vadd.f32 %v5360, %v4674
  %v5655 = vadd.f32 %v5361, %v4676
  %v5656 = vadd.f32 %v5362, %v4680
  %v5657 = vadd.f32 %v5363, %v4682
  %v5658 = vadd.f32 %v5364, %v4684
  %v5659 = vadd.f32 %v5365, %v4686
  %v5660 = vadd.f32 %v5366, %v4690
  %v5661 = vadd.f32 %v5367, %v4692
  %v5662 = vadd.f32 %v5368, %v4694
  %v5663 = vadd.f32 %v5369, %v4696
  %v5664 = vadd.f32 %v5370, %v4700
  %v5665 = vadd.f32 %v5371, %v4702
  %v5666 = vadd.f32 %v5372, %v4704
  %v5667 = vadd.f32 %v5373, %v4706
  %v5668 = vadd.f32 %v5374, %v4710
  %v5669 = vadd.f32 %v5375, %v4712
  %v5670 = vadd.f32 %v5376, %v4714
  %v5671 = vadd.f32 %v5377, %v4716
  %v5672 = vadd.f32 %v5378, %v4720
  %v5673 = vadd.f32 %v5379, %v4722
  %v5674 = vadd.f32 %v5380, %v4724
  %v5675 = vadd.f32 %v5381, %v4726
  %v5676 = vadd.f32 %v5382, %v4730
  %v5677 = vadd.f32 %v5383, %v4732
  %v5678 = vadd.f32 %v5384, %v4734
  %v5679 = vadd.f32 %v5385, %v4736
  %v5680 = vadd.f32 %v5386, %v4740
  %v5681 = vadd.f32 %v5387, %v4742
  %v5682 = vadd.f32 %v5388, %v4744
  %v5683 = vadd.f32 %v5389, %v4746
  %v5684 = vadd.f32 %v5390, %v4750
  %v5685 = vadd.f32 %v5391, %v4752
  %v5686 = vadd.f32 %v5392, %v4754
  %v5687 = vadd.f32 %v5393, %v4756
  %v5688 = vadd.f32 %v5394, %v4760
  %v5689 = vadd.f32 %v5395, %v4762
  %v5690 = vadd.f32 %v5396, %v4764
  %v5691 = vadd.f32 %v5397, %v4766
  %v5692 = vadd.f32 %v5398, %v4770
  %v5693 = vadd.f32 %v5399, %v4772
  %v5694 = vadd.f32 %v5400, %v4774
  %v5695 = vadd.f32 %v5401, %v4776
  %v5696 = vadd.f32 %v5402, %v4780
  %v5697 = vadd.f32 %v5403, %v4782
  %v5698 = vadd.f32 %v5404, %v4784
  %v5699 = vadd.f32 %v5405, %v4786
  %v5700 = vadd.f32 %v5406, %v4790
  %v5701 = vadd.f32 %v5407, %v4792
  %v5702 = vadd.f32 %v5408, %v4794
  %v5703 = vadd.f32 %v5409, %v4796
  %v5704 = vadd.f32 %v5410, %v4800
  %v5705 = vadd.f32 %v5411, %v4802
  %v5706 = vadd.f32 %v5412, %v4804
  %v5707 = vadd.f32 %v5413, %v4806
  %v5708 = vadd.f32 %v5414, %v4810
  %v5709 = vadd.f32 %v5415, %v4812
  %v5710 = vadd.f32 %v5416, %v4814
  %v5711 = vadd.f32 %v5417, %v4816
  %v5712 = vadd.f32 %v5418, %v4820
  %v5713 = vadd.f32 %v5419, %v4822
  %v5714 = vadd.f32 %v5420, %v4824
  %v5715 = vadd.f32 %v5421, %v4826
  %v5716 = vadd.f32 %v5422, %v4830
  %v5717 = vadd.f32 %v5423, %v4832
  %v5718 = vadd.f32 %v5424, %v4834
  %v5719 = vadd.f32 %v5425, %v4836
  %v5720 = vadd.f32 %v5426, %v4840
  %v5721 = vadd.f32 %v5427, %v4842
  %v5722 = vadd.f32 %v5428, %v4844
  %v5723 = vadd.f32 %v5429, %v4846
  %v5724 = vadd.f32 %v5430, %v4850
  %v5725 = vadd.f32 %v5431, %v4852
  %v5726 = vadd.f32 %v5432, %v4854
  %v5727 = vadd.f32 %v5433, %v4856
  %v5728 = vadd.f32 %v5434, %v4860
  %v5729 = vadd.f32 %v5435, %v4862
  %v5730 = vadd.f32 %v5436, %v4864
  %v5731 = vadd.f32 %v5437, %v4866
  %v5732 = vadd.f32 %v5438, %v4870
  %v5733 = vadd.f32 %v5439, %v4872
  %v5734 = vadd.f32 %v5440, %v4874
  %v5735 = vadd.f32 %v5441, %v4876
  %v5736 = vadd.f32 %v5442, %v4880
  %v5737 = vadd.f32 %v5443, %v4882
  %v5738 = vadd.f32 %v5444, %v4884
  %v5739 = vadd.f32 %v5445, %v4886
  %v5740 = vadd.f32 %v5446, %v4890
  %v5741 = vadd.f32 %v5447, %v4892
  %v5742 = vadd.f32 %v5448, %v4894
  %v5743 = vadd.f32 %v5449, %v4896
  %v5744 = vadd.f32 %v5450, %v4900
  %v5745 = vadd.f32 %v5451, %v4902
  %v5746 = vadd.f32 %v5452, %v4904
  %v5747 = vadd.f32 %v5453, %v4906
  %v5748 = vadd.f32 %v5454, %v4910
  %v5749 = vadd.f32 %v5455, %v4912
  %v5750 = vadd.f32 %v5456, %v4914
  %v5751 = vadd.f32 %v5457, %v4916
  %v5752 = vadd.f32 %v5458, %v4920
  %v5753 = vadd.f32 %v5459, %v4922
  %v5754 = vadd.f32 %v5460, %v4924
  %v5755 = vadd.f32 %v5461, %v4926
  %v5756 = vadd.f32 %v5462, %v4930
  %v5757 = vadd.f32 %v5463, %v4932
  %v5758 = vadd.f32 %v5464, %v4934
  %v5759 = vadd.f32 %v5465, %v4936
  %v5760 = vadd.f32 %v5466, %v4940
  %v5761 = vadd.f32 %v5467, %v4942
  %v5762 = vadd.f32 %v5468, %v4944
  %v5763 = vadd.f32 %v5469, %v4946
  %v5764 = vadd.f32 %v5470, %v4950
  %v5765 = vadd.f32 %v5471, %v4952
  %v5766 = vadd.f32 %v5472, %v4954
  %v5767 = vadd.f32 %v5473, %v4956
  %v5768 = vadd.f32 %v5474, %v4960
  %v5769 = vadd.f32 %v5475, %v4962
  %v5770 = vadd.f32 %v5476, %v4964
  %v5771 = vadd.f32 %v5477, %v4966
  %v5772 = vadd.f32 %v5478, %v4970
  %v5773 = vadd.f32 %v5479, %v4972
  %v5774 = vadd.f32 %v5480, %v4974
  %v5775 = vadd.f32 %v5481, %v4976
  %v5776 = vadd.f32 %v5482, %v4980
  %v5777 = vadd.f32 %v5483, %v4982
  %v5778 = vadd.f32 %v5484, %v4984
  %v5779 = vadd.f32 %v5485, %v4986
  %v5780 = vadd.f32 %v5486, %v4990
  %v5781 = vadd.f32 %v5487, %v4992
  %v5782 = vadd.f32 %v5488, %v4994
  %v5783 = vadd.f32 %v5489, %v4996
  %v5784 = vadd.f32 %v5490, %v5000
  %v5785 = vadd.f32 %v5491, %v5002
  %v5786 = vadd.f32 %v5492, %v5004
  %v5787 = vadd.f32 %v5493, %v5006
  %v5788 = vadd.f32 %v5494, %v5010
  %v5789 = vadd.f32 %v5495, %v5012
  %v5790 = vadd.f32 %v5496, %v5014
  %v5791 = vadd.f32 %v5497, %v5016
  %v5792 = vadd.f32 %v5498, %v5020
  %v5793 = vadd.f32 %v5499, %v5022
  %v5794 = vadd.f32 %v5500, %v5024
  %v5795 = vadd.f32 %v5501, %v5026
  %v5796 = vadd.f32 %v5502, %v5030
  %v5797 = vadd.f32 %v5503, %v5032
  %v5798 = vadd.f32 %v5504, %v5034
  %v5799 = vadd.f32 %v5505, %v5036
  %v5800 = vadd.f32 %v5506, %v5040
  %v5801 = vadd.f32 %v5507, %v5042
  %v5802 = vadd.f32 %v5508, %v5044
  %v5803 = vadd.f32 %v5509, %v5046
  %v5804 = vadd.f32 %v5510, %v5050
  %v5805 = vadd.f32 %v5511, %v5052
  %v5806 = vadd.f32 %v5512, %v5054
  %v5807 = vadd.f32 %v5513, %v5056
  %v5808 = vadd.f32 %v5514, %v5060
  %v5809 = vadd.f32 %v5515, %v5062
  %v5810 = vadd.f32 %v5516, %v5064
  %v5811 = vadd.f32 %v5517, %v5066
  %v5812 = vadd.f32 %v5518, %v5070
  %v5813 = vadd.f32 %v5519, %v5072
  %v5814 = vadd.f32 %v5520, %v5074
  %v5815 = vadd.f32 %v5521, %v5076
  %v5816 = vadd.f32 %v5522, %v5080
  %v5817 = vadd.f32 %v5523, %v5082
  %v5818 = vadd.f32 %v5524, %v5084
  %v5819 = vadd.f32 %v5525, %v5086
  %v5820 = vadd.f32 %v5526, %v5090
  %v5821 = vadd.f32 %v5527, %v5092
  %v5822 = vadd.f32 %v5528, %v5094
  %v5823 = vadd.f32 %v5529, %v5096
  %v5824 = vadd.f32 %v5530, %v5100
  %v5825 = vadd.f32 %v5531, %v5102
  %v5826 = vadd.f32 %v5532, %v5104
  %v5827 = vadd.f32 %v5533, %v5106
  %v5828 = vadd.f32 %v5534, %v5110
  %v5829 = vadd.f32 %v5535, %v5112
  %v5830 = vadd.f32 %v5536, %v5114
  %v5831 = vadd.f32 %v5537, %v5116
  %v5832 = vadd.f32 %v5538, %v5120
  %v5833 = vadd.f32 %v5539, %v5122
  %v5834 = vadd.f32 %v5540, %v5124
  %v5835 = vadd.f32 %v5541, %v5126
  %v5836 = vadd.f32 %v5542, %v5130
  %v5837 = vadd.f32 %v5543, %v5132
  %v5838 = vadd.f32 %v5544, %v5134
  %v5839 = vadd.f32 %v5545, %v5136
  %v5840 = vadd.f32 %v5546, %v5140
  %v5841 = vadd.f32 %v5547, %v5142
  %v5842 = vadd.f32 %v5548, %v5144
  %v5843 = vadd.f32 %v5549, %v5146
  %v5844 = vadd.f32 %v5550, %v5150
  %v5845 = vadd.f32 %v5551, %v5152
  %v5846 = vadd.f32 %v5552, %v5154
  %v5847 = vadd.f32 %v5553, %v5156
  %v5848 = vadd.f32 %v5554, %v5160
  %v5849 = vadd.f32 %v5555, %v5162
  %v5850 = vadd.f32 %v5556, %v5164
  %v5851 = vadd.f32 %v5557, %v5166
  %v5852 = vadd.f32 %v5558, %v5170
  %v5853 = vadd.f32 %v5559, %v5172
  %v5854 = vadd.f32 %v5560, %v5174
  %v5855 = vadd.f32 %v5561, %v5176
  %v5856 = vadd.f32 %v5562, %v5180
  %v5857 = vadd.f32 %v5563, %v5182
  %v5858 = vadd.f32 %v5564, %v5184
  %v5859 = vadd.f32 %v5565, %v5186
  %v5860 = vadd.f32 %v5566, %v5190
  %v5861 = vadd.f32 %v5567, %v5192
  %v5862 = vadd.f32 %v5568, %v5194
  %v5863 = vadd.f32 %v5569, %v5196
  %v5864 = vadd.f32 %v5570, %v5200
  %v5865 = vadd.f32 %v5571, %v5202
  %v5866 = vadd.f32 %v5572, %v5204
  %v5867 = vadd.f32 %v5573, %v5206
  %v5868 = vadd.f32 %v5574, %v5210
  %v5869 = vadd.f32 %v5575, %v5212
  %v5870 = vadd.f32 %v5576, %v5214
  %v5871 = vadd.f32 %v5577, %v5216
  %v5872 = vadd.f32 %v5578, %v5220
  %v5873 = vadd.f32 %v5579, %v5222
  %v5874 = vadd.f32 %v5580, %v5224
  %v5875 = vadd.f32 %v5581, %v5226
  %v5876 = vadd.f32 %v5582, %v5230
  %v5877 = vadd.f32 %v5583, %v5232
  %v5878 = vadd.f32 %v5584, %v5234
  %v5879 = vadd.f32 %v5585, %v5236
  %v5880 = vadd.f32 %v5586, %v5240
  %v5881 = vadd.f32 %v5587, %v5242
  %v5882 = vadd.f32 %v5588, %v5244
  %v5883 = vadd.f32 %v5589, %v5246
  %v5884 = vadd.f32 %v5590, %v5250
  %v5885 = vadd.f32 %v5591, %v5252
  %v5886 = vadd.f32 %v5592, %v5254
  %v5887 = vadd.f32 %v5593, %v5256
  %v5888 = vadd.f32 %v5594, %v5260
  %v5889 = vadd.f32 %v5595, %v5262
  %v5890 = vadd.f32 %v5596, %v5264
  %v5891 = vadd.f32 %v5597, %v5266
  %v5892 = vadd.f32 %v5598, %v5270
  %v5893 = vadd.f32 %v5599, %v5272
  %v5894 = vadd.f32 %v5600, %v5274
  %v5895 = vadd.f32 %v5601, %v5276
  %v5896 = vadd.f32 %v5602, %v5280
  %v5897 = vadd.f32 %v5603, %v5282
  %v5898 = vadd.f32 %v5604, %v5284
  %v5899 = vadd.f32 %v5605, %v5286
  %v5900 = vadd.f32 %v5606, %v5290
  %v5901 = vadd.f32 %v5607, %v5292
  %v5902 = vadd.f32 %v5608, %v5294
  %v5903 = vadd.f32 %v5609, %v5296
  %v5904 = vadd.f32 %v5610, %v5300
  %v5905 = vadd.f32 %v5611, %v5302
  %v5906 = vadd.f32 %v5612, %v5304
  %v5907 = vadd.f32 %v5613, %v5306
  %v5908 = vadd.f32 %v5614, %v5310
  %v5909 = vadd.f32 %v5615, %v5312
  %v5910 = vadd.f32 %v5616, %v5314
  %v5911 = vadd.f32 %v5617, %v5316
  %v5912 = vadd.f32 %v5618, %v5320
  %v5913 = vadd.f32 %v5619, %v5322
  %v5914 = vsub.f32 0.0, %v5620
  %v5915 = vsub.f32 0.0, %v5621
  %v5916 = vsub.f32 0.0, %v5622
  %v5917 = vsub.f32 0.0, %v5623
  %v5918 = vsub.f32 0.0, %v5624
  %v5919 = vsub.f32 0.0, %v5625
  %v5920 = vsub.f32 0.0, %v5626
  %v5921 = vsub.f32 0.0, %v5627
  %v5922 = vsub.f32 0.0, %v5628
  %v5923 = vsub.f32 0.0, %v5629
  %v5924 = vsub.f32 0.0, %v5630
  %v5925 = vsub.f32 0.0, %v5631
  %v5926 = vsub.f32 0.0, %v5632
  %v5927 = vsub.f32 0.0, %v5633
  %v5928 = vsub.f32 0.0, %v5634
  %v5929 = vsub.f32 0.0, %v5635
  %v5930 = vsub.f32 0.0, %v5636
  %v5931 = vsub.f32 0.0, %v5637
  %v5932 = vsub.f32 0.0, %v5638
  %v5933 = vsub.f32 0.0, %v5639
  %v5934 = vsub.f32 0.0, %v5640
  %v5935 = vsub.f32 0.0, %v5641
  %v5936 = vsub.f32 0.0, %v5642
  %v5937 = vsub.f32 0.0, %v5643
  %v5938 = vsub.f32 0.0, %v5644
  %v5939 = vsub.f32 0.0, %v5645
  %v5940 = vsub.f32 0.0, %v5646
  %v5941 = vsub.f32 0.0, %v5647
  %v5942 = vsub.f32 0.0, %v5648
  %v5943 = vsub.f32 0.0, %v5649
  %v5944 = vsub.f32 0.0, %v5650
  %v5945 = vsub.f32 0.0, %v5651
  %v5946 = vsub.f32 0.0, %v5652
  %v5947 = vsub.f32 0.0, %v5653
  %v5948 = vsub.f32 0.0, %v5654
  %v5949 = vsub.f32 0.0, %v5655
  %v5950 = vsub.f32 0.0, %v5656
  %v5951 = vsub.f32 0.0, %v5657
  %v5952 = vsub.f32 0.0, %v5658
  %v5953 = vsub.f32 0.0, %v5659
  %v5954 = vsub.f32 0.0, %v5660
  %v5955 = vsub.f32 0.0, %v5661
  %v5956 = vsub.f32 0.0, %v5662
  %v5957 = vsub.f32 0.0, %v5663
  %v5958 = vsub.f32 0.0, %v5664
  %v5959 = vsub.f32 0.0, %v5665
  %v5960 = vsub.f32 0.0, %v5666
  %v5961 = vsub.f32 0.0, %v5667
  %v5962 = vsub.f32 0.0, %v5668
  %v5963 = vsub.f32 0.0, %v5669
  %v5964 = vsub.f32 0.0, %v5670
  %v5965 = vsub.f32 0.0, %v5671
  %v5966 = vsub.f32 0.0, %v5672
  %v5967 = vsub.f32 0.0, %v5673
  %v5968 = vsub.f32 0.0, %v5674
  %v5969 = vsub.f32 0.0, %v5675
  %v5970 = vsub.f32 0.0, %v5676
  %v5971 = vsub.f32 0.0, %v5677
  %v5972 = vsub.f32 0.0, %v5678
  %v5973 = vsub.f32 0.0, %v5679
  %v5974 = vsub.f32 0.0, %v5680
  %v5975 = vsub.f32 0.0, %v5681
  %v5976 = vsub.f32 0.0, %v5682
  %v5977 = vsub.f32 0.0, %v5683
  %v5978 = vsub.f32 0.0, %v5684
  %v5979 = vsub.f32 0.0, %v5685
  %v5980 = vsub.f32 0.0, %v5686
  %v5981 = vsub.f32 0.0, %v5687
  %v5982 = vsub.f32 0.0, %v5688
  %v5983 = vsub.f32 0.0, %v5689
  %v5984 = vsub.f32 0.0, %v5690
  %v5985 = vsub.f32 0.0, %v5691
  %v5986 = vsub.f32 0.0, %v5692
  %v5987 = vsub.f32 0.0, %v5693
  %v5988 = vsub.f32 0.0, %v5694
  %v5989 = vsub.f32 0.0, %v5695
  %v5990 = vsub.f32 0.0, %v5696
  %v5991 = vsub.f32 0.0, %v5697
  %v5992 = vsub.f32 0.0, %v5698
  %v5993 = vsub.f32 0.0, %v5699
  %v5994 = vsub.f32 0.0, %v5700
  %v5995 = vsub.f32 0.0, %v5701
  %v5996 = vsub.f32 0.0, %v5702
  %v5997 = vsub.f32 0.0, %v5703
  %v5998 = vsub.f32 0.0, %v5704
  %v5999 = vsub.f32 0.0, %v5705
  %v6000 = vsub.f32 0.0, %v5706
  %v6001 = vsub.f32 0.0, %v5707
  %v6002 = vsub.f32 0.0, %v5708
  %v6003 = vsub.f32 0.0, %v5709
  %v6004 = vsub.f32 0.0, %v5710
  %v6005 = vsub.f32 0.0, %v5711
  %v6006 = vsub.f32 0.0, %v5712
  %v6007 = vsub.f32 0.0, %v5713
  %v6008 = vsub.f32 0.0, %v5714
  %v6009 = vsub.f32 0.0, %v5715
  %v6010 = vsub.f32 0.0, %v5716
  %v6011 = vsub.f32 0.0, %v5717
  %v6012 = vsub.f32 0.0, %v5718
  %v6013 = vsub.f32 0.0, %v5719
  %v6014 = vsub.f32 0.0, %v5720
  %v6015 = vsub.f32 0.0, %v5721
  %v6016 = vsub.f32 0.0, %v5722
  %v6017 = vsub.f32 0.0, %v5723
  %v6018 = vsub.f32 0.0, %v5724
  %v6019 = vsub.f32 0.0, %v5725
  %v6020 = vsub.f32 0.0, %v5726
  %v6021 = vsub.f32 0.0, %v5727
  %v6022 = vsub.f32 0.0, %v5728
  %v6023 = vsub.f32 0.0, %v5729
  %v6024 = vsub.f32 0.0, %v5730
  %v6025 = vsub.f32 0.0, %v5731
  %v6026 = vsub.f32 0.0, %v5732
  %v6027 = vsub.f32 0.0, %v5733
  %v6028 = vsub.f32 0.0, %v5734
  %v6029 = vsub.f32 0.0, %v5735
  %v6030 = vsub.f32 0.0, %v5736
  %v6031 = vsub.f32 0.0, %v5737
  %v6032 = vsub.f32 0.0, %v5738
  %v6033 = vsub.f32 0.0, %v5739
  %v6034 = vsub.f32 0.0, %v5740
  %v6035 = vsub.f32 0.0, %v5741
  %v6036 = vsub.f32 0.0, %v5742
  %v6037 = vsub.f32 0.0, %v5743
  %v6038 = vsub.f32 0.0, %v5744
  %v6039 = vsub.f32 0.0, %v5745
  %v6040 = vsub.f32 0.0, %v5746
  %v6041 = vsub.f32 0.0, %v5747
  %v6042 = vsub.f32 0.0, %v5748
  %v6043 = vsub.f32 0.0, %v5749
  %v6044 = vsub.f32 0.0, %v5750
  %v6045 = vsub.f32 0.0, %v5751
  %v6046 = vsub.f32 0.0, %v5752
  %v6047 = vsub.f32 0.0, %v5753
  %v6048 = vsub.f32 0.0, %v5754
  %v6049 = vsub.f32 0.0, %v5755
  %v6050 = vsub.f32 0.0, %v5756
  %v6051 = vsub.f32 0.0, %v5757
  %v6052 = vsub.f32 0.0, %v5758
  %v6053 = vsub.f32 0.0, %v5759
  %v6054 = vsub.f32 0.0, %v5760
  %v6055 = vsub.f32 0.0, %v5761
  %v6056 = vsub.f32 0.0, %v5762
  %v6057 = vsub.f32 0.0, %v5763
  %v6058 = vsub.f32 0.0, %v5764
  %v6059 = vsub.f32 0.0, %v5765
  %v6060 = vsub.f32 0.0, %v5766
  %v6061 = vsub.f32 0.0, %v5767
  %v6062 = vsub.f32 0.0, %v5768
  %v6063 = vsub.f32 0.0, %v5769
  %v6064 = vsub.f32 0.0, %v5770
  %v6065 = vsub.f32 0.0, %v5771
  %v6066 = vsub.f32 0.0, %v5772
  %v6067 = vsub.f32 0.0, %v5773
  %v6068 = vsub.f32 0.0, %v5774
  %v6069 = vsub.f32 0.0, %v5775
  %v6070 = vsub.f32 0.0, %v5776
  %v6071 = vsub.f32 0.0, %v5777
  %v6072 = vsub.f32 0.0, %v5778
  %v6073 = vsub.f32 0.0, %v5779
  %v6074 = vsub.f32 0.0, %v5780
  %v6075 = vsub.f32 0.0, %v5781
  %v6076 = vsub.f32 0.0, %v5782
  %v6077 = vsub.f32 0.0, %v5783
  %v6078 = vsub.f32 0.0, %v5784
  %v6079 = vsub.f32 0.0, %v5785
  %v6080 = vsub.f32 0.0, %v5786
  %v6081 = vsub.f32 0.0, %v5787
  %v6082 = vsub.f32 0.0, %v5788
  %v6083 = vsub.f32 0.0, %v5789
  %v6084 = vsub.f32 0.0, %v5790
  %v6085 = vsub.f32 0.0, %v5791
  %v6086 = vsub.f32 0.0, %v5792
  %v6087 = vsub.f32 0.0, %v5793
  %v6088 = vsub.f32 0.0, %v5794
  %v6089 = vsub.f32 0.0, %v5795
  %v6090 = vsub.f32 0.0, %v5796
  %v6091 = vsub.f32 0.0, %v5797
  %v6092 = vsub.f32 0.0, %v5798
  %v6093 = vsub.f32 0.0, %v5799
  %v6094 = vsub.f32 0.0, %v5800
  %v6095 = vsub.f32 0.0, %v5801
  %v6096 = vsub.f32 0.0, %v5802
  %v6097 = vsub.f32 0.0, %v5803
  %v6098 = vsub.f32 0.0, %v5804
  %v6099 = vsub.f32 0.0, %v5805
  %v6100 = vsub.f32 0.0, %v5806
  %v6101 = vsub.f32 0.0, %v5807
  %v6102 = vsub.f32 0.0, %v5808
  %v6103 = vsub.f32 0.0, %v5809
  %v6104 = vsub.f32 0.0, %v5810
  %v6105 = vsub.f32 0.0, %v5811
  %v6106 = vsub.f32 0.0, %v5812
  %v6107 = vsub.f32 0.0, %v5813
  %v6108 = vsub.f32 0.0, %v5814
  %v6109 = vsub.f32 0.0, %v5815
  %v6110 = vsub.f32 0.0, %v5816
  %v6111 = vsub.f32 0.0, %v5817
  %v6112 = vsub.f32 0.0, %v5818
  %v6113 = vsub.f32 0.0, %v5819
  %v6114 = vsub.f32 0.0, %v5820
  %v6115 = vsub.f32 0.0, %v5821
  %v6116 = vsub.f32 0.0, %v5822
  %v6117 = vsub.f32 0.0, %v5823
  %v6118 = vsub.f32 0.0, %v5824
  %v6119 = vsub.f32 0.0, %v5825
  %v6120 = vsub.f32 0.0, %v5826
  %v6121 = vsub.f32 0.0, %v5827
  %v6122 = vsub.f32 0.0, %v5828
  %v6123 = vsub.f32 0.0, %v5829
  %v6124 = vsub.f32 0.0, %v5830
  %v6125 = vsub.f32 0.0, %v5831
  %v6126 = vsub.f32 0.0, %v5832
  %v6127 = vsub.f32 0.0, %v5833
  %v6128 = vsub.f32 0.0, %v5834
  %v6129 = vsub.f32 0.0, %v5835
  %v6130 = vsub.f32 0.0, %v5836
  %v6131 = vsub.f32 0.0, %v5837
  %v6132 = vsub.f32 0.0, %v5838
  %v6133 = vsub.f32 0.0, %v5839
  %v6134 = vsub.f32 0.0, %v5840
  %v6135 = vsub.f32 0.0, %v5841
  %v6136 = vsub.f32 0.0, %v5842
  %v6137 = vsub.f32 0.0, %v5843
  %v6138 = vsub.f32 0.0, %v5844
  %v6139 = vsub.f32 0.0, %v5845
  %v6140 = vsub.f32 0.0, %v5846
  %v6141 = vsub.f32 0.0, %v5847
  %v6142 = vsub.f32 0.0, %v5848
  %v6143 = vsub.f32 0.0, %v5849
  %v6144 = vsub.f32 0.0, %v5850
  %v6145 = vsub.f32 0.0, %v5851
  %v6146 = vsub.f32 0.0, %v5852
  %v6147 = vsub.f32 0.0, %v5853
  %v6148 = vsub.f32 0.0, %v5854
  %v6149 = vsub.f32 0.0, %v5855
  %v6150 = vsub.f32 0.0, %v5856
  %v6151 = vsub.f32 0.0, %v5857
  %v6152 = vsub.f32 0.0, %v5858
  %v6153 = vsub.f32 0.0, %v5859
  %v6154 = vsub.f32 0.0, %v5860
  %v6155 = vsub.f32 0.0, %v5861
  %v6156 = vsub.f32 0.0, %v5862
  %v6157 = vsub.f32 0.0, %v5863
  %v6158 = vsub.f32 0.0, %v5864
  %v6159 = vsub.f32 0.0, %v5865
  %v6160 = vsub.f32 0.0, %v5866
  %v6161 = vsub.f32 0.0, %v5867
  %v6162 = vsub.f32 0.0, %v5868
  %v6163 = vsub.f32 0.0, %v5869
  %v6164 = vsub.f32 0.0, %v5870
  %v6165 = vsub.f32 0.0, %v5871
  %v6166 = vsub.f32 0.0, %v5872
  %v6167 = vsub.f32 0.0, %v5873
  %v6168 = vsub.f32 0.0, %v5874
  %v6169 = vsub.f32 0.0, %v5875
  %v6170 = vsub.f32 0.0, %v5876
  %v6171 = vsub.f32 0.0, %v5877
  %v6172 = vsub.f32 0.0, %v5878
  %v6173 = vsub.f32 0.0, %v5879
  %v6174 = vsub.f32 0.0, %v5880
  %v6175 = vsub.f32 0.0, %v5881
  %v6176 = vsub.f32 0.0, %v5882
  %v6177 = vsub.f32 0.0, %v5883
  %v6178 = vsub.f32 0.0, %v5884
  %v6179 = vsub.f32 0.0, %v5885
  %v6180 = vsub.f32 0.0, %v5886
  %v6181 = vsub.f32 0.0, %v5887
  %v6182 = vsub.f32 0.0, %v5888
  %v6183 = vsub.f32 0.0, %v5889
  %v6184 = vsub.f32 0.0, %v5890
  %v6185 = vsub.f32 0.0, %v5891
  %v6186 = vsub.f32 0.0, %v5892
  %v6187 = vsub.f32 0.0, %v5893
  %v6188 = vsub.f32 0.0, %v5894
  %v6189 = vsub.f32 0.0, %v5895
  %v6190 = vsub.f32 0.0, %v5896
  %v6191 = vsub.f32 0.0, %v5897
  %v6192 = vsub.f32 0.0, %v5898
  %v6193 = vsub.f32 0.0, %v5899
  %v6194 = vsub.f32 0.0, %v5900
  %v6195 = vsub.f32 0.0, %v5901
  %v6196 = vsub.f32 0.0, %v5902
  %v6197 = vsub.f32 0.0, %v5903
  %v6198 = vsub.f32 0.0, %v5904
  %v6199 = vsub.f32 0.0, %v5905
  %v6200 = vsub.f32 0.0, %v5906
  %v6201 = vsub.f32 0.0, %v5907
  %v6202 = vsub.f32 0.0, %v5908
  %v6203 = vsub.f32 0.0, %v5909
  %v6204 = vsub.f32 0.0, %v5910
  %v6205 = vsub.f32 0.0, %v5911
  %v6206 = vsub.f32 0.0, %v5912
  %v6207 = vsub.f32 0.0, %v5913
  %v6208 = vmul.f32 %v5914, 1.442695
  %v6209 = vpow.pop %v6208
  %v6210 = vmul.f32 %v5915, 1.442695
  %v6211 = vpow.pop %v6210
  %v6212 = vmul.f32 %v5916, 1.442695
  %v6213 = vpow.pop %v6212
  %v6214 = vmul.f32 %v5917, 1.442695
  %v6215 = vpow.pop %v6214
  %v6216 = vmul.f32 %v5918, 1.442695
  %v6217 = vpow.pop %v6216
  %v6218 = vmul.f32 %v5919, 1.442695
  %v6219 = vpow.pop %v6218
  %v6220 = vmul.f32 %v5920, 1.442695
  %v6221 = vpow.pop %v6220
  %v6222 = vmul.f32 %v5921, 1.442695
  %v6223 = vpow.pop %v6222
  %v6224 = vmul.f32 %v5922, 1.442695
  %v6225 = vpow.pop %v6224
  %v6226 = vmul.f32 %v5923, 1.442695
  %v6227 = vpow.pop %v6226
  %v6228 = vmul.f32 %v5924, 1.442695
  %v6229 = vpow.pop %v6228
  %v6230 = vmul.f32 %v5925, 1.442695
  %v6231 = vpow.pop %v6230
  %v6232 = vmul.f32 %v5926, 1.442695
  %v6233 = vpow.pop %v6232
  %v6234 = vmul.f32 %v5927, 1.442695
  %v6235 = vpow.pop %v6234
  %v6236 = vmul.f32 %v5928, 1.442695
  %v6237 = vpow.pop %v6236
  %v6238 = vmul.f32 %v5929, 1.442695
  %v6239 = vpow.pop %v6238
  %v6240 = vmul.f32 %v5930, 1.442695
  %v6241 = vpow.pop %v6240
  %v6242 = vmul.f32 %v5931, 1.442695
  %v6243 = vpow.pop %v6242
  %v6244 = vmul.f32 %v5932, 1.442695
  %v6245 = vpow.pop %v6244
  %v6246 = vmul.f32 %v5933, 1.442695
  %v6247 = vpow.pop %v6246
  %v6248 = vmul.f32 %v5934, 1.442695
  %v6249 = vpow.pop %v6248
  %v6250 = vmul.f32 %v5935, 1.442695
  %v6251 = vpow.pop %v6250
  %v6252 = vmul.f32 %v5936, 1.442695
  %v6253 = vpow.pop %v6252
  %v6254 = vmul.f32 %v5937, 1.442695
  %v6255 = vpow.pop %v6254
  %v6256 = vmul.f32 %v5938, 1.442695
  %v6257 = vpow.pop %v6256
  %v6258 = vmul.f32 %v5939, 1.442695
  %v6259 = vpow.pop %v6258
  %v6260 = vmul.f32 %v5940, 1.442695
  %v6261 = vpow.pop %v6260
  %v6262 = vmul.f32 %v5941, 1.442695
  %v6263 = vpow.pop %v6262
  %v6264 = vmul.f32 %v5942, 1.442695
  %v6265 = vpow.pop %v6264
  %v6266 = vmul.f32 %v5943, 1.442695
  %v6267 = vpow.pop %v6266
  %v6268 = vmul.f32 %v5944, 1.442695
  %v6269 = vpow.pop %v6268
  %v6270 = vmul.f32 %v5945, 1.442695
  %v6271 = vpow.pop %v6270
  %v6272 = vmul.f32 %v5946, 1.442695
  %v6273 = vpow.pop %v6272
  %v6274 = vmul.f32 %v5947, 1.442695
  %v6275 = vpow.pop %v6274
  %v6276 = vmul.f32 %v5948, 1.442695
  %v6277 = vpow.pop %v6276
  %v6278 = vmul.f32 %v5949, 1.442695
  %v6279 = vpow.pop %v6278
  %v6280 = vmul.f32 %v5950, 1.442695
  %v6281 = vpow.pop %v6280
  %v6282 = vmul.f32 %v5951, 1.442695
  %v6283 = vpow.pop %v6282
  %v6284 = vmul.f32 %v5952, 1.442695
  %v6285 = vpow.pop %v6284
  %v6286 = vmul.f32 %v5953, 1.442695
  %v6287 = vpow.pop %v6286
  %v6288 = vmul.f32 %v5954, 1.442695
  %v6289 = vpow.pop %v6288
  %v6290 = vmul.f32 %v5955, 1.442695
  %v6291 = vpow.pop %v6290
  %v6292 = vmul.f32 %v5956, 1.442695
  %v6293 = vpow.pop %v6292
  %v6294 = vmul.f32 %v5957, 1.442695
  %v6295 = vpow.pop %v6294
  %v6296 = vmul.f32 %v5958, 1.442695
  %v6297 = vpow.pop %v6296
  %v6298 = vmul.f32 %v5959, 1.442695
  %v6299 = vpow.pop %v6298
  %v6300 = vmul.f32 %v5960, 1.442695
  %v6301 = vpow.pop %v6300
  %v6302 = vmul.f32 %v5961, 1.442695
  %v6303 = vpow.pop %v6302
  %v6304 = vmul.f32 %v5962, 1.442695
  %v6305 = vpow.pop %v6304
  %v6306 = vmul.f32 %v5963, 1.442695
  %v6307 = vpow.pop %v6306
  %v6308 = vmul.f32 %v5964, 1.442695
  %v6309 = vpow.pop %v6308
  %v6310 = vmul.f32 %v5965, 1.442695
  %v6311 = vpow.pop %v6310
  %v6312 = vmul.f32 %v5966, 1.442695
  %v6313 = vpow.pop %v6312
  %v6314 = vmul.f32 %v5967, 1.442695
  %v6315 = vpow.pop %v6314
  %v6316 = vmul.f32 %v5968, 1.442695
  %v6317 = vpow.pop %v6316
  %v6318 = vmul.f32 %v5969, 1.442695
  %v6319 = vpow.pop %v6318
  %v6320 = vmul.f32 %v5970, 1.442695
  %v6321 = vpow.pop %v6320
  %v6322 = vmul.f32 %v5971, 1.442695
  %v6323 = vpow.pop %v6322
  %v6324 = vmul.f32 %v5972, 1.442695
  %v6325 = vpow.pop %v6324
  %v6326 = vmul.f32 %v5973, 1.442695
  %v6327 = vpow.pop %v6326
  %v6328 = vmul.f32 %v5974, 1.442695
  %v6329 = vpow.pop %v6328
  %v6330 = vmul.f32 %v5975, 1.442695
  %v6331 = vpow.pop %v6330
  %v6332 = vmul.f32 %v5976, 1.442695
  %v6333 = vpow.pop %v6332
  %v6334 = vmul.f32 %v5977, 1.442695
  %v6335 = vpow.pop %v6334
  %v6336 = vmul.f32 %v5978, 1.442695
  %v6337 = vpow.pop %v6336
  %v6338 = vmul.f32 %v5979, 1.442695
  %v6339 = vpow.pop %v6338
  %v6340 = vmul.f32 %v5980, 1.442695
  %v6341 = vpow.pop %v6340
  %v6342 = vmul.f32 %v5981, 1.442695
  %v6343 = vpow.pop %v6342
  %v6344 = vmul.f32 %v5982, 1.442695
  %v6345 = vpow.pop %v6344
  %v6346 = vmul.f32 %v5983, 1.442695
  %v6347 = vpow.pop %v6346
  %v6348 = vmul.f32 %v5984, 1.442695
  %v6349 = vpow.pop %v6348
  %v6350 = vmul.f32 %v5985, 1.442695
  %v6351 = vpow.pop %v6350
  %v6352 = vmul.f32 %v5986, 1.442695
  %v6353 = vpow.pop %v6352
  %v6354 = vmul.f32 %v5987, 1.442695
  %v6355 = vpow.pop %v6354
  %v6356 = vmul.f32 %v5988, 1.442695
  %v6357 = vpow.pop %v6356
  %v6358 = vmul.f32 %v5989, 1.442695
  %v6359 = vpow.pop %v6358
  %v6360 = vmul.f32 %v5990, 1.442695
  %v6361 = vpow.pop %v6360
  %v6362 = vmul.f32 %v5991, 1.442695
  %v6363 = vpow.pop %v6362
  %v6364 = vmul.f32 %v5992, 1.442695
  %v6365 = vpow.pop %v6364
  %v6366 = vmul.f32 %v5993, 1.442695
  %v6367 = vpow.pop %v6366
  %v6368 = vmul.f32 %v5994, 1.442695
  %v6369 = vpow.pop %v6368
  %v6370 = vmul.f32 %v5995, 1.442695
  %v6371 = vpow.pop %v6370
  %v6372 = vmul.f32 %v5996, 1.442695
  %v6373 = vpow.pop %v6372
  %v6374 = vmul.f32 %v5997, 1.442695
  %v6375 = vpow.pop %v6374
  %v6376 = vmul.f32 %v5998, 1.442695
  %v6377 = vpow.pop %v6376
  %v6378 = vmul.f32 %v5999, 1.442695
  %v6379 = vpow.pop %v6378
  %v6380 = vmul.f32 %v6000, 1.442695
  %v6381 = vpow.pop %v6380
  %v6382 = vmul.f32 %v6001, 1.442695
  %v6383 = vpow.pop %v6382
  %v6384 = vmul.f32 %v6002, 1.442695
  %v6385 = vpow.pop %v6384
  %v6386 = vmul.f32 %v6003, 1.442695
  %v6387 = vpow.pop %v6386
  %v6388 = vmul.f32 %v6004, 1.442695
  %v6389 = vpow.pop %v6388
  %v6390 = vmul.f32 %v6005, 1.442695
  %v6391 = vpow.pop %v6390
  %v6392 = vmul.f32 %v6006, 1.442695
  %v6393 = vpow.pop %v6392
  %v6394 = vmul.f32 %v6007, 1.442695
  %v6395 = vpow.pop %v6394
  %v6396 = vmul.f32 %v6008, 1.442695
  %v6397 = vpow.pop %v6396
  %v6398 = vmul.f32 %v6009, 1.442695
  %v6399 = vpow.pop %v6398
  %v6400 = vmul.f32 %v6010, 1.442695
  %v6401 = vpow.pop %v6400
  %v6402 = vmul.f32 %v6011, 1.442695
  %v6403 = vpow.pop %v6402
  %v6404 = vmul.f32 %v6012, 1.442695
  %v6405 = vpow.pop %v6404
  %v6406 = vmul.f32 %v6013, 1.442695
  %v6407 = vpow.pop %v6406
  %v6408 = vmul.f32 %v6014, 1.442695
  %v6409 = vpow.pop %v6408
  %v6410 = vmul.f32 %v6015, 1.442695
  %v6411 = vpow.pop %v6410
  %v6412 = vmul.f32 %v6016, 1.442695
  %v6413 = vpow.pop %v6412
  %v6414 = vmul.f32 %v6017, 1.442695
  %v6415 = vpow.pop %v6414
  %v6416 = vmul.f32 %v6018, 1.442695
  %v6417 = vpow.pop %v6416
  %v6418 = vmul.f32 %v6019, 1.442695
  %v6419 = vpow.pop %v6418
  %v6420 = vmul.f32 %v6020, 1.442695
  %v6421 = vpow.pop %v6420
  %v6422 = vmul.f32 %v6021, 1.442695
  %v6423 = vpow.pop %v6422
  %v6424 = vmul.f32 %v6022, 1.442695
  %v6425 = vpow.pop %v6424
  %v6426 = vmul.f32 %v6023, 1.442695
  %v6427 = vpow.pop %v6426
  %v6428 = vmul.f32 %v6024, 1.442695
  %v6429 = vpow.pop %v6428
  %v6430 = vmul.f32 %v6025, 1.442695
  %v6431 = vpow.pop %v6430
  %v6432 = vmul.f32 %v6026, 1.442695
  %v6433 = vpow.pop %v6432
  %v6434 = vmul.f32 %v6027, 1.442695
  %v6435 = vpow.pop %v6434
  %v6436 = vmul.f32 %v6028, 1.442695
  %v6437 = vpow.pop %v6436
  %v6438 = vmul.f32 %v6029, 1.442695
  %v6439 = vpow.pop %v6438
  %v6440 = vmul.f32 %v6030, 1.442695
  %v6441 = vpow.pop %v6440
  %v6442 = vmul.f32 %v6031, 1.442695
  %v6443 = vpow.pop %v6442
  %v6444 = vmul.f32 %v6032, 1.442695
  %v6445 = vpow.pop %v6444
  %v6446 = vmul.f32 %v6033, 1.442695
  %v6447 = vpow.pop %v6446
  %v6448 = vmul.f32 %v6034, 1.442695
  %v6449 = vpow.pop %v6448
  %v6450 = vmul.f32 %v6035, 1.442695
  %v6451 = vpow.pop %v6450
  %v6452 = vmul.f32 %v6036, 1.442695
  %v6453 = vpow.pop %v6452
  %v6454 = vmul.f32 %v6037, 1.442695
  %v6455 = vpow.pop %v6454
  %v6456 = vmul.f32 %v6038, 1.442695
  %v6457 = vpow.pop %v6456
  %v6458 = vmul.f32 %v6039, 1.442695
  %v6459 = vpow.pop %v6458
  %v6460 = vmul.f32 %v6040, 1.442695
  %v6461 = vpow.pop %v6460
  %v6462 = vmul.f32 %v6041, 1.442695
  %v6463 = vpow.pop %v6462
  %v6464 = vmul.f32 %v6042, 1.442695
  %v6465 = vpow.pop %v6464
  %v6466 = vmul.f32 %v6043, 1.442695
  %v6467 = vpow.pop %v6466
  %v6468 = vmul.f32 %v6044, 1.442695
  %v6469 = vpow.pop %v6468
  %v6470 = vmul.f32 %v6045, 1.442695
  %v6471 = vpow.pop %v6470
  %v6472 = vmul.f32 %v6046, 1.442695
  %v6473 = vpow.pop %v6472
  %v6474 = vmul.f32 %v6047, 1.442695
  %v6475 = vpow.pop %v6474
  %v6476 = vmul.f32 %v6048, 1.442695
  %v6477 = vpow.pop %v6476
  %v6478 = vmul.f32 %v6049, 1.442695
  %v6479 = vpow.pop %v6478
  %v6480 = vmul.f32 %v6050, 1.442695
  %v6481 = vpow.pop %v6480
  %v6482 = vmul.f32 %v6051, 1.442695
  %v6483 = vpow.pop %v6482
  %v6484 = vmul.f32 %v6052, 1.442695
  %v6485 = vpow.pop %v6484
  %v6486 = vmul.f32 %v6053, 1.442695
  %v6487 = vpow.pop %v6486
  %v6488 = vmul.f32 %v6054, 1.442695
  %v6489 = vpow.pop %v6488
  %v6490 = vmul.f32 %v6055, 1.442695
  %v6491 = vpow.pop %v6490
  %v6492 = vmul.f32 %v6056, 1.442695
  %v6493 = vpow.pop %v6492
  %v6494 = vmul.f32 %v6057, 1.442695
  %v6495 = vpow.pop %v6494
  %v6496 = vmul.f32 %v6058, 1.442695
  %v6497 = vpow.pop %v6496
  %v6498 = vmul.f32 %v6059, 1.442695
  %v6499 = vpow.pop %v6498
  %v6500 = vmul.f32 %v6060, 1.442695
  %v6501 = vpow.pop %v6500
  %v6502 = vmul.f32 %v6061, 1.442695
  %v6503 = vpow.pop %v6502
  %v6504 = vmul.f32 %v6062, 1.442695
  %v6505 = vpow.pop %v6504
  %v6506 = vmul.f32 %v6063, 1.442695
  %v6507 = vpow.pop %v6506
  %v6508 = vmul.f32 %v6064, 1.442695
  %v6509 = vpow.pop %v6508
  %v6510 = vmul.f32 %v6065, 1.442695
  %v6511 = vpow.pop %v6510
  %v6512 = vmul.f32 %v6066, 1.442695
  %v6513 = vpow.pop %v6512
  %v6514 = vmul.f32 %v6067, 1.442695
  %v6515 = vpow.pop %v6514
  %v6516 = vmul.f32 %v6068, 1.442695
  %v6517 = vpow.pop %v6516
  %v6518 = vmul.f32 %v6069, 1.442695
  %v6519 = vpow.pop %v6518
  %v6520 = vmul.f32 %v6070, 1.442695
  %v6521 = vpow.pop %v6520
  %v6522 = vmul.f32 %v6071, 1.442695
  %v6523 = vpow.pop %v6522
  %v6524 = vmul.f32 %v6072, 1.442695
  %v6525 = vpow.pop %v6524
  %v6526 = vmul.f32 %v6073, 1.442695
  %v6527 = vpow.pop %v6526
  %v6528 = vmul.f32 %v6074, 1.442695
  %v6529 = vpow.pop %v6528
  %v6530 = vmul.f32 %v6075, 1.442695
  %v6531 = vpow.pop %v6530
  %v6532 = vmul.f32 %v6076, 1.442695
  %v6533 = vpow.pop %v6532
  %v6534 = vmul.f32 %v6077, 1.442695
  %v6535 = vpow.pop %v6534
  %v6536 = vmul.f32 %v6078, 1.442695
  %v6537 = vpow.pop %v6536
  %v6538 = vmul.f32 %v6079, 1.442695
  %v6539 = vpow.pop %v6538
  %v6540 = vmul.f32 %v6080, 1.442695
  %v6541 = vpow.pop %v6540
  %v6542 = vmul.f32 %v6081, 1.442695
  %v6543 = vpow.pop %v6542
  %v6544 = vmul.f32 %v6082, 1.442695
  %v6545 = vpow.pop %v6544
  %v6546 = vmul.f32 %v6083, 1.442695
  %v6547 = vpow.pop %v6546
  %v6548 = vmul.f32 %v6084, 1.442695
  %v6549 = vpow.pop %v6548
  %v6550 = vmul.f32 %v6085, 1.442695
  %v6551 = vpow.pop %v6550
  %v6552 = vmul.f32 %v6086, 1.442695
  %v6553 = vpow.pop %v6552
  %v6554 = vmul.f32 %v6087, 1.442695
  %v6555 = vpow.pop %v6554
  %v6556 = vmul.f32 %v6088, 1.442695
  %v6557 = vpow.pop %v6556
  %v6558 = vmul.f32 %v6089, 1.442695
  %v6559 = vpow.pop %v6558
  %v6560 = vmul.f32 %v6090, 1.442695
  %v6561 = vpow.pop %v6560
  %v6562 = vmul.f32 %v6091, 1.442695
  %v6563 = vpow.pop %v6562
  %v6564 = vmul.f32 %v6092, 1.442695
  %v6565 = vpow.pop %v6564
  %v6566 = vmul.f32 %v6093, 1.442695
  %v6567 = vpow.pop %v6566
  %v6568 = vmul.f32 %v6094, 1.442695
  %v6569 = vpow.pop %v6568
  %v6570 = vmul.f32 %v6095, 1.442695
  %v6571 = vpow.pop %v6570
  %v6572 = vmul.f32 %v6096, 1.442695
  %v6573 = vpow.pop %v6572
  %v6574 = vmul.f32 %v6097, 1.442695
  %v6575 = vpow.pop %v6574
  %v6576 = vmul.f32 %v6098, 1.442695
  %v6577 = vpow.pop %v6576
  %v6578 = vmul.f32 %v6099, 1.442695
  %v6579 = vpow.pop %v6578
  %v6580 = vmul.f32 %v6100, 1.442695
  %v6581 = vpow.pop %v6580
  %v6582 = vmul.f32 %v6101, 1.442695
  %v6583 = vpow.pop %v6582
  %v6584 = vmul.f32 %v6102, 1.442695
  %v6585 = vpow.pop %v6584
  %v6586 = vmul.f32 %v6103, 1.442695
  %v6587 = vpow.pop %v6586
  %v6588 = vmul.f32 %v6104, 1.442695
  %v6589 = vpow.pop %v6588
  %v6590 = vmul.f32 %v6105, 1.442695
  %v6591 = vpow.pop %v6590
  %v6592 = vmul.f32 %v6106, 1.442695
  %v6593 = vpow.pop %v6592
  %v6594 = vmul.f32 %v6107, 1.442695
  %v6595 = vpow.pop %v6594
  %v6596 = vmul.f32 %v6108, 1.442695
  %v6597 = vpow.pop %v6596
  %v6598 = vmul.f32 %v6109, 1.442695
  %v6599 = vpow.pop %v6598
  %v6600 = vmul.f32 %v6110, 1.442695
  %v6601 = vpow.pop %v6600
  %v6602 = vmul.f32 %v6111, 1.442695
  %v6603 = vpow.pop %v6602
  %v6604 = vmul.f32 %v6112, 1.442695
  %v6605 = vpow.pop %v6604
  %v6606 = vmul.f32 %v6113, 1.442695
  %v6607 = vpow.pop %v6606
  %v6608 = vmul.f32 %v6114, 1.442695
  %v6609 = vpow.pop %v6608
  %v6610 = vmul.f32 %v6115, 1.442695
  %v6611 = vpow.pop %v6610
  %v6612 = vmul.f32 %v6116, 1.442695
  %v6613 = vpow.pop %v6612
  %v6614 = vmul.f32 %v6117, 1.442695
  %v6615 = vpow.pop %v6614
  %v6616 = vmul.f32 %v6118, 1.442695
  %v6617 = vpow.pop %v6616
  %v6618 = vmul.f32 %v6119, 1.442695
  %v6619 = vpow.pop %v6618
  %v6620 = vmul.f32 %v6120, 1.442695
  %v6621 = vpow.pop %v6620
  %v6622 = vmul.f32 %v6121, 1.442695
  %v6623 = vpow.pop %v6622
  %v6624 = vmul.f32 %v6122, 1.442695
  %v6625 = vpow.pop %v6624
  %v6626 = vmul.f32 %v6123, 1.442695
  %v6627 = vpow.pop %v6626
  %v6628 = vmul.f32 %v6124, 1.442695
  %v6629 = vpow.pop %v6628
  %v6630 = vmul.f32 %v6125, 1.442695
  %v6631 = vpow.pop %v6630
  %v6632 = vmul.f32 %v6126, 1.442695
  %v6633 = vpow.pop %v6632
  %v6634 = vmul.f32 %v6127, 1.442695
  %v6635 = vpow.pop %v6634
  %v6636 = vmul.f32 %v6128, 1.442695
  %v6637 = vpow.pop %v6636
  %v6638 = vmul.f32 %v6129, 1.442695
  %v6639 = vpow.pop %v6638
  %v6640 = vmul.f32 %v6130, 1.442695
  %v6641 = vpow.pop %v6640
  %v6642 = vmul.f32 %v6131, 1.442695
  %v6643 = vpow.pop %v6642
  %v6644 = vmul.f32 %v6132, 1.442695
  %v6645 = vpow.pop %v6644
  %v6646 = vmul.f32 %v6133, 1.442695
  %v6647 = vpow.pop %v6646
  %v6648 = vmul.f32 %v6134, 1.442695
  %v6649 = vpow.pop %v6648
  %v6650 = vmul.f32 %v6135, 1.442695
  %v6651 = vpow.pop %v6650
  %v6652 = vmul.f32 %v6136, 1.442695
  %v6653 = vpow.pop %v6652
  %v6654 = vmul.f32 %v6137, 1.442695
  %v6655 = vpow.pop %v6654
  %v6656 = vmul.f32 %v6138, 1.442695
  %v6657 = vpow.pop %v6656
  %v6658 = vmul.f32 %v6139, 1.442695
  %v6659 = vpow.pop %v6658
  %v6660 = vmul.f32 %v6140, 1.442695
  %v6661 = vpow.pop %v6660
  %v6662 = vmul.f32 %v6141, 1.442695
  %v6663 = vpow.pop %v6662
  %v6664 = vmul.f32 %v6142, 1.442695
  %v6665 = vpow.pop %v6664
  %v6666 = vmul.f32 %v6143, 1.442695
  %v6667 = vpow.pop %v6666
  %v6668 = vmul.f32 %v6144, 1.442695
  %v6669 = vpow.pop %v6668
  %v6670 = vmul.f32 %v6145, 1.442695
  %v6671 = vpow.pop %v6670
  %v6672 = vmul.f32 %v6146, 1.442695
  %v6673 = vpow.pop %v6672
  %v6674 = vmul.f32 %v6147, 1.442695
  %v6675 = vpow.pop %v6674
  %v6676 = vmul.f32 %v6148, 1.442695
  %v6677 = vpow.pop %v6676
  %v6678 = vmul.f32 %v6149, 1.442695
  %v6679 = vpow.pop %v6678
  %v6680 = vmul.f32 %v6150, 1.442695
  %v6681 = vpow.pop %v6680
  %v6682 = vmul.f32 %v6151, 1.442695
  %v6683 = vpow.pop %v6682
  %v6684 = vmul.f32 %v6152, 1.442695
  %v6685 = vpow.pop %v6684
  %v6686 = vmul.f32 %v6153, 1.442695
  %v6687 = vpow.pop %v6686
  %v6688 = vmul.f32 %v6154, 1.442695
  %v6689 = vpow.pop %v6688
  %v6690 = vmul.f32 %v6155, 1.442695
  %v6691 = vpow.pop %v6690
  %v6692 = vmul.f32 %v6156, 1.442695
  %v6693 = vpow.pop %v6692
  %v6694 = vmul.f32 %v6157, 1.442695
  %v6695 = vpow.pop %v6694
  %v6696 = vmul.f32 %v6158, 1.442695
  %v6697 = vpow.pop %v6696
  %v6698 = vmul.f32 %v6159, 1.442695
  %v6699 = vpow.pop %v6698
  %v6700 = vmul.f32 %v6160, 1.442695
  %v6701 = vpow.pop %v6700
  %v6702 = vmul.f32 %v6161, 1.442695
  %v6703 = vpow.pop %v6702
  %v6704 = vmul.f32 %v6162, 1.442695
  %v6705 = vpow.pop %v6704
  %v6706 = vmul.f32 %v6163, 1.442695
  %v6707 = vpow.pop %v6706
  %v6708 = vmul.f32 %v6164, 1.442695
  %v6709 = vpow.pop %v6708
  %v6710 = vmul.f32 %v6165, 1.442695
  %v6711 = vpow.pop %v6710
  %v6712 = vmul.f32 %v6166, 1.442695
  %v6713 = vpow.pop %v6712
  %v6714 = vmul.f32 %v6167, 1.442695
  %v6715 = vpow.pop %v6714
  %v6716 = vmul.f32 %v6168, 1.442695
  %v6717 = vpow.pop %v6716
  %v6718 = vmul.f32 %v6169, 1.442695
  %v6719 = vpow.pop %v6718
  %v6720 = vmul.f32 %v6170, 1.442695
  %v6721 = vpow.pop %v6720
  %v6722 = vmul.f32 %v6171, 1.442695
  %v6723 = vpow.pop %v6722
  %v6724 = vmul.f32 %v6172, 1.442695
  %v6725 = vpow.pop %v6724
  %v6726 = vmul.f32 %v6173, 1.442695
  %v6727 = vpow.pop %v6726
  %v6728 = vmul.f32 %v6174, 1.442695
  %v6729 = vpow.pop %v6728
  %v6730 = vmul.f32 %v6175, 1.442695
  %v6731 = vpow.pop %v6730
  %v6732 = vmul.f32 %v6176, 1.442695
  %v6733 = vpow.pop %v6732
  %v6734 = vmul.f32 %v6177, 1.442695
  %v6735 = vpow.pop %v6734
  %v6736 = vmul.f32 %v6178, 1.442695
  %v6737 = vpow.pop %v6736
  %v6738 = vmul.f32 %v6179, 1.442695
  %v6739 = vpow.pop %v6738
  %v6740 = vmul.f32 %v6180, 1.442695
  %v6741 = vpow.pop %v6740
  %v6742 = vmul.f32 %v6181, 1.442695
  %v6743 = vpow.pop %v6742
  %v6744 = vmul.f32 %v6182, 1.442695
  %v6745 = vpow.pop %v6744
  %v6746 = vmul.f32 %v6183, 1.442695
  %v6747 = vpow.pop %v6746
  %v6748 = vmul.f32 %v6184, 1.442695
  %v6749 = vpow.pop %v6748
  %v6750 = vmul.f32 %v6185, 1.442695
  %v6751 = vpow.pop %v6750
  %v6752 = vmul.f32 %v6186, 1.442695
  %v6753 = vpow.pop %v6752
  %v6754 = vmul.f32 %v6187, 1.442695
  %v6755 = vpow.pop %v6754
  %v6756 = vmul.f32 %v6188, 1.442695
  %v6757 = vpow.pop %v6756
  %v6758 = vmul.f32 %v6189, 1.442695
  %v6759 = vpow.pop %v6758
  %v6760 = vmul.f32 %v6190, 1.442695
  %v6761 = vpow.pop %v6760
  %v6762 = vmul.f32 %v6191, 1.442695
  %v6763 = vpow.pop %v6762
  %v6764 = vmul.f32 %v6192, 1.442695
  %v6765 = vpow.pop %v6764
  %v6766 = vmul.f32 %v6193, 1.442695
  %v6767 = vpow.pop %v6766
  %v6768 = vmul.f32 %v6194, 1.442695
  %v6769 = vpow.pop %v6768
  %v6770 = vmul.f32 %v6195, 1.442695
  %v6771 = vpow.pop %v6770
  %v6772 = vmul.f32 %v6196, 1.442695
  %v6773 = vpow.pop %v6772
  %v6774 = vmul.f32 %v6197, 1.442695
  %v6775 = vpow.pop %v6774
  %v6776 = vmul.f32 %v6198, 1.442695
  %v6777 = vpow.pop %v6776
  %v6778 = vmul.f32 %v6199, 1.442695
  %v6779 = vpow.pop %v6778
  %v6780 = vmul.f32 %v6200, 1.442695
  %v6781 = vpow.pop %v6780
  %v6782 = vmul.f32 %v6201, 1.442695
  %v6783 = vpow.pop %v6782
  %v6784 = vmul.f32 %v6202, 1.442695
  %v6785 = vpow.pop %v6784
  %v6786 = vmul.f32 %v6203, 1.442695
  %v6787 = vpow.pop %v6786
  %v6788 = vmul.f32 %v6204, 1.442695
  %v6789 = vpow.pop %v6788
  %v6790 = vmul.f32 %v6205, 1.442695
  %v6791 = vpow.pop %v6790
  %v6792 = vmul.f32 %v6206, 1.442695
  %v6793 = vpow.pop %v6792
  %v6794 = vmul.f32 %v6207, 1.442695
  %v6795 = vpow.pop %v6794
  %v6796 = vadd.f32 %v6209, 1.0
  %v6797 = vadd.f32 %v6211, 1.0
  %v6798 = vadd.f32 %v6213, 1.0
  %v6799 = vadd.f32 %v6215, 1.0
  %v6800 = vadd.f32 %v6217, 1.0
  %v6801 = vadd.f32 %v6219, 1.0
  %v6802 = vadd.f32 %v6221, 1.0
  %v6803 = vadd.f32 %v6223, 1.0
  %v6804 = vadd.f32 %v6225, 1.0
  %v6805 = vadd.f32 %v6227, 1.0
  %v6806 = vadd.f32 %v6229, 1.0
  %v6807 = vadd.f32 %v6231, 1.0
  %v6808 = vadd.f32 %v6233, 1.0
  %v6809 = vadd.f32 %v6235, 1.0
  %v6810 = vadd.f32 %v6237, 1.0
  %v6811 = vadd.f32 %v6239, 1.0
  %v6812 = vadd.f32 %v6241, 1.0
  %v6813 = vadd.f32 %v6243, 1.0
  %v6814 = vadd.f32 %v6245, 1.0
  %v6815 = vadd.f32 %v6247, 1.0
  %v6816 = vadd.f32 %v6249, 1.0
  %v6817 = vadd.f32 %v6251, 1.0
  %v6818 = vadd.f32 %v6253, 1.0
  %v6819 = vadd.f32 %v6255, 1.0
  %v6820 = vadd.f32 %v6257, 1.0
  %v6821 = vadd.f32 %v6259, 1.0
  %v6822 = vadd.f32 %v6261, 1.0
  %v6823 = vadd.f32 %v6263, 1.0
  %v6824 = vadd.f32 %v6265, 1.0
  %v6825 = vadd.f32 %v6267, 1.0
  %v6826 = vadd.f32 %v6269, 1.0
  %v6827 = vadd.f32 %v6271, 1.0
  %v6828 = vadd.f32 %v6273, 1.0
  %v6829 = vadd.f32 %v6275, 1.0
  %v6830 = vadd.f32 %v6277, 1.0
  %v6831 = vadd.f32 %v6279, 1.0
  %v6832 = vadd.f32 %v6281, 1.0
  %v6833 = vadd.f32 %v6283, 1.0
  %v6834 = vadd.f32 %v6285, 1.0
  %v6835 = vadd.f32 %v6287, 1.0
  %v6836 = vadd.f32 %v6289, 1.0
  %v6837 = vadd.f32 %v6291, 1.0
  %v6838 = vadd.f32 %v6293, 1.0
  %v6839 = vadd.f32 %v6295, 1.0
  %v6840 = vadd.f32 %v6297, 1.0
  %v6841 = vadd.f32 %v6299, 1.0
  %v6842 = vadd.f32 %v6301, 1.0
  %v6843 = vadd.f32 %v6303, 1.0
  %v6844 = vadd.f32 %v6305, 1.0
  %v6845 = vadd.f32 %v6307, 1.0
  %v6846 = vadd.f32 %v6309, 1.0
  %v6847 = vadd.f32 %v6311, 1.0
  %v6848 = vadd.f32 %v6313, 1.0
  %v6849 = vadd.f32 %v6315, 1.0
  %v6850 = vadd.f32 %v6317, 1.0
  %v6851 = vadd.f32 %v6319, 1.0
  %v6852 = vadd.f32 %v6321, 1.0
  %v6853 = vadd.f32 %v6323, 1.0
  %v6854 = vadd.f32 %v6325, 1.0
  %v6855 = vadd.f32 %v6327, 1.0
  %v6856 = vadd.f32 %v6329, 1.0
  %v6857 = vadd.f32 %v6331, 1.0
  %v6858 = vadd.f32 %v6333, 1.0
  %v6859 = vadd.f32 %v6335, 1.0
  %v6860 = vadd.f32 %v6337, 1.0
  %v6861 = vadd.f32 %v6339, 1.0
  %v6862 = vadd.f32 %v6341, 1.0
  %v6863 = vadd.f32 %v6343, 1.0
  %v6864 = vadd.f32 %v6345, 1.0
  %v6865 = vadd.f32 %v6347, 1.0
  %v6866 = vadd.f32 %v6349, 1.0
  %v6867 = vadd.f32 %v6351, 1.0
  %v6868 = vadd.f32 %v6353, 1.0
  %v6869 = vadd.f32 %v6355, 1.0
  %v6870 = vadd.f32 %v6357, 1.0
  %v6871 = vadd.f32 %v6359, 1.0
  %v6872 = vadd.f32 %v6361, 1.0
  %v6873 = vadd.f32 %v6363, 1.0
  %v6874 = vadd.f32 %v6365, 1.0
  %v6875 = vadd.f32 %v6367, 1.0
  %v6876 = vadd.f32 %v6369, 1.0
  %v6877 = vadd.f32 %v6371, 1.0
  %v6878 = vadd.f32 %v6373, 1.0
  %v6879 = vadd.f32 %v6375, 1.0
  %v6880 = vadd.f32 %v6377, 1.0
  %v6881 = vadd.f32 %v6379, 1.0
  %v6882 = vadd.f32 %v6381, 1.0
  %v6883 = vadd.f32 %v6383, 1.0
  %v6884 = vadd.f32 %v6385, 1.0
  %v6885 = vadd.f32 %v6387, 1.0
  %v6886 = vadd.f32 %v6389, 1.0
  %v6887 = vadd.f32 %v6391, 1.0
  %v6888 = vadd.f32 %v6393, 1.0
  %v6889 = vadd.f32 %v6395, 1.0
  %v6890 = vadd.f32 %v6397, 1.0
  %v6891 = vadd.f32 %v6399, 1.0
  %v6892 = vadd.f32 %v6401, 1.0
  %v6893 = vadd.f32 %v6403, 1.0
  %v6894 = vadd.f32 %v6405, 1.0
  %v6895 = vadd.f32 %v6407, 1.0
  %v6896 = vadd.f32 %v6409, 1.0
  %v6897 = vadd.f32 %v6411, 1.0
  %v6898 = vadd.f32 %v6413, 1.0
  %v6899 = vadd.f32 %v6415, 1.0
  %v6900 = vadd.f32 %v6417, 1.0
  %v6901 = vadd.f32 %v6419, 1.0
  %v6902 = vadd.f32 %v6421, 1.0
  %v6903 = vadd.f32 %v6423, 1.0
  %v6904 = vadd.f32 %v6425, 1.0
  %v6905 = vadd.f32 %v6427, 1.0
  %v6906 = vadd.f32 %v6429, 1.0
  %v6907 = vadd.f32 %v6431, 1.0
  %v6908 = vadd.f32 %v6433, 1.0
  %v6909 = vadd.f32 %v6435, 1.0
  %v6910 = vadd.f32 %v6437, 1.0
  %v6911 = vadd.f32 %v6439, 1.0
  %v6912 = vadd.f32 %v6441, 1.0
  %v6913 = vadd.f32 %v6443, 1.0
  %v6914 = vadd.f32 %v6445, 1.0
  %v6915 = vadd.f32 %v6447, 1.0
  %v6916 = vadd.f32 %v6449, 1.0
  %v6917 = vadd.f32 %v6451, 1.0
  %v6918 = vadd.f32 %v6453, 1.0
  %v6919 = vadd.f32 %v6455, 1.0
  %v6920 = vadd.f32 %v6457, 1.0
  %v6921 = vadd.f32 %v6459, 1.0
  %v6922 = vadd.f32 %v6461, 1.0
  %v6923 = vadd.f32 %v6463, 1.0
  %v6924 = vadd.f32 %v6465, 1.0
  %v6925 = vadd.f32 %v6467, 1.0
  %v6926 = vadd.f32 %v6469, 1.0
  %v6927 = vadd.f32 %v6471, 1.0
  %v6928 = vadd.f32 %v6473, 1.0
  %v6929 = vadd.f32 %v6475, 1.0
  %v6930 = vadd.f32 %v6477, 1.0
  %v6931 = vadd.f32 %v6479, 1.0
  %v6932 = vadd.f32 %v6481, 1.0
  %v6933 = vadd.f32 %v6483, 1.0
  %v6934 = vadd.f32 %v6485, 1.0
  %v6935 = vadd.f32 %v6487, 1.0
  %v6936 = vadd.f32 %v6489, 1.0
  %v6937 = vadd.f32 %v6491, 1.0
  %v6938 = vadd.f32 %v6493, 1.0
  %v6939 = vadd.f32 %v6495, 1.0
  %v6940 = vadd.f32 %v6497, 1.0
  %v6941 = vadd.f32 %v6499, 1.0
  %v6942 = vadd.f32 %v6501, 1.0
  %v6943 = vadd.f32 %v6503, 1.0
  %v6944 = vadd.f32 %v6505, 1.0
  %v6945 = vadd.f32 %v6507, 1.0
  %v6946 = vadd.f32 %v6509, 1.0
  %v6947 = vadd.f32 %v6511, 1.0
  %v6948 = vadd.f32 %v6513, 1.0
  %v6949 = vadd.f32 %v6515, 1.0
  %v6950 = vadd.f32 %v6517, 1.0
  %v6951 = vadd.f32 %v6519, 1.0
  %v6952 = vadd.f32 %v6521, 1.0
  %v6953 = vadd.f32 %v6523, 1.0
  %v6954 = vadd.f32 %v6525, 1.0
  %v6955 = vadd.f32 %v6527, 1.0
  %v6956 = vadd.f32 %v6529, 1.0
  %v6957 = vadd.f32 %v6531, 1.0
  %v6958 = vadd.f32 %v6533, 1.0
  %v6959 = vadd.f32 %v6535, 1.0
  %v6960 = vadd.f32 %v6537, 1.0
  %v6961 = vadd.f32 %v6539, 1.0
  %v6962 = vadd.f32 %v6541, 1.0
  %v6963 = vadd.f32 %v6543, 1.0
  %v6964 = vadd.f32 %v6545, 1.0
  %v6965 = vadd.f32 %v6547, 1.0
  %v6966 = vadd.f32 %v6549, 1.0
  %v6967 = vadd.f32 %v6551, 1.0
  %v6968 = vadd.f32 %v6553, 1.0
  %v6969 = vadd.f32 %v6555, 1.0
  %v6970 = vadd.f32 %v6557, 1.0
  %v6971 = vadd.f32 %v6559, 1.0
  %v6972 = vadd.f32 %v6561, 1.0
  %v6973 = vadd.f32 %v6563, 1.0
  %v6974 = vadd.f32 %v6565, 1.0
  %v6975 = vadd.f32 %v6567, 1.0
  %v6976 = vadd.f32 %v6569, 1.0
  %v6977 = vadd.f32 %v6571, 1.0
  %v6978 = vadd.f32 %v6573, 1.0
  %v6979 = vadd.f32 %v6575, 1.0
  %v6980 = vadd.f32 %v6577, 1.0
  %v6981 = vadd.f32 %v6579, 1.0
  %v6982 = vadd.f32 %v6581, 1.0
  %v6983 = vadd.f32 %v6583, 1.0
  %v6984 = vadd.f32 %v6585, 1.0
  %v6985 = vadd.f32 %v6587, 1.0
  %v6986 = vadd.f32 %v6589, 1.0
  %v6987 = vadd.f32 %v6591, 1.0
  %v6988 = vadd.f32 %v6593, 1.0
  %v6989 = vadd.f32 %v6595, 1.0
  %v6990 = vadd.f32 %v6597, 1.0
  %v6991 = vadd.f32 %v6599, 1.0
  %v6992 = vadd.f32 %v6601, 1.0
  %v6993 = vadd.f32 %v6603, 1.0
  %v6994 = vadd.f32 %v6605, 1.0
  %v6995 = vadd.f32 %v6607, 1.0
  %v6996 = vadd.f32 %v6609, 1.0
  %v6997 = vadd.f32 %v6611, 1.0
  %v6998 = vadd.f32 %v6613, 1.0
  %v6999 = vadd.f32 %v6615, 1.0
  %v7000 = vadd.f32 %v6617, 1.0
  %v7001 = vadd.f32 %v6619, 1.0
  %v7002 = vadd.f32 %v6621, 1.0
  %v7003 = vadd.f32 %v6623, 1.0
  %v7004 = vadd.f32 %v6625, 1.0
  %v7005 = vadd.f32 %v6627, 1.0
  %v7006 = vadd.f32 %v6629, 1.0
  %v7007 = vadd.f32 %v6631, 1.0
  %v7008 = vadd.f32 %v6633, 1.0
  %v7009 = vadd.f32 %v6635, 1.0
  %v7010 = vadd.f32 %v6637, 1.0
  %v7011 = vadd.f32 %v6639, 1.0
  %v7012 = vadd.f32 %v6641, 1.0
  %v7013 = vadd.f32 %v6643, 1.0
  %v7014 = vadd.f32 %v6645, 1.0
  %v7015 = vadd.f32 %v6647, 1.0
  %v7016 = vadd.f32 %v6649, 1.0
  %v7017 = vadd.f32 %v6651, 1.0
  %v7018 = vadd.f32 %v6653, 1.0
  %v7019 = vadd.f32 %v6655, 1.0
  %v7020 = vadd.f32 %v6657, 1.0
  %v7021 = vadd.f32 %v6659, 1.0
  %v7022 = vadd.f32 %v6661, 1.0
  %v7023 = vadd.f32 %v6663, 1.0
  %v7024 = vadd.f32 %v6665, 1.0
  %v7025 = vadd.f32 %v6667, 1.0
  %v7026 = vadd.f32 %v6669, 1.0
  %v7027 = vadd.f32 %v6671, 1.0
  %v7028 = vadd.f32 %v6673, 1.0
  %v7029 = vadd.f32 %v6675, 1.0
  %v7030 = vadd.f32 %v6677, 1.0
  %v7031 = vadd.f32 %v6679, 1.0
  %v7032 = vadd.f32 %v6681, 1.0
  %v7033 = vadd.f32 %v6683, 1.0
  %v7034 = vadd.f32 %v6685, 1.0
  %v7035 = vadd.f32 %v6687, 1.0
  %v7036 = vadd.f32 %v6689, 1.0
  %v7037 = vadd.f32 %v6691, 1.0
  %v7038 = vadd.f32 %v6693, 1.0
  %v7039 = vadd.f32 %v6695, 1.0
  %v7040 = vadd.f32 %v6697, 1.0
  %v7041 = vadd.f32 %v6699, 1.0
  %v7042 = vadd.f32 %v6701, 1.0
  %v7043 = vadd.f32 %v6703, 1.0
  %v7044 = vadd.f32 %v6705, 1.0
  %v7045 = vadd.f32 %v6707, 1.0
  %v7046 = vadd.f32 %v6709, 1.0
  %v7047 = vadd.f32 %v6711, 1.0
  %v7048 = vadd.f32 %v6713, 1.0
  %v7049 = vadd.f32 %v6715, 1.0
  %v7050 = vadd.f32 %v6717, 1.0
  %v7051 = vadd.f32 %v6719, 1.0
  %v7052 = vadd.f32 %v6721, 1.0
  %v7053 = vadd.f32 %v6723, 1.0
  %v7054 = vadd.f32 %v6725, 1.0
  %v7055 = vadd.f32 %v6727, 1.0
  %v7056 = vadd.f32 %v6729, 1.0
  %v7057 = vadd.f32 %v6731, 1.0
  %v7058 = vadd.f32 %v6733, 1.0
  %v7059 = vadd.f32 %v6735, 1.0
  %v7060 = vadd.f32 %v6737, 1.0
  %v7061 = vadd.f32 %v6739, 1.0
  %v7062 = vadd.f32 %v6741, 1.0
  %v7063 = vadd.f32 %v6743, 1.0
  %v7064 = vadd.f32 %v6745, 1.0
  %v7065 = vadd.f32 %v6747, 1.0
  %v7066 = vadd.f32 %v6749, 1.0
  %v7067 = vadd.f32 %v6751, 1.0
  %v7068 = vadd.f32 %v6753, 1.0
  %v7069 = vadd.f32 %v6755, 1.0
  %v7070 = vadd.f32 %v6757, 1.0
  %v7071 = vadd.f32 %v6759, 1.0
  %v7072 = vadd.f32 %v6761, 1.0
  %v7073 = vadd.f32 %v6763, 1.0
  %v7074 = vadd.f32 %v6765, 1.0
  %v7075 = vadd.f32 %v6767, 1.0
  %v7076 = vadd.f32 %v6769, 1.0
  %v7077 = vadd.f32 %v6771, 1.0
  %v7078 = vadd.f32 %v6773, 1.0
  %v7079 = vadd.f32 %v6775, 1.0
  %v7080 = vadd.f32 %v6777, 1.0
  %v7081 = vadd.f32 %v6779, 1.0
  %v7082 = vadd.f32 %v6781, 1.0
  %v7083 = vadd.f32 %v6783, 1.0
  %v7084 = vadd.f32 %v6785, 1.0
  %v7085 = vadd.f32 %v6787, 1.0
  %v7086 = vadd.f32 %v6789, 1.0
  %v7087 = vadd.f32 %v6791, 1.0
  %v7088 = vadd.f32 %v6793, 1.0
  %v7089 = vadd.f32 %v6795, 1.0
  %v7090 = vrcp.pop %v6796
  %v7091 = vrcp.pop %v6797
  %v7092 = vrcp.pop %v6798
  %v7093 = vrcp.pop %v6799
  %v7094 = vrcp.pop %v6800
  %v7095 = vrcp.pop %v6801
  %v7096 = vrcp.pop %v6802
  %v7097 = vrcp.pop %v6803
  %v7098 = vrcp.pop %v6804
  %v7099 = vrcp.pop %v6805
  %v7100 = vrcp.pop %v6806
  %v7101 = vrcp.pop %v6807
  %v7102 = vrcp.pop %v6808
  %v7103 = vrcp.pop %v6809
  %v7104 = vrcp.pop %v6810
  %v7105 = vrcp.pop %v6811
  %v7106 = vrcp.pop %v6812
  %v7107 = vrcp.pop %v6813
  %v7108 = vrcp.pop %v6814
  %v7109 = vrcp.pop %v6815
  %v7110 = vrcp.pop %v6816
  %v7111 = vrcp.pop %v6817
  %v7112 = vrcp.pop %v6818
  %v7113 = vrcp.pop %v6819
  %v7114 = vrcp.pop %v6820
  %v7115 = vrcp.pop %v6821
  %v7116 = vrcp.pop %v6822
  %v7117 = vrcp.pop %v6823
  %v7118 = vrcp.pop %v6824
  %v7119 = vrcp.pop %v6825
  %v7120 = vrcp.pop %v6826
  %v7121 = vrcp.pop %v6827
  %v7122 = vrcp.pop %v6828
  %v7123 = vrcp.pop %v6829
  %v7124 = vrcp.pop %v6830
  %v7125 = vrcp.pop %v6831
  %v7126 = vrcp.pop %v6832
  %v7127 = vrcp.pop %v6833
  %v7128 = vrcp.pop %v6834
  %v7129 = vrcp.pop %v6835
  %v7130 = vrcp.pop %v6836
  %v7131 = vrcp.pop %v6837
  %v7132 = vrcp.pop %v6838
  %v7133 = vrcp.pop %v6839
  %v7134 = vrcp.pop %v6840
  %v7135 = vrcp.pop %v6841
  %v7136 = vrcp.pop %v6842
  %v7137 = vrcp.pop %v6843
  %v7138 = vrcp.pop %v6844
  %v7139 = vrcp.pop %v6845
  %v7140 = vrcp.pop %v6846
  %v7141 = vrcp.pop %v6847
  %v7142 = vrcp.pop %v6848
  %v7143 = vrcp.pop %v6849
  %v7144 = vrcp.pop %v6850
  %v7145 = vrcp.pop %v6851
  %v7146 = vrcp.pop %v6852
  %v7147 = vrcp.pop %v6853
  %v7148 = vrcp.pop %v6854
  %v7149 = vrcp.pop %v6855
  %v7150 = vrcp.pop %v6856
  %v7151 = vrcp.pop %v6857
  %v7152 = vrcp.pop %v6858
  %v7153 = vrcp.pop %v6859
  %v7154 = vrcp.pop %v6860
  %v7155 = vrcp.pop %v6861
  %v7156 = vrcp.pop %v6862
  %v7157 = vrcp.pop %v6863
  %v7158 = vrcp.pop %v6864
  %v7159 = vrcp.pop %v6865
  %v7160 = vrcp.pop %v6866
  %v7161 = vrcp.pop %v6867
  %v7162 = vrcp.pop %v6868
  %v7163 = vrcp.pop %v6869
  %v7164 = vrcp.pop %v6870
  %v7165 = vrcp.pop %v6871
  %v7166 = vrcp.pop %v6872
  %v7167 = vrcp.pop %v6873
  %v7168 = vrcp.pop %v6874
  %v7169 = vrcp.pop %v6875
  %v7170 = vrcp.pop %v6876
  %v7171 = vrcp.pop %v6877
  %v7172 = vrcp.pop %v6878
  %v7173 = vrcp.pop %v6879
  %v7174 = vrcp.pop %v6880
  %v7175 = vrcp.pop %v6881
  %v7176 = vrcp.pop %v6882
  %v7177 = vrcp.pop %v6883
  %v7178 = vrcp.pop %v6884
  %v7179 = vrcp.pop %v6885
  %v7180 = vrcp.pop %v6886
  %v7181 = vrcp.pop %v6887
  %v7182 = vrcp.pop %v6888
  %v7183 = vrcp.pop %v6889
  %v7184 = vrcp.pop %v6890
  %v7185 = vrcp.pop %v6891
  %v7186 = vrcp.pop %v6892
  %v7187 = vrcp.pop %v6893
  %v7188 = vrcp.pop %v6894
  %v7189 = vrcp.pop %v6895
  %v7190 = vrcp.pop %v6896
  %v7191 = vrcp.pop %v6897
  %v7192 = vrcp.pop %v6898
  %v7193 = vrcp.pop %v6899
  %v7194 = vrcp.pop %v6900
  %v7195 = vrcp.pop %v6901
  %v7196 = vrcp.pop %v6902
  %v7197 = vrcp.pop %v6903
  %v7198 = vrcp.pop %v6904
  %v7199 = vrcp.pop %v6905
  %v7200 = vrcp.pop %v6906
  %v7201 = vrcp.pop %v6907
  %v7202 = vrcp.pop %v6908
  %v7203 = vrcp.pop %v6909
  %v7204 = vrcp.pop %v6910
  %v7205 = vrcp.pop %v6911
  %v7206 = vrcp.pop %v6912
  %v7207 = vrcp.pop %v6913
  %v7208 = vrcp.pop %v6914
  %v7209 = vrcp.pop %v6915
  %v7210 = vrcp.pop %v6916
  %v7211 = vrcp.pop %v6917
  %v7212 = vrcp.pop %v6918
  %v7213 = vrcp.pop %v6919
  %v7214 = vrcp.pop %v6920
  %v7215 = vrcp.pop %v6921
  %v7216 = vrcp.pop %v6922
  %v7217 = vrcp.pop %v6923
  %v7218 = vrcp.pop %v6924
  %v7219 = vrcp.pop %v6925
  %v7220 = vrcp.pop %v6926
  %v7221 = vrcp.pop %v6927
  %v7222 = vrcp.pop %v6928
  %v7223 = vrcp.pop %v6929
  %v7224 = vrcp.pop %v6930
  %v7225 = vrcp.pop %v6931
  %v7226 = vrcp.pop %v6932
  %v7227 = vrcp.pop %v6933
  %v7228 = vrcp.pop %v6934
  %v7229 = vrcp.pop %v6935
  %v7230 = vrcp.pop %v6936
  %v7231 = vrcp.pop %v6937
  %v7232 = vrcp.pop %v6938
  %v7233 = vrcp.pop %v6939
  %v7234 = vrcp.pop %v6940
  %v7235 = vrcp.pop %v6941
  %v7236 = vrcp.pop %v6942
  %v7237 = vrcp.pop %v6943
  %v7238 = vrcp.pop %v6944
  %v7239 = vrcp.pop %v6945
  %v7240 = vrcp.pop %v6946
  %v7241 = vrcp.pop %v6947
  %v7242 = vrcp.pop %v6948
  %v7243 = vrcp.pop %v6949
  %v7244 = vrcp.pop %v6950
  %v7245 = vrcp.pop %v6951
  %v7246 = vrcp.pop %v6952
  %v7247 = vrcp.pop %v6953
  %v7248 = vrcp.pop %v6954
  %v7249 = vrcp.pop %v6955
  %v7250 = vrcp.pop %v6956
  %v7251 = vrcp.pop %v6957
  %v7252 = vrcp.pop %v6958
  %v7253 = vrcp.pop %v6959
  %v7254 = vrcp.pop %v6960
  %v7255 = vrcp.pop %v6961
  %v7256 = vrcp.pop %v6962
  %v7257 = vrcp.pop %v6963
  %v7258 = vrcp.pop %v6964
  %v7259 = vrcp.pop %v6965
  %v7260 = vrcp.pop %v6966
  %v7261 = vrcp.pop %v6967
  %v7262 = vrcp.pop %v6968
  %v7263 = vrcp.pop %v6969
  %v7264 = vrcp.pop %v6970
  %v7265 = vrcp.pop %v6971
  %v7266 = vrcp.pop %v6972
  %v7267 = vrcp.pop %v6973
  %v7268 = vrcp.pop %v6974
  %v7269 = vrcp.pop %v6975
  %v7270 = vrcp.pop %v6976
  %v7271 = vrcp.pop %v6977
  %v7272 = vrcp.pop %v6978
  %v7273 = vrcp.pop %v6979
  %v7274 = vrcp.pop %v6980
  %v7275 = vrcp.pop %v6981
  %v7276 = vrcp.pop %v6982
  %v7277 = vrcp.pop %v6983
  %v7278 = vrcp.pop %v6984
  %v7279 = vrcp.pop %v6985
  %v7280 = vrcp.pop %v6986
  %v7281 = vrcp.pop %v6987
  %v7282 = vrcp.pop %v6988
  %v7283 = vrcp.pop %v6989
  %v7284 = vrcp.pop %v6990
  %v7285 = vrcp.pop %v6991
  %v7286 = vrcp.pop %v6992
  %v7287 = vrcp.pop %v6993
  %v7288 = vrcp.pop %v6994
  %v7289 = vrcp.pop %v6995
  %v7290 = vrcp.pop %v6996
  %v7291 = vrcp.pop %v6997
  %v7292 = vrcp.pop %v6998
  %v7293 = vrcp.pop %v6999
  %v7294 = vrcp.pop %v7000
  %v7295 = vrcp.pop %v7001
  %v7296 = vrcp.pop %v7002
  %v7297 = vrcp.pop %v7003
  %v7298 = vrcp.pop %v7004
  %v7299 = vrcp.pop %v7005
  %v7300 = vrcp.pop %v7006
  %v7301 = vrcp.pop %v7007
  %v7302 = vrcp.pop %v7008
  %v7303 = vrcp.pop %v7009
  %v7304 = vrcp.pop %v7010
  %v7305 = vrcp.pop %v7011
  %v7306 = vrcp.pop %v7012
  %v7307 = vrcp.pop %v7013
  %v7308 = vrcp.pop %v7014
  %v7309 = vrcp.pop %v7015
  %v7310 = vrcp.pop %v7016
  %v7311 = vrcp.pop %v7017
  %v7312 = vrcp.pop %v7018
  %v7313 = vrcp.pop %v7019
  %v7314 = vrcp.pop %v7020
  %v7315 = vrcp.pop %v7021
  %v7316 = vrcp.pop %v7022
  %v7317 = vrcp.pop %v7023
  %v7318 = vrcp.pop %v7024
  %v7319 = vrcp.pop %v7025
  %v7320 = vrcp.pop %v7026
  %v7321 = vrcp.pop %v7027
  %v7322 = vrcp.pop %v7028
  %v7323 = vrcp.pop %v7029
  %v7324 = vrcp.pop %v7030
  %v7325 = vrcp.pop %v7031
  %v7326 = vrcp.pop %v7032
  %v7327 = vrcp.pop %v7033
  %v7328 = vrcp.pop %v7034
  %v7329 = vrcp.pop %v7035
  %v7330 = vrcp.pop %v7036
  %v7331 = vrcp.pop %v7037
  %v7332 = vrcp.pop %v7038
  %v7333 = vrcp.pop %v7039
  %v7334 = vrcp.pop %v7040
  %v7335 = vrcp.pop %v7041
  %v7336 = vrcp.pop %v7042
  %v7337 = vrcp.pop %v7043
  %v7338 = vrcp.pop %v7044
  %v7339 = vrcp.pop %v7045
  %v7340 = vrcp.pop %v7046
  %v7341 = vrcp.pop %v7047
  %v7342 = vrcp.pop %v7048
  %v7343 = vrcp.pop %v7049
  %v7344 = vrcp.pop %v7050
  %v7345 = vrcp.pop %v7051
  %v7346 = vrcp.pop %v7052
  %v7347 = vrcp.pop %v7053
  %v7348 = vrcp.pop %v7054
  %v7349 = vrcp.pop %v7055
  %v7350 = vrcp.pop %v7056
  %v7351 = vrcp.pop %v7057
  %v7352 = vrcp.pop %v7058
  %v7353 = vrcp.pop %v7059
  %v7354 = vrcp.pop %v7060
  %v7355 = vrcp.pop %v7061
  %v7356 = vrcp.pop %v7062
  %v7357 = vrcp.pop %v7063
  %v7358 = vrcp.pop %v7064
  %v7359 = vrcp.pop %v7065
  %v7360 = vrcp.pop %v7066
  %v7361 = vrcp.pop %v7067
  %v7362 = vrcp.pop %v7068
  %v7363 = vrcp.pop %v7069
  %v7364 = vrcp.pop %v7070
  %v7365 = vrcp.pop %v7071
  %v7366 = vrcp.pop %v7072
  %v7367 = vrcp.pop %v7073
  %v7368 = vrcp.pop %v7074
  %v7369 = vrcp.pop %v7075
  %v7370 = vrcp.pop %v7076
  %v7371 = vrcp.pop %v7077
  %v7372 = vrcp.pop %v7078
  %v7373 = vrcp.pop %v7079
  %v7374 = vrcp.pop %v7080
  %v7375 = vrcp.pop %v7081
  %v7376 = vrcp.pop %v7082
  %v7377 = vrcp.pop %v7083
  %v7378 = vrcp.pop %v7084
  %v7379 = vrcp.pop %v7085
  %v7380 = vrcp.pop %v7086
  %v7381 = vrcp.pop %v7087
  %v7382 = vrcp.pop %v7088
  %v7383 = vrcp.pop %v7089
  %v7384 = vmul.f32 %v5620, %v7090
  %v7385 = vmul.f32 %v5621, %v7091
  %v7386 = vmul.f32 %v5622, %v7092
  %v7387 = vmul.f32 %v5623, %v7093
  %v7388 = vmul.f32 %v5624, %v7094
  %v7389 = vmul.f32 %v5625, %v7095
  %v7390 = vmul.f32 %v5626, %v7096
  %v7391 = vmul.f32 %v5627, %v7097
  %v7392 = vmul.f32 %v5628, %v7098
  %v7393 = vmul.f32 %v5629, %v7099
  %v7394 = vmul.f32 %v5630, %v7100
  %v7395 = vmul.f32 %v5631, %v7101
  %v7396 = vmul.f32 %v5632, %v7102
  %v7397 = vmul.f32 %v5633, %v7103
  %v7398 = vmul.f32 %v5634, %v7104
  %v7399 = vmul.f32 %v5635, %v7105
  %v7400 = vmul.f32 %v5636, %v7106
  %v7401 = vmul.f32 %v5637, %v7107
  %v7402 = vmul.f32 %v5638, %v7108
  %v7403 = vmul.f32 %v5639, %v7109
  %v7404 = vmul.f32 %v5640, %v7110
  %v7405 = vmul.f32 %v5641, %v7111
  %v7406 = vmul.f32 %v5642, %v7112
  %v7407 = vmul.f32 %v5643, %v7113
  %v7408 = vmul.f32 %v5644, %v7114
  %v7409 = vmul.f32 %v5645, %v7115
  %v7410 = vmul.f32 %v5646, %v7116
  %v7411 = vmul.f32 %v5647, %v7117
  %v7412 = vmul.f32 %v5648, %v7118
  %v7413 = vmul.f32 %v5649, %v7119
  %v7414 = vmul.f32 %v5650, %v7120
  %v7415 = vmul.f32 %v5651, %v7121
  %v7416 = vmul.f32 %v5652, %v7122
  %v7417 = vmul.f32 %v5653, %v7123
  %v7418 = vmul.f32 %v5654, %v7124
  %v7419 = vmul.f32 %v5655, %v7125
  %v7420 = vmul.f32 %v5656, %v7126
  %v7421 = vmul.f32 %v5657, %v7127
  %v7422 = vmul.f32 %v5658, %v7128
  %v7423 = vmul.f32 %v5659, %v7129
  %v7424 = vmul.f32 %v5660, %v7130
  %v7425 = vmul.f32 %v5661, %v7131
  %v7426 = vmul.f32 %v5662, %v7132
  %v7427 = vmul.f32 %v5663, %v7133
  %v7428 = vmul.f32 %v5664, %v7134
  %v7429 = vmul.f32 %v5665, %v7135
  %v7430 = vmul.f32 %v5666, %v7136
  %v7431 = vmul.f32 %v5667, %v7137
  %v7432 = vmul.f32 %v5668, %v7138
  %v7433 = vmul.f32 %v5669, %v7139
  %v7434 = vmul.f32 %v5670, %v7140
  %v7435 = vmul.f32 %v5671, %v7141
  %v7436 = vmul.f32 %v5672, %v7142
  %v7437 = vmul.f32 %v5673, %v7143
  %v7438 = vmul.f32 %v5674, %v7144
  %v7439 = vmul.f32 %v5675, %v7145
  %v7440 = vmul.f32 %v5676, %v7146
  %v7441 = vmul.f32 %v5677, %v7147
  %v7442 = vmul.f32 %v5678, %v7148
  %v7443 = vmul.f32 %v5679, %v7149
  %v7444 = vmul.f32 %v5680, %v7150
  %v7445 = vmul.f32 %v5681, %v7151
  %v7446 = vmul.f32 %v5682, %v7152
  %v7447 = vmul.f32 %v5683, %v7153
  %v7448 = vmul.f32 %v5684, %v7154
  %v7449 = vmul.f32 %v5685, %v7155
  %v7450 = vmul.f32 %v5686, %v7156
  %v7451 = vmul.f32 %v5687, %v7157
  %v7452 = vmul.f32 %v5688, %v7158
  %v7453 = vmul.f32 %v5689, %v7159
  %v7454 = vmul.f32 %v5690, %v7160
  %v7455 = vmul.f32 %v5691, %v7161
  %v7456 = vmul.f32 %v5692, %v7162
  %v7457 = vmul.f32 %v5693, %v7163
  %v7458 = vmul.f32 %v5694, %v7164
  %v7459 = vmul.f32 %v5695, %v7165
  %v7460 = vmul.f32 %v5696, %v7166
  %v7461 = vmul.f32 %v5697, %v7167
  %v7462 = vmul.f32 %v5698, %v7168
  %v7463 = vmul.f32 %v5699, %v7169
  %v7464 = vmul.f32 %v5700, %v7170
  %v7465 = vmul.f32 %v5701, %v7171
  %v7466 = vmul.f32 %v5702, %v7172
  %v7467 = vmul.f32 %v5703, %v7173
  %v7468 = vmul.f32 %v5704, %v7174
  %v7469 = vmul.f32 %v5705, %v7175
  %v7470 = vmul.f32 %v5706, %v7176
  %v7471 = vmul.f32 %v5707, %v7177
  %v7472 = vmul.f32 %v5708, %v7178
  %v7473 = vmul.f32 %v5709, %v7179
  %v7474 = vmul.f32 %v5710, %v7180
  %v7475 = vmul.f32 %v5711, %v7181
  %v7476 = vmul.f32 %v5712, %v7182
  %v7477 = vmul.f32 %v5713, %v7183
  %v7478 = vmul.f32 %v5714, %v7184
  %v7479 = vmul.f32 %v5715, %v7185
  %v7480 = vmul.f32 %v5716, %v7186
  %v7481 = vmul.f32 %v5717, %v7187
  %v7482 = vmul.f32 %v5718, %v7188
  %v7483 = vmul.f32 %v5719, %v7189
  %v7484 = vmul.f32 %v5720, %v7190
  %v7485 = vmul.f32 %v5721, %v7191
  %v7486 = vmul.f32 %v5722, %v7192
  %v7487 = vmul.f32 %v5723, %v7193
  %v7488 = vmul.f32 %v5724, %v7194
  %v7489 = vmul.f32 %v5725, %v7195
  %v7490 = vmul.f32 %v5726, %v7196
  %v7491 = vmul.f32 %v5727, %v7197
  %v7492 = vmul.f32 %v5728, %v7198
  %v7493 = vmul.f32 %v5729, %v7199
  %v7494 = vmul.f32 %v5730, %v7200
  %v7495 = vmul.f32 %v5731, %v7201
  %v7496 = vmul.f32 %v5732, %v7202
  %v7497 = vmul.f32 %v5733, %v7203
  %v7498 = vmul.f32 %v5734, %v7204
  %v7499 = vmul.f32 %v5735, %v7205
  %v7500 = vmul.f32 %v5736, %v7206
  %v7501 = vmul.f32 %v5737, %v7207
  %v7502 = vmul.f32 %v5738, %v7208
  %v7503 = vmul.f32 %v5739, %v7209
  %v7504 = vmul.f32 %v5740, %v7210
  %v7505 = vmul.f32 %v5741, %v7211
  %v7506 = vmul.f32 %v5742, %v7212
  %v7507 = vmul.f32 %v5743, %v7213
  %v7508 = vmul.f32 %v5744, %v7214
  %v7509 = vmul.f32 %v5745, %v7215
  %v7510 = vmul.f32 %v5746, %v7216
  %v7511 = vmul.f32 %v5747, %v7217
  %v7512 = vmul.f32 %v5748, %v7218
  %v7513 = vmul.f32 %v5749, %v7219
  %v7514 = vmul.f32 %v5750, %v7220
  %v7515 = vmul.f32 %v5751, %v7221
  %v7516 = vmul.f32 %v5752, %v7222
  %v7517 = vmul.f32 %v5753, %v7223
  %v7518 = vmul.f32 %v5754, %v7224
  %v7519 = vmul.f32 %v5755, %v7225
  %v7520 = vmul.f32 %v5756, %v7226
  %v7521 = vmul.f32 %v5757, %v7227
  %v7522 = vmul.f32 %v5758, %v7228
  %v7523 = vmul.f32 %v5759, %v7229
  %v7524 = vmul.f32 %v5760, %v7230
  %v7525 = vmul.f32 %v5761, %v7231
  %v7526 = vmul.f32 %v5762, %v7232
  %v7527 = vmul.f32 %v5763, %v7233
  %v7528 = vmul.f32 %v5764, %v7234
  %v7529 = vmul.f32 %v5765, %v7235
  %v7530 = vmul.f32 %v5766, %v7236
  %v7531 = vmul.f32 %v5767, %v7237
  %v7532 = vmul.f32 %v5768, %v7238
  %v7533 = vmul.f32 %v5769, %v7239
  %v7534 = vmul.f32 %v5770, %v7240
  %v7535 = vmul.f32 %v5771, %v7241
  %v7536 = vmul.f32 %v5772, %v7242
  %v7537 = vmul.f32 %v5773, %v7243
  %v7538 = vmul.f32 %v5774, %v7244
  %v7539 = vmul.f32 %v5775, %v7245
  %v7540 = vmul.f32 %v5776, %v7246
  %v7541 = vmul.f32 %v5777, %v7247
  %v7542 = vmul.f32 %v5778, %v7248
  %v7543 = vmul.f32 %v5779, %v7249
  %v7544 = vmul.f32 %v5780, %v7250
  %v7545 = vmul.f32 %v5781, %v7251
  %v7546 = vmul.f32 %v5782, %v7252
  %v7547 = vmul.f32 %v5783, %v7253
  %v7548 = vmul.f32 %v5784, %v7254
  %v7549 = vmul.f32 %v5785, %v7255
  %v7550 = vmul.f32 %v5786, %v7256
  %v7551 = vmul.f32 %v5787, %v7257
  %v7552 = vmul.f32 %v5788, %v7258
  %v7553 = vmul.f32 %v5789, %v7259
  %v7554 = vmul.f32 %v5790, %v7260
  %v7555 = vmul.f32 %v5791, %v7261
  %v7556 = vmul.f32 %v5792, %v7262
  %v7557 = vmul.f32 %v5793, %v7263
  %v7558 = vmul.f32 %v5794, %v7264
  %v7559 = vmul.f32 %v5795, %v7265
  %v7560 = vmul.f32 %v5796, %v7266
  %v7561 = vmul.f32 %v5797, %v7267
  %v7562 = vmul.f32 %v5798, %v7268
  %v7563 = vmul.f32 %v5799, %v7269
  %v7564 = vmul.f32 %v5800, %v7270
  %v7565 = vmul.f32 %v5801, %v7271
  %v7566 = vmul.f32 %v5802, %v7272
  %v7567 = vmul.f32 %v5803, %v7273
  %v7568 = vmul.f32 %v5804, %v7274
  %v7569 = vmul.f32 %v5805, %v7275
  %v7570 = vmul.f32 %v5806, %v7276
  %v7571 = vmul.f32 %v5807, %v7277
  %v7572 = vmul.f32 %v5808, %v7278
  %v7573 = vmul.f32 %v5809, %v7279
  %v7574 = vmul.f32 %v5810, %v7280
  %v7575 = vmul.f32 %v5811, %v7281
  %v7576 = vmul.f32 %v5812, %v7282
  %v7577 = vmul.f32 %v5813, %v7283
  %v7578 = vmul.f32 %v5814, %v7284
  %v7579 = vmul.f32 %v5815, %v7285
  %v7580 = vmul.f32 %v5816, %v7286
  %v7581 = vmul.f32 %v5817, %v7287
  %v7582 = vmul.f32 %v5818, %v7288
  %v7583 = vmul.f32 %v5819, %v7289
  %v7584 = vmul.f32 %v5820, %v7290
  %v7585 = vmul.f32 %v5821, %v7291
  %v7586 = vmul.f32 %v5822, %v7292
  %v7587 = vmul.f32 %v5823, %v7293
  %v7588 = vmul.f32 %v5824, %v7294
  %v7589 = vmul.f32 %v5825, %v7295
  %v7590 = vmul.f32 %v5826, %v7296
  %v7591 = vmul.f32 %v5827, %v7297
  %v7592 = vmul.f32 %v5828, %v7298
  %v7593 = vmul.f32 %v5829, %v7299
  %v7594 = vmul.f32 %v5830, %v7300
  %v7595 = vmul.f32 %v5831, %v7301
  %v7596 = vmul.f32 %v5832, %v7302
  %v7597 = vmul.f32 %v5833, %v7303
  %v7598 = vmul.f32 %v5834, %v7304
  %v7599 = vmul.f32 %v5835, %v7305
  %v7600 = vmul.f32 %v5836, %v7306
  %v7601 = vmul.f32 %v5837, %v7307
  %v7602 = vmul.f32 %v5838, %v7308
  %v7603 = vmul.f32 %v5839, %v7309
  %v7604 = vmul.f32 %v5840, %v7310
  %v7605 = vmul.f32 %v5841, %v7311
  %v7606 = vmul.f32 %v5842, %v7312
  %v7607 = vmul.f32 %v5843, %v7313
  %v7608 = vmul.f32 %v5844, %v7314
  %v7609 = vmul.f32 %v5845, %v7315
  %v7610 = vmul.f32 %v5846, %v7316
  %v7611 = vmul.f32 %v5847, %v7317
  %v7612 = vmul.f32 %v5848, %v7318
  %v7613 = vmul.f32 %v5849, %v7319
  %v7614 = vmul.f32 %v5850, %v7320
  %v7615 = vmul.f32 %v5851, %v7321
  %v7616 = vmul.f32 %v5852, %v7322
  %v7617 = vmul.f32 %v5853, %v7323
  %v7618 = vmul.f32 %v5854, %v7324
  %v7619 = vmul.f32 %v5855, %v7325
  %v7620 = vmul.f32 %v5856, %v7326
  %v7621 = vmul.f32 %v5857, %v7327
  %v7622 = vmul.f32 %v5858, %v7328
  %v7623 = vmul.f32 %v5859, %v7329
  %v7624 = vmul.f32 %v5860, %v7330
  %v7625 = vmul.f32 %v5861, %v7331
  %v7626 = vmul.f32 %v5862, %v7332
  %v7627 = vmul.f32 %v5863, %v7333
  %v7628 = vmul.f32 %v5864, %v7334
  %v7629 = vmul.f32 %v5865, %v7335
  %v7630 = vmul.f32 %v5866, %v7336
  %v7631 = vmul.f32 %v5867, %v7337
  %v7632 = vmul.f32 %v5868, %v7338
  %v7633 = vmul.f32 %v5869, %v7339
  %v7634 = vmul.f32 %v5870, %v7340
  %v7635 = vmul.f32 %v5871, %v7341
  %v7636 = vmul.f32 %v5872, %v7342
  %v7637 = vmul.f32 %v5873, %v7343
  %v7638 = vmul.f32 %v5874, %v7344
  %v7639 = vmul.f32 %v5875, %v7345
  %v7640 = vmul.f32 %v5876, %v7346
  %v7641 = vmul.f32 %v5877, %v7347
  %v7642 = vmul.f32 %v5878, %v7348
  %v7643 = vmul.f32 %v5879, %v7349
  %v7644 = vmul.f32 %v5880, %v7350
  %v7645 = vmul.f32 %v5881, %v7351
  %v7646 = vmul.f32 %v5882, %v7352
  %v7647 = vmul.f32 %v5883, %v7353
  %v7648 = vmul.f32 %v5884, %v7354
  %v7649 = vmul.f32 %v5885, %v7355
  %v7650 = vmul.f32 %v5886, %v7356
  %v7651 = vmul.f32 %v5887, %v7357
  %v7652 = vmul.f32 %v5888, %v7358
  %v7653 = vmul.f32 %v5889, %v7359
  %v7654 = vmul.f32 %v5890, %v7360
  %v7655 = vmul.f32 %v5891, %v7361
  %v7656 = vmul.f32 %v5892, %v7362
  %v7657 = vmul.f32 %v5893, %v7363
  %v7658 = vmul.f32 %v5894, %v7364
  %v7659 = vmul.f32 %v5895, %v7365
  %v7660 = vmul.f32 %v5896, %v7366
  %v7661 = vmul.f32 %v5897, %v7367
  %v7662 = vmul.f32 %v5898, %v7368
  %v7663 = vmul.f32 %v5899, %v7369
  %v7664 = vmul.f32 %v5900, %v7370
  %v7665 = vmul.f32 %v5901, %v7371
  %v7666 = vmul.f32 %v5902, %v7372
  %v7667 = vmul.f32 %v5903, %v7373
  %v7668 = vmul.f32 %v5904, %v7374
  %v7669 = vmul.f32 %v5905, %v7375
  %v7670 = vmul.f32 %v5906, %v7376
  %v7671 = vmul.f32 %v5907, %v7377
  %v7672 = vmul.f32 %v5908, %v7378
  %v7673 = vmul.f32 %v5909, %v7379
  %v7674 = vmul.f32 %v5910, %v7380
  %v7675 = vmul.f32 %v5911, %v7381
  %v7676 = vmul.f32 %v5912, %v7382
  %v7677 = vmul.f32 %v5913, %v7383
  %v7678 = vpack.c.bf16 %v7386, %v7384
  %v7679 = vpack.c.bf16 %v7387, %v7385
  %v7680 = vpack.c.bf16 %v7390, %v7388
  %v7681 = vpack.c.bf16 %v7391, %v7389
  %v7682 = vpack.c.bf16 %v7394, %v7392
  %v7683 = vpack.c.bf16 %v7395, %v7393
  %v7684 = vpack.c.bf16 %v7398, %v7396
  %v7685 = vpack.c.bf16 %v7399, %v7397
  %v7686 = vpack.c.bf16 %v7402, %v7400
  %v7687 = vpack.c.bf16 %v7403, %v7401
  %v7688 = vpack.c.bf16 %v7406, %v7404
  %v7689 = vpack.c.bf16 %v7407, %v7405
  %v7690 = vpack.c.bf16 %v7410, %v7408
  %v7691 = vpack.c.bf16 %v7411, %v7409
  %v7692 = vpack.c.bf16 %v7414, %v7412
  %v7693 = vpack.c.bf16 %v7415, %v7413
  %v7694 = vpack.c.bf16 %v7418, %v7416
  %v7695 = vpack.c.bf16 %v7419, %v7417
  %v7696 = vpack.c.bf16 %v7422, %v7420
  %v7697 = vpack.c.bf16 %v7423, %v7421
  %v7698 = vpack.c.bf16 %v7426, %v7424
  %v7699 = vpack.c.bf16 %v7427, %v7425
  %v7700 = vpack.c.bf16 %v7430, %v7428
  %v7701 = vpack.c.bf16 %v7431, %v7429
  %v7702 = vpack.c.bf16 %v7434, %v7432
  %v7703 = vpack.c.bf16 %v7435, %v7433
  %v7704 = vpack.c.bf16 %v7438, %v7436
  %v7705 = vpack.c.bf16 %v7439, %v7437
  %v7706 = vpack.c.bf16 %v7442, %v7440
  %v7707 = vpack.c.bf16 %v7443, %v7441
  %v7708 = vpack.c.bf16 %v7446, %v7444
  %v7709 = vpack.c.bf16 %v7447, %v7445
  %v7710 = vpack.c.bf16 %v7450, %v7448
  %v7711 = vpack.c.bf16 %v7451, %v7449
  %v7712 = vpack.c.bf16 %v7454, %v7452
  %v7713 = vpack.c.bf16 %v7455, %v7453
  %v7714 = vpack.c.bf16 %v7458, %v7456
  %v7715 = vpack.c.bf16 %v7459, %v7457
  %v7716 = vpack.c.bf16 %v7462, %v7460
  %v7717 = vpack.c.bf16 %v7463, %v7461
  %v7718 = vpack.c.bf16 %v7466, %v7464
  %v7719 = vpack.c.bf16 %v7467, %v7465
  %v7720 = vpack.c.bf16 %v7470, %v7468
  %v7721 = vpack.c.bf16 %v7471, %v7469
  %v7722 = vpack.c.bf16 %v7474, %v7472
  %v7723 = vpack.c.bf16 %v7475, %v7473
  %v7724 = vpack.c.bf16 %v7478, %v7476
  %v7725 = vpack.c.bf16 %v7479, %v7477
  %v7726 = vpack.c.bf16 %v7482, %v7480
  %v7727 = vpack.c.bf16 %v7483, %v7481
  %v7728 = vpack.c.bf16 %v7486, %v7484
  %v7729 = vpack.c.bf16 %v7487, %v7485
  %v7730 = vpack.c.bf16 %v7490, %v7488
  %v7731 = vpack.c.bf16 %v7491, %v7489
  %v7732 = vpack.c.bf16 %v7494, %v7492
  %v7733 = vpack.c.bf16 %v7495, %v7493
  %v7734 = vpack.c.bf16 %v7498, %v7496
  %v7735 = vpack.c.bf16 %v7499, %v7497
  %v7736 = vpack.c.bf16 %v7502, %v7500
  %v7737 = vpack.c.bf16 %v7503, %v7501
  %v7738 = vpack.c.bf16 %v7506, %v7504
  %v7739 = vpack.c.bf16 %v7507, %v7505
  %v7740 = vpack.c.bf16 %v7510, %v7508
  %v7741 = vpack.c.bf16 %v7511, %v7509
  %v7742 = vpack.c.bf16 %v7514, %v7512
  %v7743 = vpack.c.bf16 %v7515, %v7513
  %v7744 = vpack.c.bf16 %v7518, %v7516
  %v7745 = vpack.c.bf16 %v7519, %v7517
  %v7746 = vpack.c.bf16 %v7522, %v7520
  %v7747 = vpack.c.bf16 %v7523, %v7521
  %v7748 = vpack.c.bf16 %v7526, %v7524
  %v7749 = vpack.c.bf16 %v7527, %v7525
  %v7750 = vpack.c.bf16 %v7530, %v7528
  %v7751 = vpack.c.bf16 %v7531, %v7529
  %v7752 = vpack.c.bf16 %v7534, %v7532
  %v7753 = vpack.c.bf16 %v7535, %v7533
  %v7754 = vpack.c.bf16 %v7538, %v7536
  %v7755 = vpack.c.bf16 %v7539, %v7537
  %v7756 = vpack.c.bf16 %v7542, %v7540
  %v7757 = vpack.c.bf16 %v7543, %v7541
  %v7758 = vpack.c.bf16 %v7546, %v7544
  %v7759 = vpack.c.bf16 %v7547, %v7545
  %v7760 = vpack.c.bf16 %v7550, %v7548
  %v7761 = vpack.c.bf16 %v7551, %v7549
  %v7762 = vpack.c.bf16 %v7554, %v7552
  %v7763 = vpack.c.bf16 %v7555, %v7553
  %v7764 = vpack.c.bf16 %v7558, %v7556
  %v7765 = vpack.c.bf16 %v7559, %v7557
  %v7766 = vpack.c.bf16 %v7562, %v7560
  %v7767 = vpack.c.bf16 %v7563, %v7561
  %v7768 = vpack.c.bf16 %v7566, %v7564
  %v7769 = vpack.c.bf16 %v7567, %v7565
  %v7770 = vpack.c.bf16 %v7570, %v7568
  %v7771 = vpack.c.bf16 %v7571, %v7569
  %v7772 = vpack.c.bf16 %v7574, %v7572
  %v7773 = vpack.c.bf16 %v7575, %v7573
  %v7774 = vpack.c.bf16 %v7578, %v7576
  %v7775 = vpack.c.bf16 %v7579, %v7577
  %v7776 = vpack.c.bf16 %v7582, %v7580
  %v7777 = vpack.c.bf16 %v7583, %v7581
  %v7778 = vpack.c.bf16 %v7586, %v7584
  %v7779 = vpack.c.bf16 %v7587, %v7585
  %v7780 = vpack.c.bf16 %v7590, %v7588
  %v7781 = vpack.c.bf16 %v7591, %v7589
  %v7782 = vpack.c.bf16 %v7594, %v7592
  %v7783 = vpack.c.bf16 %v7595, %v7593
  %v7784 = vpack.c.bf16 %v7598, %v7596
  %v7785 = vpack.c.bf16 %v7599, %v7597
  %v7786 = vpack.c.bf16 %v7602, %v7600
  %v7787 = vpack.c.bf16 %v7603, %v7601
  %v7788 = vpack.c.bf16 %v7606, %v7604
  %v7789 = vpack.c.bf16 %v7607, %v7605
  %v7790 = vpack.c.bf16 %v7610, %v7608
  %v7791 = vpack.c.bf16 %v7611, %v7609
  %v7792 = vpack.c.bf16 %v7614, %v7612
  %v7793 = vpack.c.bf16 %v7615, %v7613
  %v7794 = vpack.c.bf16 %v7618, %v7616
  %v7795 = vpack.c.bf16 %v7619, %v7617
  %v7796 = vpack.c.bf16 %v7622, %v7620
  %v7797 = vpack.c.bf16 %v7623, %v7621
  %v7798 = vpack.c.bf16 %v7626, %v7624
  %v7799 = vpack.c.bf16 %v7627, %v7625
  %v7800 = vpack.c.bf16 %v7630, %v7628
  %v7801 = vpack.c.bf16 %v7631, %v7629
  %v7802 = vpack.c.bf16 %v7634, %v7632
  %v7803 = vpack.c.bf16 %v7635, %v7633
  %v7804 = vpack.c.bf16 %v7638, %v7636
  %v7805 = vpack.c.bf16 %v7639, %v7637
  %v7806 = vpack.c.bf16 %v7642, %v7640
  %v7807 = vpack.c.bf16 %v7643, %v7641
  %v7808 = vpack.c.bf16 %v7646, %v7644
  %v7809 = vpack.c.bf16 %v7647, %v7645
  %v7810 = vpack.c.bf16 %v7650, %v7648
  %v7811 = vpack.c.bf16 %v7651, %v7649
  %v7812 = vpack.c.bf16 %v7654, %v7652
  %v7813 = vpack.c.bf16 %v7655, %v7653
  %v7814 = vpack.c.bf16 %v7658, %v7656
  %v7815 = vpack.c.bf16 %v7659, %v7657
  %v7816 = vpack.c.bf16 %v7662, %v7660
  %v7817 = vpack.c.bf16 %v7663, %v7661
  %v7818 = vpack.c.bf16 %v7666, %v7664
  %v7819 = vpack.c.bf16 %v7667, %v7665
  %v7820 = vpack.c.bf16 %v7670, %v7668
  %v7821 = vpack.c.bf16 %v7671, %v7669
  %v7822 = vpack.c.bf16 %v7674, %v7672
  %v7823 = vpack.c.bf16 %v7675, %v7673
  %v7824 = vpack.c.bf16 %v7676, %v7676
  %v7825 = vpack.c.bf16 %v7677, %v7677
  %v7827 = vsel %vm536, %v7824, 0
  %v7830 = vsel %vm536, %v7825, 0
  %7832 = vmatprep.subr.bf16.mxu0 %v7679
  %7833 = vmatpush1.bf16.msra.mxu0 %v7678
  %7834 = vmatprep.subr.bf16.mxu0 %v7681
  %7835 = vmatpush1.bf16.msra.mxu0 %v7680
  %7836 = vmatprep.subr.bf16.mxu0 %v7683
  %7837 = vmatpush1.bf16.msra.mxu0 %v7682
  %7838 = vmatprep.subr.bf16.mxu0 %v7685
  %7839 = vmatpush1.bf16.msra.mxu0 %v7684
  %7840 = vmatprep.subr.bf16.mxu0 %v7687
  %7841 = vmatpush1.bf16.msra.mxu0 %v7686
  %7842 = vmatprep.subr.bf16.mxu0 %v7689
  %7843 = vmatpush1.bf16.msra.mxu0 %v7688
  %7844 = vmatprep.subr.bf16.mxu0 %v7691
  %7845 = vmatpush1.bf16.msra.mxu0 %v7690
  %7846 = vmatprep.subr.bf16.mxu0 %v7693
  %7847 = vmatpush1.bf16.msra.mxu0 %v7692
  %7848 = vmatprep.subr.bf16.mxu0 %v7695
  %7849 = vmatpush1.bf16.msra.mxu0 %v7694
  %7850 = vmatprep.subr.bf16.mxu0 %v7697
  %7851 = vmatpush1.bf16.msra.mxu0 %v7696
  %7852 = vmatprep.subr.bf16.mxu0 %v7699
  %7853 = vmatpush1.bf16.msra.mxu0 %v7698
  %7854 = vmatprep.subr.bf16.mxu0 %v7701
  %7855 = vmatpush1.bf16.msra.mxu0 %v7700
  %7856 = vmatprep.subr.bf16.mxu0 %v7703
  %7857 = vmatpush1.bf16.msra.mxu0 %v7702
  %7858 = vmatprep.subr.bf16.mxu0 %v7705
  %7859 = vmatpush1.bf16.msra.mxu0 %v7704
  %7860 = vmatprep.subr.bf16.mxu0 %v7707
  %7861 = vmatpush1.bf16.msra.mxu0 %v7706
  %7862 = vmatprep.subr.bf16.mxu0 %v7709
  %7863 = vmatpush1.bf16.msra.mxu0 %v7708
  %7864 = vmatprep.mubr.bf16.mxu0 %v1526
  %7865 = vmatmul.mubr.bf16.gmra.mrb[0].mxu0 %v1525
  %v7866 = vpop.f32.mrb[0].mxu0
  %v7867 = vadd.f32 0.0, %v7866
  %v7868 = vpop.f32.mrb[0].mxu0
  %v7869 = vadd.f32 0.0, %v7868
  %v7870 = vpop.f32.mrb[0].mxu0
  %v7871 = vadd.f32 0.0, %v7870
  %v7872 = vpop.f32.mrb[0].mxu0
  %v7873 = vadd.f32 0.0, %v7872
  %7874 = vmatprep.mubr.bf16.mxu0 %v1536
  %7875 = vmatmul.mubr.bf16.gmra.mrb[0].mxu0 %v1535
  %v7876 = vpop.f32.mrb[0].mxu0
  %v7877 = vadd.f32 0.0, %v7876
  %v7878 = vpop.f32.mrb[0].mxu0
  %v7879 = vadd.f32 0.0, %v7878
  %v7880 = vpop.f32.mrb[0].mxu0
  %v7881 = vpop.f32.mrb[0].mxu0
  %7882 = vdwg.mxu0
  %7883 = vmatprep.subr.bf16.mxu0 %v7711
  %7884 = vmatpush1.bf16.msra.mxu0 %v7710
  %7885 = vmatprep.subr.bf16.mxu0 %v7713
  %7886 = vmatpush1.bf16.msra.mxu0 %v7712
  %7887 = vmatprep.subr.bf16.mxu0 %v7715
  %7888 = vmatpush1.bf16.msra.mxu0 %v7714
  %7889 = vmatprep.subr.bf16.mxu0 %v7717
  %7890 = vmatpush1.bf16.msra.mxu0 %v7716
  %7891 = vmatprep.subr.bf16.mxu0 %v7719
  %7892 = vmatpush1.bf16.msra.mxu0 %v7718
  %7893 = vmatprep.subr.bf16.mxu0 %v7721
  %7894 = vmatpush1.bf16.msra.mxu0 %v7720
  %7895 = vmatprep.subr.bf16.mxu0 %v7723
  %7896 = vmatpush1.bf16.msra.mxu0 %v7722
  %7897 = vmatprep.subr.bf16.mxu0 %v7725
  %7898 = vmatpush1.bf16.msra.mxu0 %v7724
  %7899 = vmatprep.subr.bf16.mxu0 %v7727
  %7900 = vmatpush1.bf16.msra.mxu0 %v7726
  %7901 = vmatprep.subr.bf16.mxu0 %v7729
  %7902 = vmatpush1.bf16.msra.mxu0 %v7728
  %7903 = vmatprep.subr.bf16.mxu0 %v7731
  %7904 = vmatpush1.bf16.msra.mxu0 %v7730
  %7905 = vmatprep.subr.bf16.mxu0 %v7733
  %7906 = vmatpush1.bf16.msra.mxu0 %v7732
  %7907 = vmatprep.subr.bf16.mxu0 %v7735
  %7908 = vmatpush1.bf16.msra.mxu0 %v7734
  %7909 = vmatprep.subr.bf16.mxu0 %v7737
  %7910 = vmatpush1.bf16.msra.mxu0 %v7736
  %7911 = vmatprep.subr.bf16.mxu0 %v7739
  %7912 = vmatpush1.bf16.msra.mxu0 %v7738
  %7913 = vmatprep.subr.bf16.mxu0 %v7741
  %7914 = vmatpush1.bf16.msra.mxu0 %v7740
  %7915 = vmatprep.mubr.bf16.mxu0 %v1528
  %7916 = vmatmul.mubr.bf16.gmra.mrb[0].mxu0 %v1527
  %v7917 = vpop.f32.mrb[0].mxu0
  %v7918 = vadd.f32 %v7867, %v7917
  %v7919 = vpop.f32.mrb[0].mxu0
  %v7920 = vadd.f32 %v7869, %v7919
  %v7921 = vpop.f32.mrb[0].mxu0
  %v7922 = vadd.f32 %v7871, %v7921
  %v7923 = vpop.f32.mrb[0].mxu0
  %v7924 = vadd.f32 %v7873, %v7923
  %7925 = vmatprep.mubr.bf16.mxu0 %v1538
  %7926 = vmatmul.mubr.bf16.gmra.mrb[0].mxu0 %v1537
  %v7927 = vpop.f32.mrb[0].mxu0
  %v7928 = vadd.f32 %v7877, %v7927
  %v7929 = vpop.f32.mrb[0].mxu0
  %v7930 = vadd.f32 %v7879, %v7929
  %v7931 = vpop.f32.mrb[0].mxu0
  %v7932 = vpop.f32.mrb[0].mxu0
  %7933 = vdwg.mxu0
  %7934 = vmatprep.subr.bf16.mxu0 %v7743
  %7935 = vmatpush1.bf16.msra.mxu0 %v7742
  %7936 = vmatprep.subr.bf16.mxu0 %v7745
  %7937 = vmatpush1.bf16.msra.mxu0 %v7744
  %7938 = vmatprep.subr.bf16.mxu0 %v7747
  %7939 = vmatpush1.bf16.msra.mxu0 %v7746
  %7940 = vmatprep.subr.bf16.mxu0 %v7749
  %7941 = vmatpush1.bf16.msra.mxu0 %v7748
  %7942 = vmatprep.subr.bf16.mxu0 %v7751
  %7943 = vmatpush1.bf16.msra.mxu0 %v7750
  %7944 = vmatprep.subr.bf16.mxu0 %v7753
  %7945 = vmatpush1.bf16.msra.mxu0 %v7752
  %7946 = vmatprep.subr.bf16.mxu0 %v7755
  %7947 = vmatpush1.bf16.msra.mxu0 %v7754
  %7948 = vmatprep.subr.bf16.mxu0 %v7757
  %7949 = vmatpush1.bf16.msra.mxu0 %v7756
  %7950 = vmatprep.subr.bf16.mxu0 %v7759
  %7951 = vmatpush1.bf16.msra.mxu0 %v7758
  %7952 = vmatprep.subr.bf16.mxu0 %v7761
  %7953 = vmatpush1.bf16.msra.mxu0 %v7760
  %7954 = vmatprep.subr.bf16.mxu0 %v7763
  %7955 = vmatpush1.bf16.msra.mxu0 %v7762
  %7956 = vmatprep.subr.bf16.mxu0 %v7765
  %7957 = vmatpush1.bf16.msra.mxu0 %v7764
  %7958 = vmatprep.subr.bf16.mxu0 %v7767
  %7959 = vmatpush1.bf16.msra.mxu0 %v7766
  %7960 = vmatprep.subr.bf16.mxu0 %v7769
  %7961 = vmatpush1.bf16.msra.mxu0 %v7768
  %7962 = vmatprep.subr.bf16.mxu0 %v7771
  %7963 = vmatpush1.bf16.msra.mxu0 %v7770
  %7964 = vmatprep.subr.bf16.mxu0 %v7773
  %7965 = vmatpush1.bf16.msra.mxu0 %v7772
  %7966 = vmatprep.mubr.bf16.mxu0 %v1530
  %7967 = vmatmul.mubr.bf16.gmra.mrb[0].mxu0 %v1529
  %v7968 = vpop.f32.mrb[0].mxu0
  %v7969 = vadd.f32 %v7918, %v7968
  %v7970 = vpop.f32.mrb[0].mxu0
  %v7971 = vadd.f32 %v7920, %v7970
  %v7972 = vpop.f32.mrb[0].mxu0
  %v7973 = vadd.f32 %v7922, %v7972
  %v7974 = vpop.f32.mrb[0].mxu0
  %v7975 = vadd.f32 %v7924, %v7974
  %7976 = vmatprep.mubr.bf16.mxu0 %v1540
  %7977 = vmatmul.mubr.bf16.gmra.mrb[0].mxu0 %v1539
  %v7978 = vpop.f32.mrb[0].mxu0
  %v7979 = vadd.f32 %v7928, %v7978
  %v7980 = vpop.f32.mrb[0].mxu0
  %v7981 = vadd.f32 %v7930, %v7980
  %v7982 = vpop.f32.mrb[0].mxu0
  %v7983 = vpop.f32.mrb[0].mxu0
  %7984 = vdwg.mxu0
  %7985 = vmatprep.subr.bf16.mxu0 %v7775
  %7986 = vmatpush1.bf16.msra.mxu0 %v7774
  %7987 = vmatprep.subr.bf16.mxu0 %v7777
  %7988 = vmatpush1.bf16.msra.mxu0 %v7776
  %7989 = vmatprep.subr.bf16.mxu0 %v7779
  %7990 = vmatpush1.bf16.msra.mxu0 %v7778
  %7991 = vmatprep.subr.bf16.mxu0 %v7781
  %7992 = vmatpush1.bf16.msra.mxu0 %v7780
  %7993 = vmatprep.subr.bf16.mxu0 %v7783
  %7994 = vmatpush1.bf16.msra.mxu0 %v7782
  %7995 = vmatprep.subr.bf16.mxu0 %v7785
  %7996 = vmatpush1.bf16.msra.mxu0 %v7784
  %7997 = vmatprep.subr.bf16.mxu0 %v7787
  %7998 = vmatpush1.bf16.msra.mxu0 %v7786
  %7999 = vmatprep.subr.bf16.mxu0 %v7789
  %8000 = vmatpush1.bf16.msra.mxu0 %v7788
  %8001 = vmatprep.subr.bf16.mxu0 %v7791
  %8002 = vmatpush1.bf16.msra.mxu0 %v7790
  %8003 = vmatprep.subr.bf16.mxu0 %v7793
  %8004 = vmatpush1.bf16.msra.mxu0 %v7792
  %8005 = vmatprep.subr.bf16.mxu0 %v7795
  %8006 = vmatpush1.bf16.msra.mxu0 %v7794
  %8007 = vmatprep.subr.bf16.mxu0 %v7797
  %8008 = vmatpush1.bf16.msra.mxu0 %v7796
  %8009 = vmatprep.subr.bf16.mxu0 %v7799
  %8010 = vmatpush1.bf16.msra.mxu0 %v7798
  %8011 = vmatprep.subr.bf16.mxu0 %v7801
  %8012 = vmatpush1.bf16.msra.mxu0 %v7800
  %8013 = vmatprep.subr.bf16.mxu0 %v7803
  %8014 = vmatpush1.bf16.msra.mxu0 %v7802
  %8015 = vmatprep.subr.bf16.mxu0 %v7805
  %8016 = vmatpush1.bf16.msra.mxu0 %v7804
  %8017 = vmatprep.mubr.bf16.mxu0 %v1532
  %8018 = vmatmul.mubr.bf16.gmra.mrb[0].mxu0 %v1531
  %v8019 = vpop.f32.mrb[0].mxu0
  %v8020 = vadd.f32 %v7969, %v8019
  %v8021 = vpop.f32.mrb[0].mxu0
  %v8022 = vadd.f32 %v7971, %v8021
  %v8023 = vpop.f32.mrb[0].mxu0
  %v8024 = vadd.f32 %v7973, %v8023
  %v8025 = vpop.f32.mrb[0].mxu0
  %v8026 = vadd.f32 %v7975, %v8025
  %8027 = vmatprep.mubr.bf16.mxu0 %v1542
  %8028 = vmatmul.mubr.bf16.gmra.mrb[0].mxu0 %v1541
  %v8029 = vpop.f32.mrb[0].mxu0
  %v8030 = vadd.f32 %v7979, %v8029
  %v8031 = vpop.f32.mrb[0].mxu0
  %v8032 = vadd.f32 %v7981, %v8031
  %v8033 = vpop.f32.mrb[0].mxu0
  %v8034 = vpop.f32.mrb[0].mxu0
  %8035 = vdwg.mxu0
  %8036 = vmatprep.subr.bf16.mxu0 %v7807
  %8037 = vmatpush1.bf16.msra.mxu0 %v7806
  %8038 = vmatprep.subr.bf16.mxu0 %v7809
  %8039 = vmatpush1.bf16.msra.mxu0 %v7808
  %8040 = vmatprep.subr.bf16.mxu0 %v7811
  %8041 = vmatpush1.bf16.msra.mxu0 %v7810
  %8042 = vmatprep.subr.bf16.mxu0 %v7813
  %8043 = vmatpush1.bf16.msra.mxu0 %v7812
  %8044 = vmatprep.subr.bf16.mxu0 %v7815
  %8045 = vmatpush1.bf16.msra.mxu0 %v7814
  %8046 = vmatprep.subr.bf16.mxu0 %v7817
  %8047 = vmatpush1.bf16.msra.mxu0 %v7816
  %8048 = vmatprep.subr.bf16.mxu0 %v7819
  %8049 = vmatpush1.bf16.msra.mxu0 %v7818
  %8050 = vmatprep.subr.bf16.mxu0 %v7821
  %8051 = vmatpush1.bf16.msra.mxu0 %v7820
  %8052 = vmatprep.subr.bf16.mxu0 %v7823
  %8053 = vmatpush1.bf16.msra.mxu0 %v7822
  %8054 = vmatprep.subr.bf16.mxu0 %v7830
  %8055 = vmatpush1.bf16.msra.mxu0 %v7827
  %8056 = vmatprep.subr.bf16.mxu0 0
  %8057 = vmatpush1.bf16.msra.mxu0 0
  %8058 = vmatprep.subr.bf16.mxu0 0
  %8059 = vmatpush1.bf16.msra.mxu0 0
  %8060 = vmatprep.subr.bf16.mxu0 0
  %8061 = vmatpush1.bf16.msra.mxu0 0
  %8062 = vmatprep.subr.bf16.mxu0 0
  %8063 = vmatpush1.bf16.msra.mxu0 0
  %8064 = vmatprep.subr.bf16.mxu0 0
  %8065 = vmatpush1.bf16.msra.mxu0 0
  %8066 = vmatprep.subr.bf16.mxu0 0
  %8067 = vmatpush1.bf16.msra.mxu0 0
  %8068 = vmatprep.mubr.bf16.mxu0 %v1565
  %8069 = vmatmul.mubr.bf16.gmra.mrb[0].mxu0 %v1533
  %v8070 = vpop.f32.mrb[0].mxu0
  %v8071 = vadd.f32 %v8020, %v8070
  %v8072 = vpop.f32.mrb[0].mxu0
  %v8073 = vadd.f32 %v8022, %v8072
  %v8074 = vpop.f32.mrb[0].mxu0
  %v8075 = vadd.f32 %v8024, %v8074
  %v8076 = vpop.f32.mrb[0].mxu0
  %v8077 = vadd.f32 %v8026, %v8076
  %8078 = vmatprep.mubr.bf16.mxu0 %v1568
  %8079 = vmatmul.mubr.bf16.gmra.mrb[0].mxu0 %v1543
  %v8080 = vpop.f32.mrb[0].mxu0
  %v8081 = vadd.f32 %v8030, %v8080
  %v8082 = vpop.f32.mrb[0].mxu0
  %v8083 = vadd.f32 %v8032, %v8082
  %v8084 = vpop.f32.mrb[0].mxu0
  %v8085 = vpop.f32.mrb[0].mxu0
  %8086 = vdwg.mxu0
  %v8087 = vmul.f32 %v8071, 0.020408163
  %v8088 = vmul.f32 %v8073, 0.020408163
  %v8089 = vmul.f32 %v8075, 0.020408163
  %v8090 = vmul.f32 %v8077, 0.020408163
  %v8091 = vmul.f32 %v8081, 0.020408163
  %v8092 = vmul.f32 %v8083, 0.020408163
  %v8093 = vpack.c.bf16 %v8087, %v8087
  %v8094 = vpack.c.bf16 %v8088, %v8088
  %v8095 = vld [vmem:[%s9] sm:$0xff]
  %v8096 = vld [vmem:[%s9 + $0x8] sm:$0xff]
  %v8097 = vld [vmem:[%s9 + $0x10] sm:$0xff]
  %v8098 = vld [vmem:[%s9 + $0x18] sm:$0xff]
  %v8099 = vld [vmem:[%s9 + $0x20] sm:$0xff]
  %v8100 = vld [vmem:[%s9 + $0x28] sm:$0xff]
  %v8101 = vld [vmem:[%s9 + $0x30] sm:$0xff]
  %v8102 = vld [vmem:[%s9 + $0x38] sm:$0xff]
  %v8103 = vld [vmem:[%s9 + $0x40] sm:$0xff]
  %v8104 = vld [vmem:[%s9 + $0x48] sm:$0xff]
  %v8105 = vld [vmem:[%s9 + $0x50] sm:$0xff]
  %v8106 = vld [vmem:[%s9 + $0x58] sm:$0xff]
  %v8107 = vld [vmem:[%s9 + $0x60] sm:$0xff]
  %v8108 = vld [vmem:[%s9 + $0x68] sm:$0xff]
  %v8109 = vld [vmem:[%s9 + $0x70] sm:$0xff]
  %v8110 = vld [vmem:[%s9 + $0x78] sm:$0xff]
  %v8111 = vld [vmem:[%s9 + $0x80] sm:$0xff]
  %v8112 = vld [vmem:[%s9 + $0x88] sm:$0xff]
  %v8113 = vld [vmem:[%s9 + $0x90] sm:$0xff]
  %v8114 = vld [vmem:[%s9 + $0x98] sm:$0xff]
  %v8115 = vld [vmem:[%s9 + $0xa0] sm:$0xff]
  %v8116 = vld [vmem:[%s9 + $0xa8] sm:$0xff]
  %v8117 = vld [vmem:[%s9 + $0xb0] sm:$0xff]
  %v8118 = vld [vmem:[%s9 + $0xb8] sm:$0xff]
  %v8119 = vld [vmem:[%s9 + $0xc0] sm:$0xff]
  %v8120 = vld [vmem:[%s9 + $0xc8] sm:$0xff]
  %v8121 = vld [vmem:[%s9 + $0xd0] sm:$0xff]
  %v8122 = vld [vmem:[%s9 + $0xd8] sm:$0xff]
  %v8123 = vld [vmem:[%s9 + $0xe0] sm:$0xff]
  %v8124 = vld [vmem:[%s9 + $0xe8] sm:$0xff]
  %v8125 = vld [vmem:[%s9 + $0xf0] sm:$0xff]
  %v8126 = vld [vmem:[%s9 + $0xf8] sm:$0xff]
  %v8127 = vld [vmem:[%s10] sm:$0x3]
  %v8129 = vlaneseq
  %v8130 = vshrl.u32 %v8129, 7
  %v8131 = vsub.s32 0, %v8130
  %v8132 = vrot.slane %v8127, %v8131
  %v8133 = vlaneseq
  %v8134 = vshrl.u32 %v8133, 7
  %v8135 = vsub.s32 1, %v8134
  %v8136 = vrot.slane %v8127, %v8135
  %v8171 = vunpack.c.l.b16 %v8095
  %v8172 = vunpack.c.h.b16 %v8095
  %v8173 = vunpack.c.l.b16 %v8096
  %v8174 = vunpack.c.h.b16 %v8096
  %v8175 = vunpack.c.l.b16 %v8097
  %v8176 = vunpack.c.h.b16 %v8097
  %v8177 = vunpack.c.l.b16 %v8098
  %v8178 = vunpack.c.h.b16 %v8098
  %v8179 = vunpack.c.l.b16 %v8099
  %v8180 = vunpack.c.h.b16 %v8099
  %v8181 = vunpack.c.l.b16 %v8100
  %v8182 = vunpack.c.h.b16 %v8100
  %v8183 = vunpack.c.l.b16 %v8101
  %v8184 = vunpack.c.h.b16 %v8101
  %v8185 = vunpack.c.l.b16 %v8102
  %v8186 = vunpack.c.h.b16 %v8102
  %v8187 = vunpack.c.l.b16 %v8103
  %v8188 = vunpack.c.h.b16 %v8103
  %v8189 = vunpack.c.l.b16 %v8104
  %v8190 = vunpack.c.h.b16 %v8104
  %v8191 = vunpack.c.l.b16 %v8105
  %v8192 = vunpack.c.h.b16 %v8105
  %v8193 = vunpack.c.l.b16 %v8106
  %v8194 = vunpack.c.h.b16 %v8106
  %v8195 = vunpack.c.l.b16 %v8107
  %v8196 = vunpack.c.h.b16 %v8107
  %v8197 = vunpack.c.l.b16 %v8108
  %v8198 = vunpack.c.h.b16 %v8108
  %v8199 = vunpack.c.l.b16 %v8109
  %v8200 = vunpack.c.h.b16 %v8109
  %v8201 = vunpack.c.l.b16 %v8110
  %v8202 = vunpack.c.h.b16 %v8110
  %v8203 = vunpack.c.l.b16 %v8111
  %v8204 = vunpack.c.h.b16 %v8111
  %v8205 = vunpack.c.l.b16 %v8112
  %v8206 = vunpack.c.h.b16 %v8112
  %v8207 = vunpack.c.l.b16 %v8113
  %v8208 = vunpack.c.h.b16 %v8113
  %v8209 = vunpack.c.l.b16 %v8114
  %v8210 = vunpack.c.h.b16 %v8114
  %v8211 = vunpack.c.l.b16 %v8115
  %v8212 = vunpack.c.h.b16 %v8115
  %v8213 = vunpack.c.l.b16 %v8116
  %v8214 = vunpack.c.h.b16 %v8116
  %v8215 = vunpack.c.l.b16 %v8117
  %v8216 = vunpack.c.h.b16 %v8117
  %v8217 = vunpack.c.l.b16 %v8118
  %v8218 = vunpack.c.h.b16 %v8118
  %v8219 = vunpack.c.l.b16 %v8119
  %v8220 = vunpack.c.h.b16 %v8119
  %v8221 = vunpack.c.l.b16 %v8120
  %v8222 = vunpack.c.h.b16 %v8120
  %v8223 = vunpack.c.l.b16 %v8121
  %v8224 = vunpack.c.h.b16 %v8121
  %v8225 = vunpack.c.l.b16 %v8122
  %v8226 = vunpack.c.h.b16 %v8122
  %v8227 = vunpack.c.l.b16 %v8123
  %v8228 = vunpack.c.h.b16 %v8123
  %v8229 = vunpack.c.l.b16 %v8124
  %v8230 = vunpack.c.h.b16 %v8124
  %v8231 = vunpack.c.l.b16 %v8125
  %v8232 = vunpack.c.h.b16 %v8125
  %v8233 = vunpack.c.l.b16 %v8126
  %v8234 = vunpack.c.h.b16 %v8126
  %v8235 = vpack.c.b16 %v8173, %v8171
  %v8236 = vpack.c.b16 %v8174, %v8172
  %v8237 = vpack.c.b16 %v8177, %v8175
  %v8238 = vpack.c.b16 %v8178, %v8176
  %v8239 = vpack.c.b16 %v8181, %v8179
  %v8240 = vpack.c.b16 %v8182, %v8180
  %v8241 = vpack.c.b16 %v8185, %v8183
  %v8242 = vpack.c.b16 %v8186, %v8184
  %v8243 = vpack.c.b16 %v8189, %v8187
  %v8244 = vpack.c.b16 %v8190, %v8188
  %v8245 = vpack.c.b16 %v8193, %v8191
  %v8246 = vpack.c.b16 %v8194, %v8192
  %v8247 = vpack.c.b16 %v8197, %v8195
  %v8248 = vpack.c.b16 %v8198, %v8196
  %v8249 = vpack.c.b16 %v8201, %v8199
  %v8250 = vpack.c.b16 %v8202, %v8200
  %v8251 = vpack.c.b16 %v8205, %v8203
  %v8252 = vpack.c.b16 %v8206, %v8204
  %v8253 = vpack.c.b16 %v8209, %v8207
  %v8254 = vpack.c.b16 %v8210, %v8208
  %v8255 = vpack.c.b16 %v8213, %v8211
  %v8256 = vpack.c.b16 %v8214, %v8212
  %v8257 = vpack.c.b16 %v8217, %v8215
  %v8258 = vpack.c.b16 %v8218, %v8216
  %v8259 = vpack.c.b16 %v8221, %v8219
  %v8260 = vpack.c.b16 %v8222, %v8220
  %v8261 = vpack.c.b16 %v8225, %v8223
  %v8262 = vpack.c.b16 %v8226, %v8224
  %v8263 = vpack.c.b16 %v8229, %v8227
  %v8264 = vpack.c.b16 %v8230, %v8228
  %v8265 = vpack.c.b16 %v8233, %v8231
  %v8266 = vpack.c.b16 %v8234, %v8232
  %8299 = vmatprep.subr.bf16.mxu0 %v8236
  %8300 = vmatpush1.bf16.msra.mxu0 %v8235
  %8301 = vmatprep.subr.bf16.mxu0 %v8238
  %8302 = vmatpush1.bf16.msra.mxu0 %v8237
  %8303 = vmatprep.subr.bf16.mxu0 %v8240
  %8304 = vmatpush1.bf16.msra.mxu0 %v8239
  %8305 = vmatprep.subr.bf16.mxu0 %v8242
  %8306 = vmatpush1.bf16.msra.mxu0 %v8241
  %8307 = vmatprep.subr.bf16.mxu0 %v8244
  %8308 = vmatpush1.bf16.msra.mxu0 %v8243
  %8309 = vmatprep.subr.bf16.mxu0 %v8246
  %8310 = vmatpush1.bf16.msra.mxu0 %v8245
  %8311 = vmatprep.subr.bf16.mxu0 %v8248
  %8312 = vmatpush1.bf16.msra.mxu0 %v8247
  %8313 = vmatprep.subr.bf16.mxu0 %v8250
  %8314 = vmatpush1.bf16.msra.mxu0 %v8249
  %8315 = vmatprep.subr.bf16.mxu0 %v8252
  %8316 = vmatpush1.bf16.msra.mxu0 %v8251
  %8317 = vmatprep.subr.bf16.mxu0 %v8254
  %8318 = vmatpush1.bf16.msra.mxu0 %v8253
  %8319 = vmatprep.subr.bf16.mxu0 %v8256
  %8320 = vmatpush1.bf16.msra.mxu0 %v8255
  %8321 = vmatprep.subr.bf16.mxu0 %v8258
  %8322 = vmatpush1.bf16.msra.mxu0 %v8257
  %8323 = vmatprep.subr.bf16.mxu0 %v8260
  %8324 = vmatpush1.bf16.msra.mxu0 %v8259
  %8325 = vmatprep.subr.bf16.mxu0 %v8262
  %8326 = vmatpush1.bf16.msra.mxu0 %v8261
  %8327 = vmatprep.subr.bf16.mxu0 %v8264
  %8328 = vmatpush1.bf16.msra.mxu0 %v8263
  %8329 = vmatprep.subr.bf16.mxu0 %v8266
  %8330 = vmatpush1.bf16.msra.mxu0 %v8265
  %8331 = vmatprep.mubr.bf16.mxu0 %v8094
  %8332 = vmatmul.mubr.bf16.gmra.mrb[0].mxu0 %v8093
  %v8333 = vpop.f32.mrb[0].mxu0
  %v8334 = vadd.f32 %v8132, %v8333
  %v8335 = vpop.f32.mrb[0].mxu0
  %v8336 = vadd.f32 %v8136, %v8335
  %v8337 = vpop.f32.mrb[0].mxu0
  %v8338 = vpop.f32.mrb[0].mxu0
  %8339 = vdwg.mxu0
  %v8340 = vpack.c.bf16 %v8089, %v8087
  %v8341 = vpack.c.bf16 %v8090, %v8088
  %v8342 = vpack.c.bf16 %v8091, %v8091
  %v8343 = vpack.c.bf16 %v8092, %v8092
  %v8344 = vld [vmem:[%s11] sm:$0xff]
  %v8345 = vld [vmem:[%s11 + $0x8] sm:$0xff]
  %v8346 = vld [vmem:[%s11 + $0x10] sm:$0xff]
  %v8347 = vld [vmem:[%s11 + $0x18] sm:$0xff]
  %v8348 = vld [vmem:[%s11 + $0x20] sm:$0xff]
  %v8349 = vld [vmem:[%s11 + $0x28] sm:$0xff]
  %v8350 = vld [vmem:[%s11 + $0x30] sm:$0xff]
  %v8351 = vld [vmem:[%s11 + $0x38] sm:$0xff]
  %v8352 = vld [vmem:[%s11 + $0x40] sm:$0xff]
  %v8353 = vld [vmem:[%s11 + $0x48] sm:$0xff]
  %v8354 = vld [vmem:[%s11 + $0x50] sm:$0xff]
  %v8355 = vld [vmem:[%s11 + $0x58] sm:$0xff]
  %v8356 = vld [vmem:[%s11 + $0x60] sm:$0xff]
  %v8357 = vld [vmem:[%s11 + $0x68] sm:$0xff]
  %v8358 = vld [vmem:[%s11 + $0x70] sm:$0xff]
  %v8359 = vld [vmem:[%s11 + $0x78] sm:$0xff]
  %v8360 = vld [vmem:[%s11 + $0x80] sm:$0xff]
  %v8361 = vld [vmem:[%s11 + $0x88] sm:$0xff]
  %v8362 = vld [vmem:[%s11 + $0x90] sm:$0xff]
  %v8363 = vld [vmem:[%s11 + $0x98] sm:$0xff]
  %v8364 = vld [vmem:[%s11 + $0xa0] sm:$0xff]
  %v8365 = vld [vmem:[%s11 + $0xa8] sm:$0xff]
  %v8366 = vld [vmem:[%s11 + $0xb0] sm:$0xff]
  %v8367 = vld [vmem:[%s11 + $0xb8] sm:$0xff]
  %v8368 = vld [vmem:[%s11 + $0xc0] sm:$0xff]
  %v8369 = vld [vmem:[%s11 + $0xc8] sm:$0xff]
  %v8370 = vld [vmem:[%s11 + $0xd0] sm:$0xff]
  %v8371 = vld [vmem:[%s11 + $0xd8] sm:$0xff]
  %v8372 = vld [vmem:[%s11 + $0xe0] sm:$0xff]
  %v8373 = vld [vmem:[%s11 + $0xe8] sm:$0xff]
  %v8374 = vld [vmem:[%s11 + $0xf0] sm:$0xff]
  %v8375 = vld [vmem:[%s11 + $0xf8] sm:$0xff]
  %v8376 = vld [vmem:[%s12] sm:$0x3]
  %v8378 = vlaneseq
  %v8379 = vshrl.u32 %v8378, 7
  %v8380 = vsub.s32 0, %v8379
  %v8381 = vrot.slane %v8376, %v8380
  %v8382 = vlaneseq
  %v8383 = vshrl.u32 %v8382, 7
  %v8384 = vsub.s32 1, %v8383
  %v8385 = vrot.slane %v8376, %v8384
  %vm8392 = vcmask 1044480
  %v8393 = vrot.slane %v8340, 3
  %v8394 = vrot.slane %v8342, 3
  %v8395 = vsel %vm8392, %v8393, %v8394
  %v8396 = vrot.slane %v8341, 3
  %v8397 = vrot.slane %v8343, 3
  %v8398 = vsel %vm8392, %v8396, %v8397
  %v8435 = vunpack.c.l.b16 %v8344
  %v8436 = vunpack.c.h.b16 %v8344
  %v8437 = vunpack.c.l.b16 %v8345
  %v8438 = vunpack.c.h.b16 %v8345
  %v8439 = vunpack.c.l.b16 %v8346
  %v8440 = vunpack.c.h.b16 %v8346
  %v8441 = vunpack.c.l.b16 %v8347
  %v8442 = vunpack.c.h.b16 %v8347
  %v8443 = vunpack.c.l.b16 %v8348
  %v8444 = vunpack.c.h.b16 %v8348
  %v8445 = vunpack.c.l.b16 %v8349
  %v8446 = vunpack.c.h.b16 %v8349
  %v8447 = vunpack.c.l.b16 %v8350
  %v8448 = vunpack.c.h.b16 %v8350
  %v8449 = vunpack.c.l.b16 %v8351
  %v8450 = vunpack.c.h.b16 %v8351
  %v8451 = vunpack.c.l.b16 %v8352
  %v8452 = vunpack.c.h.b16 %v8352
  %v8453 = vunpack.c.l.b16 %v8353
  %v8454 = vunpack.c.h.b16 %v8353
  %v8455 = vunpack.c.l.b16 %v8354
  %v8456 = vunpack.c.h.b16 %v8354
  %v8457 = vunpack.c.l.b16 %v8355
  %v8458 = vunpack.c.h.b16 %v8355
  %v8459 = vunpack.c.l.b16 %v8356
  %v8460 = vunpack.c.h.b16 %v8356
  %v8461 = vunpack.c.l.b16 %v8357
  %v8462 = vunpack.c.h.b16 %v8357
  %v8463 = vunpack.c.l.b16 %v8358
  %v8464 = vunpack.c.h.b16 %v8358
  %v8465 = vunpack.c.l.b16 %v8359
  %v8466 = vunpack.c.h.b16 %v8359
  %v8467 = vunpack.c.l.b16 %v8360
  %v8468 = vunpack.c.h.b16 %v8360
  %v8469 = vunpack.c.l.b16 %v8361
  %v8470 = vunpack.c.h.b16 %v8361
  %v8471 = vunpack.c.l.b16 %v8362
  %v8472 = vunpack.c.h.b16 %v8362
  %v8473 = vunpack.c.l.b16 %v8363
  %v8474 = vunpack.c.h.b16 %v8363
  %v8475 = vunpack.c.l.b16 %v8364
  %v8476 = vunpack.c.h.b16 %v8364
  %v8477 = vunpack.c.l.b16 %v8365
  %v8478 = vunpack.c.h.b16 %v8365
  %v8479 = vunpack.c.l.b16 %v8366
  %v8480 = vunpack.c.h.b16 %v8366
  %v8481 = vunpack.c.l.b16 %v8367
  %v8482 = vunpack.c.h.b16 %v8367
  %v8483 = vunpack.c.l.b16 %v8368
  %v8484 = vunpack.c.h.b16 %v8368
  %v8485 = vunpack.c.l.b16 %v8369
  %v8486 = vunpack.c.h.b16 %v8369
  %v8487 = vunpack.c.l.b16 %v8370
  %v8488 = vunpack.c.h.b16 %v8370
  %v8489 = vunpack.c.l.b16 %v8371
  %v8490 = vunpack.c.h.b16 %v8371
  %v8491 = vunpack.c.l.b16 %v8372
  %v8492 = vunpack.c.h.b16 %v8372
  %v8493 = vunpack.c.l.b16 %v8373
  %v8494 = vunpack.c.h.b16 %v8373
  %v8495 = vunpack.c.l.b16 %v8374
  %v8496 = vunpack.c.h.b16 %v8374
  %v8497 = vunpack.c.l.b16 %v8375
  %v8498 = vunpack.c.h.b16 %v8375
  %v8499 = vpack.c.b16 %v8437, %v8435
  %v8500 = vpack.c.b16 %v8438, %v8436
  %v8501 = vpack.c.b16 %v8441, %v8439
  %v8502 = vpack.c.b16 %v8442, %v8440
  %v8503 = vpack.c.b16 %v8445, %v8443
  %v8504 = vpack.c.b16 %v8446, %v8444
  %v8505 = vpack.c.b16 %v8449, %v8447
  %v8506 = vpack.c.b16 %v8450, %v8448
  %v8507 = vpack.c.b16 %v8453, %v8451
  %v8508 = vpack.c.b16 %v8454, %v8452
  %v8509 = vpack.c.b16 %v8457, %v8455
  %v8510 = vpack.c.b16 %v8458, %v8456
  %v8511 = vpack.c.b16 %v8461, %v8459
  %v8512 = vpack.c.b16 %v8462, %v8460
  %v8513 = vpack.c.b16 %v8465, %v8463
  %v8514 = vpack.c.b16 %v8466, %v8464
  %v8515 = vpack.c.b16 %v8469, %v8467
  %v8516 = vpack.c.b16 %v8470, %v8468
  %v8517 = vpack.c.b16 %v8473, %v8471
  %v8518 = vpack.c.b16 %v8474, %v8472
  %v8519 = vpack.c.b16 %v8477, %v8475
  %v8520 = vpack.c.b16 %v8478, %v8476
  %v8521 = vpack.c.b16 %v8481, %v8479
  %v8522 = vpack.c.b16 %v8482, %v8480
  %v8523 = vpack.c.b16 %v8485, %v8483
  %v8524 = vpack.c.b16 %v8486, %v8484
  %v8525 = vpack.c.b16 %v8489, %v8487
  %v8526 = vpack.c.b16 %v8490, %v8488
  %v8527 = vpack.c.b16 %v8493, %v8491
  %v8528 = vpack.c.b16 %v8494, %v8492
  %v8529 = vpack.c.b16 %v8497, %v8495
  %v8530 = vpack.c.b16 %v8498, %v8496
  %8563 = vmatprep.subr.bf16.mxu0 %v8500
  %8564 = vmatpush1.bf16.msra.mxu0 %v8499
  %8565 = vmatprep.subr.bf16.mxu0 %v8502
  %8566 = vmatpush1.bf16.msra.mxu0 %v8501
  %8567 = vmatprep.subr.bf16.mxu0 %v8504
  %8568 = vmatpush1.bf16.msra.mxu0 %v8503
  %8569 = vmatprep.subr.bf16.mxu0 %v8506
  %8570 = vmatpush1.bf16.msra.mxu0 %v8505
  %8571 = vmatprep.subr.bf16.mxu0 %v8508
  %8572 = vmatpush1.bf16.msra.mxu0 %v8507
  %8573 = vmatprep.subr.bf16.mxu0 %v8510
  %8574 = vmatpush1.bf16.msra.mxu0 %v8509
  %8575 = vmatprep.subr.bf16.mxu0 %v8512
  %8576 = vmatpush1.bf16.msra.mxu0 %v8511
  %8577 = vmatprep.subr.bf16.mxu0 %v8514
  %8578 = vmatpush1.bf16.msra.mxu0 %v8513
  %8579 = vmatprep.subr.bf16.mxu0 %v8516
  %8580 = vmatpush1.bf16.msra.mxu0 %v8515
  %8581 = vmatprep.subr.bf16.mxu0 %v8518
  %8582 = vmatpush1.bf16.msra.mxu0 %v8517
  %8583 = vmatprep.subr.bf16.mxu0 %v8520
  %8584 = vmatpush1.bf16.msra.mxu0 %v8519
  %8585 = vmatprep.subr.bf16.mxu0 %v8522
  %8586 = vmatpush1.bf16.msra.mxu0 %v8521
  %8587 = vmatprep.subr.bf16.mxu0 %v8524
  %8588 = vmatpush1.bf16.msra.mxu0 %v8523
  %8589 = vmatprep.subr.bf16.mxu0 %v8526
  %8590 = vmatpush1.bf16.msra.mxu0 %v8525
  %8591 = vmatprep.subr.bf16.mxu0 %v8528
  %8592 = vmatpush1.bf16.msra.mxu0 %v8527
  %8593 = vmatprep.subr.bf16.mxu0 %v8530
  %8594 = vmatpush1.bf16.msra.mxu0 %v8529
  %8595 = vmatprep.mubr.bf16.mxu0 %v8398
  %8596 = vmatmul.mubr.bf16.gmra.mrb[0].mxu0 %v8395
  %v8597 = vpop.f32.mrb[0].mxu0
  %v8598 = vadd.f32 %v8381, %v8597
  %v8599 = vpop.f32.mrb[0].mxu0
  %v8600 = vadd.f32 %v8385, %v8599
  %v8601 = vpop.f32.mrb[0].mxu0
  %v8602 = vadd.f32 %v8381, %v8601
  %v8603 = vpop.f32.mrb[0].mxu0
  %v8604 = vadd.f32 %v8385, %v8603
  %8605 = vmatprep.mubr.bf16.mxu0 %v8397
  %8606 = vmatmul.mubr.bf16.gmra.mrb[0].mxu0 %v8394
  %v8607 = vpop.f32.mrb[0].mxu0
  %v8608 = vadd.f32 %v8381, %v8607
  %v8609 = vpop.f32.mrb[0].mxu0
  %v8610 = vadd.f32 %v8385, %v8609
  %v8611 = vpop.f32.mrb[0].mxu0
  %v8612 = vpop.f32.mrb[0].mxu0
  %8613 = vdwg.mxu0
  %v8614 = vld [vmem:[%s13] sm:$0xff]
  %v8615 = vld [vmem:[%s13 + $0x8] sm:$0xff]
  %v8616 = vld [vmem:[%s13 + $0x10] sm:$0xf]
  %v8617 = vld [vmem:[%s13 + $0x18] sm:$0xf]
  %v8618 = vmul.f32 %v8334, %v8334
  %v8619 = vmul.f32 %v8336, %v8336
  %vm8620 = vcmask 1045504
  %v8621 = vsel %vm8620, %v8618, 0.0
  %v8622 = vsel %vm8620, %v8619, 0.0
  %v8623 = vadd.f32 %v8621, %v8622
  %8624 = vadd.xlane.f32.xlu0 %v8623
  %v8625 = vpop.xlane.xlu0 %8624
  %v8626 = vpack.c.bf16 %v8334, %v8334
  %v8627 = vpack.c.bf16 %v8336, %v8336
  %v8628 = vpack.c.bf16 %v8616, %v8614
  %v8629 = vpack.c.bf16 %v8617, %v8615
  %8630 = vmatprep.subr.bf16.mxu0 %v8629
  %8631 = vmatpush1.bf16.xpose.msra.mxu0 %v8628
  %8632 = vmatprep.subr.bf16.mxu0 0
  %8633 = vmatpush1.bf16.xpose.msra.mxu0 0
  %8634 = vmatprep.subr.bf16.mxu0 0
  %8635 = vmatpush1.bf16.xpose.msra.mxu0 0
  %8636 = vmatprep.subr.bf16.mxu0 0
  %8637 = vmatpush1.bf16.xpose.msra.mxu0 0
  %8638 = vmatprep.subr.bf16.mxu0 0
  %8639 = vmatpush1.bf16.xpose.msra.mxu0 0
  %8640 = vmatprep.subr.bf16.mxu0 0
  %8641 = vmatpush1.bf16.xpose.msra.mxu0 0
  %8642 = vmatprep.subr.bf16.mxu0 0
  %8643 = vmatpush1.bf16.xpose.msra.mxu0 0
  %8644 = vmatprep.subr.bf16.mxu0 0
  %8645 = vmatpush1.bf16.xpose.msra.mxu0 0
  %8646 = vmatprep.subr.bf16.mxu0 0
  %8647 = vmatpush1.bf16.xpose.msra.mxu0 0
  %8648 = vmatprep.subr.bf16.mxu0 0
  %8649 = vmatpush1.bf16.xpose.msra.mxu0 0
  %8650 = vmatprep.subr.bf16.mxu0 0
  %8651 = vmatpush1.bf16.xpose.msra.mxu0 0
  %8652 = vmatprep.subr.bf16.mxu0 0
  %8653 = vmatpush1.bf16.xpose.msra.mxu0 0
  %8654 = vmatprep.subr.bf16.mxu0 0
  %8655 = vmatpush1.bf16.xpose.msra.mxu0 0
  %8656 = vmatprep.subr.bf16.mxu0 0
  %8657 = vmatpush1.bf16.xpose.msra.mxu0 0
  %8658 = vmatprep.subr.bf16.mxu0 0
  %8659 = vmatpush1.bf16.xpose.msra.mxu0 0
  %8660 = vmatprep.subr.bf16.mxu0 0
  %8661 = vmatpush1.bf16.xpose.msra.mxu0 0
  %8662 = vmatprep.mubr.bf16.mxu0 %v8627
  %8663 = vmatmul.mubr.bf16.gmra.mrb[0].mxu0 %v8626
  %v8664 = vpop.f32.mrb[0].mxu0
  %v8665 = vadd.f32 0.0, %v8664
  %v8666 = vpop.f32.mrb[0].mxu0
  %v8667 = vpop.f32.mrb[0].mxu0
  %v8668 = vpop.f32.mrb[0].mxu0
  %8669 = vdwg.mxu0
  %v8670 = vld [vmem:[%s14] sm:$0x1]
  %v8672 = vlaneseq
  %v8673 = vshrl.u32 %v8672, 7
  %v8674 = vsub.s32 0, %v8673
  %v8675 = vrot.slane %v8670, %v8674
  %v8677 = vadd.f32 %v8625, %v8675
  %v8678 = vmul.f32 %v8665, 2.0
  %v8679 = vsub.f32 %v8677, %v8678
  %v8680 = vmax.f32 %v8679, 0.0
  %v8681 = vrsqrt.pop %v8680
  %v8682 = vmul.f32 %v8680, %v8681
  %vm8683 = vcmp.eq.f32.partialorder %v8680, inf
  %v8684 = vsel %vm8683, %v8680, %v8682
  %vm8685 = vcmp.eq.f32.partialorder %v8680, 0.0
  %v8686 = vand.u32 %v8680, 2147483648
  %v8687 = vsel %vm8685, %v8686, %v8684
  %v8688 = vmul.f32 %v8687, -1.0
  %v8689 = vmul.f32 %v8688, 1.442695
  %v8690 = vpow.pop %v8689
  %vm8691 = vcmask 97280
  %v8693 = vsel %vm8691, %v8690, 0
  %v8696 = vsel %vm536, %v8616, 0
  %v8699 = vsel %vm536, %v8617, 0
  %8701 = vmatprep.subr.mxu0 %v8615
  %8702 = vmatpush1.msra.mxu0 %v8614
  %8703 = vmatprep.subr.mxu0 %v8699
  %8704 = vmatpush1.msra.mxu0 %v8696
  %8705 = vmatprep.subr.mxu0 0.0
  %8706 = vmatpush1.msra.mxu0 0.0
  %8707 = vmatprep.subr.mxu0 0.0
  %8708 = vmatpush1.msra.mxu0 0.0
  %8709 = vmatprep.subr.mxu0 0.0
  %8710 = vmatpush1.msra.mxu0 0.0
  %8711 = vmatprep.subr.mxu0 0.0
  %8712 = vmatpush1.msra.mxu0 0.0
  %8713 = vmatprep.subr.mxu0 0.0
  %8714 = vmatpush1.msra.mxu0 0.0
  %8715 = vmatprep.subr.mxu0 0.0
  %8716 = vmatpush1.msra.mxu0 0.0
  %8717 = vmatprep.subr.mxu0 0.0
  %8718 = vmatpush1.msra.mxu0 0.0
  %8719 = vmatprep.subr.mxu0 0.0
  %8720 = vmatpush1.msra.mxu0 0.0
  %8721 = vmatprep.subr.mxu0 0.0
  %8722 = vmatpush1.msra.mxu0 0.0
  %8723 = vmatprep.subr.mxu0 0.0
  %8724 = vmatpush1.msra.mxu0 0.0
  %8725 = vmatprep.subr.mxu0 0.0
  %8726 = vmatpush1.msra.mxu0 0.0
  %8727 = vmatprep.subr.mxu0 0.0
  %8728 = vmatpush1.msra.mxu0 0.0
  %8729 = vmatprep.subr.mxu0 0.0
  %8730 = vmatpush1.msra.mxu0 0.0
  %8731 = vmatprep.subr.mxu0 0.0
  %8732 = vmatpush1.msra.mxu0 0.0
  %8733 = vmatprep.subr.mxu0 0.0
  %8734 = vmatpush1.msra.mxu0 0.0
  %8735 = vmatprep.subr.mxu0 0.0
  %8736 = vmatpush1.msra.mxu0 0.0
  %8737 = vmatprep.subr.mxu0 0.0
  %8738 = vmatpush1.msra.mxu0 0.0
  %8739 = vmatprep.subr.mxu0 0.0
  %8740 = vmatpush1.msra.mxu0 0.0
  %8741 = vmatprep.subr.mxu0 0.0
  %8742 = vmatpush1.msra.mxu0 0.0
  %8743 = vmatprep.subr.mxu0 0.0
  %8744 = vmatpush1.msra.mxu0 0.0
  %8745 = vmatprep.subr.mxu0 0.0
  %8746 = vmatpush1.msra.mxu0 0.0
  %8747 = vmatprep.subr.mxu0 0.0
  %8748 = vmatpush1.msra.mxu0 0.0
  %8749 = vmatprep.subr.mxu0 0.0
  %8750 = vmatpush1.msra.mxu0 0.0
  %8751 = vmatprep.subr.mxu0 0.0
  %8752 = vmatpush1.msra.mxu0 0.0
  %8753 = vmatprep.subr.mxu0 0.0
  %8754 = vmatpush1.msra.mxu0 0.0
  %8755 = vmatprep.subr.mxu0 0.0
  %8756 = vmatpush1.msra.mxu0 0.0
  %8757 = vmatprep.subr.mxu0 0.0
  %8758 = vmatpush1.msra.mxu0 0.0
  %8759 = vmatprep.subr.mxu0 0.0
  %8760 = vmatpush1.msra.mxu0 0.0
  %8761 = vmatprep.subr.mxu0 0.0
  %8762 = vmatpush1.msra.mxu0 0.0
  %8763 = vmatprep.subr.mxu0 0.0
  %8764 = vmatpush1.msra.mxu0 0.0
  %8765 = vmatprep.mubr.f32.mxu0 0.0
  %8766 = vmatmul.mubr.f32.gmra.mrb[0].mxu0 %v8693
  %v8767 = vpop.f32.mrb[0].mxu0
  %v8768 = vadd.f32 0.0, %v8767
  %v8769 = vpop.f32.mrb[0].mxu0
  %v8770 = vadd.f32 0.0, %v8769
  %8771 = vdwg.mxu0
  %8772 = vst [vmem:[%s21] sm:$0x3f] %v8768
  %8773 = vst [vmem:[%s21 + $0x8] sm:$0x3f] %v8770
  %v8774 = vld [vmem:[%s15] sm:$0xff]
  %v8775 = vld [vmem:[%s15 + $0x8] sm:$0xff]
  %v8776 = vld [vmem:[%s15 + $0x10] sm:$0xf]
  %v8777 = vld [vmem:[%s15 + $0x18] sm:$0xf]
  %v8778 = vmul.f32 %v8598, %v8598
  %v8779 = vmul.f32 %v8600, %v8600
  %v8780 = vmul.f32 %v8602, %v8602
  %v8781 = vmul.f32 %v8604, %v8604
  %v8782 = vmul.f32 %v8608, %v8608
  %v8783 = vmul.f32 %v8610, %v8610
  %v8784 = vadd.f32 %v8778, %v8779
  %8785 = vadd.xlane.f32.xlu0 %v8784
  %v8786 = vpop.xlane.xlu0 %8785
  %v8787 = vadd.f32 %v8780, %v8781
  %8788 = vadd.xlane.f32.xlu0 %v8787
  %v8789 = vpop.xlane.xlu0 %8788
  %vm8790 = vcmask 1041408
  %v8791 = vsel %vm8790, %v8782, 0.0
  %v8792 = vsel %vm8790, %v8783, 0.0
  %v8793 = vadd.f32 %v8791, %v8792
  %8794 = vadd.xlane.f32.xlu0 %v8793
  %v8795 = vpop.xlane.xlu0 %8794
  %v8796 = vpack.c.bf16 %v8602, %v8598
  %v8797 = vpack.c.bf16 %v8604, %v8600
  %v8798 = vpack.c.bf16 %v8608, %v8608
  %v8799 = vpack.c.bf16 %v8610, %v8610
  %v8800 = vpack.c.bf16 %v8776, %v8774
  %v8801 = vpack.c.bf16 %v8777, %v8775
  %8802 = vmatprep.subr.bf16.mxu0 %v8801
  %8803 = vmatpush1.bf16.xpose.msra.mxu0 %v8800
  %8804 = vmatprep.subr.bf16.mxu0 0
  %8805 = vmatpush1.bf16.xpose.msra.mxu0 0
  %8806 = vmatprep.subr.bf16.mxu0 0
  %8807 = vmatpush1.bf16.xpose.msra.mxu0 0
  %8808 = vmatprep.subr.bf16.mxu0 0
  %8809 = vmatpush1.bf16.xpose.msra.mxu0 0
  %8810 = vmatprep.subr.bf16.mxu0 0
  %8811 = vmatpush1.bf16.xpose.msra.mxu0 0
  %8812 = vmatprep.subr.bf16.mxu0 0
  %8813 = vmatpush1.bf16.xpose.msra.mxu0 0
  %8814 = vmatprep.subr.bf16.mxu0 0
  %8815 = vmatpush1.bf16.xpose.msra.mxu0 0
  %8816 = vmatprep.subr.bf16.mxu0 0
  %8817 = vmatpush1.bf16.xpose.msra.mxu0 0
  %8818 = vmatprep.subr.bf16.mxu0 0
  %8819 = vmatpush1.bf16.xpose.msra.mxu0 0
  %8820 = vmatprep.subr.bf16.mxu0 0
  %8821 = vmatpush1.bf16.xpose.msra.mxu0 0
  %8822 = vmatprep.subr.bf16.mxu0 0
  %8823 = vmatpush1.bf16.xpose.msra.mxu0 0
  %8824 = vmatprep.subr.bf16.mxu0 0
  %8825 = vmatpush1.bf16.xpose.msra.mxu0 0
  %8826 = vmatprep.subr.bf16.mxu0 0
  %8827 = vmatpush1.bf16.xpose.msra.mxu0 0
  %8828 = vmatprep.subr.bf16.mxu0 0
  %8829 = vmatpush1.bf16.xpose.msra.mxu0 0
  %8830 = vmatprep.subr.bf16.mxu0 0
  %8831 = vmatpush1.bf16.xpose.msra.mxu0 0
  %8832 = vmatprep.subr.bf16.mxu0 0
  %8833 = vmatpush1.bf16.xpose.msra.mxu0 0
  %8834 = vmatprep.mubr.bf16.mxu0 %v8797
  %8835 = vmatmul.mubr.bf16.gmra.mrb[0].mxu0 %v8796
  %v8836 = vpop.f32.mrb[0].mxu0
  %v8837 = vadd.f32 0.0, %v8836
  %v8838 = vpop.f32.mrb[0].mxu0
  %v8839 = vpop.f32.mrb[0].mxu0
  %v8840 = vadd.f32 0.0, %v8839
  %v8841 = vpop.f32.mrb[0].mxu0
  %8842 = vmatprep.mubr.bf16.mxu0 %v8799
  %8843 = vmatmul.mubr.bf16.gmra.mrb[0].mxu0 %v8798
  %v8844 = vpop.f32.mrb[0].mxu0
  %v8845 = vadd.f32 0.0, %v8844
  %v8846 = vpop.f32.mrb[0].mxu0
  %v8847 = vpop.f32.mrb[0].mxu0
  %v8848 = vpop.f32.mrb[0].mxu0
  %8849 = vdwg.mxu0
  %v8850 = vld [vmem:[%s16] sm:$0x1]
  %v8852 = vlaneseq
  %v8853 = vshrl.u32 %v8852, 7
  %v8854 = vsub.s32 0, %v8853
  %v8855 = vrot.slane %v8850, %v8854
  %v8857 = vadd.f32 %v8786, %v8855
  %v8858 = vadd.f32 %v8789, %v8855
  %v8859 = vadd.f32 %v8795, %v8855
  %v8860 = vmul.f32 %v8837, 2.0
  %v8861 = vmul.f32 %v8840, 2.0
  %v8862 = vmul.f32 %v8845, 2.0
  %v8863 = vsub.f32 %v8857, %v8860
  %v8864 = vsub.f32 %v8858, %v8861
  %v8865 = vsub.f32 %v8859, %v8862
  %v8866 = vmax.f32 %v8863, 0.0
  %v8867 = vmax.f32 %v8864, 0.0
  %v8868 = vmax.f32 %v8865, 0.0
  %v8869 = vrsqrt.pop %v8866
  %v8870 = vmul.f32 %v8866, %v8869
  %vm8871 = vcmp.eq.f32.partialorder %v8866, inf
  %v8872 = vsel %vm8871, %v8866, %v8870
  %vm8873 = vcmp.eq.f32.partialorder %v8866, 0.0
  %v8874 = vand.u32 %v8866, 2147483648
  %v8875 = vsel %vm8873, %v8874, %v8872
  %v8876 = vrsqrt.pop %v8867
  %v8877 = vmul.f32 %v8867, %v8876
  %vm8878 = vcmp.eq.f32.partialorder %v8867, inf
  %v8879 = vsel %vm8878, %v8867, %v8877
  %vm8880 = vcmp.eq.f32.partialorder %v8867, 0.0
  %v8881 = vand.u32 %v8867, 2147483648
  %v8882 = vsel %vm8880, %v8881, %v8879
  %v8883 = vrsqrt.pop %v8868
  %v8884 = vmul.f32 %v8868, %v8883
  %vm8885 = vcmp.eq.f32.partialorder %v8868, inf
  %v8886 = vsel %vm8885, %v8868, %v8884
  %vm8887 = vcmp.eq.f32.partialorder %v8868, 0.0
  %v8888 = vand.u32 %v8868, 2147483648
  %v8889 = vsel %vm8887, %v8888, %v8886
  %v8890 = vmul.f32 %v8875, -1.0
  %v8891 = vmul.f32 %v8882, -1.0
  %v8892 = vmul.f32 %v8889, -1.0
  %v8893 = vmul.f32 %v8890, 1.442695
  %v8894 = vpow.pop %v8893
  %v8895 = vmul.f32 %v8891, 1.442695
  %v8896 = vpow.pop %v8895
  %v8897 = vmul.f32 %v8892, 1.442695
  %v8898 = vpow.pop %v8897
  %v8899 = vld [vmem:[%s17] sm:$0xff]
  %v8900 = vld [vmem:[%s17 + $0x8] sm:$0xf]
  %v8902 = vsel %vm8691, %v8894, 0
  %v8905 = vsel %vm8691, %v8896, 0
  %v8908 = vsel %vm8691, %v8898, 0
  %v8911 = vsel %vm536, %v8900, 0
  %8913 = vmatprep.subr.mxu0 0.0
  %8914 = vmatpush1.msra.mxu0 %v8899
  %8915 = vmatprep.subr.mxu0 0.0
  %8916 = vmatpush1.msra.mxu0 %v8911
  %8917 = vmatprep.subr.mxu0 0.0
  %8918 = vmatpush1.msra.mxu0 0.0
  %8919 = vmatprep.subr.mxu0 0.0
  %8920 = vmatpush1.msra.mxu0 0.0
  %8921 = vmatprep.subr.mxu0 0.0
  %8922 = vmatpush1.msra.mxu0 0.0
  %8923 = vmatprep.subr.mxu0 0.0
  %8924 = vmatpush1.msra.mxu0 0.0
  %8925 = vmatprep.subr.mxu0 0.0
  %8926 = vmatpush1.msra.mxu0 0.0
  %8927 = vmatprep.subr.mxu0 0.0
  %8928 = vmatpush1.msra.mxu0 0.0
  %8929 = vmatprep.subr.mxu0 0.0
  %8930 = vmatpush1.msra.mxu0 0.0
  %8931 = vmatprep.subr.mxu0 0.0
  %8932 = vmatpush1.msra.mxu0 0.0
  %8933 = vmatprep.subr.mxu0 0.0
  %8934 = vmatpush1.msra.mxu0 0.0
  %8935 = vmatprep.subr.mxu0 0.0
  %8936 = vmatpush1.msra.mxu0 0.0
  %8937 = vmatprep.subr.mxu0 0.0
  %8938 = vmatpush1.msra.mxu0 0.0
  %8939 = vmatprep.subr.mxu0 0.0
  %8940 = vmatpush1.msra.mxu0 0.0
  %8941 = vmatprep.subr.mxu0 0.0
  %8942 = vmatpush1.msra.mxu0 0.0
  %8943 = vmatprep.subr.mxu0 0.0
  %8944 = vmatpush1.msra.mxu0 0.0
  %8945 = vmatprep.subr.mxu0 0.0
  %8946 = vmatpush1.msra.mxu0 0.0
  %8947 = vmatprep.subr.mxu0 0.0
  %8948 = vmatpush1.msra.mxu0 0.0
  %8949 = vmatprep.subr.mxu0 0.0
  %8950 = vmatpush1.msra.mxu0 0.0
  %8951 = vmatprep.subr.mxu0 0.0
  %8952 = vmatpush1.msra.mxu0 0.0
  %8953 = vmatprep.subr.mxu0 0.0
  %8954 = vmatpush1.msra.mxu0 0.0
  %8955 = vmatprep.subr.mxu0 0.0
  %8956 = vmatpush1.msra.mxu0 0.0
  %8957 = vmatprep.subr.mxu0 0.0
  %8958 = vmatpush1.msra.mxu0 0.0
  %8959 = vmatprep.subr.mxu0 0.0
  %8960 = vmatpush1.msra.mxu0 0.0
  %8961 = vmatprep.subr.mxu0 0.0
  %8962 = vmatpush1.msra.mxu0 0.0
  %8963 = vmatprep.subr.mxu0 0.0
  %8964 = vmatpush1.msra.mxu0 0.0
  %8965 = vmatprep.subr.mxu0 0.0
  %8966 = vmatpush1.msra.mxu0 0.0
  %8967 = vmatprep.subr.mxu0 0.0
  %8968 = vmatpush1.msra.mxu0 0.0
  %8969 = vmatprep.subr.mxu0 0.0
  %8970 = vmatpush1.msra.mxu0 0.0
  %8971 = vmatprep.subr.mxu0 0.0
  %8972 = vmatpush1.msra.mxu0 0.0
  %8973 = vmatprep.subr.mxu0 0.0
  %8974 = vmatpush1.msra.mxu0 0.0
  %8975 = vmatprep.subr.mxu0 0.0
  %8976 = vmatpush1.msra.mxu0 0.0
  %8977 = vmatprep.mubr.f32.mxu0 0.0
  %8978 = vmatmul.mubr.f32.gmra.mrb[0].mxu0 %v8902
  %v8979 = vpop.f32.mrb[0].mxu0
  %v8980 = vadd.f32 0.0, %v8979
  %v8981 = vpop.f32.mrb[0].mxu0
  %8982 = vmatprep.mubr.f32.mxu0 0.0
  %8983 = vmatmul.mubr.f32.gmra.mrb[0].mxu0 %v8905
  %v8984 = vpop.f32.mrb[0].mxu0
  %v8985 = vadd.f32 0.0, %v8984
  %v8986 = vpop.f32.mrb[0].mxu0
  %8987 = vmatprep.mubr.f32.mxu0 0.0
  %8988 = vmatmul.mubr.f32.gmra.mrb[0].mxu0 %v8908
  %v8989 = vpop.f32.mrb[0].mxu0
  %v8990 = vadd.f32 0.0, %v8989
  %v8991 = vpop.f32.mrb[0].mxu0
  %8992 = vdwg.mxu0
  %vm8993 = vcmask 48128
  %v8994 = vsel %vm8993, %v8980, 0.0
  %8995 = vadd.xlane.f32.xlu0 %v8994
  %v8996 = vpop.xlane.xlu0 %8995
  %v8997 = vsel %vm8993, %v8985, 0.0
  %8998 = vadd.xlane.f32.xlu0 %v8997
  %v8999 = vpop.xlane.xlu0 %8998
  %vm9000 = vcmask 41984
  %v9001 = vsel %vm9000, %v8990, 0.0
  %9002 = vadd.xlane.f32.xlu0 %v9001
  %v9003 = vpop.xlane.xlu0 %9002
  %v9004 = vrcp.pop %v8996
  %v9005 = vmul.f32 %v8980, %v9004
  %v9006 = vrcp.pop %v8999
  %v9007 = vmul.f32 %v8985, %v9006
  %v9008 = vrcp.pop %v9003
  %v9009 = vmul.f32 %v8990, %v9008
  %v9010 = vsel %vm8993, %v9005, -inf
  %9011 = vmax.xlane.f32.xlu0 %v9010
  %v9012 = vpop.xlane.xlu0 %9011
  %v9013 = vsel %vm8993, %v9007, -inf
  %9014 = vmax.xlane.f32.xlu0 %v9013
  %v9015 = vpop.xlane.xlu0 %9014
  %v9016 = vsel %vm9000, %v9009, -inf
  %9017 = vmax.xlane.f32.xlu0 %v9016
  %v9018 = vpop.xlane.xlu0 %9017
  %v9019 = vld [vmem:[%s18] sm:$0x3f]
  %v9020 = vld [vmem:[%s19] sm:$0xff]
  %v9021 = vld [vmem:[%s19 + $0x8] sm:$0xff]
  %v9022 = vld [vmem:[%s19 + $0x10] sm:$0x3]
  %v9023 = vmul.f32 %v9012, %v9020
  %v9024 = vmul.f32 %v9015, %v9021
  %v9025 = vmul.f32 %v9018, %v9022
  %vm9026 = vcmask 146432
  %v9028 = vsel %vm9026, %v9019, 0
  %v9031 = vsel %vm8790, %v9025, 0
  %9033 = vmatprep.subr.mxu0 0.0
  %9034 = vmatpush1.msra.mxu0 %v9023
  %9035 = vmatprep.subr.mxu0 0.0
  %9036 = vmatpush1.msra.mxu0 %v9024
  %9037 = vmatprep.subr.mxu0 0.0
  %9038 = vmatpush1.msra.mxu0 %v9031
  %9039 = vmatprep.subr.mxu0 0.0
  %9040 = vmatpush1.msra.mxu0 0.0
  %9041 = vmatprep.subr.mxu0 0.0
  %9042 = vmatpush1.msra.mxu0 0.0
  %9043 = vmatprep.subr.mxu0 0.0
  %9044 = vmatpush1.msra.mxu0 0.0
  %9045 = vmatprep.subr.mxu0 0.0
  %9046 = vmatpush1.msra.mxu0 0.0
  %9047 = vmatprep.subr.mxu0 0.0
  %9048 = vmatpush1.msra.mxu0 0.0
  %9049 = vmatprep.subr.mxu0 0.0
  %9050 = vmatpush1.msra.mxu0 0.0
  %9051 = vmatprep.subr.mxu0 0.0
  %9052 = vmatpush1.msra.mxu0 0.0
  %9053 = vmatprep.subr.mxu0 0.0
  %9054 = vmatpush1.msra.mxu0 0.0
  %9055 = vmatprep.subr.mxu0 0.0
  %9056 = vmatpush1.msra.mxu0 0.0
  %9057 = vmatprep.subr.mxu0 0.0
  %9058 = vmatpush1.msra.mxu0 0.0
  %9059 = vmatprep.subr.mxu0 0.0
  %9060 = vmatpush1.msra.mxu0 0.0
  %9061 = vmatprep.subr.mxu0 0.0
  %9062 = vmatpush1.msra.mxu0 0.0
  %9063 = vmatprep.subr.mxu0 0.0
  %9064 = vmatpush1.msra.mxu0 0.0
  %9065 = vmatprep.subr.mxu0 0.0
  %9066 = vmatpush1.msra.mxu0 0.0
  %9067 = vmatprep.subr.mxu0 0.0
  %9068 = vmatpush1.msra.mxu0 0.0
  %9069 = vmatprep.subr.mxu0 0.0
  %9070 = vmatpush1.msra.mxu0 0.0
  %9071 = vmatprep.subr.mxu0 0.0
  %9072 = vmatpush1.msra.mxu0 0.0
  %9073 = vmatprep.subr.mxu0 0.0
  %9074 = vmatpush1.msra.mxu0 0.0
  %9075 = vmatprep.subr.mxu0 0.0
  %9076 = vmatpush1.msra.mxu0 0.0
  %9077 = vmatprep.subr.mxu0 0.0
  %9078 = vmatpush1.msra.mxu0 0.0
  %9079 = vmatprep.subr.mxu0 0.0
  %9080 = vmatpush1.msra.mxu0 0.0
  %9081 = vmatprep.subr.mxu0 0.0
  %9082 = vmatpush1.msra.mxu0 0.0
  %9083 = vmatprep.subr.mxu0 0.0
  %9084 = vmatpush1.msra.mxu0 0.0
  %9085 = vmatprep.subr.mxu0 0.0
  %9086 = vmatpush1.msra.mxu0 0.0
  %9087 = vmatprep.subr.mxu0 0.0
  %9088 = vmatpush1.msra.mxu0 0.0
  %9089 = vmatprep.subr.mxu0 0.0
  %9090 = vmatpush1.msra.mxu0 0.0
  %9091 = vmatprep.subr.mxu0 0.0
  %9092 = vmatpush1.msra.mxu0 0.0
  %9093 = vmatprep.subr.mxu0 0.0
  %9094 = vmatpush1.msra.mxu0 0.0
  %9095 = vmatprep.subr.mxu0 0.0
  %9096 = vmatpush1.msra.mxu0 0.0
  %9097 = vmatprep.mubr.f32.mxu0 0.0
  %9098 = vmatmul.mubr.f32.gmra.mrb[0].mxu0 %v9028
  %v9099 = vpop.f32.mrb[0].mxu0
  %v9100 = vadd.f32 0.0, %v9099
  %v9101 = vpop.f32.mrb[0].mxu0
  %9102 = vdwg.mxu0
  %v9103 = vld [vmem:[%s20] sm:$0x3f]
  %v9104 = vld [vmem:[%s20 + $0x8] sm:$0x3f]
  %v9106 = vsel %vm8993, %v9100, 0
  %v9109 = vsel %vm8620, %v9103, 0
  %v9112 = vsel %vm8620, %v9104, 0
  %9114 = vmatprep.subr.mxu0 %v9112
  %9115 = vmatpush1.msra.mxu0 %v9109
  %9116 = vmatprep.subr.mxu0 0.0
  %9117 = vmatpush1.msra.mxu0 0.0
  %9118 = vmatprep.subr.mxu0 0.0
  %9119 = vmatpush1.msra.mxu0 0.0
  %9120 = vmatprep.subr.mxu0 0.0
  %9121 = vmatpush1.msra.mxu0 0.0
  %9122 = vmatprep.subr.mxu0 0.0
  %9123 = vmatpush1.msra.mxu0 0.0
  %9124 = vmatprep.subr.mxu0 0.0
  %9125 = vmatpush1.msra.mxu0 0.0
  %9126 = vmatprep.subr.mxu0 0.0
  %9127 = vmatpush1.msra.mxu0 0.0
  %9128 = vmatprep.subr.mxu0 0.0
  %9129 = vmatpush1.msra.mxu0 0.0
  %9130 = vmatprep.subr.mxu0 0.0
  %9131 = vmatpush1.msra.mxu0 0.0
  %9132 = vmatprep.subr.mxu0 0.0
  %9133 = vmatpush1.msra.mxu0 0.0
  %9134 = vmatprep.subr.mxu0 0.0
  %9135 = vmatpush1.msra.mxu0 0.0
  %9136 = vmatprep.subr.mxu0 0.0
  %9137 = vmatpush1.msra.mxu0 0.0
  %9138 = vmatprep.subr.mxu0 0.0
  %9139 = vmatpush1.msra.mxu0 0.0
  %9140 = vmatprep.subr.mxu0 0.0
  %9141 = vmatpush1.msra.mxu0 0.0
  %9142 = vmatprep.subr.mxu0 0.0
  %9143 = vmatpush1.msra.mxu0 0.0
  %9144 = vmatprep.subr.mxu0 0.0
  %9145 = vmatpush1.msra.mxu0 0.0
  %9146 = vmatprep.subr.mxu0 0.0
  %9147 = vmatpush1.msra.mxu0 0.0
  %9148 = vmatprep.subr.mxu0 0.0
  %9149 = vmatpush1.msra.mxu0 0.0
  %9150 = vmatprep.subr.mxu0 0.0
  %9151 = vmatpush1.msra.mxu0 0.0
  %9152 = vmatprep.subr.mxu0 0.0
  %9153 = vmatpush1.msra.mxu0 0.0
  %9154 = vmatprep.subr.mxu0 0.0
  %9155 = vmatpush1.msra.mxu0 0.0
  %9156 = vmatprep.subr.mxu0 0.0
  %9157 = vmatpush1.msra.mxu0 0.0
  %9158 = vmatprep.subr.mxu0 0.0
  %9159 = vmatpush1.msra.mxu0 0.0
  %9160 = vmatprep.subr.mxu0 0.0
  %9161 = vmatpush1.msra.mxu0 0.0
  %9162 = vmatprep.subr.mxu0 0.0
  %9163 = vmatpush1.msra.mxu0 0.0
  %9164 = vmatprep.subr.mxu0 0.0
  %9165 = vmatpush1.msra.mxu0 0.0
  %9166 = vmatprep.subr.mxu0 0.0
  %9167 = vmatpush1.msra.mxu0 0.0
  %9168 = vmatprep.subr.mxu0 0.0
  %9169 = vmatpush1.msra.mxu0 0.0
  %9170 = vmatprep.subr.mxu0 0.0
  %9171 = vmatpush1.msra.mxu0 0.0
  %9172 = vmatprep.subr.mxu0 0.0
  %9173 = vmatpush1.msra.mxu0 0.0
  %9174 = vmatprep.subr.mxu0 0.0
  %9175 = vmatpush1.msra.mxu0 0.0
  %9176 = vmatprep.subr.mxu0 0.0
  %9177 = vmatpush1.msra.mxu0 0.0
  %9178 = vmatprep.mubr.f32.mxu0 0.0
  %9179 = vmatmul.mubr.f32.gmra.mrb[0].mxu0 %v9106
  %v9180 = vpop.f32.mrb[0].mxu0
  %v9181 = vadd.f32 0.0, %v9180
  %v9182 = vpop.f32.mrb[0].mxu0
  %v9183 = vadd.f32 0.0, %v9182
  %9184 = vdwg.mxu0
  %9185 = vst [vmem:[%s22] sm:$0x3f] %v9181
  %9186 = vst [vmem:[%s22 + $0x8] sm:$0x3f] %v9183
  // Predicated region
  $region86: #{_pmapper_forward_impl.2} parent=0 // pred_check
    _
  $region87: #{_pmapper_forward_impl.2} parent=0 // pred_check_branch
    %9188 = sbr.rel (0) target = $region89
  $region88: #{_pmapper_forward_impl.2} parent=0 // pred_region
    _
  $region89: #{_pmapper_forward_impl.2} parent=0 // pred_fallthru
    _
  // Predicated region
  $region90: #{_pmapper_forward_impl.2} parent=0 // pred_check
    _
  $region91: #{_pmapper_forward_impl.2} parent=0 // pred_check_branch
    %9190 = sbr.rel (0) target = $region93
  $region92: #{_pmapper_forward_impl.2} parent=0 // pred_region
    _
  $region93: #{_pmapper_forward_impl.2} parent=0 // pred_fallthru
    _
  // Predicated region
  $region94: #{_pmapper_forward_impl.2} parent=0 // pred_check
    _
  $region95: #{_pmapper_forward_impl.2} parent=0 // pred_check_branch
    %9192 = sbr.rel (0) target = $region97
  $region96: #{_pmapper_forward_impl.2} parent=0 // pred_region
    _
  $region97: #{_pmapper_forward_impl.2} parent=0 // pred_fallthru
    _
  // Predicated region
  $region98: #{_pmapper_forward_impl.2} parent=0 // pred_check
    _
  $region99: #{_pmapper_forward_impl.2} parent=0 // pred_check_branch
    %9194 = sbr.rel (0) target = $region101
  $region100: #{_pmapper_forward_impl.2} parent=0 // pred_region
    _
  $region101: #{_pmapper_forward_impl.2} parent=0 // pred_fallthru
    _

</llo_original>
